<compile_context>
chip_gen: v7x
topology: tpu7x:2x2x1
jax: 0.10.0
libtpu: 0.0.40
codegen_flags: <defaults>
</compile_context>

<pallas_src>
import jax
import jax.numpy as jnp
from jax.experimental import pallas as pl
from jax.experimental.pallas import tpu as pltpu


# ----------------------------------------------------------------------------
# Kernel builder: whole decoder (linear + n_layers ResBlocks) in one kernel.
# ----------------------------------------------------------------------------
def _build_decoder_kernel(n_layers, C, n_params):
    sizes = [2 ** i for i in range(n_layers)]            # per-layer input S
    for S in sizes:
        assert S & (S - 1) == 0, "spatial size must be a power of two"

    # VMEM scratch: for each layer with S > 1, a zero-halo activation buffer
    # (flat pitch W, halo of W+1 rows top and bottom) and a (M, 9C) tap matrix.
    scratch_shapes = []
    scratch_idx = {}
    for i, S in enumerate(sizes):
        if S > 1:
            M, halo = S * S, S + 1
            scratch_idx[i] = len(scratch_shapes)
            scratch_shapes.append(pltpu.VMEM((M + 2 * halo, C), jnp.float32))
            scratch_shapes.append(pltpu.VMEM((M, 9 * C), jnp.float32))

    n_inputs = 3 + 6 * n_layers

    def kernel(*refs):
        x_ref, lin_w_ref, lin_b_ref = refs[0], refs[1], refs[2]
        lrefs = [refs[3 + 6 * i: 3 + 6 * (i + 1)] for i in range(n_layers)]
        o_ref = refs[n_inputs]
        scratch = refs[n_inputs + 1:]

        # ---- zero only the halo rows of every pad buffer (interiors are
        #      always fully rewritten before they are read) ----
        for i, S in enumerate(sizes):
            if S > 1:
                M, halo = S * S, S + 1
                pad_ref = scratch[scratch_idx[i]]
                z = jnp.zeros((halo, C), jnp.float32)
                pad_ref[pl.ds(0, halo), :] = z
                pad_ref[pl.ds(halo + M, halo), :] = z

        def conv3x3(h_val, pad_ref, tap_ref, w_ref, b_ref, j, S,
                    mask_l, mask_r):
            """3x3 'same' conv (pre-flipped ConvT kernel j) as a single
            (M, 9C) x (9C, C) MXU matmul on a halo'd tap matrix."""
            M, W, halo = S * S, S, S + 1
            if h_val is not None:
                pad_ref[pl.ds(halo, M), :] = h_val
            for kh in range(3):
                for kw in range(3):
                    blk = kh * 3 + kw
                    tap = pad_ref[pl.ds(kh * W + kw, M), :]
                    if kw == 0:
                        tap = tap * mask_l          # left column-wrap guard
                    elif kw == 2:
                        tap = tap * mask_r          # right column-wrap guard
                    tap_ref[:, blk * C:(blk + 1) * C] = tap
            t = tap_ref[...].astype(jnp.bfloat16)
            return (jnp.dot(t, w_ref[j], preferred_element_type=jnp.float32)
                    + b_ref[j])

        # ---- estimator_inv: Linear(n_params -> C) -> 1x1xC image ----
        h = (jnp.dot(x_ref[0], lin_w_ref[...],
                     preferred_element_type=jnp.float32) + lin_b_ref[...])

        for i, S in enumerate(sizes):
            M, W = S * S, S
            skip_w, skip_b, conv_w, conv_b, pool_w, pool_b = lrefs[i]

            if S == 1:
                # A 3x3 'same' conv of a 1x1 image is just the center tap.
                x = h
                skip = (jnp.dot(x.astype(jnp.bfloat16), skip_w[...],
                                preferred_element_type=jnp.float32)
                        + skip_b[...])

                def center(v, j):
                    return (jnp.dot(v.astype(jnp.bfloat16),
                                    conv_w[j, 4 * C:5 * C, :],
                                    preferred_element_type=jnp.float32)
                            + conv_b[j])

                t = center(x, 0)
                t = center(t, 1)
                t = center(t, 2)
                t = jnp.maximum(t, 0.0)
                t = center(t, 3)
                t = center(t, 4)
                t = center(t, 5)
                y = t + skip
            else:
                halo = W + 1
                pad_ref = scratch[scratch_idx[i]]
                tap_ref = scratch[scratch_idx[i] + 1]
                # column-validity masks for kw = 0 / 2 taps
                # (W is a power of two, so `& (W-1)` == `% W`).
                col = jax.lax.broadcasted_iota(jnp.int32, (M, 1), 0) & (W - 1)
                mask_l = (col > 0).astype(jnp.float32)
                mask_r = (col < (W - 1)).astype(jnp.float32)

                # This layer's input already sits in its pad-buffer interior
                # (written by the previous layer's in-VMEM depth-to-space).
                x = pad_ref[pl.ds(halo, M), :]
                skip = (jnp.dot(x.astype(jnp.bfloat16), skip_w[...],
                                preferred_element_type=jnp.float32)
                        + skip_b[...])

                t = conv3x3(None, pad_ref, tap_ref, conv_w, conv_b, 0, S,
                            mask_l, mask_r)
                t = conv3x3(t, pad_ref, tap_ref, conv_w, conv_b, 1, S,
                            mask_l, mask_r)
                t = conv3x3(t, pad_ref, tap_ref, conv_w, conv_b, 2, S,
                            mask_l, mask_r)
                t = jnp.maximum(t, 0.0)
                t = conv3x3(t, pad_ref, tap_ref, conv_w, conv_b, 3, S,
                            mask_l, mask_r)
                t = conv3x3(t, pad_ref, tap_ref, conv_w, conv_b, 4, S,
                            mask_l, mask_r)
                t = conv3x3(t, pad_ref, tap_ref, conv_w, conv_b, 5, S,
                            mask_l, mask_r)
                y = t + skip

            # pool = ConvT(k=2, s=2) as a per-pixel (C -> 4C) matmul; the
            # Decoder's trailing ReLU is elementwise so it commutes with the
            # depth-to-space permutation.
            if i + 1 < n_layers:
                # 2x2 depth-to-space straight into the NEXT layer's pad
                # interior (never touches HBM).  One (C, C) matmul per
                # (dh, dw) block, sliced from the pool weight ref.
                S_out = 2 * S
                halo_n = S_out + 1
                pad_next = scratch[scratch_idx[i + 1]]
                yb = y.astype(jnp.bfloat16)
                # TODO(synk): for much deeper decoders replace the per-pixel
                # unrolled stores below with strided row-chunk stores.
                for k in range(4):                       # k = dh*2 + dw
                    dh, dw = k // 2, k % 2
                    blk = (jnp.dot(yb, pool_w[:, k * C:(k + 1) * C],
                                   preferred_element_type=jnp.float32)
                           + pool_b[:, k * C:(k + 1) * C])
                    blk = jnp.maximum(blk, 0.0)          # Decoder's ReLU
                    for r in range(S):
                        for c in range(S):
                            m = r * S + c
                            dest = (halo_n + (2 * r + dh) * S_out
                                    + (2 * c + dw))
                            pad_next[pl.ds(dest, 1), :] = blk[m:m + 1, :]
                h = None
            else:
                # Final layer: lane-dense (M, 4C) pre-depth-to-space output.
                pool = (jnp.dot(y.astype(jnp.bfloat16), pool_w[...],
                                preferred_element_type=jnp.float32)
                        + pool_b[...])
                o_ref[0] = jnp.maximum(pool, 0.0).astype(o_ref.dtype)

    return kernel, scratch_shapes


# ----------------------------------------------------------------------------
# Decoder forward (single fused pallas_call).
# ----------------------------------------------------------------------------
def decoder_forward(params_in, prepared, n_layers):
    B, n_params = params_in.shape
    C = prepared['lin_w_t'].shape[1]
    S_last = 2 ** (n_layers - 1)
    M_last = S_last * S_last

    kernel, scratch_shapes = _build_decoder_kernel(n_layers, C, n_params)

    in_specs = [
        pl.BlockSpec((1, 1, n_params), lambda b: (b, 0, 0)),     # params
        pl.BlockSpec((n_params, C), lambda b: (0, 0)),           # lin weight
        pl.BlockSpec((1, C), lambda b: (0, 0)),                  # lin bias
    ]
    args = [params_in.reshape(B, 1, n_params).astype(jnp.float32),
            prepared['lin_w_t'], prepared['lin_b']]
    for i in range(n_layers):
        lp = prepared['layers'][i]
        in_specs += [
            pl.BlockSpec((C, C), lambda b: (0, 0)),              # skip w
            pl.BlockSpec((1, C), lambda b: (0, 0)),              # skip b
            pl.BlockSpec((6, 9 * C, C), lambda b: (0, 0, 0)),    # conv w (9C,C)
            pl.BlockSpec((6, 1, C), lambda b: (0, 0, 0)),        # conv b
            pl.BlockSpec((C, 4 * C), lambda b: (0, 0)),          # pool w
            pl.BlockSpec((1, 4 * C), lambda b: (0, 0)),          # pool b
        ]
        args += [lp['skip_w'], lp['skip_b'], lp['conv_w9'], lp['conv_b'],
                 lp['pool_w'], lp['pool_b']]

    flops = 2 * B * n_params * C
    weight_bytes = 4 * (n_params * C + C)
    for i in range(n_layers):
        flops += 2 * B * (4 ** i) * C * C * (9 * 6 + 1 + 4)
        weight_bytes += 2 * C * C * (1 + 9 * 6 + 4) + 4 * C * (1 + 6 + 4)
    bytes_accessed = (4 * B * n_params + weight_bytes
                      + 4 * B * M_last * 4 * C)

    out = pl.pallas_call(
        kernel,
        out_shape=jax.ShapeDtypeStruct((B, M_last, 4 * C), jnp.float32),
        grid=(B,),
        in_specs=in_specs,
        out_specs=pl.BlockSpec((1, M_last, 4 * C), lambda b: (b, 0, 0)),
        scratch_shapes=scratch_shapes,
        compiler_params=pltpu.CompilerParams(
            dimension_semantics=("parallel",)),
        cost_estimate=pl.CostEstimate(flops=flops, transcendentals=0,
                                      bytes_accessed=bytes_accessed),
    )(*args)

    # Final 2x2 depth-to-space on the (only) lane-dense kernel output; all
    # intermediate-layer relayouts already happened inside the kernel in VMEM.
    out = out.reshape(B, S_last, S_last, 2, 2, C).transpose(0, 1, 3, 2, 4, 5)
    return out.reshape(B, 2 * S_last, 2 * S_last, C)


# ----------------------------------------------------------------------------
# One-time weight re-layout (ConvTranspose -> matmul form, bf16 for the MXU).
# ----------------------------------------------------------------------------
def prepare_weights(weights, n_layers):
    C = weights['lin_w'].shape[0]
    prep = {
        'lin_w_t': jnp.asarray(weights['lin_w'].T, jnp.float32),
        'lin_b': weights['lin_b'].reshape(1, C).astype(jnp.float32),
        'layers': [],
    }
    for i in range(n_layers):
        p = weights[f'layer{i}']
        # ConvT(k=3,s=1,p=1) == 3x3 'same' conv with a spatially flipped
        # kernel; rows ordered ((kh*3+kw)*C + i), columns o -> (9C, C).
        conv_w9 = jnp.stack(
            [jnp.flip(jnp.transpose(p[f'c{j}_w'], (2, 3, 0, 1)),
                      axis=(0, 1)).reshape(9 * C, C) for j in range(6)],
            axis=0).astype(jnp.bfloat16)                       # (6, 9C, C)
        conv_b = jnp.stack([p[f'c{j}_b'].reshape(1, C) for j in range(6)],
                           axis=0).astype(jnp.float32)         # (6, 1, C)
        prep['layers'].append({
            'skip_w': p['skip_w'].reshape(C, C).astype(jnp.bfloat16),
            'skip_b': p['skip_b'].reshape(1, C).astype(jnp.float32),
            'conv_w9': conv_w9,
            'conv_b': conv_b,
            # ConvT(k=2,s=2): wm[i, (kh*2+kw)*C + o] = w_t[i, o, kh, kw]
            'pool_w': jnp.transpose(p['pool_w'], (0, 2, 3, 1))
                        .reshape(C, 4 * C).astype(jnp.bfloat16),
            'pool_b': jnp.tile(p['pool_b'], 4).reshape(1, 4 * C)
                        .astype(jnp.float32),
        })
    return prep


# ----------------------------------------------------------------------------
# Independent pure-JAX reference using real transposed-conv semantics.
# ----------------------------------------------------------------------------
def _convT_ref(x, w_t, b, k, stride, pad):
    """PyTorch ConvTranspose2d (NHWC) via lhs-dilated conv, flipped kernel."""
    w_hwio = jnp.flip(jnp.transpose(w_t, (2, 3, 0, 1)), axis=(0, 1))
    e = k - 1 - pad
    y = jax.lax.conv_general_dilated(
        x, w_hwio, window_strides=(1, 1), padding=[(e, e), (e, e)],
        lhs_dilation=(stride, stride),
        dimension_numbers=('NHWC', 'HWIO', 'NHWC'))
    return y + b.reshape(1, 1, 1, -1)


def _resblock_ref(x, p):
    skip = _convT_ref(x, p['skip_w'], p['skip_b'], 1, 1, 0)
    h = _convT_ref(x, p['c0_w'], p['c0_b'], 3, 1, 1)
    h = _convT_ref(h, p['c1_w'], p['c1_b'], 3, 1, 1)
    h = _convT_ref(h, p['c2_w'], p['c2_b'], 3, 1, 1)
    h = jax.nn.relu(h)
    h = _convT_ref(h, p['c3_w'], p['c3_b'], 3, 1, 1)
    h = _convT_ref(h, p['c4_w'], p['c4_b'], 3, 1, 1)
    h = _convT_ref(h, p['c5_w'], p['c5_b'], 3, 1, 1)
    return _convT_ref(h + skip, p['pool_w'], p['pool_b'], 2, 2, 0)


def decoder_forward_ref(params_in, weights, n_layers):
    B = params_in.shape[0]
    C = weights['lin_w'].shape[0]
    x = params_in @ weights['lin_w'].T + weights['lin_b']
    images = x.reshape(B, 1, 1, C)
    for i in range(n_layers):
        images = jax.nn.relu(_resblock_ref(images, weights[f'layer{i}']))
    return images


# ----------------------------------------------------------------------------
# Deterministic parameter init (PyTorch weight layouts, synthetic values).
# ----------------------------------------------------------------------------
def init_params(key, n_layers, hidden, n_params):
    def nrm(k, shape, scale=0.05):
        return scale * jax.random.normal(k, shape, dtype=jnp.float32)

    keys = iter(jax.random.split(key, 2 + n_layers * 16))
    w = {'lin_w': nrm(next(keys), (hidden, n_params)),
         'lin_b': nrm(next(keys), (hidden,))}
    for i in range(n_layers):
        layer = {
            'skip_w': nrm(next(keys), (hidden, hidden, 1, 1)),
            'skip_b': nrm(next(keys), (hidden,)),
        }
        for j in range(6):
            layer[f'c{j}_w'] = nrm(next(keys), (hidden, hidden, 3, 3))
            layer[f'c{j}_b'] = nrm(next(keys), (hidden,))
        layer['pool_w'] = nrm(next(keys), (hidden, hidden, 2, 2))
        layer['pool_b'] = nrm(next(keys), (hidden,))
        w[f'layer{i}'] = layer
    return w


if __name__ == "__main__":
    n_layers, hidden, n_params, B = 3, 32, 8, 2
    key = jax.random.PRNGKey(0)
    k_w, k_x = jax.random.split(key)
    weights = init_params(k_w, n_layers, hidden, n_params)
    x = jax.random.normal(k_x, (B, n_params), dtype=jnp.float32)

    prepared = prepare_weights(weights, n_layers)
    fwd = jax.jit(decoder_forward, static_argnums=(2,))
    out = jax.block_until_ready(fwd(x, prepared, n_layers))

    # Independent check against real ConvTranspose2d semantics (f32 reference
    # vs bf16-MXU Pallas path -> relaxed tolerance).
    ref = decoder_forward_ref(x, weights, n_layers)
    assert out.shape == (B, 2 ** n_layers, 2 ** n_layers, hidden), out.shape
    max_err = float(jnp.max(jnp.abs(out - ref)))
    assert jnp.allclose(out, ref, atol=2e-2, rtol=2e-2), max_err
    print("KERNEL_OK")
</pallas_src>

<mosaic_0001>
module attributes {stable_mosaic.version = 11 : i64} {
  func.func @kernel(%arg0: i32, %arg1: memref<1x1x8xf32, #tpu.memory_space<vmem>>, %arg2: memref<8x32xf32, #tpu.memory_space<vmem>>, %arg3: memref<1x32xf32, #tpu.memory_space<vmem>>, %arg4: memref<32x32xbf16, #tpu.memory_space<vmem>>, %arg5: memref<1x32xf32, #tpu.memory_space<vmem>>, %arg6: memref<6x288x32xbf16, #tpu.memory_space<vmem>>, %arg7: memref<6x1x32xf32, #tpu.memory_space<vmem>>, %arg8: memref<32x128xbf16, #tpu.memory_space<vmem>>, %arg9: memref<1x128xf32, #tpu.memory_space<vmem>>, %arg10: memref<32x32xbf16, #tpu.memory_space<vmem>>, %arg11: memref<1x32xf32, #tpu.memory_space<vmem>>, %arg12: memref<6x288x32xbf16, #tpu.memory_space<vmem>>, %arg13: memref<6x1x32xf32, #tpu.memory_space<vmem>>, %arg14: memref<32x128xbf16, #tpu.memory_space<vmem>>, %arg15: memref<1x128xf32, #tpu.memory_space<vmem>>, %arg16: memref<32x32xbf16, #tpu.memory_space<vmem>>, %arg17: memref<1x32xf32, #tpu.memory_space<vmem>>, %arg18: memref<6x288x32xbf16, #tpu.memory_space<vmem>>, %arg19: memref<6x1x32xf32, #tpu.memory_space<vmem>>, %arg20: memref<32x128xbf16, #tpu.memory_space<vmem>>, %arg21: memref<1x128xf32, #tpu.memory_space<vmem>>, %arg22: memref<1x16x128xf32, #tpu.memory_space<vmem>>, %arg23: memref<10x32xf32, #tpu.memory_space<vmem>>, %arg24: memref<4x288xf32, #tpu.memory_space<vmem>>, %arg25: memref<26x32xf32, #tpu.memory_space<vmem>>, %arg26: memref<16x288xf32, #tpu.memory_space<vmem>>) attributes {dimension_semantics = [#tpu.dimension_semantics<parallel>], iteration_bounds = array<i64: 2>, scalar_prefetch = 0 : i64, scratch_operands = 4 : i64, tpu.core_type = #tpu.core_type<tc>, window_params = [{transform_indices = @transform_0, window_bounds = array<i64: 1, 1, 8>}, {pipeline_mode = #tpu.pipeline_mode<synchronous>, transform_indices = @transform_1, window_bounds = array<i64: 8, 32>}, {pipeline_mode = #tpu.pipeline_mode<synchronous>, transform_indices = @transform_2, window_bounds = array<i64: 1, 32>}, {pipeline_mode = #tpu.pipeline_mode<synchronous>, transform_indices = @transform_3, window_bounds = array<i64: 32, 32>}, {pipeline_mode = #tpu.pipeline_mode<synchronous>, transform_indices = @transform_4, window_bounds = array<i64: 1, 32>}, {pipeline_mode = #tpu.pipeline_mode<synchronous>, transform_indices = @transform_5, window_bounds = array<i64: 6, 288, 32>}, {pipeline_mode = #tpu.pipeline_mode<synchronous>, transform_indices = @transform_6, window_bounds = array<i64: 6, 1, 32>}, {pipeline_mode = #tpu.pipeline_mode<synchronous>, transform_indices = @transform_7, window_bounds = array<i64: 32, 128>}, {pipeline_mode = #tpu.pipeline_mode<synchronous>, transform_indices = @transform_8, window_bounds = array<i64: 1, 128>}, {pipeline_mode = #tpu.pipeline_mode<synchronous>, transform_indices = @transform_9, window_bounds = array<i64: 32, 32>}, {pipeline_mode = #tpu.pipeline_mode<synchronous>, transform_indices = @transform_10, window_bounds = array<i64: 1, 32>}, {pipeline_mode = #tpu.pipeline_mode<synchronous>, transform_indices = @transform_11, window_bounds = array<i64: 6, 288, 32>}, {pipeline_mode = #tpu.pipeline_mode<synchronous>, transform_indices = @transform_12, window_bounds = array<i64: 6, 1, 32>}, {pipeline_mode = #tpu.pipeline_mode<synchronous>, transform_indices = @transform_13, window_bounds = array<i64: 32, 128>}, {pipeline_mode = #tpu.pipeline_mode<synchronous>, transform_indices = @transform_14, window_bounds = array<i64: 1, 128>}, {pipeline_mode = #tpu.pipeline_mode<synchronous>, transform_indices = @transform_15, window_bounds = array<i64: 32, 32>}, {pipeline_mode = #tpu.pipeline_mode<synchronous>, transform_indices = @transform_16, window_bounds = array<i64: 1, 32>}, {pipeline_mode = #tpu.pipeline_mode<synchronous>, transform_indices = @transform_17, window_bounds = array<i64: 6, 288, 32>}, {pipeline_mode = #tpu.pipeline_mode<synchronous>, transform_indices = @transform_18, window_bounds = array<i64: 6, 1, 32>}, {pipeline_mode = #tpu.pipeline_mode<synchronous>, transform_indices = @transform_19, window_bounds = array<i64: 32, 128>}, {pipeline_mode = #tpu.pipeline_mode<synchronous>, transform_indices = @transform_20, window_bounds = array<i64: 1, 128>}, {transform_indices = @transform_21, window_bounds = array<i64: 1, 16, 128>}]} {
    %cst = arith.constant 0.000000e+00 : f32
    %0 = vector.broadcast %cst : f32 to vector<3x32xf32>
    %c0 = arith.constant 0 : index
    %c0_0 = arith.constant 0 : index
    %1 = vector.load %arg23[%c0, %c0_0] : memref<10x32xf32, #tpu.memory_space<vmem>>, vector<3x32xf32>
    tpu.vector_store %arg23[%c0, %c0_0], %0 {strides = array<i32>} : memref<10x32xf32, #tpu.memory_space<vmem>>, vector<3x32xf32>,
    %c7 = arith.constant 7 : index
    %c0_1 = arith.constant 0 : index
    %2 = vector.load %arg23[%c7, %c0_1] : memref<10x32xf32, #tpu.memory_space<vmem>>, vector<3x32xf32>
    tpu.vector_store %arg23[%c7, %c0_1], %0 {strides = array<i32>} : memref<10x32xf32, #tpu.memory_space<vmem>>, vector<3x32xf32>,
    %cst_2 = arith.constant 0.000000e+00 : f32
    %3 = vector.broadcast %cst_2 : f32 to vector<5x32xf32>
    %c0_3 = arith.constant 0 : index
    %c0_4 = arith.constant 0 : index
    %4 = vector.load %arg25[%c0_3, %c0_4] : memref<26x32xf32, #tpu.memory_space<vmem>>, vector<5x32xf32>
    tpu.vector_store %arg25[%c0_3, %c0_4], %3 {strides = array<i32>} : memref<26x32xf32, #tpu.memory_space<vmem>>, vector<5x32xf32>,
    %c21 = arith.constant 21 : index
    %c0_5 = arith.constant 0 : index
    %5 = vector.load %arg25[%c21, %c0_5] : memref<26x32xf32, #tpu.memory_space<vmem>>, vector<5x32xf32>
    tpu.vector_store %arg25[%c21, %c0_5], %3 {strides = array<i32>} : memref<26x32xf32, #tpu.memory_space<vmem>>, vector<5x32xf32>,
    %c0_6 = arith.constant 0 : index
    %c0_7 = arith.constant 0 : index
    %c0_8 = arith.constant 0 : index
    %6 = vector.load %arg1[%c0_6, %c0_7, %c0_8] : memref<1x1x8xf32, #tpu.memory_space<vmem>>, vector<1x1x8xf32>
    %7 = vector.shape_cast %6 : vector<1x1x8xf32> to vector<1x8xf32>
    %c0_9 = arith.constant 0 : index
    %c0_10 = arith.constant 0 : index
    %8 = vector.load %arg2[%c0_9, %c0_10] : memref<8x32xf32, #tpu.memory_space<vmem>>, vector<8x32xf32>
    %cst_11 = arith.constant dense<0.000000e+00> : vector<1x32xf32>
    %9 = tpu.matmul %7, %8, %cst_11 {dimension_numbers = #tpu.dot_dimension_numbers<[1], [0], [0], [1], [0, 0, 1, 1], [], []>} : vector<1x8xf32>, vector<8x32xf32>, vector<1x32xf32> -> vector<1x32xf32>
    %c0_12 = arith.constant 0 : index
    %c0_13 = arith.constant 0 : index
    %10 = vector.load %arg3[%c0_12, %c0_13] : memref<1x32xf32, #tpu.memory_space<vmem>>, vector<1x32xf32>
    %11 = arith.addf %9, %10 : vector<1x32xf32>
    %12 = arith.truncf %11 : vector<1x32xf32> to vector<1x32xbf16>
    %c0_14 = arith.constant 0 : index
    %c0_15 = arith.constant 0 : index
    %13 = vector.load %arg4[%c0_14, %c0_15] : memref<32x32xbf16, #tpu.memory_space<vmem>>, vector<32x32xbf16>
    %cst_16 = arith.constant dense<0.000000e+00> : vector<1x32xf32>
    %14 = tpu.matmul %12, %13, %cst_16 {dimension_numbers = #tpu.dot_dimension_numbers<[1], [0], [0], [1], [0, 0, 1, 1], [], []>} : vector<1x32xbf16>, vector<32x32xbf16>, vector<1x32xf32> -> vector<1x32xf32>
    %c0_17 = arith.constant 0 : index
    %c0_18 = arith.constant 0 : index
    %15 = vector.load %arg5[%c0_17, %c0_18] : memref<1x32xf32, #tpu.memory_space<vmem>>, vector<1x32xf32>
    %16 = arith.addf %14, %15 : vector<1x32xf32>
    %17 = arith.truncf %11 : vector<1x32xf32> to vector<1x32xbf16>
    %c0_19 = arith.constant 0 : index
    %c128 = arith.constant 128 : index
    %c0_20 = arith.constant 0 : index
    %18 = vector.load %arg6[%c0_19, %c128, %c0_20] : memref<6x288x32xbf16, #tpu.memory_space<vmem>>, vector<1x32x32xbf16>
    %19 = vector.shape_cast %18 : vector<1x32x32xbf16> to vector<32x32xbf16>
    %cst_21 = arith.constant dense<0.000000e+00> : vector<1x32xf32>
    %20 = tpu.matmul %17, %19, %cst_21 {dimension_numbers = #tpu.dot_dimension_numbers<[1], [0], [0], [1], [0, 0, 1, 1], [], []>} : vector<1x32xbf16>, vector<32x32xbf16>, vector<1x32xf32> -> vector<1x32xf32>
    %c0_22 = arith.constant 0 : index
    %c0_23 = arith.constant 0 : index
    %c0_24 = arith.constant 0 : index
    %21 = vector.load %arg7[%c0_22, %c0_23, %c0_24] : memref<6x1x32xf32, #tpu.memory_space<vmem>>, vector<1x1x32xf32>
    %22 = vector.shape_cast %21 : vector<1x1x32xf32> to vector<1x32xf32>
    %23 = arith.addf %20, %22 : vector<1x32xf32>
    %24 = arith.truncf %23 : vector<1x32xf32> to vector<1x32xbf16>
    %c1 = arith.constant 1 : index
    %c128_25 = arith.constant 128 : index
    %c0_26 = arith.constant 0 : index
    %25 = vector.load %arg6[%c1, %c128_25, %c0_26] : memref<6x288x32xbf16, #tpu.memory_space<vmem>>, vector<1x32x32xbf16>
    %26 = vector.shape_cast %25 : vector<1x32x32xbf16> to vector<32x32xbf16>
    %cst_27 = arith.constant dense<0.000000e+00> : vector<1x32xf32>
    %27 = tpu.matmul %24, %26, %cst_27 {dimension_numbers = #tpu.dot_dimension_numbers<[1], [0], [0], [1], [0, 0, 1, 1], [], []>} : vector<1x32xbf16>, vector<32x32xbf16>, vector<1x32xf32> -> vector<1x32xf32>
    %c1_28 = arith.constant 1 : index
    %c0_29 = arith.constant 0 : index
    %c0_30 = arith.constant 0 : index
    %28 = vector.load %arg7[%c1_28, %c0_29, %c0_30] : memref<6x1x32xf32, #tpu.memory_space<vmem>>, vector<1x1x32xf32>
    %29 = vector.shape_cast %28 : vector<1x1x32xf32> to vector<1x32xf32>
    %30 = arith.addf %27, %29 : vector<1x32xf32>
    %31 = arith.truncf %30 : vector<1x32xf32> to vector<1x32xbf16>
    %c2 = arith.constant 2 : index
    %c128_31 = arith.constant 128 : index
    %c0_32 = arith.constant 0 : index
    %32 = vector.load %arg6[%c2, %c128_31, %c0_32] : memref<6x288x32xbf16, #tpu.memory_space<vmem>>, vector<1x32x32xbf16>
    %33 = vector.shape_cast %32 : vector<1x32x32xbf16> to vector<32x32xbf16>
    %cst_33 = arith.constant dense<0.000000e+00> : vector<1x32xf32>
    %34 = tpu.matmul %31, %33, %cst_33 {dimension_numbers = #tpu.dot_dimension_numbers<[1], [0], [0], [1], [0, 0, 1, 1], [], []>} : vector<1x32xbf16>, vector<32x32xbf16>, vector<1x32xf32> -> vector<1x32xf32>
    %c2_34 = arith.constant 2 : index
    %c0_35 = arith.constant 0 : index
    %c0_36 = arith.constant 0 : index
    %35 = vector.load %arg7[%c2_34, %c0_35, %c0_36] : memref<6x1x32xf32, #tpu.memory_space<vmem>>, vector<1x1x32xf32>
    %36 = vector.shape_cast %35 : vector<1x1x32xf32> to vector<1x32xf32>
    %37 = arith.addf %34, %36 : vector<1x32xf32>
    %cst_37 = arith.constant 0.000000e+00 : f32
    %38 = vector.broadcast %cst_37 : f32 to vector<1x32xf32>
    %39 = arith.maximumf %37, %38 : vector<1x32xf32>
    %40 = arith.truncf %39 : vector<1x32xf32> to vector<1x32xbf16>
    %c3 = arith.constant 3 : index
    %c128_38 = arith.constant 128 : index
    %c0_39 = arith.constant 0 : index
    %41 = vector.load %arg6[%c3, %c128_38, %c0_39] : memref<6x288x32xbf16, #tpu.memory_space<vmem>>, vector<1x32x32xbf16>
    %42 = vector.shape_cast %41 : vector<1x32x32xbf16> to vector<32x32xbf16>
    %cst_40 = arith.constant dense<0.000000e+00> : vector<1x32xf32>
    %43 = tpu.matmul %40, %42, %cst_40 {dimension_numbers = #tpu.dot_dimension_numbers<[1], [0], [0], [1], [0, 0, 1, 1], [], []>} : vector<1x32xbf16>, vector<32x32xbf16>, vector<1x32xf32> -> vector<1x32xf32>
    %c3_41 = arith.constant 3 : index
    %c0_42 = arith.constant 0 : index
    %c0_43 = arith.constant 0 : index
    %44 = vector.load %arg7[%c3_41, %c0_42, %c0_43] : memref<6x1x32xf32, #tpu.memory_space<vmem>>, vector<1x1x32xf32>
    %45 = vector.shape_cast %44 : vector<1x1x32xf32> to vector<1x32xf32>
    %46 = arith.addf %43, %45 : vector<1x32xf32>
    %47 = arith.truncf %46 : vector<1x32xf32> to vector<1x32xbf16>
    %c4 = arith.constant 4 : index
    %c128_44 = arith.constant 128 : index
    %c0_45 = arith.constant 0 : index
    %48 = vector.load %arg6[%c4, %c128_44, %c0_45] : memref<6x288x32xbf16, #tpu.memory_space<vmem>>, vector<1x32x32xbf16>
    %49 = vector.shape_cast %48 : vector<1x32x32xbf16> to vector<32x32xbf16>
    %cst_46 = arith.constant dense<0.000000e+00> : vector<1x32xf32>
    %50 = tpu.matmul %47, %49, %cst_46 {dimension_numbers = #tpu.dot_dimension_numbers<[1], [0], [0], [1], [0, 0, 1, 1], [], []>} : vector<1x32xbf16>, vector<32x32xbf16>, vector<1x32xf32> -> vector<1x32xf32>
    %c4_47 = arith.constant 4 : index
    %c0_48 = arith.constant 0 : index
    %c0_49 = arith.constant 0 : index
    %51 = vector.load %arg7[%c4_47, %c0_48, %c0_49] : memref<6x1x32xf32, #tpu.memory_space<vmem>>, vector<1x1x32xf32>
    %52 = vector.shape_cast %51 : vector<1x1x32xf32> to vector<1x32xf32>
    %53 = arith.addf %50, %52 : vector<1x32xf32>
    %54 = arith.truncf %53 : vector<1x32xf32> to vector<1x32xbf16>
    %c5 = arith.constant 5 : index
    %c128_50 = arith.constant 128 : index
    %c0_51 = arith.constant 0 : index
    %55 = vector.load %arg6[%c5, %c128_50, %c0_51] : memref<6x288x32xbf16, #tpu.memory_space<vmem>>, vector<1x32x32xbf16>
    %56 = vector.shape_cast %55 : vector<1x32x32xbf16> to vector<32x32xbf16>
    %cst_52 = arith.constant dense<0.000000e+00> : vector<1x32xf32>
    %57 = tpu.matmul %54, %56, %cst_52 {dimension_numbers = #tpu.dot_dimension_numbers<[1], [0], [0], [1], [0, 0, 1, 1], [], []>} : vector<1x32xbf16>, vector<32x32xbf16>, vector<1x32xf32> -> vector<1x32xf32>
    %c5_53 = arith.constant 5 : index
    %c0_54 = arith.constant 0 : index
    %c0_55 = arith.constant 0 : index
    %58 = vector.load %arg7[%c5_53, %c0_54, %c0_55] : memref<6x1x32xf32, #tpu.memory_space<vmem>>, vector<1x1x32xf32>
    %59 = vector.shape_cast %58 : vector<1x1x32xf32> to vector<1x32xf32>
    %60 = arith.addf %57, %59 : vector<1x32xf32>
    %61 = arith.addf %60, %16 : vector<1x32xf32>
    %62 = arith.truncf %61 : vector<1x32xf32> to vector<1x32xbf16>
    %c0_56 = arith.constant 0 : index
    %c0_57 = arith.constant 0 : index
    %63 = vector.load %arg8[%c0_56, %c0_57] : memref<32x128xbf16, #tpu.memory_space<vmem>>, vector<32x32xbf16>
    %cst_58 = arith.constant dense<0.000000e+00> : vector<1x32xf32>
    %64 = tpu.matmul %62, %63, %cst_58 {dimension_numbers = #tpu.dot_dimension_numbers<[1], [0], [0], [1], [0, 0, 1, 1], [], []>} : vector<1x32xbf16>, vector<32x32xbf16>, vector<1x32xf32> -> vector<1x32xf32>
    %c0_59 = arith.constant 0 : index
    %c0_60 = arith.constant 0 : index
    %65 = vector.load %arg9[%c0_59, %c0_60] : memref<1x128xf32, #tpu.memory_space<vmem>>, vector<1x32xf32>
    %66 = arith.addf %64, %65 : vector<1x32xf32>
    %cst_61 = arith.constant 0.000000e+00 : f32
    %67 = vector.broadcast %cst_61 : f32 to vector<1x32xf32>
    %68 = arith.maximumf %66, %67 : vector<1x32xf32>
    %c3_62 = arith.constant 3 : index
    %c0_63 = arith.constant 0 : index
    %69 = vector.load %arg23[%c3_62, %c0_63] : memref<10x32xf32, #tpu.memory_space<vmem>>, vector<1x32xf32>
    tpu.vector_store %arg23[%c3_62, %c0_63], %68 {strides = array<i32>} : memref<10x32xf32, #tpu.memory_space<vmem>>, vector<1x32xf32>,
    %c0_64 = arith.constant 0 : index
    %c32 = arith.constant 32 : index
    %70 = vector.load %arg8[%c0_64, %c32] : memref<32x128xbf16, #tpu.memory_space<vmem>>, vector<32x32xbf16>
    %cst_65 = arith.constant dense<0.000000e+00> : vector<1x32xf32>
    %71 = tpu.matmul %62, %70, %cst_65 {dimension_numbers = #tpu.dot_dimension_numbers<[1], [0], [0], [1], [0, 0, 1, 1], [], []>} : vector<1x32xbf16>, vector<32x32xbf16>, vector<1x32xf32> -> vector<1x32xf32>
    %c0_66 = arith.constant 0 : index
    %c32_67 = arith.constant 32 : index
    %72 = vector.load %arg9[%c0_66, %c32_67] : memref<1x128xf32, #tpu.memory_space<vmem>>, vector<1x32xf32>
    %73 = arith.addf %71, %72 : vector<1x32xf32>
    %cst_68 = arith.constant 0.000000e+00 : f32
    %74 = vector.broadcast %cst_68 : f32 to vector<1x32xf32>
    %75 = arith.maximumf %73, %74 : vector<1x32xf32>
    %c4_69 = arith.constant 4 : index
    %c0_70 = arith.constant 0 : index
    %76 = vector.load %arg23[%c4_69, %c0_70] : memref<10x32xf32, #tpu.memory_space<vmem>>, vector<1x32xf32>
    tpu.vector_store %arg23[%c4_69, %c0_70], %75 {strides = array<i32>} : memref<10x32xf32, #tpu.memory_space<vmem>>, vector<1x32xf32>,
    %c0_71 = arith.constant 0 : index
    %c64 = arith.constant 64 : index
    %77 = vector.load %arg8[%c0_71, %c64] : memref<32x128xbf16, #tpu.memory_space<vmem>>, vector<32x32xbf16>
    %cst_72 = arith.constant dense<0.000000e+00> : vector<1x32xf32>
    %78 = tpu.matmul %62, %77, %cst_72 {dimension_numbers = #tpu.dot_dimension_numbers<[1], [0], [0], [1], [0, 0, 1, 1], [], []>} : vector<1x32xbf16>, vector<32x32xbf16>, vector<1x32xf32> -> vector<1x32xf32>
    %c0_73 = arith.constant 0 : index
    %c64_74 = arith.constant 64 : index
    %79 = vector.load %arg9[%c0_73, %c64_74] : memref<1x128xf32, #tpu.memory_space<vmem>>, vector<1x32xf32>
    %80 = arith.addf %78, %79 : vector<1x32xf32>
    %cst_75 = arith.constant 0.000000e+00 : f32
    %81 = vector.broadcast %cst_75 : f32 to vector<1x32xf32>
    %82 = arith.maximumf %80, %81 : vector<1x32xf32>
    %c5_76 = arith.constant 5 : index
    %c0_77 = arith.constant 0 : index
    %83 = vector.load %arg23[%c5_76, %c0_77] : memref<10x32xf32, #tpu.memory_space<vmem>>, vector<1x32xf32>
    tpu.vector_store %arg23[%c5_76, %c0_77], %82 {strides = array<i32>} : memref<10x32xf32, #tpu.memory_space<vmem>>, vector<1x32xf32>,
    %c0_78 = arith.constant 0 : index
    %c96 = arith.constant 96 : index
    %84 = vector.load %arg8[%c0_78, %c96] : memref<32x128xbf16, #tpu.memory_space<vmem>>, vector<32x32xbf16>
    %cst_79 = arith.constant dense<0.000000e+00> : vector<1x32xf32>
    %85 = tpu.matmul %62, %84, %cst_79 {dimension_numbers = #tpu.dot_dimension_numbers<[1], [0], [0], [1], [0, 0, 1, 1], [], []>} : vector<1x32xbf16>, vector<32x32xbf16>, vector<1x32xf32> -> vector<1x32xf32>
    %c0_80 = arith.constant 0 : index
    %c96_81 = arith.constant 96 : index
    %86 = vector.load %arg9[%c0_80, %c96_81] : memref<1x128xf32, #tpu.memory_space<vmem>>, vector<1x32xf32>
    %87 = arith.addf %85, %86 : vector<1x32xf32>
    %cst_82 = arith.constant 0.000000e+00 : f32
    %88 = vector.broadcast %cst_82 : f32 to vector<1x32xf32>
    %89 = arith.maximumf %87, %88 : vector<1x32xf32>
    %c6 = arith.constant 6 : index
    %c0_83 = arith.constant 0 : index
    %90 = vector.load %arg23[%c6, %c0_83] : memref<10x32xf32, #tpu.memory_space<vmem>>, vector<1x32xf32>
    tpu.vector_store %arg23[%c6, %c0_83], %89 {strides = array<i32>} : memref<10x32xf32, #tpu.memory_space<vmem>>, vector<1x32xf32>,
    %91 = tpu.iota {dimensions = array<i32: 0>} : vector<4x1xi32>
    %c1_i32 = arith.constant 1 : i32
    %92 = vector.broadcast %c1_i32 : i32 to vector<4x1xi32>
    %93 = arith.andi %91, %92 : vector<4x1xi32>
    %c0_i32 = arith.constant 0 : i32
    %94 = vector.broadcast %c0_i32 : i32 to vector<4x1xi32>
    %95 = arith.cmpi sgt, %93, %94 : vector<4x1xi32>
    %96 = arith.extui %95 : vector<4x1xi1> to vector<4x1xi32>
    %97 = arith.sitofp %96 : vector<4x1xi32> to vector<4x1xf32>
    %c1_i32_84 = arith.constant 1 : i32
    %98 = vector.broadcast %c1_i32_84 : i32 to vector<4x1xi32>
    %99 = arith.cmpi slt, %93, %98 : vector<4x1xi32>
    %100 = arith.extui %99 : vector<4x1xi1> to vector<4x1xi32>
    %101 = arith.sitofp %100 : vector<4x1xi32> to vector<4x1xf32>
    %c3_85 = arith.constant 3 : index
    %c0_86 = arith.constant 0 : index
    %102 = vector.load %arg23[%c3_85, %c0_86] : memref<10x32xf32, #tpu.memory_space<vmem>>, vector<4x32xf32>
    %103 = arith.truncf %102 : vector<4x32xf32> to vector<4x32xbf16>
    %c0_87 = arith.constant 0 : index
    %c0_88 = arith.constant 0 : index
    %104 = vector.load %arg10[%c0_87, %c0_88] : memref<32x32xbf16, #tpu.memory_space<vmem>>, vector<32x32xbf16>
    %cst_89 = arith.constant dense<0.000000e+00> : vector<4x32xf32>
    %105 = tpu.matmul %103, %104, %cst_89 {dimension_numbers = #tpu.dot_dimension_numbers<[1], [0], [0], [1], [0, 0, 1, 1], [], []>} : vector<4x32xbf16>, vector<32x32xbf16>, vector<4x32xf32> -> vector<4x32xf32>
    %c0_90 = arith.constant 0 : index
    %c0_91 = arith.constant 0 : index
    %106 = vector.load %arg11[%c0_90, %c0_91] : memref<1x32xf32, #tpu.memory_space<vmem>>, vector<1x32xf32>
    %107 = vector.broadcast %106 : vector<1x32xf32> to vector<4x32xf32>
    %108 = arith.addf %105, %107 : vector<4x32xf32>
    %c0_92 = arith.constant 0 : index
    %c0_93 = arith.constant 0 : index
    %109 = vector.load %arg23[%c0_92, %c0_93] : memref<10x32xf32, #tpu.memory_space<vmem>>, vector<4x32xf32>
    %110 = vector.broadcast %97 : vector<4x1xf32> to vector<4x32xf32>
    %111 = arith.mulf %109, %110 : vector<4x32xf32>
    %c0_94 = arith.constant 0 : index
    %c0_95 = arith.constant 0 : index
    %112 = vector.load %arg24[%c0_94, %c0_95] : memref<4x288xf32, #tpu.memory_space<vmem>>, vector<4x32xf32>
    tpu.vector_store %arg24[%c0_94, %c0_95], %111 {strides = array<i32>} : memref<4x288xf32, #tpu.memory_space<vmem>>, vector<4x32xf32>,
    %c1_96 = arith.constant 1 : index
    %c0_97 = arith.constant 0 : index
    %113 = vector.load %arg23[%c1_96, %c0_97] : memref<10x32xf32, #tpu.memory_space<vmem>>, vector<4x32xf32>
    %c0_98 = arith.constant 0 : index
    %c32_99 = arith.constant 32 : index
    %114 = vector.load %arg24[%c0_98, %c32_99] : memref<4x288xf32, #tpu.memory_space<vmem>>, vector<4x32xf32>
    tpu.vector_store %arg24[%c0_98, %c32_99], %113 {strides = array<i32>} : memref<4x288xf32, #tpu.memory_space<vmem>>, vector<4x32xf32>,
    %c2_100 = arith.constant 2 : index
    %c0_101 = arith.constant 0 : index
    %115 = vector.load %arg23[%c2_100, %c0_101] : memref<10x32xf32, #tpu.memory_space<vmem>>, vector<4x32xf32>
    %116 = vector.broadcast %101 : vector<4x1xf32> to vector<4x32xf32>
    %117 = arith.mulf %115, %116 : vector<4x32xf32>
    %c0_102 = arith.constant 0 : index
    %c64_103 = arith.constant 64 : index
    %118 = vector.load %arg24[%c0_102, %c64_103] : memref<4x288xf32, #tpu.memory_space<vmem>>, vector<4x32xf32>
    tpu.vector_store %arg24[%c0_102, %c64_103], %117 {strides = array<i32>} : memref<4x288xf32, #tpu.memory_space<vmem>>, vector<4x32xf32>,
    %c2_104 = arith.constant 2 : index
    %c0_105 = arith.constant 0 : index
    %119 = vector.load %arg23[%c2_104, %c0_105] : memref<10x32xf32, #tpu.memory_space<vmem>>, vector<4x32xf32>
    %120 = vector.broadcast %97 : vector<4x1xf32> to vector<4x32xf32>
    %121 = arith.mulf %119, %120 : vector<4x32xf32>
    %c0_106 = arith.constant 0 : index
    %c96_107 = arith.constant 96 : index
    %122 = vector.load %arg24[%c0_106, %c96_107] : memref<4x288xf32, #tpu.memory_space<vmem>>, vector<4x32xf32>
    tpu.vector_store %arg24[%c0_106, %c96_107], %121 {strides = array<i32>} : memref<4x288xf32, #tpu.memory_space<vmem>>, vector<4x32xf32>,
    %c3_108 = arith.constant 3 : index
    %c0_109 = arith.constant 0 : index
    %123 = vector.load %arg23[%c3_108, %c0_109] : memref<10x32xf32, #tpu.memory_space<vmem>>, vector<4x32xf32>
    %c0_110 = arith.constant 0 : index
    %c128_111 = arith.constant 128 : index
    %124 = vector.load %arg24[%c0_110, %c128_111] : memref<4x288xf32, #tpu.memory_space<vmem>>, vector<4x32xf32>
    tpu.vector_store %arg24[%c0_110, %c128_111], %123 {strides = array<i32>} : memref<4x288xf32, #tpu.memory_space<vmem>>, vector<4x32xf32>,
    %c4_112 = arith.constant 4 : index
    %c0_113 = arith.constant 0 : index
    %125 = vector.load %arg23[%c4_112, %c0_113] : memref<10x32xf32, #tpu.memory_space<vmem>>, vector<4x32xf32>
    %126 = vector.broadcast %101 : vector<4x1xf32> to vector<4x32xf32>
    %127 = arith.mulf %125, %126 : vector<4x32xf32>
    %c0_114 = arith.constant 0 : index
    %c160 = arith.constant 160 : index
    %128 = vector.load %arg24[%c0_114, %c160] : memref<4x288xf32, #tpu.memory_space<vmem>>, vector<4x32xf32>
    tpu.vector_store %arg24[%c0_114, %c160], %127 {strides = array<i32>} : memref<4x288xf32, #tpu.memory_space<vmem>>, vector<4x32xf32>,
    %c4_115 = arith.constant 4 : index
    %c0_116 = arith.constant 0 : index
    %129 = vector.load %arg23[%c4_115, %c0_116] : memref<10x32xf32, #tpu.memory_space<vmem>>, vector<4x32xf32>
    %130 = vector.broadcast %97 : vector<4x1xf32> to vector<4x32xf32>
    %131 = arith.mulf %129, %130 : vector<4x32xf32>
    %c0_117 = arith.constant 0 : index
    %c192 = arith.constant 192 : index
    %132 = vector.load %arg24[%c0_117, %c192] : memref<4x288xf32, #tpu.memory_space<vmem>>, vector<4x32xf32>
    tpu.vector_store %arg24[%c0_117, %c192], %131 {strides = array<i32>} : memref<4x288xf32, #tpu.memory_space<vmem>>, vector<4x32xf32>,
    %c5_118 = arith.constant 5 : index
    %c0_119 = arith.constant 0 : index
    %133 = vector.load %arg23[%c5_118, %c0_119] : memref<10x32xf32, #tpu.memory_space<vmem>>, vector<4x32xf32>
    %c0_120 = arith.constant 0 : index
    %c224 = arith.constant 224 : index
    %134 = vector.load %arg24[%c0_120, %c224] : memref<4x288xf32, #tpu.memory_space<vmem>>, vector<4x32xf32>
    tpu.vector_store %arg24[%c0_120, %c224], %133 {strides = array<i32>} : memref<4x288xf32, #tpu.memory_space<vmem>>, vector<4x32xf32>,
    %c6_121 = arith.constant 6 : index
    %c0_122 = arith.constant 0 : index
    %135 = vector.load %arg23[%c6_121, %c0_122] : memref<10x32xf32, #tpu.memory_space<vmem>>, vector<4x32xf32>
    %136 = vector.broadcast %101 : vector<4x1xf32> to vector<4x32xf32>
    %137 = arith.mulf %135, %136 : vector<4x32xf32>
    %c0_123 = arith.constant 0 : index
    %c256 = arith.constant 256 : index
    %138 = vector.load %arg24[%c0_123, %c256] : memref<4x288xf32, #tpu.memory_space<vmem>>, vector<4x32xf32>
    tpu.vector_store %arg24[%c0_123, %c256], %137 {strides = array<i32>} : memref<4x288xf32, #tpu.memory_space<vmem>>, vector<4x32xf32>,
    %c0_124 = arith.constant 0 : index
    %c0_125 = arith.constant 0 : index
    %139 = vector.load %arg24[%c0_124, %c0_125] : memref<4x288xf32, #tpu.memory_space<vmem>>, vector<4x288xf32>
    %140 = arith.truncf %139 : vector<4x288xf32> to vector<4x288xbf16>
    %c0_126 = arith.constant 0 : index
    %c0_127 = arith.constant 0 : index
    %c0_128 = arith.constant 0 : index
    %141 = vector.load %arg12[%c0_126, %c0_127, %c0_128] : memref<6x288x32xbf16, #tpu.memory_space<vmem>>, vector<1x288x32xbf16>
    %142 = vector.shape_cast %141 : vector<1x288x32xbf16> to vector<288x32xbf16>
    %cst_129 = arith.constant dense<0.000000e+00> : vector<4x32xf32>
    %143 = tpu.matmul %140, %142, %cst_129 {dimension_numbers = #tpu.dot_dimension_numbers<[1], [0], [0], [1], [0, 0, 1, 1], [], []>} : vector<4x288xbf16>, vector<288x32xbf16>, vector<4x32xf32> -> vector<4x32xf32>
    %c0_130 = arith.constant 0 : index
    %c0_131 = arith.constant 0 : index
    %c0_132 = arith.constant 0 : index
    %144 = vector.load %arg13[%c0_130, %c0_131, %c0_132] : memref<6x1x32xf32, #tpu.memory_space<vmem>>, vector<1x1x32xf32>
    %145 = vector.shape_cast %144 : vector<1x1x32xf32> to vector<1x32xf32>
    %146 = vector.broadcast %145 : vector<1x32xf32> to vector<4x32xf32>
    %147 = arith.addf %143, %146 : vector<4x32xf32>
    %c3_133 = arith.constant 3 : index
    %c0_134 = arith.constant 0 : index
    %148 = vector.load %arg23[%c3_133, %c0_134] : memref<10x32xf32, #tpu.memory_space<vmem>>, vector<4x32xf32>
    tpu.vector_store %arg23[%c3_133, %c0_134], %147 {strides = array<i32>} : memref<10x32xf32, #tpu.memory_space<vmem>>, vector<4x32xf32>,
    %c0_135 = arith.constant 0 : index
    %c0_136 = arith.constant 0 : index
    %149 = vector.load %arg23[%c0_135, %c0_136] : memref<10x32xf32, #tpu.memory_space<vmem>>, vector<4x32xf32>
    %150 = vector.broadcast %97 : vector<4x1xf32> to vector<4x32xf32>
    %151 = arith.mulf %149, %150 : vector<4x32xf32>
    %c0_137 = arith.constant 0 : index
    %c0_138 = arith.constant 0 : index
    %152 = vector.load %arg24[%c0_137, %c0_138] : memref<4x288xf32, #tpu.memory_space<vmem>>, vector<4x32xf32>
    tpu.vector_store %arg24[%c0_137, %c0_138], %151 {strides = array<i32>} : memref<4x288xf32, #tpu.memory_space<vmem>>, vector<4x32xf32>,
    %c1_139 = arith.constant 1 : index
    %c0_140 = arith.constant 0 : index
    %153 = vector.load %arg23[%c1_139, %c0_140] : memref<10x32xf32, #tpu.memory_space<vmem>>, vector<4x32xf32>
    %c0_141 = arith.constant 0 : index
    %c32_142 = arith.constant 32 : index
    %154 = vector.load %arg24[%c0_141, %c32_142] : memref<4x288xf32, #tpu.memory_space<vmem>>, vector<4x32xf32>
    tpu.vector_store %arg24[%c0_141, %c32_142], %153 {strides = array<i32>} : memref<4x288xf32, #tpu.memory_space<vmem>>, vector<4x32xf32>,
    %c2_143 = arith.constant 2 : index
    %c0_144 = arith.constant 0 : index
    %155 = vector.load %arg23[%c2_143, %c0_144] : memref<10x32xf32, #tpu.memory_space<vmem>>, vector<4x32xf32>
    %156 = vector.broadcast %101 : vector<4x1xf32> to vector<4x32xf32>
    %157 = arith.mulf %155, %156 : vector<4x32xf32>
    %c0_145 = arith.constant 0 : index
    %c64_146 = arith.constant 64 : index
    %158 = vector.load %arg24[%c0_145, %c64_146] : memref<4x288xf32, #tpu.memory_space<vmem>>, vector<4x32xf32>
    tpu.vector_store %arg24[%c0_145, %c64_146], %157 {strides = array<i32>} : memref<4x288xf32, #tpu.memory_space<vmem>>, vector<4x32xf32>,
    %c2_147 = arith.constant 2 : index
    %c0_148 = arith.constant 0 : index
    %159 = vector.load %arg23[%c2_147, %c0_148] : memref<10x32xf32, #tpu.memory_space<vmem>>, vector<4x32xf32>
    %160 = vector.broadcast %97 : vector<4x1xf32> to vector<4x32xf32>
    %161 = arith.mulf %159, %160 : vector<4x32xf32>
    %c0_149 = arith.constant 0 : index
    %c96_150 = arith.constant 96 : index
    %162 = vector.load %arg24[%c0_149, %c96_150] : memref<4x288xf32, #tpu.memory_space<vmem>>, vector<4x32xf32>
    tpu.vector_store %arg24[%c0_149, %c96_150], %161 {strides = array<i32>} : memref<4x288xf32, #tpu.memory_space<vmem>>, vector<4x32xf32>,
    %c3_151 = arith.constant 3 : index
    %c0_152 = arith.constant 0 : index
    %163 = vector.load %arg23[%c3_151, %c0_152] : memref<10x32xf32, #tpu.memory_space<vmem>>, vector<4x32xf32>
    %c0_153 = arith.constant 0 : index
    %c128_154 = arith.constant 128 : index
    %164 = vector.load %arg24[%c0_153, %c128_154] : memref<4x288xf32, #tpu.memory_space<vmem>>, vector<4x32xf32>
    tpu.vector_store %arg24[%c0_153, %c128_154], %163 {strides = array<i32>} : memref<4x288xf32, #tpu.memory_space<vmem>>, vector<4x32xf32>,
    %c4_155 = arith.constant 4 : index
    %c0_156 = arith.constant 0 : index
    %165 = vector.load %arg23[%c4_155, %c0_156] : memref<10x32xf32, #tpu.memory_space<vmem>>, vector<4x32xf32>
    %166 = vector.broadcast %101 : vector<4x1xf32> to vector<4x32xf32>
    %167 = arith.mulf %165, %166 : vector<4x32xf32>
    %c0_157 = arith.constant 0 : index
    %c160_158 = arith.constant 160 : index
    %168 = vector.load %arg24[%c0_157, %c160_158] : memref<4x288xf32, #tpu.memory_space<vmem>>, vector<4x32xf32>
    tpu.vector_store %arg24[%c0_157, %c160_158], %167 {strides = array<i32>} : memref<4x288xf32, #tpu.memory_space<vmem>>, vector<4x32xf32>,
    %c4_159 = arith.constant 4 : index
    %c0_160 = arith.constant 0 : index
    %169 = vector.load %arg23[%c4_159, %c0_160] : memref<10x32xf32, #tpu.memory_space<vmem>>, vector<4x32xf32>
    %170 = vector.broadcast %97 : vector<4x1xf32> to vector<4x32xf32>
    %171 = arith.mulf %169, %170 : vector<4x32xf32>
    %c0_161 = arith.constant 0 : index
    %c192_162 = arith.constant 192 : index
    %172 = vector.load %arg24[%c0_161, %c192_162] : memref<4x288xf32, #tpu.memory_space<vmem>>, vector<4x32xf32>
    tpu.vector_store %arg24[%c0_161, %c192_162], %171 {strides = array<i32>} : memref<4x288xf32, #tpu.memory_space<vmem>>, vector<4x32xf32>,
    %c5_163 = arith.constant 5 : index
    %c0_164 = arith.constant 0 : index
    %173 = vector.load %arg23[%c5_163, %c0_164] : memref<10x32xf32, #tpu.memory_space<vmem>>, vector<4x32xf32>
    %c0_165 = arith.constant 0 : index
    %c224_166 = arith.constant 224 : index
    %174 = vector.load %arg24[%c0_165, %c224_166] : memref<4x288xf32, #tpu.memory_space<vmem>>, vector<4x32xf32>
    tpu.vector_store %arg24[%c0_165, %c224_166], %173 {strides = array<i32>} : memref<4x288xf32, #tpu.memory_space<vmem>>, vector<4x32xf32>,
    %c6_167 = arith.constant 6 : index
    %c0_168 = arith.constant 0 : index
    %175 = vector.load %arg23[%c6_167, %c0_168] : memref<10x32xf32, #tpu.memory_space<vmem>>, vector<4x32xf32>
    %176 = vector.broadcast %101 : vector<4x1xf32> to vector<4x32xf32>
    %177 = arith.mulf %175, %176 : vector<4x32xf32>
    %c0_169 = arith.constant 0 : index
    %c256_170 = arith.constant 256 : index
    %178 = vector.load %arg24[%c0_169, %c256_170] : memref<4x288xf32, #tpu.memory_space<vmem>>, vector<4x32xf32>
    tpu.vector_store %arg24[%c0_169, %c256_170], %177 {strides = array<i32>} : memref<4x288xf32, #tpu.memory_space<vmem>>, vector<4x32xf32>,
    %c0_171 = arith.constant 0 : index
    %c0_172 = arith.constant 0 : index
    %179 = vector.load %arg24[%c0_171, %c0_172] : memref<4x288xf32, #tpu.memory_space<vmem>>, vector<4x288xf32>
    %180 = arith.truncf %179 : vector<4x288xf32> to vector<4x288xbf16>
    %c1_173 = arith.constant 1 : index
    %c0_174 = arith.constant 0 : index
    %c0_175 = arith.constant 0 : index
    %181 = vector.load %arg12[%c1_173, %c0_174, %c0_175] : memref<6x288x32xbf16, #tpu.memory_space<vmem>>, vector<1x288x32xbf16>
    %182 = vector.shape_cast %181 : vector<1x288x32xbf16> to vector<288x32xbf16>
    %cst_176 = arith.constant dense<0.000000e+00> : vector<4x32xf32>
    %183 = tpu.matmul %180, %182, %cst_176 {dimension_numbers = #tpu.dot_dimension_numbers<[1], [0], [0], [1], [0, 0, 1, 1], [], []>} : vector<4x288xbf16>, vector<288x32xbf16>, vector<4x32xf32> -> vector<4x32xf32>
    %c1_177 = arith.constant 1 : index
    %c0_178 = arith.constant 0 : index
    %c0_179 = arith.constant 0 : index
    %184 = vector.load %arg13[%c1_177, %c0_178, %c0_179] : memref<6x1x32xf32, #tpu.memory_space<vmem>>, vector<1x1x32xf32>
    %185 = vector.shape_cast %184 : vector<1x1x32xf32> to vector<1x32xf32>
    %186 = vector.broadcast %185 : vector<1x32xf32> to vector<4x32xf32>
    %187 = arith.addf %183, %186 : vector<4x32xf32>
    %c3_180 = arith.constant 3 : index
    %c0_181 = arith.constant 0 : index
    %188 = vector.load %arg23[%c3_180, %c0_181] : memref<10x32xf32, #tpu.memory_space<vmem>>, vector<4x32xf32>
    tpu.vector_store %arg23[%c3_180, %c0_181], %187 {strides = array<i32>} : memref<10x32xf32, #tpu.memory_space<vmem>>, vector<4x32xf32>,
    %c0_182 = arith.constant 0 : index
    %c0_183 = arith.constant 0 : index
    %189 = vector.load %arg23[%c0_182, %c0_183] : memref<10x32xf32, #tpu.memory_space<vmem>>, vector<4x32xf32>
    %190 = vector.broadcast %97 : vector<4x1xf32> to vector<4x32xf32>
    %191 = arith.mulf %189, %190 : vector<4x32xf32>
    %c0_184 = arith.constant 0 : index
    %c0_185 = arith.constant 0 : index
    %192 = vector.load %arg24[%c0_184, %c0_185] : memref<4x288xf32, #tpu.memory_space<vmem>>, vector<4x32xf32>
    tpu.vector_store %arg24[%c0_184, %c0_185], %191 {strides = array<i32>} : memref<4x288xf32, #tpu.memory_space<vmem>>, vector<4x32xf32>,
    %c1_186 = arith.constant 1 : index
    %c0_187 = arith.constant 0 : index
    %193 = vector.load %arg23[%c1_186, %c0_187] : memref<10x32xf32, #tpu.memory_space<vmem>>, vector<4x32xf32>
    %c0_188 = arith.constant 0 : index
    %c32_189 = arith.constant 32 : index
    %194 = vector.load %arg24[%c0_188, %c32_189] : memref<4x288xf32, #tpu.memory_space<vmem>>, vector<4x32xf32>
    tpu.vector_store %arg24[%c0_188, %c32_189], %193 {strides = array<i32>} : memref<4x288xf32, #tpu.memory_space<vmem>>, vector<4x32xf32>,
    %c2_190 = arith.constant 2 : index
    %c0_191 = arith.constant 0 : index
    %195 = vector.load %arg23[%c2_190, %c0_191] : memref<10x32xf32, #tpu.memory_space<vmem>>, vector<4x32xf32>
    %196 = vector.broadcast %101 : vector<4x1xf32> to vector<4x32xf32>
    %197 = arith.mulf %195, %196 : vector<4x32xf32>
    %c0_192 = arith.constant 0 : index
    %c64_193 = arith.constant 64 : index
    %198 = vector.load %arg24[%c0_192, %c64_193] : memref<4x288xf32, #tpu.memory_space<vmem>>, vector<4x32xf32>
    tpu.vector_store %arg24[%c0_192, %c64_193], %197 {strides = array<i32>} : memref<4x288xf32, #tpu.memory_space<vmem>>, vector<4x32xf32>,
    %c2_194 = arith.constant 2 : index
    %c0_195 = arith.constant 0 : index
    %199 = vector.load %arg23[%c2_194, %c0_195] : memref<10x32xf32, #tpu.memory_space<vmem>>, vector<4x32xf32>
    %200 = vector.broadcast %97 : vector<4x1xf32> to vector<4x32xf32>
    %201 = arith.mulf %199, %200 : vector<4x32xf32>
    %c0_196 = arith.constant 0 : index
    %c96_197 = arith.constant 96 : index
    %202 = vector.load %arg24[%c0_196, %c96_197] : memref<4x288xf32, #tpu.memory_space<vmem>>, vector<4x32xf32>
    tpu.vector_store %arg24[%c0_196, %c96_197], %201 {strides = array<i32>} : memref<4x288xf32, #tpu.memory_space<vmem>>, vector<4x32xf32>,
    %c3_198 = arith.constant 3 : index
    %c0_199 = arith.constant 0 : index
    %203 = vector.load %arg23[%c3_198, %c0_199] : memref<10x32xf32, #tpu.memory_space<vmem>>, vector<4x32xf32>
    %c0_200 = arith.constant 0 : index
    %c128_201 = arith.constant 128 : index
    %204 = vector.load %arg24[%c0_200, %c128_201] : memref<4x288xf32, #tpu.memory_space<vmem>>, vector<4x32xf32>
    tpu.vector_store %arg24[%c0_200, %c128_201], %203 {strides = array<i32>} : memref<4x288xf32, #tpu.memory_space<vmem>>, vector<4x32xf32>,
    %c4_202 = arith.constant 4 : index
    %c0_203 = arith.constant 0 : index
    %205 = vector.load %arg23[%c4_202, %c0_203] : memref<10x32xf32, #tpu.memory_space<vmem>>, vector<4x32xf32>
    %206 = vector.broadcast %101 : vector<4x1xf32> to vector<4x32xf32>
    %207 = arith.mulf %205, %206 : vector<4x32xf32>
    %c0_204 = arith.constant 0 : index
    %c160_205 = arith.constant 160 : index
    %208 = vector.load %arg24[%c0_204, %c160_205] : memref<4x288xf32, #tpu.memory_space<vmem>>, vector<4x32xf32>
    tpu.vector_store %arg24[%c0_204, %c160_205], %207 {strides = array<i32>} : memref<4x288xf32, #tpu.memory_space<vmem>>, vector<4x32xf32>,
    %c4_206 = arith.constant 4 : index
    %c0_207 = arith.constant 0 : index
    %209 = vector.load %arg23[%c4_206, %c0_207] : memref<10x32xf32, #tpu.memory_space<vmem>>, vector<4x32xf32>
    %210 = vector.broadcast %97 : vector<4x1xf32> to vector<4x32xf32>
    %211 = arith.mulf %209, %210 : vector<4x32xf32>
    %c0_208 = arith.constant 0 : index
    %c192_209 = arith.constant 192 : index
    %212 = vector.load %arg24[%c0_208, %c192_209] : memref<4x288xf32, #tpu.memory_space<vmem>>, vector<4x32xf32>
    tpu.vector_store %arg24[%c0_208, %c192_209], %211 {strides = array<i32>} : memref<4x288xf32, #tpu.memory_space<vmem>>, vector<4x32xf32>,
    %c5_210 = arith.constant 5 : index
    %c0_211 = arith.constant 0 : index
    %213 = vector.load %arg23[%c5_210, %c0_211] : memref<10x32xf32, #tpu.memory_space<vmem>>, vector<4x32xf32>
    %c0_212 = arith.constant 0 : index
    %c224_213 = arith.constant 224 : index
    %214 = vector.load %arg24[%c0_212, %c224_213] : memref<4x288xf32, #tpu.memory_space<vmem>>, vector<4x32xf32>
    tpu.vector_store %arg24[%c0_212, %c224_213], %213 {strides = array<i32>} : memref<4x288xf32, #tpu.memory_space<vmem>>, vector<4x32xf32>,
    %c6_214 = arith.constant 6 : index
    %c0_215 = arith.constant 0 : index
    %215 = vector.load %arg23[%c6_214, %c0_215] : memref<10x32xf32, #tpu.memory_space<vmem>>, vector<4x32xf32>
    %216 = vector.broadcast %101 : vector<4x1xf32> to vector<4x32xf32>
    %217 = arith.mulf %215, %216 : vector<4x32xf32>
    %c0_216 = arith.constant 0 : index
    %c256_217 = arith.constant 256 : index
    %218 = vector.load %arg24[%c0_216, %c256_217] : memref<4x288xf32, #tpu.memory_space<vmem>>, vector<4x32xf32>
    tpu.vector_store %arg24[%c0_216, %c256_217], %217 {strides = array<i32>} : memref<4x288xf32, #tpu.memory_space<vmem>>, vector<4x32xf32>,
    %c0_218 = arith.constant 0 : index
    %c0_219 = arith.constant 0 : index
    %219 = vector.load %arg24[%c0_218, %c0_219] : memref<4x288xf32, #tpu.memory_space<vmem>>, vector<4x288xf32>
    %220 = arith.truncf %219 : vector<4x288xf32> to vector<4x288xbf16>
    %c2_220 = arith.constant 2 : index
    %c0_221 = arith.constant 0 : index
    %c0_222 = arith.constant 0 : index
    %221 = vector.load %arg12[%c2_220, %c0_221, %c0_222] : memref<6x288x32xbf16, #tpu.memory_space<vmem>>, vector<1x288x32xbf16>
    %222 = vector.shape_cast %221 : vector<1x288x32xbf16> to vector<288x32xbf16>
    %cst_223 = arith.constant dense<0.000000e+00> : vector<4x32xf32>
    %223 = tpu.matmul %220, %222, %cst_223 {dimension_numbers = #tpu.dot_dimension_numbers<[1], [0], [0], [1], [0, 0, 1, 1], [], []>} : vector<4x288xbf16>, vector<288x32xbf16>, vector<4x32xf32> -> vector<4x32xf32>
    %c2_224 = arith.constant 2 : index
    %c0_225 = arith.constant 0 : index
    %c0_226 = arith.constant 0 : index
    %224 = vector.load %arg13[%c2_224, %c0_225, %c0_226] : memref<6x1x32xf32, #tpu.memory_space<vmem>>, vector<1x1x32xf32>
    %225 = vector.shape_cast %224 : vector<1x1x32xf32> to vector<1x32xf32>
    %226 = vector.broadcast %225 : vector<1x32xf32> to vector<4x32xf32>
    %227 = arith.addf %223, %226 : vector<4x32xf32>
    %cst_227 = arith.constant 0.000000e+00 : f32
    %228 = vector.broadcast %cst_227 : f32 to vector<4x32xf32>
    %229 = arith.maximumf %227, %228 : vector<4x32xf32>
    %c3_228 = arith.constant 3 : index
    %c0_229 = arith.constant 0 : index
    %230 = vector.load %arg23[%c3_228, %c0_229] : memref<10x32xf32, #tpu.memory_space<vmem>>, vector<4x32xf32>
    tpu.vector_store %arg23[%c3_228, %c0_229], %229 {strides = array<i32>} : memref<10x32xf32, #tpu.memory_space<vmem>>, vector<4x32xf32>,
    %c0_230 = arith.constant 0 : index
    %c0_231 = arith.constant 0 : index
    %231 = vector.load %arg23[%c0_230, %c0_231] : memref<10x32xf32, #tpu.memory_space<vmem>>, vector<4x32xf32>
    %232 = vector.broadcast %97 : vector<4x1xf32> to vector<4x32xf32>
    %233 = arith.mulf %231, %232 : vector<4x32xf32>
    %c0_232 = arith.constant 0 : index
    %c0_233 = arith.constant 0 : index
    %234 = vector.load %arg24[%c0_232, %c0_233] : memref<4x288xf32, #tpu.memory_space<vmem>>, vector<4x32xf32>
    tpu.vector_store %arg24[%c0_232, %c0_233], %233 {strides = array<i32>} : memref<4x288xf32, #tpu.memory_space<vmem>>, vector<4x32xf32>,
    %c1_234 = arith.constant 1 : index
    %c0_235 = arith.constant 0 : index
    %235 = vector.load %arg23[%c1_234, %c0_235] : memref<10x32xf32, #tpu.memory_space<vmem>>, vector<4x32xf32>
    %c0_236 = arith.constant 0 : index
    %c32_237 = arith.constant 32 : index
    %236 = vector.load %arg24[%c0_236, %c32_237] : memref<4x288xf32, #tpu.memory_space<vmem>>, vector<4x32xf32>
    tpu.vector_store %arg24[%c0_236, %c32_237], %235 {strides = array<i32>} : memref<4x288xf32, #tpu.memory_space<vmem>>, vector<4x32xf32>,
    %c2_238 = arith.constant 2 : index
    %c0_239 = arith.constant 0 : index
    %237 = vector.load %arg23[%c2_238, %c0_239] : memref<10x32xf32, #tpu.memory_space<vmem>>, vector<4x32xf32>
    %238 = vector.broadcast %101 : vector<4x1xf32> to vector<4x32xf32>
    %239 = arith.mulf %237, %238 : vector<4x32xf32>
    %c0_240 = arith.constant 0 : index
    %c64_241 = arith.constant 64 : index
    %240 = vector.load %arg24[%c0_240, %c64_241] : memref<4x288xf32, #tpu.memory_space<vmem>>, vector<4x32xf32>
    tpu.vector_store %arg24[%c0_240, %c64_241], %239 {strides = array<i32>} : memref<4x288xf32, #tpu.memory_space<vmem>>, vector<4x32xf32>,
    %c2_242 = arith.constant 2 : index
    %c0_243 = arith.constant 0 : index
    %241 = vector.load %arg23[%c2_242, %c0_243] : memref<10x32xf32, #tpu.memory_space<vmem>>, vector<4x32xf32>
    %242 = vector.broadcast %97 : vector<4x1xf32> to vector<4x32xf32>
    %243 = arith.mulf %241, %242 : vector<4x32xf32>
    %c0_244 = arith.constant 0 : index
    %c96_245 = arith.constant 96 : index
    %244 = vector.load %arg24[%c0_244, %c96_245] : memref<4x288xf32, #tpu.memory_space<vmem>>, vector<4x32xf32>
    tpu.vector_store %arg24[%c0_244, %c96_245], %243 {strides = array<i32>} : memref<4x288xf32, #tpu.memory_space<vmem>>, vector<4x32xf32>,
    %c3_246 = arith.constant 3 : index
    %c0_247 = arith.constant 0 : index
    %245 = vector.load %arg23[%c3_246, %c0_247] : memref<10x32xf32, #tpu.memory_space<vmem>>, vector<4x32xf32>
    %c0_248 = arith.constant 0 : index
    %c128_249 = arith.constant 128 : index
    %246 = vector.load %arg24[%c0_248, %c128_249] : memref<4x288xf32, #tpu.memory_space<vmem>>, vector<4x32xf32>
    tpu.vector_store %arg24[%c0_248, %c128_249], %245 {strides = array<i32>} : memref<4x288xf32, #tpu.memory_space<vmem>>, vector<4x32xf32>,
    %c4_250 = arith.constant 4 : index
    %c0_251 = arith.constant 0 : index
    %247 = vector.load %arg23[%c4_250, %c0_251] : memref<10x32xf32, #tpu.memory_space<vmem>>, vector<4x32xf32>
    %248 = vector.broadcast %101 : vector<4x1xf32> to vector<4x32xf32>
    %249 = arith.mulf %247, %248 : vector<4x32xf32>
    %c0_252 = arith.constant 0 : index
    %c160_253 = arith.constant 160 : index
    %250 = vector.load %arg24[%c0_252, %c160_253] : memref<4x288xf32, #tpu.memory_space<vmem>>, vector<4x32xf32>
    tpu.vector_store %arg24[%c0_252, %c160_253], %249 {strides = array<i32>} : memref<4x288xf32, #tpu.memory_space<vmem>>, vector<4x32xf32>,
    %c4_254 = arith.constant 4 : index
    %c0_255 = arith.constant 0 : index
    %251 = vector.load %arg23[%c4_254, %c0_255] : memref<10x32xf32, #tpu.memory_space<vmem>>, vector<4x32xf32>
    %252 = vector.broadcast %97 : vector<4x1xf32> to vector<4x32xf32>
    %253 = arith.mulf %251, %252 : vector<4x32xf32>
    %c0_256 = arith.constant 0 : index
    %c192_257 = arith.constant 192 : index
    %254 = vector.load %arg24[%c0_256, %c192_257] : memref<4x288xf32, #tpu.memory_space<vmem>>, vector<4x32xf32>
    tpu.vector_store %arg24[%c0_256, %c192_257], %253 {strides = array<i32>} : memref<4x288xf32, #tpu.memory_space<vmem>>, vector<4x32xf32>,
    %c5_258 = arith.constant 5 : index
    %c0_259 = arith.constant 0 : index
    %255 = vector.load %arg23[%c5_258, %c0_259] : memref<10x32xf32, #tpu.memory_space<vmem>>, vector<4x32xf32>
    %c0_260 = arith.constant 0 : index
    %c224_261 = arith.constant 224 : index
    %256 = vector.load %arg24[%c0_260, %c224_261] : memref<4x288xf32, #tpu.memory_space<vmem>>, vector<4x32xf32>
    tpu.vector_store %arg24[%c0_260, %c224_261], %255 {strides = array<i32>} : memref<4x288xf32, #tpu.memory_space<vmem>>, vector<4x32xf32>,
    %c6_262 = arith.constant 6 : index
    %c0_263 = arith.constant 0 : index
    %257 = vector.load %arg23[%c6_262, %c0_263] : memref<10x32xf32, #tpu.memory_space<vmem>>, vector<4x32xf32>
    %258 = vector.broadcast %101 : vector<4x1xf32> to vector<4x32xf32>
    %259 = arith.mulf %257, %258 : vector<4x32xf32>
    %c0_264 = arith.constant 0 : index
    %c256_265 = arith.constant 256 : index
    %260 = vector.load %arg24[%c0_264, %c256_265] : memref<4x288xf32, #tpu.memory_space<vmem>>, vector<4x32xf32>
    tpu.vector_store %arg24[%c0_264, %c256_265], %259 {strides = array<i32>} : memref<4x288xf32, #tpu.memory_space<vmem>>, vector<4x32xf32>,
    %c0_266 = arith.constant 0 : index
    %c0_267 = arith.constant 0 : index
    %261 = vector.load %arg24[%c0_266, %c0_267] : memref<4x288xf32, #tpu.memory_space<vmem>>, vector<4x288xf32>
    %262 = arith.truncf %261 : vector<4x288xf32> to vector<4x288xbf16>
    %c3_268 = arith.constant 3 : index
    %c0_269 = arith.constant 0 : index
    %c0_270 = arith.constant 0 : index
    %263 = vector.load %arg12[%c3_268, %c0_269, %c0_270] : memref<6x288x32xbf16, #tpu.memory_space<vmem>>, vector<1x288x32xbf16>
    %264 = vector.shape_cast %263 : vector<1x288x32xbf16> to vector<288x32xbf16>
    %cst_271 = arith.constant dense<0.000000e+00> : vector<4x32xf32>
    %265 = tpu.matmul %262, %264, %cst_271 {dimension_numbers = #tpu.dot_dimension_numbers<[1], [0], [0], [1], [0, 0, 1, 1], [], []>} : vector<4x288xbf16>, vector<288x32xbf16>, vector<4x32xf32> -> vector<4x32xf32>
    %c3_272 = arith.constant 3 : index
    %c0_273 = arith.constant 0 : index
    %c0_274 = arith.constant 0 : index
    %266 = vector.load %arg13[%c3_272, %c0_273, %c0_274] : memref<6x1x32xf32, #tpu.memory_space<vmem>>, vector<1x1x32xf32>
    %267 = vector.shape_cast %266 : vector<1x1x32xf32> to vector<1x32xf32>
    %268 = vector.broadcast %267 : vector<1x32xf32> to vector<4x32xf32>
    %269 = arith.addf %265, %268 : vector<4x32xf32>
    %c3_275 = arith.constant 3 : index
    %c0_276 = arith.constant 0 : index
    %270 = vector.load %arg23[%c3_275, %c0_276] : memref<10x32xf32, #tpu.memory_space<vmem>>, vector<4x32xf32>
    tpu.vector_store %arg23[%c3_275, %c0_276], %269 {strides = array<i32>} : memref<10x32xf32, #tpu.memory_space<vmem>>, vector<4x32xf32>,
    %c0_277 = arith.constant 0 : index
    %c0_278 = arith.constant 0 : index
    %271 = vector.load %arg23[%c0_277, %c0_278] : memref<10x32xf32, #tpu.memory_space<vmem>>, vector<4x32xf32>
    %272 = vector.broadcast %97 : vector<4x1xf32> to vector<4x32xf32>
    %273 = arith.mulf %271, %272 : vector<4x32xf32>
    %c0_279 = arith.constant 0 : index
    %c0_280 = arith.constant 0 : index
    %274 = vector.load %arg24[%c0_279, %c0_280] : memref<4x288xf32, #tpu.memory_space<vmem>>, vector<4x32xf32>
    tpu.vector_store %arg24[%c0_279, %c0_280], %273 {strides = array<i32>} : memref<4x288xf32, #tpu.memory_space<vmem>>, vector<4x32xf32>,
    %c1_281 = arith.constant 1 : index
    %c0_282 = arith.constant 0 : index
    %275 = vector.load %arg23[%c1_281, %c0_282] : memref<10x32xf32, #tpu.memory_space<vmem>>, vector<4x32xf32>
    %c0_283 = arith.constant 0 : index
    %c32_284 = arith.constant 32 : index
    %276 = vector.load %arg24[%c0_283, %c32_284] : memref<4x288xf32, #tpu.memory_space<vmem>>, vector<4x32xf32>
    tpu.vector_store %arg24[%c0_283, %c32_284], %275 {strides = array<i32>} : memref<4x288xf32, #tpu.memory_space<vmem>>, vector<4x32xf32>,
    %c2_285 = arith.constant 2 : index
    %c0_286 = arith.constant 0 : index
    %277 = vector.load %arg23[%c2_285, %c0_286] : memref<10x32xf32, #tpu.memory_space<vmem>>, vector<4x32xf32>
    %278 = vector.broadcast %101 : vector<4x1xf32> to vector<4x32xf32>
    %279 = arith.mulf %277, %278 : vector<4x32xf32>
    %c0_287 = arith.constant 0 : index
    %c64_288 = arith.constant 64 : index
    %280 = vector.load %arg24[%c0_287, %c64_288] : memref<4x288xf32, #tpu.memory_space<vmem>>, vector<4x32xf32>
    tpu.vector_store %arg24[%c0_287, %c64_288], %279 {strides = array<i32>} : memref<4x288xf32, #tpu.memory_space<vmem>>, vector<4x32xf32>,
    %c2_289 = arith.constant 2 : index
    %c0_290 = arith.constant 0 : index
    %281 = vector.load %arg23[%c2_289, %c0_290] : memref<10x32xf32, #tpu.memory_space<vmem>>, vector<4x32xf32>
    %282 = vector.broadcast %97 : vector<4x1xf32> to vector<4x32xf32>
    %283 = arith.mulf %281, %282 : vector<4x32xf32>
    %c0_291 = arith.constant 0 : index
    %c96_292 = arith.constant 96 : index
    %284 = vector.load %arg24[%c0_291, %c96_292] : memref<4x288xf32, #tpu.memory_space<vmem>>, vector<4x32xf32>
    tpu.vector_store %arg24[%c0_291, %c96_292], %283 {strides = array<i32>} : memref<4x288xf32, #tpu.memory_space<vmem>>, vector<4x32xf32>,
    %c3_293 = arith.constant 3 : index
    %c0_294 = arith.constant 0 : index
    %285 = vector.load %arg23[%c3_293, %c0_294] : memref<10x32xf32, #tpu.memory_space<vmem>>, vector<4x32xf32>
    %c0_295 = arith.constant 0 : index
    %c128_296 = arith.constant 128 : index
    %286 = vector.load %arg24[%c0_295, %c128_296] : memref<4x288xf32, #tpu.memory_space<vmem>>, vector<4x32xf32>
    tpu.vector_store %arg24[%c0_295, %c128_296], %285 {strides = array<i32>} : memref<4x288xf32, #tpu.memory_space<vmem>>, vector<4x32xf32>,
    %c4_297 = arith.constant 4 : index
    %c0_298 = arith.constant 0 : index
    %287 = vector.load %arg23[%c4_297, %c0_298] : memref<10x32xf32, #tpu.memory_space<vmem>>, vector<4x32xf32>
    %288 = vector.broadcast %101 : vector<4x1xf32> to vector<4x32xf32>
    %289 = arith.mulf %287, %288 : vector<4x32xf32>
    %c0_299 = arith.constant 0 : index
    %c160_300 = arith.constant 160 : index
    %290 = vector.load %arg24[%c0_299, %c160_300] : memref<4x288xf32, #tpu.memory_space<vmem>>, vector<4x32xf32>
    tpu.vector_store %arg24[%c0_299, %c160_300], %289 {strides = array<i32>} : memref<4x288xf32, #tpu.memory_space<vmem>>, vector<4x32xf32>,
    %c4_301 = arith.constant 4 : index
    %c0_302 = arith.constant 0 : index
    %291 = vector.load %arg23[%c4_301, %c0_302] : memref<10x32xf32, #tpu.memory_space<vmem>>, vector<4x32xf32>
    %292 = vector.broadcast %97 : vector<4x1xf32> to vector<4x32xf32>
    %293 = arith.mulf %291, %292 : vector<4x32xf32>
    %c0_303 = arith.constant 0 : index
    %c192_304 = arith.constant 192 : index
    %294 = vector.load %arg24[%c0_303, %c192_304] : memref<4x288xf32, #tpu.memory_space<vmem>>, vector<4x32xf32>
    tpu.vector_store %arg24[%c0_303, %c192_304], %293 {strides = array<i32>} : memref<4x288xf32, #tpu.memory_space<vmem>>, vector<4x32xf32>,
    %c5_305 = arith.constant 5 : index
    %c0_306 = arith.constant 0 : index
    %295 = vector.load %arg23[%c5_305, %c0_306] : memref<10x32xf32, #tpu.memory_space<vmem>>, vector<4x32xf32>
    %c0_307 = arith.constant 0 : index
    %c224_308 = arith.constant 224 : index
    %296 = vector.load %arg24[%c0_307, %c224_308] : memref<4x288xf32, #tpu.memory_space<vmem>>, vector<4x32xf32>
    tpu.vector_store %arg24[%c0_307, %c224_308], %295 {strides = array<i32>} : memref<4x288xf32, #tpu.memory_space<vmem>>, vector<4x32xf32>,
    %c6_309 = arith.constant 6 : index
    %c0_310 = arith.constant 0 : index
    %297 = vector.load %arg23[%c6_309, %c0_310] : memref<10x32xf32, #tpu.memory_space<vmem>>, vector<4x32xf32>
    %298 = vector.broadcast %101 : vector<4x1xf32> to vector<4x32xf32>
    %299 = arith.mulf %297, %298 : vector<4x32xf32>
    %c0_311 = arith.constant 0 : index
    %c256_312 = arith.constant 256 : index
    %300 = vector.load %arg24[%c0_311, %c256_312] : memref<4x288xf32, #tpu.memory_space<vmem>>, vector<4x32xf32>
    tpu.vector_store %arg24[%c0_311, %c256_312], %299 {strides = array<i32>} : memref<4x288xf32, #tpu.memory_space<vmem>>, vector<4x32xf32>,
    %c0_313 = arith.constant 0 : index
    %c0_314 = arith.constant 0 : index
    %301 = vector.load %arg24[%c0_313, %c0_314] : memref<4x288xf32, #tpu.memory_space<vmem>>, vector<4x288xf32>
    %302 = arith.truncf %301 : vector<4x288xf32> to vector<4x288xbf16>
    %c4_315 = arith.constant 4 : index
    %c0_316 = arith.constant 0 : index
    %c0_317 = arith.constant 0 : index
    %303 = vector.load %arg12[%c4_315, %c0_316, %c0_317] : memref<6x288x32xbf16, #tpu.memory_space<vmem>>, vector<1x288x32xbf16>
    %304 = vector.shape_cast %303 : vector<1x288x32xbf16> to vector<288x32xbf16>
    %cst_318 = arith.constant dense<0.000000e+00> : vector<4x32xf32>
    %305 = tpu.matmul %302, %304, %cst_318 {dimension_numbers = #tpu.dot_dimension_numbers<[1], [0], [0], [1], [0, 0, 1, 1], [], []>} : vector<4x288xbf16>, vector<288x32xbf16>, vector<4x32xf32> -> vector<4x32xf32>
    %c4_319 = arith.constant 4 : index
    %c0_320 = arith.constant 0 : index
    %c0_321 = arith.constant 0 : index
    %306 = vector.load %arg13[%c4_319, %c0_320, %c0_321] : memref<6x1x32xf32, #tpu.memory_space<vmem>>, vector<1x1x32xf32>
    %307 = vector.shape_cast %306 : vector<1x1x32xf32> to vector<1x32xf32>
    %308 = vector.broadcast %307 : vector<1x32xf32> to vector<4x32xf32>
    %309 = arith.addf %305, %308 : vector<4x32xf32>
    %c3_322 = arith.constant 3 : index
    %c0_323 = arith.constant 0 : index
    %310 = vector.load %arg23[%c3_322, %c0_323] : memref<10x32xf32, #tpu.memory_space<vmem>>, vector<4x32xf32>
    tpu.vector_store %arg23[%c3_322, %c0_323], %309 {strides = array<i32>} : memref<10x32xf32, #tpu.memory_space<vmem>>, vector<4x32xf32>,
    %c0_324 = arith.constant 0 : index
    %c0_325 = arith.constant 0 : index
    %311 = vector.load %arg23[%c0_324, %c0_325] : memref<10x32xf32, #tpu.memory_space<vmem>>, vector<4x32xf32>
    %312 = vector.broadcast %97 : vector<4x1xf32> to vector<4x32xf32>
    %313 = arith.mulf %311, %312 : vector<4x32xf32>
    %c0_326 = arith.constant 0 : index
    %c0_327 = arith.constant 0 : index
    %314 = vector.load %arg24[%c0_326, %c0_327] : memref<4x288xf32, #tpu.memory_space<vmem>>, vector<4x32xf32>
    tpu.vector_store %arg24[%c0_326, %c0_327], %313 {strides = array<i32>} : memref<4x288xf32, #tpu.memory_space<vmem>>, vector<4x32xf32>,
    %c1_328 = arith.constant 1 : index
    %c0_329 = arith.constant 0 : index
    %315 = vector.load %arg23[%c1_328, %c0_329] : memref<10x32xf32, #tpu.memory_space<vmem>>, vector<4x32xf32>
    %c0_330 = arith.constant 0 : index
    %c32_331 = arith.constant 32 : index
    %316 = vector.load %arg24[%c0_330, %c32_331] : memref<4x288xf32, #tpu.memory_space<vmem>>, vector<4x32xf32>
    tpu.vector_store %arg24[%c0_330, %c32_331], %315 {strides = array<i32>} : memref<4x288xf32, #tpu.memory_space<vmem>>, vector<4x32xf32>,
    %c2_332 = arith.constant 2 : index
    %c0_333 = arith.constant 0 : index
    %317 = vector.load %arg23[%c2_332, %c0_333] : memref<10x32xf32, #tpu.memory_space<vmem>>, vector<4x32xf32>
    %318 = vector.broadcast %101 : vector<4x1xf32> to vector<4x32xf32>
    %319 = arith.mulf %317, %318 : vector<4x32xf32>
    %c0_334 = arith.constant 0 : index
    %c64_335 = arith.constant 64 : index
    %320 = vector.load %arg24[%c0_334, %c64_335] : memref<4x288xf32, #tpu.memory_space<vmem>>, vector<4x32xf32>
    tpu.vector_store %arg24[%c0_334, %c64_335], %319 {strides = array<i32>} : memref<4x288xf32, #tpu.memory_space<vmem>>, vector<4x32xf32>,
    %c2_336 = arith.constant 2 : index
    %c0_337 = arith.constant 0 : index
    %321 = vector.load %arg23[%c2_336, %c0_337] : memref<10x32xf32, #tpu.memory_space<vmem>>, vector<4x32xf32>
    %322 = vector.broadcast %97 : vector<4x1xf32> to vector<4x32xf32>
    %323 = arith.mulf %321, %322 : vector<4x32xf32>
    %c0_338 = arith.constant 0 : index
    %c96_339 = arith.constant 96 : index
    %324 = vector.load %arg24[%c0_338, %c96_339] : memref<4x288xf32, #tpu.memory_space<vmem>>, vector<4x32xf32>
    tpu.vector_store %arg24[%c0_338, %c96_339], %323 {strides = array<i32>} : memref<4x288xf32, #tpu.memory_space<vmem>>, vector<4x32xf32>,
    %c3_340 = arith.constant 3 : index
    %c0_341 = arith.constant 0 : index
    %325 = vector.load %arg23[%c3_340, %c0_341] : memref<10x32xf32, #tpu.memory_space<vmem>>, vector<4x32xf32>
    %c0_342 = arith.constant 0 : index
    %c128_343 = arith.constant 128 : index
    %326 = vector.load %arg24[%c0_342, %c128_343] : memref<4x288xf32, #tpu.memory_space<vmem>>, vector<4x32xf32>
    tpu.vector_store %arg24[%c0_342, %c128_343], %325 {strides = array<i32>} : memref<4x288xf32, #tpu.memory_space<vmem>>, vector<4x32xf32>,
    %c4_344 = arith.constant 4 : index
    %c0_345 = arith.constant 0 : index
    %327 = vector.load %arg23[%c4_344, %c0_345] : memref<10x32xf32, #tpu.memory_space<vmem>>, vector<4x32xf32>
    %328 = vector.broadcast %101 : vector<4x1xf32> to vector<4x32xf32>
    %329 = arith.mulf %327, %328 : vector<4x32xf32>
    %c0_346 = arith.constant 0 : index
    %c160_347 = arith.constant 160 : index
    %330 = vector.load %arg24[%c0_346, %c160_347] : memref<4x288xf32, #tpu.memory_space<vmem>>, vector<4x32xf32>
    tpu.vector_store %arg24[%c0_346, %c160_347], %329 {strides = array<i32>} : memref<4x288xf32, #tpu.memory_space<vmem>>, vector<4x32xf32>,
    %c4_348 = arith.constant 4 : index
    %c0_349 = arith.constant 0 : index
    %331 = vector.load %arg23[%c4_348, %c0_349] : memref<10x32xf32, #tpu.memory_space<vmem>>, vector<4x32xf32>
    %332 = vector.broadcast %97 : vector<4x1xf32> to vector<4x32xf32>
    %333 = arith.mulf %331, %332 : vector<4x32xf32>
    %c0_350 = arith.constant 0 : index
    %c192_351 = arith.constant 192 : index
    %334 = vector.load %arg24[%c0_350, %c192_351] : memref<4x288xf32, #tpu.memory_space<vmem>>, vector<4x32xf32>
    tpu.vector_store %arg24[%c0_350, %c192_351], %333 {strides = array<i32>} : memref<4x288xf32, #tpu.memory_space<vmem>>, vector<4x32xf32>,
    %c5_352 = arith.constant 5 : index
    %c0_353 = arith.constant 0 : index
    %335 = vector.load %arg23[%c5_352, %c0_353] : memref<10x32xf32, #tpu.memory_space<vmem>>, vector<4x32xf32>
    %c0_354 = arith.constant 0 : index
    %c224_355 = arith.constant 224 : index
    %336 = vector.load %arg24[%c0_354, %c224_355] : memref<4x288xf32, #tpu.memory_space<vmem>>, vector<4x32xf32>
    tpu.vector_store %arg24[%c0_354, %c224_355], %335 {strides = array<i32>} : memref<4x288xf32, #tpu.memory_space<vmem>>, vector<4x32xf32>,
    %c6_356 = arith.constant 6 : index
    %c0_357 = arith.constant 0 : index
    %337 = vector.load %arg23[%c6_356, %c0_357] : memref<10x32xf32, #tpu.memory_space<vmem>>, vector<4x32xf32>
    %338 = vector.broadcast %101 : vector<4x1xf32> to vector<4x32xf32>
    %339 = arith.mulf %337, %338 : vector<4x32xf32>
    %c0_358 = arith.constant 0 : index
    %c256_359 = arith.constant 256 : index
    %340 = vector.load %arg24[%c0_358, %c256_359] : memref<4x288xf32, #tpu.memory_space<vmem>>, vector<4x32xf32>
    tpu.vector_store %arg24[%c0_358, %c256_359], %339 {strides = array<i32>} : memref<4x288xf32, #tpu.memory_space<vmem>>, vector<4x32xf32>,
    %c0_360 = arith.constant 0 : index
    %c0_361 = arith.constant 0 : index
    %341 = vector.load %arg24[%c0_360, %c0_361] : memref<4x288xf32, #tpu.memory_space<vmem>>, vector<4x288xf32>
    %342 = arith.truncf %341 : vector<4x288xf32> to vector<4x288xbf16>
    %c5_362 = arith.constant 5 : index
    %c0_363 = arith.constant 0 : index
    %c0_364 = arith.constant 0 : index
    %343 = vector.load %arg12[%c5_362, %c0_363, %c0_364] : memref<6x288x32xbf16, #tpu.memory_space<vmem>>, vector<1x288x32xbf16>
    %344 = vector.shape_cast %343 : vector<1x288x32xbf16> to vector<288x32xbf16>
    %cst_365 = arith.constant dense<0.000000e+00> : vector<4x32xf32>
    %345 = tpu.matmul %342, %344, %cst_365 {dimension_numbers = #tpu.dot_dimension_numbers<[1], [0], [0], [1], [0, 0, 1, 1], [], []>} : vector<4x288xbf16>, vector<288x32xbf16>, vector<4x32xf32> -> vector<4x32xf32>
    %c5_366 = arith.constant 5 : index
    %c0_367 = arith.constant 0 : index
    %c0_368 = arith.constant 0 : index
    %346 = vector.load %arg13[%c5_366, %c0_367, %c0_368] : memref<6x1x32xf32, #tpu.memory_space<vmem>>, vector<1x1x32xf32>
    %347 = vector.shape_cast %346 : vector<1x1x32xf32> to vector<1x32xf32>
    %348 = vector.broadcast %347 : vector<1x32xf32> to vector<4x32xf32>
    %349 = arith.addf %345, %348 : vector<4x32xf32>
    %350 = arith.addf %349, %108 : vector<4x32xf32>
    %351 = arith.truncf %350 : vector<4x32xf32> to vector<4x32xbf16>
    %c0_369 = arith.constant 0 : index
    %c0_370 = arith.constant 0 : index
    %352 = vector.load %arg14[%c0_369, %c0_370] : memref<32x128xbf16, #tpu.memory_space<vmem>>, vector<32x32xbf16>
    %cst_371 = arith.constant dense<0.000000e+00> : vector<4x32xf32>
    %353 = tpu.matmul %351, %352, %cst_371 {dimension_numbers = #tpu.dot_dimension_numbers<[1], [0], [0], [1], [0, 0, 1, 1], [], []>} : vector<4x32xbf16>, vector<32x32xbf16>, vector<4x32xf32> -> vector<4x32xf32>
    %c0_372 = arith.constant 0 : index
    %c0_373 = arith.constant 0 : index
    %354 = vector.load %arg15[%c0_372, %c0_373] : memref<1x128xf32, #tpu.memory_space<vmem>>, vector<1x32xf32>
    %355 = vector.broadcast %354 : vector<1x32xf32> to vector<4x32xf32>
    %356 = arith.addf %353, %355 : vector<4x32xf32>
    %cst_374 = arith.constant 0.000000e+00 : f32
    %357 = vector.broadcast %cst_374 : f32 to vector<4x32xf32>
    %358 = arith.maximumf %356, %357 : vector<4x32xf32>
    %359 = vector.extract_strided_slice %358 {offsets = [0, 0], sizes = [1, 32], strides = [1, 1]} : vector<4x32xf32> to vector<1x32xf32>
    %c5_375 = arith.constant 5 : index
    %c0_376 = arith.constant 0 : index
    %360 = vector.load %arg25[%c5_375, %c0_376] : memref<26x32xf32, #tpu.memory_space<vmem>>, vector<1x32xf32>
    tpu.vector_store %arg25[%c5_375, %c0_376], %359 {strides = array<i32>} : memref<26x32xf32, #tpu.memory_space<vmem>>, vector<1x32xf32>,
    %361 = vector.extract_strided_slice %358 {offsets = [1, 0], sizes = [1, 32], strides = [1, 1]} : vector<4x32xf32> to vector<1x32xf32>
    %c7_377 = arith.constant 7 : index
    %c0_378 = arith.constant 0 : index
    %362 = vector.load %arg25[%c7_377, %c0_378] : memref<26x32xf32, #tpu.memory_space<vmem>>, vector<1x32xf32>
    tpu.vector_store %arg25[%c7_377, %c0_378], %361 {strides = array<i32>} : memref<26x32xf32, #tpu.memory_space<vmem>>, vector<1x32xf32>,
    %363 = vector.extract_strided_slice %358 {offsets = [2, 0], sizes = [1, 32], strides = [1, 1]} : vector<4x32xf32> to vector<1x32xf32>
    %c13 = arith.constant 13 : index
    %c0_379 = arith.constant 0 : index
    %364 = vector.load %arg25[%c13, %c0_379] : memref<26x32xf32, #tpu.memory_space<vmem>>, vector<1x32xf32>
    tpu.vector_store %arg25[%c13, %c0_379], %363 {strides = array<i32>} : memref<26x32xf32, #tpu.memory_space<vmem>>, vector<1x32xf32>,
    %365 = vector.extract_strided_slice %358 {offsets = [3, 0], sizes = [1, 32], strides = [1, 1]} : vector<4x32xf32> to vector<1x32xf32>
    %c15 = arith.constant 15 : index
    %c0_380 = arith.constant 0 : index
    %366 = vector.load %arg25[%c15, %c0_380] : memref<26x32xf32, #tpu.memory_space<vmem>>, vector<1x32xf32>
    tpu.vector_store %arg25[%c15, %c0_380], %365 {strides = array<i32>} : memref<26x32xf32, #tpu.memory_space<vmem>>, vector<1x32xf32>,
    %c0_381 = arith.constant 0 : index
    %c32_382 = arith.constant 32 : index
    %367 = vector.load %arg14[%c0_381, %c32_382] : memref<32x128xbf16, #tpu.memory_space<vmem>>, vector<32x32xbf16>
    %cst_383 = arith.constant dense<0.000000e+00> : vector<4x32xf32>
    %368 = tpu.matmul %351, %367, %cst_383 {dimension_numbers = #tpu.dot_dimension_numbers<[1], [0], [0], [1], [0, 0, 1, 1], [], []>} : vector<4x32xbf16>, vector<32x32xbf16>, vector<4x32xf32> -> vector<4x32xf32>
    %c0_384 = arith.constant 0 : index
    %c32_385 = arith.constant 32 : index
    %369 = vector.load %arg15[%c0_384, %c32_385] : memref<1x128xf32, #tpu.memory_space<vmem>>, vector<1x32xf32>
    %370 = vector.broadcast %369 : vector<1x32xf32> to vector<4x32xf32>
    %371 = arith.addf %368, %370 : vector<4x32xf32>
    %cst_386 = arith.constant 0.000000e+00 : f32
    %372 = vector.broadcast %cst_386 : f32 to vector<4x32xf32>
    %373 = arith.maximumf %371, %372 : vector<4x32xf32>
    %374 = vector.extract_strided_slice %373 {offsets = [0, 0], sizes = [1, 32], strides = [1, 1]} : vector<4x32xf32> to vector<1x32xf32>
    %c6_387 = arith.constant 6 : index
    %c0_388 = arith.constant 0 : index
    %375 = vector.load %arg25[%c6_387, %c0_388] : memref<26x32xf32, #tpu.memory_space<vmem>>, vector<1x32xf32>
    tpu.vector_store %arg25[%c6_387, %c0_388], %374 {strides = array<i32>} : memref<26x32xf32, #tpu.memory_space<vmem>>, vector<1x32xf32>,
    %376 = vector.extract_strided_slice %373 {offsets = [1, 0], sizes = [1, 32], strides = [1, 1]} : vector<4x32xf32> to vector<1x32xf32>
    %c8 = arith.constant 8 : index
    %c0_389 = arith.constant 0 : index
    %377 = vector.load %arg25[%c8, %c0_389] : memref<26x32xf32, #tpu.memory_space<vmem>>, vector<1x32xf32>
    tpu.vector_store %arg25[%c8, %c0_389], %376 {strides = array<i32>} : memref<26x32xf32, #tpu.memory_space<vmem>>, vector<1x32xf32>,
    %378 = vector.extract_strided_slice %373 {offsets = [2, 0], sizes = [1, 32], strides = [1, 1]} : vector<4x32xf32> to vector<1x32xf32>
    %c14 = arith.constant 14 : index
    %c0_390 = arith.constant 0 : index
    %379 = vector.load %arg25[%c14, %c0_390] : memref<26x32xf32, #tpu.memory_space<vmem>>, vector<1x32xf32>
    tpu.vector_store %arg25[%c14, %c0_390], %378 {strides = array<i32>} : memref<26x32xf32, #tpu.memory_space<vmem>>, vector<1x32xf32>,
    %380 = vector.extract_strided_slice %373 {offsets = [3, 0], sizes = [1, 32], strides = [1, 1]} : vector<4x32xf32> to vector<1x32xf32>
    %c16 = arith.constant 16 : index
    %c0_391 = arith.constant 0 : index
    %381 = vector.load %arg25[%c16, %c0_391] : memref<26x32xf32, #tpu.memory_space<vmem>>, vector<1x32xf32>
    tpu.vector_store %arg25[%c16, %c0_391], %380 {strides = array<i32>} : memref<26x32xf32, #tpu.memory_space<vmem>>, vector<1x32xf32>,
    %c0_392 = arith.constant 0 : index
    %c64_393 = arith.constant 64 : index
    %382 = vector.load %arg14[%c0_392, %c64_393] : memref<32x128xbf16, #tpu.memory_space<vmem>>, vector<32x32xbf16>
    %cst_394 = arith.constant dense<0.000000e+00> : vector<4x32xf32>
    %383 = tpu.matmul %351, %382, %cst_394 {dimension_numbers = #tpu.dot_dimension_numbers<[1], [0], [0], [1], [0, 0, 1, 1], [], []>} : vector<4x32xbf16>, vector<32x32xbf16>, vector<4x32xf32> -> vector<4x32xf32>
    %c0_395 = arith.constant 0 : index
    %c64_396 = arith.constant 64 : index
    %384 = vector.load %arg15[%c0_395, %c64_396] : memref<1x128xf32, #tpu.memory_space<vmem>>, vector<1x32xf32>
    %385 = vector.broadcast %384 : vector<1x32xf32> to vector<4x32xf32>
    %386 = arith.addf %383, %385 : vector<4x32xf32>
    %cst_397 = arith.constant 0.000000e+00 : f32
    %387 = vector.broadcast %cst_397 : f32 to vector<4x32xf32>
    %388 = arith.maximumf %386, %387 : vector<4x32xf32>
    %389 = vector.extract_strided_slice %388 {offsets = [0, 0], sizes = [1, 32], strides = [1, 1]} : vector<4x32xf32> to vector<1x32xf32>
    %c9 = arith.constant 9 : index
    %c0_398 = arith.constant 0 : index
    %390 = vector.load %arg25[%c9, %c0_398] : memref<26x32xf32, #tpu.memory_space<vmem>>, vector<1x32xf32>
    tpu.vector_store %arg25[%c9, %c0_398], %389 {strides = array<i32>} : memref<26x32xf32, #tpu.memory_space<vmem>>, vector<1x32xf32>,
    %391 = vector.extract_strided_slice %388 {offsets = [1, 0], sizes = [1, 32], strides = [1, 1]} : vector<4x32xf32> to vector<1x32xf32>
    %c11 = arith.constant 11 : index
    %c0_399 = arith.constant 0 : index
    %392 = vector.load %arg25[%c11, %c0_399] : memref<26x32xf32, #tpu.memory_space<vmem>>, vector<1x32xf32>
    tpu.vector_store %arg25[%c11, %c0_399], %391 {strides = array<i32>} : memref<26x32xf32, #tpu.memory_space<vmem>>, vector<1x32xf32>,
    %393 = vector.extract_strided_slice %388 {offsets = [2, 0], sizes = [1, 32], strides = [1, 1]} : vector<4x32xf32> to vector<1x32xf32>
    %c17 = arith.constant 17 : index
    %c0_400 = arith.constant 0 : index
    %394 = vector.load %arg25[%c17, %c0_400] : memref<26x32xf32, #tpu.memory_space<vmem>>, vector<1x32xf32>
    tpu.vector_store %arg25[%c17, %c0_400], %393 {strides = array<i32>} : memref<26x32xf32, #tpu.memory_space<vmem>>, vector<1x32xf32>,
    %395 = vector.extract_strided_slice %388 {offsets = [3, 0], sizes = [1, 32], strides = [1, 1]} : vector<4x32xf32> to vector<1x32xf32>
    %c19 = arith.constant 19 : index
    %c0_401 = arith.constant 0 : index
    %396 = vector.load %arg25[%c19, %c0_401] : memref<26x32xf32, #tpu.memory_space<vmem>>, vector<1x32xf32>
    tpu.vector_store %arg25[%c19, %c0_401], %395 {strides = array<i32>} : memref<26x32xf32, #tpu.memory_space<vmem>>, vector<1x32xf32>,
    %c0_402 = arith.constant 0 : index
    %c96_403 = arith.constant 96 : index
    %397 = vector.load %arg14[%c0_402, %c96_403] : memref<32x128xbf16, #tpu.memory_space<vmem>>, vector<32x32xbf16>
    %cst_404 = arith.constant dense<0.000000e+00> : vector<4x32xf32>
    %398 = tpu.matmul %351, %397, %cst_404 {dimension_numbers = #tpu.dot_dimension_numbers<[1], [0], [0], [1], [0, 0, 1, 1], [], []>} : vector<4x32xbf16>, vector<32x32xbf16>, vector<4x32xf32> -> vector<4x32xf32>
    %c0_405 = arith.constant 0 : index
    %c96_406 = arith.constant 96 : index
    %399 = vector.load %arg15[%c0_405, %c96_406] : memref<1x128xf32, #tpu.memory_space<vmem>>, vector<1x32xf32>
    %400 = vector.broadcast %399 : vector<1x32xf32> to vector<4x32xf32>
    %401 = arith.addf %398, %400 : vector<4x32xf32>
    %cst_407 = arith.constant 0.000000e+00 : f32
    %402 = vector.broadcast %cst_407 : f32 to vector<4x32xf32>
    %403 = arith.maximumf %401, %402 : vector<4x32xf32>
    %404 = vector.extract_strided_slice %403 {offsets = [0, 0], sizes = [1, 32], strides = [1, 1]} : vector<4x32xf32> to vector<1x32xf32>
    %c10 = arith.constant 10 : index
    %c0_408 = arith.constant 0 : index
    %405 = vector.load %arg25[%c10, %c0_408] : memref<26x32xf32, #tpu.memory_space<vmem>>, vector<1x32xf32>
    tpu.vector_store %arg25[%c10, %c0_408], %404 {strides = array<i32>} : memref<26x32xf32, #tpu.memory_space<vmem>>, vector<1x32xf32>,
    %406 = vector.extract_strided_slice %403 {offsets = [1, 0], sizes = [1, 32], strides = [1, 1]} : vector<4x32xf32> to vector<1x32xf32>
    %c12 = arith.constant 12 : index
    %c0_409 = arith.constant 0 : index
    %407 = vector.load %arg25[%c12, %c0_409] : memref<26x32xf32, #tpu.memory_space<vmem>>, vector<1x32xf32>
    tpu.vector_store %arg25[%c12, %c0_409], %406 {strides = array<i32>} : memref<26x32xf32, #tpu.memory_space<vmem>>, vector<1x32xf32>,
    %408 = vector.extract_strided_slice %403 {offsets = [2, 0], sizes = [1, 32], strides = [1, 1]} : vector<4x32xf32> to vector<1x32xf32>
    %c18 = arith.constant 18 : index
    %c0_410 = arith.constant 0 : index
    %409 = vector.load %arg25[%c18, %c0_410] : memref<26x32xf32, #tpu.memory_space<vmem>>, vector<1x32xf32>
    tpu.vector_store %arg25[%c18, %c0_410], %408 {strides = array<i32>} : memref<26x32xf32, #tpu.memory_space<vmem>>, vector<1x32xf32>,
    %410 = vector.extract_strided_slice %403 {offsets = [3, 0], sizes = [1, 32], strides = [1, 1]} : vector<4x32xf32> to vector<1x32xf32>
    %c20 = arith.constant 20 : index
    %c0_411 = arith.constant 0 : index
    %411 = vector.load %arg25[%c20, %c0_411] : memref<26x32xf32, #tpu.memory_space<vmem>>, vector<1x32xf32>
    tpu.vector_store %arg25[%c20, %c0_411], %410 {strides = array<i32>} : memref<26x32xf32, #tpu.memory_space<vmem>>, vector<1x32xf32>,
    %412 = tpu.iota {dimensions = array<i32: 0>} : vector<16x1xi32>
    %c3_i32 = arith.constant 3 : i32
    %413 = vector.broadcast %c3_i32 : i32 to vector<16x1xi32>
    %414 = arith.andi %412, %413 : vector<16x1xi32>
    %c0_i32_412 = arith.constant 0 : i32
    %415 = vector.broadcast %c0_i32_412 : i32 to vector<16x1xi32>
    %416 = arith.cmpi sgt, %414, %415 : vector<16x1xi32>
    %417 = arith.extui %416 : vector<16x1xi1> to vector<16x1xi32>
    %418 = arith.sitofp %417 : vector<16x1xi32> to vector<16x1xf32>
    %c3_i32_413 = arith.constant 3 : i32
    %419 = vector.broadcast %c3_i32_413 : i32 to vector<16x1xi32>
    %420 = arith.cmpi slt, %414, %419 : vector<16x1xi32>
    %421 = arith.extui %420 : vector<16x1xi1> to vector<16x1xi32>
    %422 = arith.sitofp %421 : vector<16x1xi32> to vector<16x1xf32>
    %c5_414 = arith.constant 5 : index
    %c0_415 = arith.constant 0 : index
    %423 = vector.load %arg25[%c5_414, %c0_415] : memref<26x32xf32, #tpu.memory_space<vmem>>, vector<16x32xf32>
    %424 = arith.truncf %423 : vector<16x32xf32> to vector<16x32xbf16>
    %c0_416 = arith.constant 0 : index
    %c0_417 = arith.constant 0 : index
    %425 = vector.load %arg16[%c0_416, %c0_417] : memref<32x32xbf16, #tpu.memory_space<vmem>>, vector<32x32xbf16>
    %cst_418 = arith.constant dense<0.000000e+00> : vector<16x32xf32>
    %426 = tpu.matmul %424, %425, %cst_418 {dimension_numbers = #tpu.dot_dimension_numbers<[1], [0], [0], [1], [0, 0, 1, 1], [], []>} : vector<16x32xbf16>, vector<32x32xbf16>, vector<16x32xf32> -> vector<16x32xf32>
    %c0_419 = arith.constant 0 : index
    %c0_420 = arith.constant 0 : index
    %427 = vector.load %arg17[%c0_419, %c0_420] : memref<1x32xf32, #tpu.memory_space<vmem>>, vector<1x32xf32>
    %428 = vector.broadcast %427 : vector<1x32xf32> to vector<16x32xf32>
    %429 = arith.addf %426, %428 : vector<16x32xf32>
    %c0_421 = arith.constant 0 : index
    %c0_422 = arith.constant 0 : index
    %430 = vector.load %arg25[%c0_421, %c0_422] : memref<26x32xf32, #tpu.memory_space<vmem>>, vector<16x32xf32>
    %431 = vector.broadcast %418 : vector<16x1xf32> to vector<16x32xf32>
    %432 = arith.mulf %430, %431 : vector<16x32xf32>
    %c0_423 = arith.constant 0 : index
    %c0_424 = arith.constant 0 : index
    %433 = vector.load %arg26[%c0_423, %c0_424] : memref<16x288xf32, #tpu.memory_space<vmem>>, vector<16x32xf32>
    tpu.vector_store %arg26[%c0_423, %c0_424], %432 {strides = array<i32>} : memref<16x288xf32, #tpu.memory_space<vmem>>, vector<16x32xf32>,
    %c1_425 = arith.constant 1 : index
    %c0_426 = arith.constant 0 : index
    %434 = vector.load %arg25[%c1_425, %c0_426] : memref<26x32xf32, #tpu.memory_space<vmem>>, vector<16x32xf32>
    %c0_427 = arith.constant 0 : index
    %c32_428 = arith.constant 32 : index
    %435 = vector.load %arg26[%c0_427, %c32_428] : memref<16x288xf32, #tpu.memory_space<vmem>>, vector<16x32xf32>
    tpu.vector_store %arg26[%c0_427, %c32_428], %434 {strides = array<i32>} : memref<16x288xf32, #tpu.memory_space<vmem>>, vector<16x32xf32>,
    %c2_429 = arith.constant 2 : index
    %c0_430 = arith.constant 0 : index
    %436 = vector.load %arg25[%c2_429, %c0_430] : memref<26x32xf32, #tpu.memory_space<vmem>>, vector<16x32xf32>
    %437 = vector.broadcast %422 : vector<16x1xf32> to vector<16x32xf32>
    %438 = arith.mulf %436, %437 : vector<16x32xf32>
    %c0_431 = arith.constant 0 : index
    %c64_432 = arith.constant 64 : index
    %439 = vector.load %arg26[%c0_431, %c64_432] : memref<16x288xf32, #tpu.memory_space<vmem>>, vector<16x32xf32>
    tpu.vector_store %arg26[%c0_431, %c64_432], %438 {strides = array<i32>} : memref<16x288xf32, #tpu.memory_space<vmem>>, vector<16x32xf32>,
    %c4_433 = arith.constant 4 : index
    %c0_434 = arith.constant 0 : index
    %440 = vector.load %arg25[%c4_433, %c0_434] : memref<26x32xf32, #tpu.memory_space<vmem>>, vector<16x32xf32>
    %441 = vector.broadcast %418 : vector<16x1xf32> to vector<16x32xf32>
    %442 = arith.mulf %440, %441 : vector<16x32xf32>
    %c0_435 = arith.constant 0 : index
    %c96_436 = arith.constant 96 : index
    %443 = vector.load %arg26[%c0_435, %c96_436] : memref<16x288xf32, #tpu.memory_space<vmem>>, vector<16x32xf32>
    tpu.vector_store %arg26[%c0_435, %c96_436], %442 {strides = array<i32>} : memref<16x288xf32, #tpu.memory_space<vmem>>, vector<16x32xf32>,
    %c5_437 = arith.constant 5 : index
    %c0_438 = arith.constant 0 : index
    %444 = vector.load %arg25[%c5_437, %c0_438] : memref<26x32xf32, #tpu.memory_space<vmem>>, vector<16x32xf32>
    %c0_439 = arith.constant 0 : index
    %c128_440 = arith.constant 128 : index
    %445 = vector.load %arg26[%c0_439, %c128_440] : memref<16x288xf32, #tpu.memory_space<vmem>>, vector<16x32xf32>
    tpu.vector_store %arg26[%c0_439, %c128_440], %444 {strides = array<i32>} : memref<16x288xf32, #tpu.memory_space<vmem>>, vector<16x32xf32>,
    %c6_441 = arith.constant 6 : index
    %c0_442 = arith.constant 0 : index
    %446 = vector.load %arg25[%c6_441, %c0_442] : memref<26x32xf32, #tpu.memory_space<vmem>>, vector<16x32xf32>
    %447 = vector.broadcast %422 : vector<16x1xf32> to vector<16x32xf32>
    %448 = arith.mulf %446, %447 : vector<16x32xf32>
    %c0_443 = arith.constant 0 : index
    %c160_444 = arith.constant 160 : index
    %449 = vector.load %arg26[%c0_443, %c160_444] : memref<16x288xf32, #tpu.memory_space<vmem>>, vector<16x32xf32>
    tpu.vector_store %arg26[%c0_443, %c160_444], %448 {strides = array<i32>} : memref<16x288xf32, #tpu.memory_space<vmem>>, vector<16x32xf32>,
    %c8_445 = arith.constant 8 : index
    %c0_446 = arith.constant 0 : index
    %450 = vector.load %arg25[%c8_445, %c0_446] : memref<26x32xf32, #tpu.memory_space<vmem>>, vector<16x32xf32>
    %451 = vector.broadcast %418 : vector<16x1xf32> to vector<16x32xf32>
    %452 = arith.mulf %450, %451 : vector<16x32xf32>
    %c0_447 = arith.constant 0 : index
    %c192_448 = arith.constant 192 : index
    %453 = vector.load %arg26[%c0_447, %c192_448] : memref<16x288xf32, #tpu.memory_space<vmem>>, vector<16x32xf32>
    tpu.vector_store %arg26[%c0_447, %c192_448], %452 {strides = array<i32>} : memref<16x288xf32, #tpu.memory_space<vmem>>, vector<16x32xf32>,
    %c9_449 = arith.constant 9 : index
    %c0_450 = arith.constant 0 : index
    %454 = vector.load %arg25[%c9_449, %c0_450] : memref<26x32xf32, #tpu.memory_space<vmem>>, vector<16x32xf32>
    %c0_451 = arith.constant 0 : index
    %c224_452 = arith.constant 224 : index
    %455 = vector.load %arg26[%c0_451, %c224_452] : memref<16x288xf32, #tpu.memory_space<vmem>>, vector<16x32xf32>
    tpu.vector_store %arg26[%c0_451, %c224_452], %454 {strides = array<i32>} : memref<16x288xf32, #tpu.memory_space<vmem>>, vector<16x32xf32>,
    %c10_453 = arith.constant 10 : index
    %c0_454 = arith.constant 0 : index
    %456 = vector.load %arg25[%c10_453, %c0_454] : memref<26x32xf32, #tpu.memory_space<vmem>>, vector<16x32xf32>
    %457 = vector.broadcast %422 : vector<16x1xf32> to vector<16x32xf32>
    %458 = arith.mulf %456, %457 : vector<16x32xf32>
    %c0_455 = arith.constant 0 : index
    %c256_456 = arith.constant 256 : index
    %459 = vector.load %arg26[%c0_455, %c256_456] : memref<16x288xf32, #tpu.memory_space<vmem>>, vector<16x32xf32>
    tpu.vector_store %arg26[%c0_455, %c256_456], %458 {strides = array<i32>} : memref<16x288xf32, #tpu.memory_space<vmem>>, vector<16x32xf32>,
    %c0_457 = arith.constant 0 : index
    %c0_458 = arith.constant 0 : index
    %460 = vector.load %arg26[%c0_457, %c0_458] : memref<16x288xf32, #tpu.memory_space<vmem>>, vector<16x288xf32>
    %461 = arith.truncf %460 : vector<16x288xf32> to vector<16x288xbf16>
    %c0_459 = arith.constant 0 : index
    %c0_460 = arith.constant 0 : index
    %c0_461 = arith.constant 0 : index
    %462 = vector.load %arg18[%c0_459, %c0_460, %c0_461] : memref<6x288x32xbf16, #tpu.memory_space<vmem>>, vector<1x288x32xbf16>
    %463 = vector.shape_cast %462 : vector<1x288x32xbf16> to vector<288x32xbf16>
    %cst_462 = arith.constant dense<0.000000e+00> : vector<16x32xf32>
    %464 = tpu.matmul %461, %463, %cst_462 {dimension_numbers = #tpu.dot_dimension_numbers<[1], [0], [0], [1], [0, 0, 1, 1], [], []>} : vector<16x288xbf16>, vector<288x32xbf16>, vector<16x32xf32> -> vector<16x32xf32>
    %c0_463 = arith.constant 0 : index
    %c0_464 = arith.constant 0 : index
    %c0_465 = arith.constant 0 : index
    %465 = vector.load %arg19[%c0_463, %c0_464, %c0_465] : memref<6x1x32xf32, #tpu.memory_space<vmem>>, vector<1x1x32xf32>
    %466 = vector.shape_cast %465 : vector<1x1x32xf32> to vector<1x32xf32>
    %467 = vector.broadcast %466 : vector<1x32xf32> to vector<16x32xf32>
    %468 = arith.addf %464, %467 : vector<16x32xf32>
    %c5_466 = arith.constant 5 : index
    %c0_467 = arith.constant 0 : index
    %469 = vector.load %arg25[%c5_466, %c0_467] : memref<26x32xf32, #tpu.memory_space<vmem>>, vector<16x32xf32>
    tpu.vector_store %arg25[%c5_466, %c0_467], %468 {strides = array<i32>} : memref<26x32xf32, #tpu.memory_space<vmem>>, vector<16x32xf32>,
    %c0_468 = arith.constant 0 : index
    %c0_469 = arith.constant 0 : index
    %470 = vector.load %arg25[%c0_468, %c0_469] : memref<26x32xf32, #tpu.memory_space<vmem>>, vector<16x32xf32>
    %471 = vector.broadcast %418 : vector<16x1xf32> to vector<16x32xf32>
    %472 = arith.mulf %470, %471 : vector<16x32xf32>
    %c0_470 = arith.constant 0 : index
    %c0_471 = arith.constant 0 : index
    %473 = vector.load %arg26[%c0_470, %c0_471] : memref<16x288xf32, #tpu.memory_space<vmem>>, vector<16x32xf32>
    tpu.vector_store %arg26[%c0_470, %c0_471], %472 {strides = array<i32>} : memref<16x288xf32, #tpu.memory_space<vmem>>, vector<16x32xf32>,
    %c1_472 = arith.constant 1 : index
    %c0_473 = arith.constant 0 : index
    %474 = vector.load %arg25[%c1_472, %c0_473] : memref<26x32xf32, #tpu.memory_space<vmem>>, vector<16x32xf32>
    %c0_474 = arith.constant 0 : index
    %c32_475 = arith.constant 32 : index
    %475 = vector.load %arg26[%c0_474, %c32_475] : memref<16x288xf32, #tpu.memory_space<vmem>>, vector<16x32xf32>
    tpu.vector_store %arg26[%c0_474, %c32_475], %474 {strides = array<i32>} : memref<16x288xf32, #tpu.memory_space<vmem>>, vector<16x32xf32>,
    %c2_476 = arith.constant 2 : index
    %c0_477 = arith.constant 0 : index
    %476 = vector.load %arg25[%c2_476, %c0_477] : memref<26x32xf32, #tpu.memory_space<vmem>>, vector<16x32xf32>
    %477 = vector.broadcast %422 : vector<16x1xf32> to vector<16x32xf32>
    %478 = arith.mulf %476, %477 : vector<16x32xf32>
    %c0_478 = arith.constant 0 : index
    %c64_479 = arith.constant 64 : index
    %479 = vector.load %arg26[%c0_478, %c64_479] : memref<16x288xf32, #tpu.memory_space<vmem>>, vector<16x32xf32>
    tpu.vector_store %arg26[%c0_478, %c64_479], %478 {strides = array<i32>} : memref<16x288xf32, #tpu.memory_space<vmem>>, vector<16x32xf32>,
    %c4_480 = arith.constant 4 : index
    %c0_481 = arith.constant 0 : index
    %480 = vector.load %arg25[%c4_480, %c0_481] : memref<26x32xf32, #tpu.memory_space<vmem>>, vector<16x32xf32>
    %481 = vector.broadcast %418 : vector<16x1xf32> to vector<16x32xf32>
    %482 = arith.mulf %480, %481 : vector<16x32xf32>
    %c0_482 = arith.constant 0 : index
    %c96_483 = arith.constant 96 : index
    %483 = vector.load %arg26[%c0_482, %c96_483] : memref<16x288xf32, #tpu.memory_space<vmem>>, vector<16x32xf32>
    tpu.vector_store %arg26[%c0_482, %c96_483], %482 {strides = array<i32>} : memref<16x288xf32, #tpu.memory_space<vmem>>, vector<16x32xf32>,
    %c5_484 = arith.constant 5 : index
    %c0_485 = arith.constant 0 : index
    %484 = vector.load %arg25[%c5_484, %c0_485] : memref<26x32xf32, #tpu.memory_space<vmem>>, vector<16x32xf32>
    %c0_486 = arith.constant 0 : index
    %c128_487 = arith.constant 128 : index
    %485 = vector.load %arg26[%c0_486, %c128_487] : memref<16x288xf32, #tpu.memory_space<vmem>>, vector<16x32xf32>
    tpu.vector_store %arg26[%c0_486, %c128_487], %484 {strides = array<i32>} : memref<16x288xf32, #tpu.memory_space<vmem>>, vector<16x32xf32>,
    %c6_488 = arith.constant 6 : index
    %c0_489 = arith.constant 0 : index
    %486 = vector.load %arg25[%c6_488, %c0_489] : memref<26x32xf32, #tpu.memory_space<vmem>>, vector<16x32xf32>
    %487 = vector.broadcast %422 : vector<16x1xf32> to vector<16x32xf32>
    %488 = arith.mulf %486, %487 : vector<16x32xf32>
    %c0_490 = arith.constant 0 : index
    %c160_491 = arith.constant 160 : index
    %489 = vector.load %arg26[%c0_490, %c160_491] : memref<16x288xf32, #tpu.memory_space<vmem>>, vector<16x32xf32>
    tpu.vector_store %arg26[%c0_490, %c160_491], %488 {strides = array<i32>} : memref<16x288xf32, #tpu.memory_space<vmem>>, vector<16x32xf32>,
    %c8_492 = arith.constant 8 : index
    %c0_493 = arith.constant 0 : index
    %490 = vector.load %arg25[%c8_492, %c0_493] : memref<26x32xf32, #tpu.memory_space<vmem>>, vector<16x32xf32>
    %491 = vector.broadcast %418 : vector<16x1xf32> to vector<16x32xf32>
    %492 = arith.mulf %490, %491 : vector<16x32xf32>
    %c0_494 = arith.constant 0 : index
    %c192_495 = arith.constant 192 : index
    %493 = vector.load %arg26[%c0_494, %c192_495] : memref<16x288xf32, #tpu.memory_space<vmem>>, vector<16x32xf32>
    tpu.vector_store %arg26[%c0_494, %c192_495], %492 {strides = array<i32>} : memref<16x288xf32, #tpu.memory_space<vmem>>, vector<16x32xf32>,
    %c9_496 = arith.constant 9 : index
    %c0_497 = arith.constant 0 : index
    %494 = vector.load %arg25[%c9_496, %c0_497] : memref<26x32xf32, #tpu.memory_space<vmem>>, vector<16x32xf32>
    %c0_498 = arith.constant 0 : index
    %c224_499 = arith.constant 224 : index
    %495 = vector.load %arg26[%c0_498, %c224_499] : memref<16x288xf32, #tpu.memory_space<vmem>>, vector<16x32xf32>
    tpu.vector_store %arg26[%c0_498, %c224_499], %494 {strides = array<i32>} : memref<16x288xf32, #tpu.memory_space<vmem>>, vector<16x32xf32>,
    %c10_500 = arith.constant 10 : index
    %c0_501 = arith.constant 0 : index
    %496 = vector.load %arg25[%c10_500, %c0_501] : memref<26x32xf32, #tpu.memory_space<vmem>>, vector<16x32xf32>
    %497 = vector.broadcast %422 : vector<16x1xf32> to vector<16x32xf32>
    %498 = arith.mulf %496, %497 : vector<16x32xf32>
    %c0_502 = arith.constant 0 : index
    %c256_503 = arith.constant 256 : index
    %499 = vector.load %arg26[%c0_502, %c256_503] : memref<16x288xf32, #tpu.memory_space<vmem>>, vector<16x32xf32>
    tpu.vector_store %arg26[%c0_502, %c256_503], %498 {strides = array<i32>} : memref<16x288xf32, #tpu.memory_space<vmem>>, vector<16x32xf32>,
    %c0_504 = arith.constant 0 : index
    %c0_505 = arith.constant 0 : index
    %500 = vector.load %arg26[%c0_504, %c0_505] : memref<16x288xf32, #tpu.memory_space<vmem>>, vector<16x288xf32>
    %501 = arith.truncf %500 : vector<16x288xf32> to vector<16x288xbf16>
    %c1_506 = arith.constant 1 : index
    %c0_507 = arith.constant 0 : index
    %c0_508 = arith.constant 0 : index
    %502 = vector.load %arg18[%c1_506, %c0_507, %c0_508] : memref<6x288x32xbf16, #tpu.memory_space<vmem>>, vector<1x288x32xbf16>
    %503 = vector.shape_cast %502 : vector<1x288x32xbf16> to vector<288x32xbf16>
    %cst_509 = arith.constant dense<0.000000e+00> : vector<16x32xf32>
    %504 = tpu.matmul %501, %503, %cst_509 {dimension_numbers = #tpu.dot_dimension_numbers<[1], [0], [0], [1], [0, 0, 1, 1], [], []>} : vector<16x288xbf16>, vector<288x32xbf16>, vector<16x32xf32> -> vector<16x32xf32>
    %c1_510 = arith.constant 1 : index
    %c0_511 = arith.constant 0 : index
    %c0_512 = arith.constant 0 : index
    %505 = vector.load %arg19[%c1_510, %c0_511, %c0_512] : memref<6x1x32xf32, #tpu.memory_space<vmem>>, vector<1x1x32xf32>
    %506 = vector.shape_cast %505 : vector<1x1x32xf32> to vector<1x32xf32>
    %507 = vector.broadcast %506 : vector<1x32xf32> to vector<16x32xf32>
    %508 = arith.addf %504, %507 : vector<16x32xf32>
    %c5_513 = arith.constant 5 : index
    %c0_514 = arith.constant 0 : index
    %509 = vector.load %arg25[%c5_513, %c0_514] : memref<26x32xf32, #tpu.memory_space<vmem>>, vector<16x32xf32>
    tpu.vector_store %arg25[%c5_513, %c0_514], %508 {strides = array<i32>} : memref<26x32xf32, #tpu.memory_space<vmem>>, vector<16x32xf32>,
    %c0_515 = arith.constant 0 : index
    %c0_516 = arith.constant 0 : index
    %510 = vector.load %arg25[%c0_515, %c0_516] : memref<26x32xf32, #tpu.memory_space<vmem>>, vector<16x32xf32>
    %511 = vector.broadcast %418 : vector<16x1xf32> to vector<16x32xf32>
    %512 = arith.mulf %510, %511 : vector<16x32xf32>
    %c0_517 = arith.constant 0 : index
    %c0_518 = arith.constant 0 : index
    %513 = vector.load %arg26[%c0_517, %c0_518] : memref<16x288xf32, #tpu.memory_space<vmem>>, vector<16x32xf32>
    tpu.vector_store %arg26[%c0_517, %c0_518], %512 {strides = array<i32>} : memref<16x288xf32, #tpu.memory_space<vmem>>, vector<16x32xf32>,
    %c1_519 = arith.constant 1 : index
    %c0_520 = arith.constant 0 : index
    %514 = vector.load %arg25[%c1_519, %c0_520] : memref<26x32xf32, #tpu.memory_space<vmem>>, vector<16x32xf32>
    %c0_521 = arith.constant 0 : index
    %c32_522 = arith.constant 32 : index
    %515 = vector.load %arg26[%c0_521, %c32_522] : memref<16x288xf32, #tpu.memory_space<vmem>>, vector<16x32xf32>
    tpu.vector_store %arg26[%c0_521, %c32_522], %514 {strides = array<i32>} : memref<16x288xf32, #tpu.memory_space<vmem>>, vector<16x32xf32>,
    %c2_523 = arith.constant 2 : index
    %c0_524 = arith.constant 0 : index
    %516 = vector.load %arg25[%c2_523, %c0_524] : memref<26x32xf32, #tpu.memory_space<vmem>>, vector<16x32xf32>
    %517 = vector.broadcast %422 : vector<16x1xf32> to vector<16x32xf32>
    %518 = arith.mulf %516, %517 : vector<16x32xf32>
    %c0_525 = arith.constant 0 : index
    %c64_526 = arith.constant 64 : index
    %519 = vector.load %arg26[%c0_525, %c64_526] : memref<16x288xf32, #tpu.memory_space<vmem>>, vector<16x32xf32>
    tpu.vector_store %arg26[%c0_525, %c64_526], %518 {strides = array<i32>} : memref<16x288xf32, #tpu.memory_space<vmem>>, vector<16x32xf32>,
    %c4_527 = arith.constant 4 : index
    %c0_528 = arith.constant 0 : index
    %520 = vector.load %arg25[%c4_527, %c0_528] : memref<26x32xf32, #tpu.memory_space<vmem>>, vector<16x32xf32>
    %521 = vector.broadcast %418 : vector<16x1xf32> to vector<16x32xf32>
    %522 = arith.mulf %520, %521 : vector<16x32xf32>
    %c0_529 = arith.constant 0 : index
    %c96_530 = arith.constant 96 : index
    %523 = vector.load %arg26[%c0_529, %c96_530] : memref<16x288xf32, #tpu.memory_space<vmem>>, vector<16x32xf32>
    tpu.vector_store %arg26[%c0_529, %c96_530], %522 {strides = array<i32>} : memref<16x288xf32, #tpu.memory_space<vmem>>, vector<16x32xf32>,
    %c5_531 = arith.constant 5 : index
    %c0_532 = arith.constant 0 : index
    %524 = vector.load %arg25[%c5_531, %c0_532] : memref<26x32xf32, #tpu.memory_space<vmem>>, vector<16x32xf32>
    %c0_533 = arith.constant 0 : index
    %c128_534 = arith.constant 128 : index
    %525 = vector.load %arg26[%c0_533, %c128_534] : memref<16x288xf32, #tpu.memory_space<vmem>>, vector<16x32xf32>
    tpu.vector_store %arg26[%c0_533, %c128_534], %524 {strides = array<i32>} : memref<16x288xf32, #tpu.memory_space<vmem>>, vector<16x32xf32>,
    %c6_535 = arith.constant 6 : index
    %c0_536 = arith.constant 0 : index
    %526 = vector.load %arg25[%c6_535, %c0_536] : memref<26x32xf32, #tpu.memory_space<vmem>>, vector<16x32xf32>
    %527 = vector.broadcast %422 : vector<16x1xf32> to vector<16x32xf32>
    %528 = arith.mulf %526, %527 : vector<16x32xf32>
    %c0_537 = arith.constant 0 : index
    %c160_538 = arith.constant 160 : index
    %529 = vector.load %arg26[%c0_537, %c160_538] : memref<16x288xf32, #tpu.memory_space<vmem>>, vector<16x32xf32>
    tpu.vector_store %arg26[%c0_537, %c160_538], %528 {strides = array<i32>} : memref<16x288xf32, #tpu.memory_space<vmem>>, vector<16x32xf32>,
    %c8_539 = arith.constant 8 : index
    %c0_540 = arith.constant 0 : index
    %530 = vector.load %arg25[%c8_539, %c0_540] : memref<26x32xf32, #tpu.memory_space<vmem>>, vector<16x32xf32>
    %531 = vector.broadcast %418 : vector<16x1xf32> to vector<16x32xf32>
    %532 = arith.mulf %530, %531 : vector<16x32xf32>
    %c0_541 = arith.constant 0 : index
    %c192_542 = arith.constant 192 : index
    %533 = vector.load %arg26[%c0_541, %c192_542] : memref<16x288xf32, #tpu.memory_space<vmem>>, vector<16x32xf32>
    tpu.vector_store %arg26[%c0_541, %c192_542], %532 {strides = array<i32>} : memref<16x288xf32, #tpu.memory_space<vmem>>, vector<16x32xf32>,
    %c9_543 = arith.constant 9 : index
    %c0_544 = arith.constant 0 : index
    %534 = vector.load %arg25[%c9_543, %c0_544] : memref<26x32xf32, #tpu.memory_space<vmem>>, vector<16x32xf32>
    %c0_545 = arith.constant 0 : index
    %c224_546 = arith.constant 224 : index
    %535 = vector.load %arg26[%c0_545, %c224_546] : memref<16x288xf32, #tpu.memory_space<vmem>>, vector<16x32xf32>
    tpu.vector_store %arg26[%c0_545, %c224_546], %534 {strides = array<i32>} : memref<16x288xf32, #tpu.memory_space<vmem>>, vector<16x32xf32>,
    %c10_547 = arith.constant 10 : index
    %c0_548 = arith.constant 0 : index
    %536 = vector.load %arg25[%c10_547, %c0_548] : memref<26x32xf32, #tpu.memory_space<vmem>>, vector<16x32xf32>
    %537 = vector.broadcast %422 : vector<16x1xf32> to vector<16x32xf32>
    %538 = arith.mulf %536, %537 : vector<16x32xf32>
    %c0_549 = arith.constant 0 : index
    %c256_550 = arith.constant 256 : index
    %539 = vector.load %arg26[%c0_549, %c256_550] : memref<16x288xf32, #tpu.memory_space<vmem>>, vector<16x32xf32>
    tpu.vector_store %arg26[%c0_549, %c256_550], %538 {strides = array<i32>} : memref<16x288xf32, #tpu.memory_space<vmem>>, vector<16x32xf32>,
    %c0_551 = arith.constant 0 : index
    %c0_552 = arith.constant 0 : index
    %540 = vector.load %arg26[%c0_551, %c0_552] : memref<16x288xf32, #tpu.memory_space<vmem>>, vector<16x288xf32>
    %541 = arith.truncf %540 : vector<16x288xf32> to vector<16x288xbf16>
    %c2_553 = arith.constant 2 : index
    %c0_554 = arith.constant 0 : index
    %c0_555 = arith.constant 0 : index
    %542 = vector.load %arg18[%c2_553, %c0_554, %c0_555] : memref<6x288x32xbf16, #tpu.memory_space<vmem>>, vector<1x288x32xbf16>
    %543 = vector.shape_cast %542 : vector<1x288x32xbf16> to vector<288x32xbf16>
    %cst_556 = arith.constant dense<0.000000e+00> : vector<16x32xf32>
    %544 = tpu.matmul %541, %543, %cst_556 {dimension_numbers = #tpu.dot_dimension_numbers<[1], [0], [0], [1], [0, 0, 1, 1], [], []>} : vector<16x288xbf16>, vector<288x32xbf16>, vector<16x32xf32> -> vector<16x32xf32>
    %c2_557 = arith.constant 2 : index
    %c0_558 = arith.constant 0 : index
    %c0_559 = arith.constant 0 : index
    %545 = vector.load %arg19[%c2_557, %c0_558, %c0_559] : memref<6x1x32xf32, #tpu.memory_space<vmem>>, vector<1x1x32xf32>
    %546 = vector.shape_cast %545 : vector<1x1x32xf32> to vector<1x32xf32>
    %547 = vector.broadcast %546 : vector<1x32xf32> to vector<16x32xf32>
    %548 = arith.addf %544, %547 : vector<16x32xf32>
    %cst_560 = arith.constant 0.000000e+00 : f32
    %549 = vector.broadcast %cst_560 : f32 to vector<16x32xf32>
    %550 = arith.maximumf %548, %549 : vector<16x32xf32>
    %c5_561 = arith.constant 5 : index
    %c0_562 = arith.constant 0 : index
    %551 = vector.load %arg25[%c5_561, %c0_562] : memref<26x32xf32, #tpu.memory_space<vmem>>, vector<16x32xf32>
    tpu.vector_store %arg25[%c5_561, %c0_562], %550 {strides = array<i32>} : memref<26x32xf32, #tpu.memory_space<vmem>>, vector<16x32xf32>,
    %c0_563 = arith.constant 0 : index
    %c0_564 = arith.constant 0 : index
    %552 = vector.load %arg25[%c0_563, %c0_564] : memref<26x32xf32, #tpu.memory_space<vmem>>, vector<16x32xf32>
    %553 = vector.broadcast %418 : vector<16x1xf32> to vector<16x32xf32>
    %554 = arith.mulf %552, %553 : vector<16x32xf32>
    %c0_565 = arith.constant 0 : index
    %c0_566 = arith.constant 0 : index
    %555 = vector.load %arg26[%c0_565, %c0_566] : memref<16x288xf32, #tpu.memory_space<vmem>>, vector<16x32xf32>
    tpu.vector_store %arg26[%c0_565, %c0_566], %554 {strides = array<i32>} : memref<16x288xf32, #tpu.memory_space<vmem>>, vector<16x32xf32>,
    %c1_567 = arith.constant 1 : index
    %c0_568 = arith.constant 0 : index
    %556 = vector.load %arg25[%c1_567, %c0_568] : memref<26x32xf32, #tpu.memory_space<vmem>>, vector<16x32xf32>
    %c0_569 = arith.constant 0 : index
    %c32_570 = arith.constant 32 : index
    %557 = vector.load %arg26[%c0_569, %c32_570] : memref<16x288xf32, #tpu.memory_space<vmem>>, vector<16x32xf32>
    tpu.vector_store %arg26[%c0_569, %c32_570], %556 {strides = array<i32>} : memref<16x288xf32, #tpu.memory_space<vmem>>, vector<16x32xf32>,
    %c2_571 = arith.constant 2 : index
    %c0_572 = arith.constant 0 : index
    %558 = vector.load %arg25[%c2_571, %c0_572] : memref<26x32xf32, #tpu.memory_space<vmem>>, vector<16x32xf32>
    %559 = vector.broadcast %422 : vector<16x1xf32> to vector<16x32xf32>
    %560 = arith.mulf %558, %559 : vector<16x32xf32>
    %c0_573 = arith.constant 0 : index
    %c64_574 = arith.constant 64 : index
    %561 = vector.load %arg26[%c0_573, %c64_574] : memref<16x288xf32, #tpu.memory_space<vmem>>, vector<16x32xf32>
    tpu.vector_store %arg26[%c0_573, %c64_574], %560 {strides = array<i32>} : memref<16x288xf32, #tpu.memory_space<vmem>>, vector<16x32xf32>,
    %c4_575 = arith.constant 4 : index
    %c0_576 = arith.constant 0 : index
    %562 = vector.load %arg25[%c4_575, %c0_576] : memref<26x32xf32, #tpu.memory_space<vmem>>, vector<16x32xf32>
    %563 = vector.broadcast %418 : vector<16x1xf32> to vector<16x32xf32>
    %564 = arith.mulf %562, %563 : vector<16x32xf32>
    %c0_577 = arith.constant 0 : index
    %c96_578 = arith.constant 96 : index
    %565 = vector.load %arg26[%c0_577, %c96_578] : memref<16x288xf32, #tpu.memory_space<vmem>>, vector<16x32xf32>
    tpu.vector_store %arg26[%c0_577, %c96_578], %564 {strides = array<i32>} : memref<16x288xf32, #tpu.memory_space<vmem>>, vector<16x32xf32>,
    %c5_579 = arith.constant 5 : index
    %c0_580 = arith.constant 0 : index
    %566 = vector.load %arg25[%c5_579, %c0_580] : memref<26x32xf32, #tpu.memory_space<vmem>>, vector<16x32xf32>
    %c0_581 = arith.constant 0 : index
    %c128_582 = arith.constant 128 : index
    %567 = vector.load %arg26[%c0_581, %c128_582] : memref<16x288xf32, #tpu.memory_space<vmem>>, vector<16x32xf32>
    tpu.vector_store %arg26[%c0_581, %c128_582], %566 {strides = array<i32>} : memref<16x288xf32, #tpu.memory_space<vmem>>, vector<16x32xf32>,
    %c6_583 = arith.constant 6 : index
    %c0_584 = arith.constant 0 : index
    %568 = vector.load %arg25[%c6_583, %c0_584] : memref<26x32xf32, #tpu.memory_space<vmem>>, vector<16x32xf32>
    %569 = vector.broadcast %422 : vector<16x1xf32> to vector<16x32xf32>
    %570 = arith.mulf %568, %569 : vector<16x32xf32>
    %c0_585 = arith.constant 0 : index
    %c160_586 = arith.constant 160 : index
    %571 = vector.load %arg26[%c0_585, %c160_586] : memref<16x288xf32, #tpu.memory_space<vmem>>, vector<16x32xf32>
    tpu.vector_store %arg26[%c0_585, %c160_586], %570 {strides = array<i32>} : memref<16x288xf32, #tpu.memory_space<vmem>>, vector<16x32xf32>,
    %c8_587 = arith.constant 8 : index
    %c0_588 = arith.constant 0 : index
    %572 = vector.load %arg25[%c8_587, %c0_588] : memref<26x32xf32, #tpu.memory_space<vmem>>, vector<16x32xf32>
    %573 = vector.broadcast %418 : vector<16x1xf32> to vector<16x32xf32>
    %574 = arith.mulf %572, %573 : vector<16x32xf32>
    %c0_589 = arith.constant 0 : index
    %c192_590 = arith.constant 192 : index
    %575 = vector.load %arg26[%c0_589, %c192_590] : memref<16x288xf32, #tpu.memory_space<vmem>>, vector<16x32xf32>
    tpu.vector_store %arg26[%c0_589, %c192_590], %574 {strides = array<i32>} : memref<16x288xf32, #tpu.memory_space<vmem>>, vector<16x32xf32>,
    %c9_591 = arith.constant 9 : index
    %c0_592 = arith.constant 0 : index
    %576 = vector.load %arg25[%c9_591, %c0_592] : memref<26x32xf32, #tpu.memory_space<vmem>>, vector<16x32xf32>
    %c0_593 = arith.constant 0 : index
    %c224_594 = arith.constant 224 : index
    %577 = vector.load %arg26[%c0_593, %c224_594] : memref<16x288xf32, #tpu.memory_space<vmem>>, vector<16x32xf32>
    tpu.vector_store %arg26[%c0_593, %c224_594], %576 {strides = array<i32>} : memref<16x288xf32, #tpu.memory_space<vmem>>, vector<16x32xf32>,
    %c10_595 = arith.constant 10 : index
    %c0_596 = arith.constant 0 : index
    %578 = vector.load %arg25[%c10_595, %c0_596] : memref<26x32xf32, #tpu.memory_space<vmem>>, vector<16x32xf32>
    %579 = vector.broadcast %422 : vector<16x1xf32> to vector<16x32xf32>
    %580 = arith.mulf %578, %579 : vector<16x32xf32>
    %c0_597 = arith.constant 0 : index
    %c256_598 = arith.constant 256 : index
    %581 = vector.load %arg26[%c0_597, %c256_598] : memref<16x288xf32, #tpu.memory_space<vmem>>, vector<16x32xf32>
    tpu.vector_store %arg26[%c0_597, %c256_598], %580 {strides = array<i32>} : memref<16x288xf32, #tpu.memory_space<vmem>>, vector<16x32xf32>,
    %c0_599 = arith.constant 0 : index
    %c0_600 = arith.constant 0 : index
    %582 = vector.load %arg26[%c0_599, %c0_600] : memref<16x288xf32, #tpu.memory_space<vmem>>, vector<16x288xf32>
    %583 = arith.truncf %582 : vector<16x288xf32> to vector<16x288xbf16>
    %c3_601 = arith.constant 3 : index
    %c0_602 = arith.constant 0 : index
    %c0_603 = arith.constant 0 : index
    %584 = vector.load %arg18[%c3_601, %c0_602, %c0_603] : memref<6x288x32xbf16, #tpu.memory_space<vmem>>, vector<1x288x32xbf16>
    %585 = vector.shape_cast %584 : vector<1x288x32xbf16> to vector<288x32xbf16>
    %cst_604 = arith.constant dense<0.000000e+00> : vector<16x32xf32>
    %586 = tpu.matmul %583, %585, %cst_604 {dimension_numbers = #tpu.dot_dimension_numbers<[1], [0], [0], [1], [0, 0, 1, 1], [], []>} : vector<16x288xbf16>, vector<288x32xbf16>, vector<16x32xf32> -> vector<16x32xf32>
    %c3_605 = arith.constant 3 : index
    %c0_606 = arith.constant 0 : index
    %c0_607 = arith.constant 0 : index
    %587 = vector.load %arg19[%c3_605, %c0_606, %c0_607] : memref<6x1x32xf32, #tpu.memory_space<vmem>>, vector<1x1x32xf32>
    %588 = vector.shape_cast %587 : vector<1x1x32xf32> to vector<1x32xf32>
    %589 = vector.broadcast %588 : vector<1x32xf32> to vector<16x32xf32>
    %590 = arith.addf %586, %589 : vector<16x32xf32>
    %c5_608 = arith.constant 5 : index
    %c0_609 = arith.constant 0 : index
    %591 = vector.load %arg25[%c5_608, %c0_609] : memref<26x32xf32, #tpu.memory_space<vmem>>, vector<16x32xf32>
    tpu.vector_store %arg25[%c5_608, %c0_609], %590 {strides = array<i32>} : memref<26x32xf32, #tpu.memory_space<vmem>>, vector<16x32xf32>,
    %c0_610 = arith.constant 0 : index
    %c0_611 = arith.constant 0 : index
    %592 = vector.load %arg25[%c0_610, %c0_611] : memref<26x32xf32, #tpu.memory_space<vmem>>, vector<16x32xf32>
    %593 = vector.broadcast %418 : vector<16x1xf32> to vector<16x32xf32>
    %594 = arith.mulf %592, %593 : vector<16x32xf32>
    %c0_612 = arith.constant 0 : index
    %c0_613 = arith.constant 0 : index
    %595 = vector.load %arg26[%c0_612, %c0_613] : memref<16x288xf32, #tpu.memory_space<vmem>>, vector<16x32xf32>
    tpu.vector_store %arg26[%c0_612, %c0_613], %594 {strides = array<i32>} : memref<16x288xf32, #tpu.memory_space<vmem>>, vector<16x32xf32>,
    %c1_614 = arith.constant 1 : index
    %c0_615 = arith.constant 0 : index
    %596 = vector.load %arg25[%c1_614, %c0_615] : memref<26x32xf32, #tpu.memory_space<vmem>>, vector<16x32xf32>
    %c0_616 = arith.constant 0 : index
    %c32_617 = arith.constant 32 : index
    %597 = vector.load %arg26[%c0_616, %c32_617] : memref<16x288xf32, #tpu.memory_space<vmem>>, vector<16x32xf32>
    tpu.vector_store %arg26[%c0_616, %c32_617], %596 {strides = array<i32>} : memref<16x288xf32, #tpu.memory_space<vmem>>, vector<16x32xf32>,
    %c2_618 = arith.constant 2 : index
    %c0_619 = arith.constant 0 : index
    %598 = vector.load %arg25[%c2_618, %c0_619] : memref<26x32xf32, #tpu.memory_space<vmem>>, vector<16x32xf32>
    %599 = vector.broadcast %422 : vector<16x1xf32> to vector<16x32xf32>
    %600 = arith.mulf %598, %599 : vector<16x32xf32>
    %c0_620 = arith.constant 0 : index
    %c64_621 = arith.constant 64 : index
    %601 = vector.load %arg26[%c0_620, %c64_621] : memref<16x288xf32, #tpu.memory_space<vmem>>, vector<16x32xf32>
    tpu.vector_store %arg26[%c0_620, %c64_621], %600 {strides = array<i32>} : memref<16x288xf32, #tpu.memory_space<vmem>>, vector<16x32xf32>,
    %c4_622 = arith.constant 4 : index
    %c0_623 = arith.constant 0 : index
    %602 = vector.load %arg25[%c4_622, %c0_623] : memref<26x32xf32, #tpu.memory_space<vmem>>, vector<16x32xf32>
    %603 = vector.broadcast %418 : vector<16x1xf32> to vector<16x32xf32>
    %604 = arith.mulf %602, %603 : vector<16x32xf32>
    %c0_624 = arith.constant 0 : index
    %c96_625 = arith.constant 96 : index
    %605 = vector.load %arg26[%c0_624, %c96_625] : memref<16x288xf32, #tpu.memory_space<vmem>>, vector<16x32xf32>
    tpu.vector_store %arg26[%c0_624, %c96_625], %604 {strides = array<i32>} : memref<16x288xf32, #tpu.memory_space<vmem>>, vector<16x32xf32>,
    %c5_626 = arith.constant 5 : index
    %c0_627 = arith.constant 0 : index
    %606 = vector.load %arg25[%c5_626, %c0_627] : memref<26x32xf32, #tpu.memory_space<vmem>>, vector<16x32xf32>
    %c0_628 = arith.constant 0 : index
    %c128_629 = arith.constant 128 : index
    %607 = vector.load %arg26[%c0_628, %c128_629] : memref<16x288xf32, #tpu.memory_space<vmem>>, vector<16x32xf32>
    tpu.vector_store %arg26[%c0_628, %c128_629], %606 {strides = array<i32>} : memref<16x288xf32, #tpu.memory_space<vmem>>, vector<16x32xf32>,
    %c6_630 = arith.constant 6 : index
    %c0_631 = arith.constant 0 : index
    %608 = vector.load %arg25[%c6_630, %c0_631] : memref<26x32xf32, #tpu.memory_space<vmem>>, vector<16x32xf32>
    %609 = vector.broadcast %422 : vector<16x1xf32> to vector<16x32xf32>
    %610 = arith.mulf %608, %609 : vector<16x32xf32>
    %c0_632 = arith.constant 0 : index
    %c160_633 = arith.constant 160 : index
    %611 = vector.load %arg26[%c0_632, %c160_633] : memref<16x288xf32, #tpu.memory_space<vmem>>, vector<16x32xf32>
    tpu.vector_store %arg26[%c0_632, %c160_633], %610 {strides = array<i32>} : memref<16x288xf32, #tpu.memory_space<vmem>>, vector<16x32xf32>,
    %c8_634 = arith.constant 8 : index
    %c0_635 = arith.constant 0 : index
    %612 = vector.load %arg25[%c8_634, %c0_635] : memref<26x32xf32, #tpu.memory_space<vmem>>, vector<16x32xf32>
    %613 = vector.broadcast %418 : vector<16x1xf32> to vector<16x32xf32>
    %614 = arith.mulf %612, %613 : vector<16x32xf32>
    %c0_636 = arith.constant 0 : index
    %c192_637 = arith.constant 192 : index
    %615 = vector.load %arg26[%c0_636, %c192_637] : memref<16x288xf32, #tpu.memory_space<vmem>>, vector<16x32xf32>
    tpu.vector_store %arg26[%c0_636, %c192_637], %614 {strides = array<i32>} : memref<16x288xf32, #tpu.memory_space<vmem>>, vector<16x32xf32>,
    %c9_638 = arith.constant 9 : index
    %c0_639 = arith.constant 0 : index
    %616 = vector.load %arg25[%c9_638, %c0_639] : memref<26x32xf32, #tpu.memory_space<vmem>>, vector<16x32xf32>
    %c0_640 = arith.constant 0 : index
    %c224_641 = arith.constant 224 : index
    %617 = vector.load %arg26[%c0_640, %c224_641] : memref<16x288xf32, #tpu.memory_space<vmem>>, vector<16x32xf32>
    tpu.vector_store %arg26[%c0_640, %c224_641], %616 {strides = array<i32>} : memref<16x288xf32, #tpu.memory_space<vmem>>, vector<16x32xf32>,
    %c10_642 = arith.constant 10 : index
    %c0_643 = arith.constant 0 : index
    %618 = vector.load %arg25[%c10_642, %c0_643] : memref<26x32xf32, #tpu.memory_space<vmem>>, vector<16x32xf32>
    %619 = vector.broadcast %422 : vector<16x1xf32> to vector<16x32xf32>
    %620 = arith.mulf %618, %619 : vector<16x32xf32>
    %c0_644 = arith.constant 0 : index
    %c256_645 = arith.constant 256 : index
    %621 = vector.load %arg26[%c0_644, %c256_645] : memref<16x288xf32, #tpu.memory_space<vmem>>, vector<16x32xf32>
    tpu.vector_store %arg26[%c0_644, %c256_645], %620 {strides = array<i32>} : memref<16x288xf32, #tpu.memory_space<vmem>>, vector<16x32xf32>,
    %c0_646 = arith.constant 0 : index
    %c0_647 = arith.constant 0 : index
    %622 = vector.load %arg26[%c0_646, %c0_647] : memref<16x288xf32, #tpu.memory_space<vmem>>, vector<16x288xf32>
    %623 = arith.truncf %622 : vector<16x288xf32> to vector<16x288xbf16>
    %c4_648 = arith.constant 4 : index
    %c0_649 = arith.constant 0 : index
    %c0_650 = arith.constant 0 : index
    %624 = vector.load %arg18[%c4_648, %c0_649, %c0_650] : memref<6x288x32xbf16, #tpu.memory_space<vmem>>, vector<1x288x32xbf16>
    %625 = vector.shape_cast %624 : vector<1x288x32xbf16> to vector<288x32xbf16>
    %cst_651 = arith.constant dense<0.000000e+00> : vector<16x32xf32>
    %626 = tpu.matmul %623, %625, %cst_651 {dimension_numbers = #tpu.dot_dimension_numbers<[1], [0], [0], [1], [0, 0, 1, 1], [], []>} : vector<16x288xbf16>, vector<288x32xbf16>, vector<16x32xf32> -> vector<16x32xf32>
    %c4_652 = arith.constant 4 : index
    %c0_653 = arith.constant 0 : index
    %c0_654 = arith.constant 0 : index
    %627 = vector.load %arg19[%c4_652, %c0_653, %c0_654] : memref<6x1x32xf32, #tpu.memory_space<vmem>>, vector<1x1x32xf32>
    %628 = vector.shape_cast %627 : vector<1x1x32xf32> to vector<1x32xf32>
    %629 = vector.broadcast %628 : vector<1x32xf32> to vector<16x32xf32>
    %630 = arith.addf %626, %629 : vector<16x32xf32>
    %c5_655 = arith.constant 5 : index
    %c0_656 = arith.constant 0 : index
    %631 = vector.load %arg25[%c5_655, %c0_656] : memref<26x32xf32, #tpu.memory_space<vmem>>, vector<16x32xf32>
    tpu.vector_store %arg25[%c5_655, %c0_656], %630 {strides = array<i32>} : memref<26x32xf32, #tpu.memory_space<vmem>>, vector<16x32xf32>,
    %c0_657 = arith.constant 0 : index
    %c0_658 = arith.constant 0 : index
    %632 = vector.load %arg25[%c0_657, %c0_658] : memref<26x32xf32, #tpu.memory_space<vmem>>, vector<16x32xf32>
    %633 = vector.broadcast %418 : vector<16x1xf32> to vector<16x32xf32>
    %634 = arith.mulf %632, %633 : vector<16x32xf32>
    %c0_659 = arith.constant 0 : index
    %c0_660 = arith.constant 0 : index
    %635 = vector.load %arg26[%c0_659, %c0_660] : memref<16x288xf32, #tpu.memory_space<vmem>>, vector<16x32xf32>
    tpu.vector_store %arg26[%c0_659, %c0_660], %634 {strides = array<i32>} : memref<16x288xf32, #tpu.memory_space<vmem>>, vector<16x32xf32>,
    %c1_661 = arith.constant 1 : index
    %c0_662 = arith.constant 0 : index
    %636 = vector.load %arg25[%c1_661, %c0_662] : memref<26x32xf32, #tpu.memory_space<vmem>>, vector<16x32xf32>
    %c0_663 = arith.constant 0 : index
    %c32_664 = arith.constant 32 : index
    %637 = vector.load %arg26[%c0_663, %c32_664] : memref<16x288xf32, #tpu.memory_space<vmem>>, vector<16x32xf32>
    tpu.vector_store %arg26[%c0_663, %c32_664], %636 {strides = array<i32>} : memref<16x288xf32, #tpu.memory_space<vmem>>, vector<16x32xf32>,
    %c2_665 = arith.constant 2 : index
    %c0_666 = arith.constant 0 : index
    %638 = vector.load %arg25[%c2_665, %c0_666] : memref<26x32xf32, #tpu.memory_space<vmem>>, vector<16x32xf32>
    %639 = vector.broadcast %422 : vector<16x1xf32> to vector<16x32xf32>
    %640 = arith.mulf %638, %639 : vector<16x32xf32>
    %c0_667 = arith.constant 0 : index
    %c64_668 = arith.constant 64 : index
    %641 = vector.load %arg26[%c0_667, %c64_668] : memref<16x288xf32, #tpu.memory_space<vmem>>, vector<16x32xf32>
    tpu.vector_store %arg26[%c0_667, %c64_668], %640 {strides = array<i32>} : memref<16x288xf32, #tpu.memory_space<vmem>>, vector<16x32xf32>,
    %c4_669 = arith.constant 4 : index
    %c0_670 = arith.constant 0 : index
    %642 = vector.load %arg25[%c4_669, %c0_670] : memref<26x32xf32, #tpu.memory_space<vmem>>, vector<16x32xf32>
    %643 = vector.broadcast %418 : vector<16x1xf32> to vector<16x32xf32>
    %644 = arith.mulf %642, %643 : vector<16x32xf32>
    %c0_671 = arith.constant 0 : index
    %c96_672 = arith.constant 96 : index
    %645 = vector.load %arg26[%c0_671, %c96_672] : memref<16x288xf32, #tpu.memory_space<vmem>>, vector<16x32xf32>
    tpu.vector_store %arg26[%c0_671, %c96_672], %644 {strides = array<i32>} : memref<16x288xf32, #tpu.memory_space<vmem>>, vector<16x32xf32>,
    %c5_673 = arith.constant 5 : index
    %c0_674 = arith.constant 0 : index
    %646 = vector.load %arg25[%c5_673, %c0_674] : memref<26x32xf32, #tpu.memory_space<vmem>>, vector<16x32xf32>
    %c0_675 = arith.constant 0 : index
    %c128_676 = arith.constant 128 : index
    %647 = vector.load %arg26[%c0_675, %c128_676] : memref<16x288xf32, #tpu.memory_space<vmem>>, vector<16x32xf32>
    tpu.vector_store %arg26[%c0_675, %c128_676], %646 {strides = array<i32>} : memref<16x288xf32, #tpu.memory_space<vmem>>, vector<16x32xf32>,
    %c6_677 = arith.constant 6 : index
    %c0_678 = arith.constant 0 : index
    %648 = vector.load %arg25[%c6_677, %c0_678] : memref<26x32xf32, #tpu.memory_space<vmem>>, vector<16x32xf32>
    %649 = vector.broadcast %422 : vector<16x1xf32> to vector<16x32xf32>
    %650 = arith.mulf %648, %649 : vector<16x32xf32>
    %c0_679 = arith.constant 0 : index
    %c160_680 = arith.constant 160 : index
    %651 = vector.load %arg26[%c0_679, %c160_680] : memref<16x288xf32, #tpu.memory_space<vmem>>, vector<16x32xf32>
    tpu.vector_store %arg26[%c0_679, %c160_680], %650 {strides = array<i32>} : memref<16x288xf32, #tpu.memory_space<vmem>>, vector<16x32xf32>,
    %c8_681 = arith.constant 8 : index
    %c0_682 = arith.constant 0 : index
    %652 = vector.load %arg25[%c8_681, %c0_682] : memref<26x32xf32, #tpu.memory_space<vmem>>, vector<16x32xf32>
    %653 = vector.broadcast %418 : vector<16x1xf32> to vector<16x32xf32>
    %654 = arith.mulf %652, %653 : vector<16x32xf32>
    %c0_683 = arith.constant 0 : index
    %c192_684 = arith.constant 192 : index
    %655 = vector.load %arg26[%c0_683, %c192_684] : memref<16x288xf32, #tpu.memory_space<vmem>>, vector<16x32xf32>
    tpu.vector_store %arg26[%c0_683, %c192_684], %654 {strides = array<i32>} : memref<16x288xf32, #tpu.memory_space<vmem>>, vector<16x32xf32>,
    %c9_685 = arith.constant 9 : index
    %c0_686 = arith.constant 0 : index
    %656 = vector.load %arg25[%c9_685, %c0_686] : memref<26x32xf32, #tpu.memory_space<vmem>>, vector<16x32xf32>
    %c0_687 = arith.constant 0 : index
    %c224_688 = arith.constant 224 : index
    %657 = vector.load %arg26[%c0_687, %c224_688] : memref<16x288xf32, #tpu.memory_space<vmem>>, vector<16x32xf32>
    tpu.vector_store %arg26[%c0_687, %c224_688], %656 {strides = array<i32>} : memref<16x288xf32, #tpu.memory_space<vmem>>, vector<16x32xf32>,
    %c10_689 = arith.constant 10 : index
    %c0_690 = arith.constant 0 : index
    %658 = vector.load %arg25[%c10_689, %c0_690] : memref<26x32xf32, #tpu.memory_space<vmem>>, vector<16x32xf32>
    %659 = vector.broadcast %422 : vector<16x1xf32> to vector<16x32xf32>
    %660 = arith.mulf %658, %659 : vector<16x32xf32>
    %c0_691 = arith.constant 0 : index
    %c256_692 = arith.constant 256 : index
    %661 = vector.load %arg26[%c0_691, %c256_692] : memref<16x288xf32, #tpu.memory_space<vmem>>, vector<16x32xf32>
    tpu.vector_store %arg26[%c0_691, %c256_692], %660 {strides = array<i32>} : memref<16x288xf32, #tpu.memory_space<vmem>>, vector<16x32xf32>,
    %c0_693 = arith.constant 0 : index
    %c0_694 = arith.constant 0 : index
    %662 = vector.load %arg26[%c0_693, %c0_694] : memref<16x288xf32, #tpu.memory_space<vmem>>, vector<16x288xf32>
    %663 = arith.truncf %662 : vector<16x288xf32> to vector<16x288xbf16>
    %c5_695 = arith.constant 5 : index
    %c0_696 = arith.constant 0 : index
    %c0_697 = arith.constant 0 : index
    %664 = vector.load %arg18[%c5_695, %c0_696, %c0_697] : memref<6x288x32xbf16, #tpu.memory_space<vmem>>, vector<1x288x32xbf16>
    %665 = vector.shape_cast %664 : vector<1x288x32xbf16> to vector<288x32xbf16>
    %cst_698 = arith.constant dense<0.000000e+00> : vector<16x32xf32>
    %666 = tpu.matmul %663, %665, %cst_698 {dimension_numbers = #tpu.dot_dimension_numbers<[1], [0], [0], [1], [0, 0, 1, 1], [], []>} : vector<16x288xbf16>, vector<288x32xbf16>, vector<16x32xf32> -> vector<16x32xf32>
    %c5_699 = arith.constant 5 : index
    %c0_700 = arith.constant 0 : index
    %c0_701 = arith.constant 0 : index
    %667 = vector.load %arg19[%c5_699, %c0_700, %c0_701] : memref<6x1x32xf32, #tpu.memory_space<vmem>>, vector<1x1x32xf32>
    %668 = vector.shape_cast %667 : vector<1x1x32xf32> to vector<1x32xf32>
    %669 = vector.broadcast %668 : vector<1x32xf32> to vector<16x32xf32>
    %670 = arith.addf %666, %669 : vector<16x32xf32>
    %671 = arith.addf %670, %429 : vector<16x32xf32>
    %672 = arith.truncf %671 : vector<16x32xf32> to vector<16x32xbf16>
    %c0_702 = arith.constant 0 : index
    %c0_703 = arith.constant 0 : index
    %673 = vector.load %arg20[%c0_702, %c0_703] : memref<32x128xbf16, #tpu.memory_space<vmem>>, vector<32x128xbf16>
    %cst_704 = arith.constant dense<0.000000e+00> : vector<16x128xf32>
    %674 = tpu.matmul %672, %673, %cst_704 {dimension_numbers = #tpu.dot_dimension_numbers<[1], [0], [0], [1], [0, 0, 1, 1], [], []>} : vector<16x32xbf16>, vector<32x128xbf16>, vector<16x128xf32> -> vector<16x128xf32>
    %c0_705 = arith.constant 0 : index
    %c0_706 = arith.constant 0 : index
    %675 = vector.load %arg21[%c0_705, %c0_706] : memref<1x128xf32, #tpu.memory_space<vmem>>, vector<1x128xf32>
    %676 = vector.broadcast %675 : vector<1x128xf32> to vector<16x128xf32>
    %677 = arith.addf %674, %676 : vector<16x128xf32>
    %cst_707 = arith.constant 0.000000e+00 : f32
    %678 = vector.broadcast %cst_707 : f32 to vector<16x128xf32>
    %679 = arith.maximumf %677, %678 : vector<16x128xf32>
    %c0_708 = arith.constant 0 : index
    %c0_709 = arith.constant 0 : index
    %c0_710 = arith.constant 0 : index
    %680 = vector.load %arg22[%c0_708, %c0_709, %c0_710] : memref<1x16x128xf32, #tpu.memory_space<vmem>>, vector<1x16x128xf32>
    %681 = vector.shape_cast %680 : vector<1x16x128xf32> to vector<16x128xf32>
    %682 = vector.shape_cast %679 : vector<16x128xf32> to vector<1x16x128xf32>
    tpu.vector_store %arg22[%c0_708, %c0_709, %c0_710], %682 {strides = array<i32>} : memref<1x16x128xf32, #tpu.memory_space<vmem>>, vector<1x16x128xf32>,
    return
  }
  func.func @transform_0(%arg0: i32) -> (i32, i32, i32) {
    %c0_i32 = arith.constant 0 : i32
    %c0_i32_0 = arith.constant 0 : i32
    %c0_i32_1 = arith.constant 0 : i32
    return %arg0, %c0_i32, %c0_i32_0 : i32, i32, i32
  }
  func.func @transform_1(%arg0: i32) -> (i32, i32) {
    %c0_i32 = arith.constant 0 : i32
    %c0_i32_0 = arith.constant 0 : i32
    %c0_i32_1 = arith.constant 0 : i32
    return %c0_i32, %c0_i32_0 : i32, i32
  }
  func.func @transform_2(%arg0: i32) -> (i32, i32) {
    %c0_i32 = arith.constant 0 : i32
    %c0_i32_0 = arith.constant 0 : i32
    %c0_i32_1 = arith.constant 0 : i32
    return %c0_i32, %c0_i32_0 : i32, i32
  }
  func.func @transform_3(%arg0: i32) -> (i32, i32) {
    %c0_i32 = arith.constant 0 : i32
    %c0_i32_0 = arith.constant 0 : i32
    %c0_i32_1 = arith.constant 0 : i32
    return %c0_i32, %c0_i32_0 : i32, i32
  }
  func.func @transform_4(%arg0: i32) -> (i32, i32) {
    %c0_i32 = arith.constant 0 : i32
    %c0_i32_0 = arith.constant 0 : i32
    %c0_i32_1 = arith.constant 0 : i32
    return %c0_i32, %c0_i32_0 : i32, i32
  }
  func.func @transform_5(%arg0: i32) -> (i32, i32, i32) {
    %c0_i32 = arith.constant 0 : i32
    %c0_i32_0 = arith.constant 0 : i32
    %c0_i32_1 = arith.constant 0 : i32
    %c0_i32_2 = arith.constant 0 : i32
    return %c0_i32, %c0_i32_0, %c0_i32_1 : i32, i32, i32
  }
  func.func @transform_6(%arg0: i32) -> (i32, i32, i32) {
    %c0_i32 = arith.constant 0 : i32
    %c0_i32_0 = arith.constant 0 : i32
    %c0_i32_1 = arith.constant 0 : i32
    %c0_i32_2 = arith.constant 0 : i32
    return %c0_i32, %c0_i32_0, %c0_i32_1 : i32, i32, i32
  }
  func.func @transform_7(%arg0: i32) -> (i32, i32) {
    %c0_i32 = arith.constant 0 : i32
    %c0_i32_0 = arith.constant 0 : i32
    %c0_i32_1 = arith.constant 0 : i32
    return %c0_i32, %c0_i32_0 : i32, i32
  }
  func.func @transform_8(%arg0: i32) -> (i32, i32) {
    %c0_i32 = arith.constant 0 : i32
    %c0_i32_0 = arith.constant 0 : i32
    %c0_i32_1 = arith.constant 0 : i32
    return %c0_i32, %c0_i32_0 : i32, i32
  }
  func.func @transform_9(%arg0: i32) -> (i32, i32) {
    %c0_i32 = arith.constant 0 : i32
    %c0_i32_0 = arith.constant 0 : i32
    %c0_i32_1 = arith.constant 0 : i32
    return %c0_i32, %c0_i32_0 : i32, i32
  }
  func.func @transform_10(%arg0: i32) -> (i32, i32) {
    %c0_i32 = arith.constant 0 : i32
    %c0_i32_0 = arith.constant 0 : i32
    %c0_i32_1 = arith.constant 0 : i32
    return %c0_i32, %c0_i32_0 : i32, i32
  }
  func.func @transform_11(%arg0: i32) -> (i32, i32, i32) {
    %c0_i32 = arith.constant 0 : i32
    %c0_i32_0 = arith.constant 0 : i32
    %c0_i32_1 = arith.constant 0 : i32
    %c0_i32_2 = arith.constant 0 : i32
    return %c0_i32, %c0_i32_0, %c0_i32_1 : i32, i32, i32
  }
  func.func @transform_12(%arg0: i32) -> (i32, i32, i32) {
    %c0_i32 = arith.constant 0 : i32
    %c0_i32_0 = arith.constant 0 : i32
    %c0_i32_1 = arith.constant 0 : i32
    %c0_i32_2 = arith.constant 0 : i32
    return %c0_i32, %c0_i32_0, %c0_i32_1 : i32, i32, i32
  }
  func.func @transform_13(%arg0: i32) -> (i32, i32) {
    %c0_i32 = arith.constant 0 : i32
    %c0_i32_0 = arith.constant 0 : i32
    %c0_i32_1 = arith.constant 0 : i32
    return %c0_i32, %c0_i32_0 : i32, i32
  }
  func.func @transform_14(%arg0: i32) -> (i32, i32) {
    %c0_i32 = arith.constant 0 : i32
    %c0_i32_0 = arith.constant 0 : i32
    %c0_i32_1 = arith.constant 0 : i32
    return %c0_i32, %c0_i32_0 : i32, i32
  }
  func.func @transform_15(%arg0: i32) -> (i32, i32) {
    %c0_i32 = arith.constant 0 : i32
    %c0_i32_0 = arith.constant 0 : i32
    %c0_i32_1 = arith.constant 0 : i32
    return %c0_i32, %c0_i32_0 : i32, i32
  }
  func.func @transform_16(%arg0: i32) -> (i32, i32) {
    %c0_i32 = arith.constant 0 : i32
    %c0_i32_0 = arith.constant 0 : i32
    %c0_i32_1 = arith.constant 0 : i32
    return %c0_i32, %c0_i32_0 : i32, i32
  }
  func.func @transform_17(%arg0: i32) -> (i32, i32, i32) {
    %c0_i32 = arith.constant 0 : i32
    %c0_i32_0 = arith.constant 0 : i32
    %c0_i32_1 = arith.constant 0 : i32
    %c0_i32_2 = arith.constant 0 : i32
    return %c0_i32, %c0_i32_0, %c0_i32_1 : i32, i32, i32
  }
  func.func @transform_18(%arg0: i32) -> (i32, i32, i32) {
    %c0_i32 = arith.constant 0 : i32
    %c0_i32_0 = arith.constant 0 : i32
    %c0_i32_1 = arith.constant 0 : i32
    %c0_i32_2 = arith.constant 0 : i32
    return %c0_i32, %c0_i32_0, %c0_i32_1 : i32, i32, i32
  }
  func.func @transform_19(%arg0: i32) -> (i32, i32) {
    %c0_i32 = arith.constant 0 : i32
    %c0_i32_0 = arith.constant 0 : i32
    %c0_i32_1 = arith.constant 0 : i32
    return %c0_i32, %c0_i32_0 : i32, i32
  }
  func.func @transform_20(%arg0: i32) -> (i32, i32) {
    %c0_i32 = arith.constant 0 : i32
    %c0_i32_0 = arith.constant 0 : i32
    %c0_i32_1 = arith.constant 0 : i32
    return %c0_i32, %c0_i32_0 : i32, i32
  }
  func.func @transform_21(%arg0: i32) -> (i32, i32, i32) {
    %c0_i32 = arith.constant 0 : i32
    %c0_i32_0 = arith.constant 0 : i32
    %c0_i32_1 = arith.constant 0 : i32
    return %arg0, %c0_i32, %c0_i32_0 : i32, i32, i32
  }
}

</mosaic_0001>

<llo_original>
// kernel: decoder_forward.1
$region0: #{decoder_forward.1}
  #allocation0 [shape = 'u32[]', space=smem, size = 0x4, offset = 0x4, fixed_abs, tag = 'smem constant byte address 0x4 - core index']
  #allocation1 [shape = 'u32[144,128]{1,0:T(1,128)}', space=vmem, size = 0x12000, scoped, tag = 'internal scratch']
  #allocation2 [shape = 'f32[10,32]{1,0:T(8,128)}', space=vmem, size = 0x2000, scoped, tag = 'scratch operand']
  #allocation3 [shape = 'f32[4,288]{1,0:T(4,128)}', space=vmem, size = 0x1800, scoped, tag = 'scratch operand']
  #allocation4 [shape = 'f32[26,32]{1,0:T(8,128)}', space=vmem, size = 0x4000, scoped, tag = 'scratch operand']
  #allocation5 [shape = 'f32[16,288]{1,0:T(8,128)}', space=vmem, size = 0x6000, scoped, tag = 'scratch operand']
  %s0 = inlined_call_operand.vmem [shape: f32[2,1,8], index: 0, kind: input, shape index: {}]
  %s1 = inlined_call_operand.vmem [shape: f32[8,32], index: 1, kind: input, shape index: {}]
  %s2 = inlined_call_operand.vmem [shape: f32[1,32], index: 2, kind: input, shape index: {}]
  %s3 = inlined_call_operand.vmem [shape: bf16[32,32], index: 3, kind: input, shape index: {}]
  %s4 = inlined_call_operand.vmem [shape: f32[1,32], index: 4, kind: input, shape index: {}]
  %s5 = inlined_call_operand.vmem [shape: bf16[6,288,32], index: 5, kind: input, shape index: {}]
  %s6 = inlined_call_operand.vmem [shape: f32[6,1,32], index: 6, kind: input, shape index: {}]
  %s7 = inlined_call_operand.vmem [shape: bf16[32,128], index: 7, kind: input, shape index: {}]
  %s8 = inlined_call_operand.vmem [shape: f32[1,128], index: 8, kind: input, shape index: {}]
  %s9 = inlined_call_operand.vmem [shape: bf16[32,32], index: 9, kind: input, shape index: {}]
  %s10 = inlined_call_operand.vmem [shape: f32[1,32], index: 10, kind: input, shape index: {}]
  %s11 = inlined_call_operand.vmem [shape: bf16[6,288,32], index: 11, kind: input, shape index: {}]
  %s12 = inlined_call_operand.vmem [shape: f32[6,1,32], index: 12, kind: input, shape index: {}]
  %s13 = inlined_call_operand.vmem [shape: bf16[32,128], index: 13, kind: input, shape index: {}]
  %s14 = inlined_call_operand.vmem [shape: f32[1,128], index: 14, kind: input, shape index: {}]
  %s15 = inlined_call_operand.vmem [shape: bf16[32,32], index: 15, kind: input, shape index: {}]
  %s16 = inlined_call_operand.vmem [shape: f32[1,32], index: 16, kind: input, shape index: {}]
  %s17 = inlined_call_operand.vmem [shape: bf16[6,288,32], index: 17, kind: input, shape index: {}]
  %s18 = inlined_call_operand.vmem [shape: f32[6,1,32], index: 18, kind: input, shape index: {}]
  %s19 = inlined_call_operand.vmem [shape: bf16[32,128], index: 19, kind: input, shape index: {}]
  %s20 = inlined_call_operand.vmem [shape: f32[1,128], index: 20, kind: input, shape index: {}]
  %s21 = inlined_call_operand.vmem [shape: f32[2,16,128], index: 21, kind: output, shape index: {}]
  %s22 = sld [smem:[#allocation0]]
  $region117: #{decoder_forward.1} parent=0
    _
  %s24 = ssub.s32 1, %s22
  %s25 = scalar_select 0, %s24, %s22
  loop: start=0, step=1, limit=4
  $region2: #{decoder_forward.1} parent=0 // loop_pre_header
    _
  $region3: #{decoder_forward.1} parent=0 // loop_header
    %s27 = sphi 0, %s31
    %p28 = scmp.ge.s32.totalorder %s27, 4
    %s37 = sphi 0, %s39
    %s40 = sphi 0, %s37
    %s41 = sphi 0, %s40
    %s57 = sphi 0, %s41
    %s61 = sphi 0, %s61
    %s63 = sphi 0, %s61
    %s64 = sphi 0, %s63
    %s78 = sphi 0, %s64
    %s82 = sphi 0, %s82
    %s84 = sphi 0, %s82
    %s85 = sphi 0, %s84
    %s99 = sphi 0, %s85
    %s103 = sphi 0, %s103
    %s105 = sphi 0, %s103
    %s106 = sphi 0, %s105
    %s120 = sphi 0, %s106
    %s124 = sphi 0, %s124
    %s126 = sphi 0, %s124
    %s127 = sphi 0, %s126
    %s141 = sphi 0, %s127
    %s145 = sphi 0, %s145
    %s147 = sphi 0, %s145
    %s148 = sphi 0, %s147
    %s162 = sphi 0, %s148
    %s166 = sphi 0, %s166
    %s168 = sphi 0, %s166
    %s169 = sphi 0, %s168
    %s183 = sphi 0, %s169
    %s187 = sphi 0, %s187
    %s189 = sphi 0, %s187
    %s190 = sphi 0, %s189
    %s204 = sphi 0, %s190
    %s208 = sphi 0, %s208
    %s210 = sphi 0, %s208
    %s211 = sphi 0, %s210
    %s225 = sphi 0, %s211
    %s229 = sphi 0, %s229
    %s231 = sphi 0, %s229
    %s232 = sphi 0, %s231
    %s246 = sphi 0, %s232
    %s250 = sphi 0, %s250
    %s252 = sphi 0, %s250
    %s253 = sphi 0, %s252
    %s267 = sphi 0, %s253
    %s271 = sphi 0, %s271
    %s273 = sphi 0, %s271
    %s274 = sphi 0, %s273
    %s288 = sphi 0, %s274
    %s292 = sphi 0, %s292
    %s294 = sphi 0, %s292
    %s295 = sphi 0, %s294
    %s309 = sphi 0, %s295
    %s313 = sphi 0, %s313
    %s315 = sphi 0, %s313
    %s316 = sphi 0, %s315
    %s330 = sphi 0, %s316
    %s334 = sphi 0, %s334
    %s336 = sphi 0, %s334
    %s337 = sphi 0, %s336
    %s351 = sphi 0, %s337
    %s355 = sphi 0, %s355
    %s357 = sphi 0, %s355
    %s358 = sphi 0, %s357
    %s372 = sphi 0, %s358
    %s376 = sphi 0, %s376
    %s378 = sphi 0, %s376
    %s379 = sphi 0, %s378
    %s393 = sphi 0, %s379
    %s397 = sphi 0, %s397
    %s399 = sphi 0, %s397
    %s400 = sphi 0, %s399
    %s414 = sphi 0, %s400
    %s418 = sphi 0, %s418
    %s420 = sphi 0, %s418
    %s421 = sphi 0, %s420
    %s435 = sphi 0, %s421
    %s439 = sphi 0, %s439
    %s441 = sphi 0, %s439
    %s442 = sphi 0, %s441
    %s456 = sphi 0, %s442
    %s460 = sphi 0, %s460
    %s462 = sphi 0, %s460
    %s463 = sphi 0, %s462
    %s477 = sphi 0, %s463
    %s483 = sphi 0, %s485
    %s486 = sphi 0, %s483
    %s487 = sphi 0, %s486
    %s503 = sphi 0, %s487
  $region4: #{decoder_forward.1} parent=0 // loop_header_branch
    %30 = sbr.rel (%p28) target = $region8
  $region5: #{decoder_forward.1} parent=0 // loop_body
    %s32 = ssub.s32 %s27, 1
    %s33 = ssub.s32 %s27, 2
    %s34 = sadd.s32 %s27, 1
    %s35 = ssub.s32 %s27, %s34
    %p36 = scmp.eq.s32.totalorder %s35, 0
    %s38 = sadd.s32 %s37, 1
    %s39 = scalar_select %p36, %s37, %s38
    %p42 = pneg %p36
    %p43 = scmp.eq.s32.totalorder %s27, 1
    %p44 = por %p42, %p43
    %p45 = scmp.ne.s32.totalorder %s37, %s40
    %p46 = scmp.eq.s32.totalorder %s27, 0
    %p47 = por %p45, %p46
    %p48 = scmp.ne.s32.totalorder %s37, %s40
    %p49 = scmp.eq.s32.totalorder %s32, 1
    %p50 = por %p48, %p49
    %p51 = scmp.ne.s32.totalorder %s40, %s41
    %p52 = scmp.eq.s32.totalorder %s32, 0
    %p53 = por %p51, %p52
    %p54 = scmp.ne.s32.totalorder %s40, %s41
    %p55 = scmp.eq.s32.totalorder %s33, 1
    %p56 = por %p54, %p55
    %p58 = scmp.ne.s32.totalorder %s41, %s57
    %p59 = scmp.eq.s32.totalorder %s33, 0
    %p60 = por %p58, %p59
    %s62 = sadd.s32 %s61, 1
    %p65 = scmp.eq.s32.totalorder %s27, 1
    %p66 = scmp.ne.s32.totalorder %s61, %s63
    %p67 = scmp.eq.s32.totalorder %s27, 0
    %p68 = por %p66, %p67
    %p69 = scmp.ne.s32.totalorder %s61, %s63
    %p70 = scmp.eq.s32.totalorder %s32, 1
    %p71 = por %p69, %p70
    %p72 = scmp.ne.s32.totalorder %s63, %s64
    %p73 = scmp.eq.s32.totalorder %s32, 0
    %p74 = por %p72, %p73
    %p75 = scmp.ne.s32.totalorder %s63, %s64
    %p76 = scmp.eq.s32.totalorder %s33, 1
    %p77 = por %p75, %p76
    %p79 = scmp.ne.s32.totalorder %s64, %s78
    %p80 = scmp.eq.s32.totalorder %s33, 0
    %p81 = por %p79, %p80
    %s83 = sadd.s32 %s82, 1
    %p86 = scmp.eq.s32.totalorder %s27, 1
    %p87 = scmp.ne.s32.totalorder %s82, %s84
    %p88 = scmp.eq.s32.totalorder %s27, 0
    %p89 = por %p87, %p88
    %p90 = scmp.ne.s32.totalorder %s82, %s84
    %p91 = scmp.eq.s32.totalorder %s32, 1
    %p92 = por %p90, %p91
    %p93 = scmp.ne.s32.totalorder %s84, %s85
    %p94 = scmp.eq.s32.totalorder %s32, 0
    %p95 = por %p93, %p94
    %p96 = scmp.ne.s32.totalorder %s84, %s85
    %p97 = scmp.eq.s32.totalorder %s33, 1
    %p98 = por %p96, %p97
    %p100 = scmp.ne.s32.totalorder %s85, %s99
    %p101 = scmp.eq.s32.totalorder %s33, 0
    %p102 = por %p100, %p101
    %s104 = sadd.s32 %s103, 1
    %p107 = scmp.eq.s32.totalorder %s27, 1
    %p108 = scmp.ne.s32.totalorder %s103, %s105
    %p109 = scmp.eq.s32.totalorder %s27, 0
    %p110 = por %p108, %p109
    %p111 = scmp.ne.s32.totalorder %s103, %s105
    %p112 = scmp.eq.s32.totalorder %s32, 1
    %p113 = por %p111, %p112
    %p114 = scmp.ne.s32.totalorder %s105, %s106
    %p115 = scmp.eq.s32.totalorder %s32, 0
    %p116 = por %p114, %p115
    %p117 = scmp.ne.s32.totalorder %s105, %s106
    %p118 = scmp.eq.s32.totalorder %s33, 1
    %p119 = por %p117, %p118
    %p121 = scmp.ne.s32.totalorder %s106, %s120
    %p122 = scmp.eq.s32.totalorder %s33, 0
    %p123 = por %p121, %p122
    %s125 = sadd.s32 %s124, 1
    %p128 = scmp.eq.s32.totalorder %s27, 1
    %p129 = scmp.ne.s32.totalorder %s124, %s126
    %p130 = scmp.eq.s32.totalorder %s27, 0
    %p131 = por %p129, %p130
    %p132 = scmp.ne.s32.totalorder %s124, %s126
    %p133 = scmp.eq.s32.totalorder %s32, 1
    %p134 = por %p132, %p133
    %p135 = scmp.ne.s32.totalorder %s126, %s127
    %p136 = scmp.eq.s32.totalorder %s32, 0
    %p137 = por %p135, %p136
    %p138 = scmp.ne.s32.totalorder %s126, %s127
    %p139 = scmp.eq.s32.totalorder %s33, 1
    %p140 = por %p138, %p139
    %p142 = scmp.ne.s32.totalorder %s127, %s141
    %p143 = scmp.eq.s32.totalorder %s33, 0
    %p144 = por %p142, %p143
    %s146 = sadd.s32 %s145, 1
    %p149 = scmp.eq.s32.totalorder %s27, 1
    %p150 = scmp.ne.s32.totalorder %s145, %s147
    %p151 = scmp.eq.s32.totalorder %s27, 0
    %p152 = por %p150, %p151
    %p153 = scmp.ne.s32.totalorder %s145, %s147
    %p154 = scmp.eq.s32.totalorder %s32, 1
    %p155 = por %p153, %p154
    %p156 = scmp.ne.s32.totalorder %s147, %s148
    %p157 = scmp.eq.s32.totalorder %s32, 0
    %p158 = por %p156, %p157
    %p159 = scmp.ne.s32.totalorder %s147, %s148
    %p160 = scmp.eq.s32.totalorder %s33, 1
    %p161 = por %p159, %p160
    %p163 = scmp.ne.s32.totalorder %s148, %s162
    %p164 = scmp.eq.s32.totalorder %s33, 0
    %p165 = por %p163, %p164
    %s167 = sadd.s32 %s166, 1
    %p170 = scmp.eq.s32.totalorder %s27, 1
    %p171 = scmp.ne.s32.totalorder %s166, %s168
    %p172 = scmp.eq.s32.totalorder %s27, 0
    %p173 = por %p171, %p172
    %p174 = scmp.ne.s32.totalorder %s166, %s168
    %p175 = scmp.eq.s32.totalorder %s32, 1
    %p176 = por %p174, %p175
    %p177 = scmp.ne.s32.totalorder %s168, %s169
    %p178 = scmp.eq.s32.totalorder %s32, 0
    %p179 = por %p177, %p178
    %p180 = scmp.ne.s32.totalorder %s168, %s169
    %p181 = scmp.eq.s32.totalorder %s33, 1
    %p182 = por %p180, %p181
    %p184 = scmp.ne.s32.totalorder %s169, %s183
    %p185 = scmp.eq.s32.totalorder %s33, 0
    %p186 = por %p184, %p185
    %s188 = sadd.s32 %s187, 1
    %p191 = scmp.eq.s32.totalorder %s27, 1
    %p192 = scmp.ne.s32.totalorder %s187, %s189
    %p193 = scmp.eq.s32.totalorder %s27, 0
    %p194 = por %p192, %p193
    %p195 = scmp.ne.s32.totalorder %s187, %s189
    %p196 = scmp.eq.s32.totalorder %s32, 1
    %p197 = por %p195, %p196
    %p198 = scmp.ne.s32.totalorder %s189, %s190
    %p199 = scmp.eq.s32.totalorder %s32, 0
    %p200 = por %p198, %p199
    %p201 = scmp.ne.s32.totalorder %s189, %s190
    %p202 = scmp.eq.s32.totalorder %s33, 1
    %p203 = por %p201, %p202
    %p205 = scmp.ne.s32.totalorder %s190, %s204
    %p206 = scmp.eq.s32.totalorder %s33, 0
    %p207 = por %p205, %p206
    %s209 = sadd.s32 %s208, 1
    %p212 = scmp.eq.s32.totalorder %s27, 1
    %p213 = scmp.ne.s32.totalorder %s208, %s210
    %p214 = scmp.eq.s32.totalorder %s27, 0
    %p215 = por %p213, %p214
    %p216 = scmp.ne.s32.totalorder %s208, %s210
    %p217 = scmp.eq.s32.totalorder %s32, 1
    %p218 = por %p216, %p217
    %p219 = scmp.ne.s32.totalorder %s210, %s211
    %p220 = scmp.eq.s32.totalorder %s32, 0
    %p221 = por %p219, %p220
    %p222 = scmp.ne.s32.totalorder %s210, %s211
    %p223 = scmp.eq.s32.totalorder %s33, 1
    %p224 = por %p222, %p223
    %p226 = scmp.ne.s32.totalorder %s211, %s225
    %p227 = scmp.eq.s32.totalorder %s33, 0
    %p228 = por %p226, %p227
    %s230 = sadd.s32 %s229, 1
    %p233 = scmp.eq.s32.totalorder %s27, 1
    %p234 = scmp.ne.s32.totalorder %s229, %s231
    %p235 = scmp.eq.s32.totalorder %s27, 0
    %p236 = por %p234, %p235
    %p237 = scmp.ne.s32.totalorder %s229, %s231
    %p238 = scmp.eq.s32.totalorder %s32, 1
    %p239 = por %p237, %p238
    %p240 = scmp.ne.s32.totalorder %s231, %s232
    %p241 = scmp.eq.s32.totalorder %s32, 0
    %p242 = por %p240, %p241
    %p243 = scmp.ne.s32.totalorder %s231, %s232
    %p244 = scmp.eq.s32.totalorder %s33, 1
    %p245 = por %p243, %p244
    %p247 = scmp.ne.s32.totalorder %s232, %s246
    %p248 = scmp.eq.s32.totalorder %s33, 0
    %p249 = por %p247, %p248
    %s251 = sadd.s32 %s250, 1
    %p254 = scmp.eq.s32.totalorder %s27, 1
    %p255 = scmp.ne.s32.totalorder %s250, %s252
    %p256 = scmp.eq.s32.totalorder %s27, 0
    %p257 = por %p255, %p256
    %p258 = scmp.ne.s32.totalorder %s250, %s252
    %p259 = scmp.eq.s32.totalorder %s32, 1
    %p260 = por %p258, %p259
    %p261 = scmp.ne.s32.totalorder %s252, %s253
    %p262 = scmp.eq.s32.totalorder %s32, 0
    %p263 = por %p261, %p262
    %p264 = scmp.ne.s32.totalorder %s252, %s253
    %p265 = scmp.eq.s32.totalorder %s33, 1
    %p266 = por %p264, %p265
    %p268 = scmp.ne.s32.totalorder %s253, %s267
    %p269 = scmp.eq.s32.totalorder %s33, 0
    %p270 = por %p268, %p269
    %s272 = sadd.s32 %s271, 1
    %p275 = scmp.eq.s32.totalorder %s27, 1
    %p276 = scmp.ne.s32.totalorder %s271, %s273
    %p277 = scmp.eq.s32.totalorder %s27, 0
    %p278 = por %p276, %p277
    %p279 = scmp.ne.s32.totalorder %s271, %s273
    %p280 = scmp.eq.s32.totalorder %s32, 1
    %p281 = por %p279, %p280
    %p282 = scmp.ne.s32.totalorder %s273, %s274
    %p283 = scmp.eq.s32.totalorder %s32, 0
    %p284 = por %p282, %p283
    %p285 = scmp.ne.s32.totalorder %s273, %s274
    %p286 = scmp.eq.s32.totalorder %s33, 1
    %p287 = por %p285, %p286
    %p289 = scmp.ne.s32.totalorder %s274, %s288
    %p290 = scmp.eq.s32.totalorder %s33, 0
    %p291 = por %p289, %p290
    %s293 = sadd.s32 %s292, 1
    %p296 = scmp.eq.s32.totalorder %s27, 1
    %p297 = scmp.ne.s32.totalorder %s292, %s294
    %p298 = scmp.eq.s32.totalorder %s27, 0
    %p299 = por %p297, %p298
    %p300 = scmp.ne.s32.totalorder %s292, %s294
    %p301 = scmp.eq.s32.totalorder %s32, 1
    %p302 = por %p300, %p301
    %p303 = scmp.ne.s32.totalorder %s294, %s295
    %p304 = scmp.eq.s32.totalorder %s32, 0
    %p305 = por %p303, %p304
    %p306 = scmp.ne.s32.totalorder %s294, %s295
    %p307 = scmp.eq.s32.totalorder %s33, 1
    %p308 = por %p306, %p307
    %p310 = scmp.ne.s32.totalorder %s295, %s309
    %p311 = scmp.eq.s32.totalorder %s33, 0
    %p312 = por %p310, %p311
    %s314 = sadd.s32 %s313, 1
    %p317 = scmp.eq.s32.totalorder %s27, 1
    %p318 = scmp.ne.s32.totalorder %s313, %s315
    %p319 = scmp.eq.s32.totalorder %s27, 0
    %p320 = por %p318, %p319
    %p321 = scmp.ne.s32.totalorder %s313, %s315
    %p322 = scmp.eq.s32.totalorder %s32, 1
    %p323 = por %p321, %p322
    %p324 = scmp.ne.s32.totalorder %s315, %s316
    %p325 = scmp.eq.s32.totalorder %s32, 0
    %p326 = por %p324, %p325
    %p327 = scmp.ne.s32.totalorder %s315, %s316
    %p328 = scmp.eq.s32.totalorder %s33, 1
    %p329 = por %p327, %p328
    %p331 = scmp.ne.s32.totalorder %s316, %s330
    %p332 = scmp.eq.s32.totalorder %s33, 0
    %p333 = por %p331, %p332
    %s335 = sadd.s32 %s334, 1
    %p338 = scmp.eq.s32.totalorder %s27, 1
    %p339 = scmp.ne.s32.totalorder %s334, %s336
    %p340 = scmp.eq.s32.totalorder %s27, 0
    %p341 = por %p339, %p340
    %p342 = scmp.ne.s32.totalorder %s334, %s336
    %p343 = scmp.eq.s32.totalorder %s32, 1
    %p344 = por %p342, %p343
    %p345 = scmp.ne.s32.totalorder %s336, %s337
    %p346 = scmp.eq.s32.totalorder %s32, 0
    %p347 = por %p345, %p346
    %p348 = scmp.ne.s32.totalorder %s336, %s337
    %p349 = scmp.eq.s32.totalorder %s33, 1
    %p350 = por %p348, %p349
    %p352 = scmp.ne.s32.totalorder %s337, %s351
    %p353 = scmp.eq.s32.totalorder %s33, 0
    %p354 = por %p352, %p353
    %s356 = sadd.s32 %s355, 1
    %p359 = scmp.eq.s32.totalorder %s27, 1
    %p360 = scmp.ne.s32.totalorder %s355, %s357
    %p361 = scmp.eq.s32.totalorder %s27, 0
    %p362 = por %p360, %p361
    %p363 = scmp.ne.s32.totalorder %s355, %s357
    %p364 = scmp.eq.s32.totalorder %s32, 1
    %p365 = por %p363, %p364
    %p366 = scmp.ne.s32.totalorder %s357, %s358
    %p367 = scmp.eq.s32.totalorder %s32, 0
    %p368 = por %p366, %p367
    %p369 = scmp.ne.s32.totalorder %s357, %s358
    %p370 = scmp.eq.s32.totalorder %s33, 1
    %p371 = por %p369, %p370
    %p373 = scmp.ne.s32.totalorder %s358, %s372
    %p374 = scmp.eq.s32.totalorder %s33, 0
    %p375 = por %p373, %p374
    %s377 = sadd.s32 %s376, 1
    %p380 = scmp.eq.s32.totalorder %s27, 1
    %p381 = scmp.ne.s32.totalorder %s376, %s378
    %p382 = scmp.eq.s32.totalorder %s27, 0
    %p383 = por %p381, %p382
    %p384 = scmp.ne.s32.totalorder %s376, %s378
    %p385 = scmp.eq.s32.totalorder %s32, 1
    %p386 = por %p384, %p385
    %p387 = scmp.ne.s32.totalorder %s378, %s379
    %p388 = scmp.eq.s32.totalorder %s32, 0
    %p389 = por %p387, %p388
    %p390 = scmp.ne.s32.totalorder %s378, %s379
    %p391 = scmp.eq.s32.totalorder %s33, 1
    %p392 = por %p390, %p391
    %p394 = scmp.ne.s32.totalorder %s379, %s393
    %p395 = scmp.eq.s32.totalorder %s33, 0
    %p396 = por %p394, %p395
    %s398 = sadd.s32 %s397, 1
    %p401 = scmp.eq.s32.totalorder %s27, 1
    %p402 = scmp.ne.s32.totalorder %s397, %s399
    %p403 = scmp.eq.s32.totalorder %s27, 0
    %p404 = por %p402, %p403
    %p405 = scmp.ne.s32.totalorder %s397, %s399
    %p406 = scmp.eq.s32.totalorder %s32, 1
    %p407 = por %p405, %p406
    %p408 = scmp.ne.s32.totalorder %s399, %s400
    %p409 = scmp.eq.s32.totalorder %s32, 0
    %p410 = por %p408, %p409
    %p411 = scmp.ne.s32.totalorder %s399, %s400
    %p412 = scmp.eq.s32.totalorder %s33, 1
    %p413 = por %p411, %p412
    %p415 = scmp.ne.s32.totalorder %s400, %s414
    %p416 = scmp.eq.s32.totalorder %s33, 0
    %p417 = por %p415, %p416
    %s419 = sadd.s32 %s418, 1
    %p422 = scmp.eq.s32.totalorder %s27, 1
    %p423 = scmp.ne.s32.totalorder %s418, %s420
    %p424 = scmp.eq.s32.totalorder %s27, 0
    %p425 = por %p423, %p424
    %p426 = scmp.ne.s32.totalorder %s418, %s420
    %p427 = scmp.eq.s32.totalorder %s32, 1
    %p428 = por %p426, %p427
    %p429 = scmp.ne.s32.totalorder %s420, %s421
    %p430 = scmp.eq.s32.totalorder %s32, 0
    %p431 = por %p429, %p430
    %p432 = scmp.ne.s32.totalorder %s420, %s421
    %p433 = scmp.eq.s32.totalorder %s33, 1
    %p434 = por %p432, %p433
    %p436 = scmp.ne.s32.totalorder %s421, %s435
    %p437 = scmp.eq.s32.totalorder %s33, 0
    %p438 = por %p436, %p437
    %s440 = sadd.s32 %s439, 1
    %p443 = scmp.eq.s32.totalorder %s27, 1
    %p444 = scmp.ne.s32.totalorder %s439, %s441
    %p445 = scmp.eq.s32.totalorder %s27, 0
    %p446 = por %p444, %p445
    %p447 = scmp.ne.s32.totalorder %s439, %s441
    %p448 = scmp.eq.s32.totalorder %s32, 1
    %p449 = por %p447, %p448
    %p450 = scmp.ne.s32.totalorder %s441, %s442
    %p451 = scmp.eq.s32.totalorder %s32, 0
    %p452 = por %p450, %p451
    %p453 = scmp.ne.s32.totalorder %s441, %s442
    %p454 = scmp.eq.s32.totalorder %s33, 1
    %p455 = por %p453, %p454
    %p457 = scmp.ne.s32.totalorder %s442, %s456
    %p458 = scmp.eq.s32.totalorder %s33, 0
    %p459 = por %p457, %p458
    %s461 = sadd.s32 %s460, 1
    %p464 = scmp.eq.s32.totalorder %s27, 1
    %p465 = scmp.ne.s32.totalorder %s460, %s462
    %p466 = scmp.eq.s32.totalorder %s27, 0
    %p467 = por %p465, %p466
    %p468 = scmp.ne.s32.totalorder %s460, %s462
    %p469 = scmp.eq.s32.totalorder %s32, 1
    %p470 = por %p468, %p469
    %p471 = scmp.ne.s32.totalorder %s462, %s463
    %p472 = scmp.eq.s32.totalorder %s32, 0
    %p473 = por %p471, %p472
    %p474 = scmp.ne.s32.totalorder %s462, %s463
    %p475 = scmp.eq.s32.totalorder %s33, 1
    %p476 = por %p474, %p475
    %p478 = scmp.ne.s32.totalorder %s463, %s477
    %p479 = scmp.eq.s32.totalorder %s33, 0
    %p480 = por %p478, %p479
    %s481 = ssub.s32 %s27, %s34
    %p482 = scmp.eq.s32.totalorder %s481, 0
    %s484 = sadd.s32 %s483, 1
    %s485 = scalar_select %p482, %s483, %s484
    %p488 = pneg %p482
    %p489 = scmp.eq.s32.totalorder %s27, 1
    %p490 = por %p488, %p489
    %p491 = scmp.ne.s32.totalorder %s483, %s486
    %p492 = scmp.eq.s32.totalorder %s27, 0
    %p493 = por %p491, %p492
    %p494 = scmp.ne.s32.totalorder %s483, %s486
    %p495 = scmp.eq.s32.totalorder %s32, 1
    %p496 = por %p494, %p495
    %p497 = scmp.ne.s32.totalorder %s486, %s487
    %p498 = scmp.eq.s32.totalorder %s32, 0
    %p499 = por %p497, %p498
    %p500 = scmp.ne.s32.totalorder %s486, %s487
    %p501 = scmp.eq.s32.totalorder %s33, 1
    %p502 = por %p500, %p501
    %p504 = scmp.ne.s32.totalorder %s487, %s503
    %p505 = scmp.eq.s32.totalorder %s33, 0
    %p506 = por %p504, %p505
    %p507 = scmp.le.s32.totalorder 1, %s27
    %p508 = scmp.lt.s32.totalorder %s27, 3
    %p509 = pnand %p507, %p508
    %p510 = pneg %p509
    // Predicated region
    $region9: #{decoder_forward.1} parent=5 // pred_check
      _
    $region10: #{decoder_forward.1} parent=5 // pred_check_branch
      %512 = sbr.rel (%p509) target = $region12
    $region11: #{decoder_forward.1} parent=5 // pred_region
      %s513 = ssub.s32 %s27, 1
      // Predicated region
      $region13: #{decoder_forward.1} parent=11 // pred_check
        %p514 = pneg %p74
      $region14: #{decoder_forward.1} parent=11 // pred_check_branch
        %516 = sbr.rel (%p514) target = $region16
      $region15: #{decoder_forward.1} parent=11 // pred_region
        _
      $region16: #{decoder_forward.1} parent=11 // pred_fallthru
        _
      // Predicated region
      $region17: #{decoder_forward.1} parent=11 // pred_check
        %p517 = pneg %p95
      $region18: #{decoder_forward.1} parent=11 // pred_check_branch
        %519 = sbr.rel (%p517) target = $region20
      $region19: #{decoder_forward.1} parent=11 // pred_region
        _
      $region20: #{decoder_forward.1} parent=11 // pred_fallthru
        _
      // Predicated region
      $region21: #{decoder_forward.1} parent=11 // pred_check
        %p520 = pneg %p116
      $region22: #{decoder_forward.1} parent=11 // pred_check_branch
        %522 = sbr.rel (%p520) target = $region24
      $region23: #{decoder_forward.1} parent=11 // pred_region
        _
      $region24: #{decoder_forward.1} parent=11 // pred_fallthru
        _
      // Predicated region
      $region25: #{decoder_forward.1} parent=11 // pred_check
        %p523 = pneg %p137
      $region26: #{decoder_forward.1} parent=11 // pred_check_branch
        %525 = sbr.rel (%p523) target = $region28
      $region27: #{decoder_forward.1} parent=11 // pred_region
        _
      $region28: #{decoder_forward.1} parent=11 // pred_fallthru
        _
      // Predicated region
      $region29: #{decoder_forward.1} parent=11 // pred_check
        %p526 = pneg %p158
      $region30: #{decoder_forward.1} parent=11 // pred_check_branch
        %528 = sbr.rel (%p526) target = $region32
      $region31: #{decoder_forward.1} parent=11 // pred_region
        _
      $region32: #{decoder_forward.1} parent=11 // pred_fallthru
        _
      // Predicated region
      $region33: #{decoder_forward.1} parent=11 // pred_check
        %p529 = pneg %p179
      $region34: #{decoder_forward.1} parent=11 // pred_check_branch
        %531 = sbr.rel (%p529) target = $region36
      $region35: #{decoder_forward.1} parent=11 // pred_region
        _
      $region36: #{decoder_forward.1} parent=11 // pred_fallthru
        _
      // Predicated region
      $region37: #{decoder_forward.1} parent=11 // pred_check
        %p532 = pneg %p200
      $region38: #{decoder_forward.1} parent=11 // pred_check_branch
        %534 = sbr.rel (%p532) target = $region40
      $region39: #{decoder_forward.1} parent=11 // pred_region
        _
      $region40: #{decoder_forward.1} parent=11 // pred_fallthru
        _
      // Predicated region
      $region41: #{decoder_forward.1} parent=11 // pred_check
        %p535 = pneg %p221
      $region42: #{decoder_forward.1} parent=11 // pred_check_branch
        %537 = sbr.rel (%p535) target = $region44
      $region43: #{decoder_forward.1} parent=11 // pred_region
        _
      $region44: #{decoder_forward.1} parent=11 // pred_fallthru
        _
      // Predicated region
      $region45: #{decoder_forward.1} parent=11 // pred_check
        %p538 = pneg %p242
      $region46: #{decoder_forward.1} parent=11 // pred_check_branch
        %540 = sbr.rel (%p538) target = $region48
      $region47: #{decoder_forward.1} parent=11 // pred_region
        _
      $region48: #{decoder_forward.1} parent=11 // pred_fallthru
        _
      // Predicated region
      $region49: #{decoder_forward.1} parent=11 // pred_check
        %p541 = pneg %p263
      $region50: #{decoder_forward.1} parent=11 // pred_check_branch
        %543 = sbr.rel (%p541) target = $region52
      $region51: #{decoder_forward.1} parent=11 // pred_region
        _
      $region52: #{decoder_forward.1} parent=11 // pred_fallthru
        _
      // Predicated region
      $region53: #{decoder_forward.1} parent=11 // pred_check
        %p544 = pneg %p284
      $region54: #{decoder_forward.1} parent=11 // pred_check_branch
        %546 = sbr.rel (%p544) target = $region56
      $region55: #{decoder_forward.1} parent=11 // pred_region
        _
      $region56: #{decoder_forward.1} parent=11 // pred_fallthru
        _
      // Predicated region
      $region57: #{decoder_forward.1} parent=11 // pred_check
        %p547 = pneg %p305
      $region58: #{decoder_forward.1} parent=11 // pred_check_branch
        %549 = sbr.rel (%p547) target = $region60
      $region59: #{decoder_forward.1} parent=11 // pred_region
        _
      $region60: #{decoder_forward.1} parent=11 // pred_fallthru
        _
      // Predicated region
      $region61: #{decoder_forward.1} parent=11 // pred_check
        %p550 = pneg %p326
      $region62: #{decoder_forward.1} parent=11 // pred_check_branch
        %552 = sbr.rel (%p550) target = $region64
      $region63: #{decoder_forward.1} parent=11 // pred_region
        _
      $region64: #{decoder_forward.1} parent=11 // pred_fallthru
        _
      // Predicated region
      $region65: #{decoder_forward.1} parent=11 // pred_check
        %p553 = pneg %p347
      $region66: #{decoder_forward.1} parent=11 // pred_check_branch
        %555 = sbr.rel (%p553) target = $region68
      $region67: #{decoder_forward.1} parent=11 // pred_region
        _
      $region68: #{decoder_forward.1} parent=11 // pred_fallthru
        _
      // Predicated region
      $region69: #{decoder_forward.1} parent=11 // pred_check
        %p556 = pneg %p368
      $region70: #{decoder_forward.1} parent=11 // pred_check_branch
        %558 = sbr.rel (%p556) target = $region72
      $region71: #{decoder_forward.1} parent=11 // pred_region
        _
      $region72: #{decoder_forward.1} parent=11 // pred_fallthru
        _
      // Predicated region
      $region73: #{decoder_forward.1} parent=11 // pred_check
        %p559 = pneg %p389
      $region74: #{decoder_forward.1} parent=11 // pred_check_branch
        %561 = sbr.rel (%p559) target = $region76
      $region75: #{decoder_forward.1} parent=11 // pred_region
        _
      $region76: #{decoder_forward.1} parent=11 // pred_fallthru
        _
      // Predicated region
      $region77: #{decoder_forward.1} parent=11 // pred_check
        %p562 = pneg %p410
      $region78: #{decoder_forward.1} parent=11 // pred_check_branch
        %564 = sbr.rel (%p562) target = $region80
      $region79: #{decoder_forward.1} parent=11 // pred_region
        _
      $region80: #{decoder_forward.1} parent=11 // pred_fallthru
        _
      // Predicated region
      $region81: #{decoder_forward.1} parent=11 // pred_check
        %p565 = pneg %p431
      $region82: #{decoder_forward.1} parent=11 // pred_check_branch
        %567 = sbr.rel (%p565) target = $region84
      $region83: #{decoder_forward.1} parent=11 // pred_region
        _
      $region84: #{decoder_forward.1} parent=11 // pred_fallthru
        _
      // Predicated region
      $region85: #{decoder_forward.1} parent=11 // pred_check
        %p568 = pneg %p452
      $region86: #{decoder_forward.1} parent=11 // pred_check_branch
        %570 = sbr.rel (%p568) target = $region88
      $region87: #{decoder_forward.1} parent=11 // pred_region
        _
      $region88: #{decoder_forward.1} parent=11 // pred_fallthru
        _
      // Predicated region
      $region89: #{decoder_forward.1} parent=11 // pred_check
        %p571 = pneg %p473
      $region90: #{decoder_forward.1} parent=11 // pred_check_branch
        %573 = sbr.rel (%p571) target = $region92
      $region91: #{decoder_forward.1} parent=11 // pred_region
        _
      $region92: #{decoder_forward.1} parent=11 // pred_fallthru
        _
    $region12: #{decoder_forward.1} parent=5 // pred_fallthru
      _
    %p574 = scmp.lt.s32.totalorder %s27, 2
    // Predicated region
    $region93: #{decoder_forward.1} parent=5 // pred_check
      %p575 = pneg %p574
    $region94: #{decoder_forward.1} parent=5 // pred_check_branch
      %577 = sbr.rel (%p575) target = $region96
    $region95: #{decoder_forward.1} parent=5 // pred_region
      // Predicated region
      $region97: #{decoder_forward.1} parent=95 // pred_check
        %p578 = pneg %p47
      $region98: #{decoder_forward.1} parent=95 // pred_check_branch
        %580 = sbr.rel (%p578) target = $region100
      $region99: #{decoder_forward.1} parent=95 // pred_region
        %p581 = scmp.lt.s32.totalorder %s27, 1
        %s582 = scalar_select %p581, %s27, 1
        %s583 = scalar_lea.vmem %s0, %s582
      $region100: #{decoder_forward.1} parent=95 // pred_fallthru
        _
    $region96: #{decoder_forward.1} parent=5 // pred_fallthru
      _
    %p584 = scmp.le.s32.totalorder 1, %s27
    %p585 = scmp.lt.s32.totalorder %s27, 3
    %p586 = pnand %p584, %p585
    %p587 = pneg %p586
    // Predicated region
    $region101: #{decoder_forward.1} parent=5 // pred_check
      _
    $region102: #{decoder_forward.1} parent=5 // pred_check_branch
      %589 = sbr.rel (%p586) target = $region104
    $region103: #{decoder_forward.1} parent=5 // pred_region
      %s590 = ssub.s32 %s27, 1
      %p591 = scmp.lt.s32.totalorder %s32, 1
      %s592 = scalar_select %p591, %s32, 1
      %s593 = scalar_lea.vmem %s0, %s592
      %p594 = pneg %p53
      %p595 = pneg %p50
      %p596 = pneg %p74
      %p597 = pneg %p71
      %p598 = pneg %p95
      %p599 = pneg %p92
      %p600 = pneg %p116
      %p601 = pneg %p113
      %p602 = pneg %p137
      %p603 = pneg %p134
      %p604 = pneg %p158
      %p605 = pneg %p155
      %p606 = pneg %p179
      %p607 = pneg %p176
      %p608 = pneg %p200
      %p609 = pneg %p197
      %p610 = pneg %p221
      %p611 = pneg %p218
      %p612 = pneg %p242
      %p613 = pneg %p239
      %p614 = pneg %p263
      %p615 = pneg %p260
      %p616 = pneg %p284
      %p617 = pneg %p281
      %p618 = pneg %p305
      %p619 = pneg %p302
      %p620 = pneg %p326
      %p621 = pneg %p323
      %p622 = pneg %p347
      %p623 = pneg %p344
      %p624 = pneg %p368
      %p625 = pneg %p365
      %p626 = pneg %p389
      %p627 = pneg %p386
      %p628 = pneg %p410
      %p629 = pneg %p407
      %p630 = pneg %p431
      %p631 = pneg %p428
      %p632 = pneg %p452
      %p633 = pneg %p449
      %p634 = pneg %p473
      %p635 = pneg %p470
      %p636 = pneg %p499
      %p637 = pneg %p496
      %p638 = scmp.lt.s32.totalorder %s32, 1
      %s639 = scalar_select %p638, %s32, 1
      %s640 = smul.addr %s639, 2
      %s641 = smul.addr %s640, 8
      %s642 = scalar_lea.vmem %s21, %s641
      %p643 = scmp.lt.s32.totalorder %s32, 1
      %s644 = scalar_select %p643, %s32, 1
      %s645 = scalar_lea.vmem %s0, %s644
      %p646 = scmp.lt.s32.totalorder %s32, 1
      %s647 = scalar_select %p646, %s32, 1
      %s648 = smul.addr %s647, 2
      %s649 = smul.addr %s648, 8
      %s650 = scalar_lea.vmem %s21, %s649
      %vm652 = vcmask 256000
      %653 = vst.msk [vmem:[#allocation2] sm:$0x7] %vm652, 0.0
      %654 = vst.msk [vmem:[#allocation2 + $0x7] sm:$0x7] %vm652, 0.0
      %vm655 = vcmask 258048
      %656 = vst.msk [vmem:[#allocation4] sm:$0x1f] %vm655, 0.0
      %657 = vst.msk [vmem:[#allocation4 + $0x15] sm:$0x1f] %vm655, 0.0
      %v658 = vld [vmem:[%s645] sm:$0x1]
      %v659 = vld [vmem:[%s1] sm:$0xff]
      %v660 = vld [vmem:[%s2] sm:$0x1]
      %vm661 = vcmask 64512
      %v663 = vsel %vm661, %v658, 0
      %665 = vmatprep.subr.mxu0 0.0
      %666 = vmatpush1.msra.mxu0 %v659
      %667 = vmatprep.subr.mxu0 0.0
      %668 = vmatpush1.msra.mxu0 0.0
      %669 = vmatprep.subr.mxu0 0.0
      %670 = vmatpush1.msra.mxu0 0.0
      %671 = vmatprep.subr.mxu0 0.0
      %672 = vmatpush1.msra.mxu0 0.0
      %673 = vmatprep.subr.mxu0 0.0
      %674 = vmatpush1.msra.mxu0 0.0
      %675 = vmatprep.subr.mxu0 0.0
      %676 = vmatpush1.msra.mxu0 0.0
      %677 = vmatprep.subr.mxu0 0.0
      %678 = vmatpush1.msra.mxu0 0.0
      %679 = vmatprep.subr.mxu0 0.0
      %680 = vmatpush1.msra.mxu0 0.0
      %681 = vmatprep.subr.mxu0 0.0
      %682 = vmatpush1.msra.mxu0 0.0
      %683 = vmatprep.subr.mxu0 0.0
      %684 = vmatpush1.msra.mxu0 0.0
      %685 = vmatprep.subr.mxu0 0.0
      %686 = vmatpush1.msra.mxu0 0.0
      %687 = vmatprep.subr.mxu0 0.0
      %688 = vmatpush1.msra.mxu0 0.0
      %689 = vmatprep.subr.mxu0 0.0
      %690 = vmatpush1.msra.mxu0 0.0
      %691 = vmatprep.subr.mxu0 0.0
      %692 = vmatpush1.msra.mxu0 0.0
      %693 = vmatprep.subr.mxu0 0.0
      %694 = vmatpush1.msra.mxu0 0.0
      %695 = vmatprep.subr.mxu0 0.0
      %696 = vmatpush1.msra.mxu0 0.0
      %697 = vmatprep.subr.mxu0 0.0
      %698 = vmatpush1.msra.mxu0 0.0
      %699 = vmatprep.subr.mxu0 0.0
      %700 = vmatpush1.msra.mxu0 0.0
      %701 = vmatprep.subr.mxu0 0.0
      %702 = vmatpush1.msra.mxu0 0.0
      %703 = vmatprep.subr.mxu0 0.0
      %704 = vmatpush1.msra.mxu0 0.0
      %705 = vmatprep.subr.mxu0 0.0
      %706 = vmatpush1.msra.mxu0 0.0
      %707 = vmatprep.subr.mxu0 0.0
      %708 = vmatpush1.msra.mxu0 0.0
      %709 = vmatprep.subr.mxu0 0.0
      %710 = vmatpush1.msra.mxu0 0.0
      %711 = vmatprep.subr.mxu0 0.0
      %712 = vmatpush1.msra.mxu0 0.0
      %713 = vmatprep.subr.mxu0 0.0
      %714 = vmatpush1.msra.mxu0 0.0
      %715 = vmatprep.subr.mxu0 0.0
      %716 = vmatpush1.msra.mxu0 0.0
      %717 = vmatprep.subr.mxu0 0.0
      %718 = vmatpush1.msra.mxu0 0.0
      %719 = vmatprep.subr.mxu0 0.0
      %720 = vmatpush1.msra.mxu0 0.0
      %721 = vmatprep.subr.mxu0 0.0
      %722 = vmatpush1.msra.mxu0 0.0
      %723 = vmatprep.subr.mxu0 0.0
      %724 = vmatpush1.msra.mxu0 0.0
      %725 = vmatprep.subr.mxu0 0.0
      %726 = vmatpush1.msra.mxu0 0.0
      %727 = vmatprep.subr.mxu0 0.0
      %728 = vmatpush1.msra.mxu0 0.0
      %729 = vmatprep.mubr.f32.mxu0 0.0
      %730 = vmatmul.mubr.f32.gmra.mrb[0].mxu0 %v663
      %v731 = vpop.f32.mrb[0].mxu0
      %v732 = vadd.f32 %v660, %v731
      %v733 = vpop.f32.mrb[0].mxu0
      %734 = vdwg.mxu0
      %v735 = vpack.c.bf16 %v732, %v732
      %v736 = vld [vmem:[%s3] sm:$0xf]
      %v737 = vld [vmem:[%s3 + $0x4] sm:$0xf]
      %v738 = vld [vmem:[%s3 + $0x8] sm:$0xf]
      %v739 = vld [vmem:[%s3 + $0xc] sm:$0xf]
      %v740 = vld [vmem:[%s4] sm:$0x1]
      %v745 = vunpack.c.l.b16 %v736
      %v746 = vunpack.c.l.b16 %v737
      %v747 = vunpack.c.l.b16 %v738
      %v748 = vunpack.c.l.b16 %v739
      %v749 = vpack.c.b16 %v746, %v745
      %v750 = vpack.c.b16 %v748, %v747
      %vm753 = vcmask 261120
      %v755 = vsel %vm753, %v735, 0
      %757 = vmatprep.subr.bf16.mxu0 0
      %758 = vmatpush1.bf16.msra.mxu0 %v749
      %759 = vmatprep.subr.bf16.mxu0 0
      %760 = vmatpush1.bf16.msra.mxu0 %v750
      %761 = vmatprep.subr.bf16.mxu0 0
      %762 = vmatpush1.bf16.msra.mxu0 0
      %763 = vmatprep.subr.bf16.mxu0 0
      %764 = vmatpush1.bf16.msra.mxu0 0
      %765 = vmatprep.subr.bf16.mxu0 0
      %766 = vmatpush1.bf16.msra.mxu0 0
      %767 = vmatprep.subr.bf16.mxu0 0
      %768 = vmatpush1.bf16.msra.mxu0 0
      %769 = vmatprep.subr.bf16.mxu0 0
      %770 = vmatpush1.bf16.msra.mxu0 0
      %771 = vmatprep.subr.bf16.mxu0 0
      %772 = vmatpush1.bf16.msra.mxu0 0
      %773 = vmatprep.subr.bf16.mxu0 0
      %774 = vmatpush1.bf16.msra.mxu0 0
      %775 = vmatprep.subr.bf16.mxu0 0
      %776 = vmatpush1.bf16.msra.mxu0 0
      %777 = vmatprep.subr.bf16.mxu0 0
      %778 = vmatpush1.bf16.msra.mxu0 0
      %779 = vmatprep.subr.bf16.mxu0 0
      %780 = vmatpush1.bf16.msra.mxu0 0
      %781 = vmatprep.subr.bf16.mxu0 0
      %782 = vmatpush1.bf16.msra.mxu0 0
      %783 = vmatprep.subr.bf16.mxu0 0
      %784 = vmatpush1.bf16.msra.mxu0 0
      %785 = vmatprep.subr.bf16.mxu0 0
      %786 = vmatpush1.bf16.msra.mxu0 0
      %787 = vmatprep.subr.bf16.mxu0 0
      %788 = vmatpush1.bf16.msra.mxu0 0
      %789 = vmatprep.mubr.bf16.mxu0 0
      %790 = vmatmul.mubr.bf16.gmra.mrb[0].mxu0 %v755
      %v791 = vpop.f32.mrb[0].mxu0
      %v792 = vadd.f32 %v740, %v791
      %v793 = vpop.f32.mrb[0].mxu0
      %v794 = vpop.f32.mrb[0].mxu0
      %v795 = vpop.f32.mrb[0].mxu0
      %796 = vdwg.mxu0
      %v797 = vld [vmem:[%s5 + $0x40] sm:$0xf]
      %v798 = vld [vmem:[%s5 + $0x44] sm:$0xf]
      %v799 = vld [vmem:[%s5 + $0x48] sm:$0xf]
      %v800 = vld [vmem:[%s5 + $0x4c] sm:$0xf]
      %v801 = vld [vmem:[%s6] sm:$0x1]
      %v806 = vunpack.c.l.b16 %v797
      %v807 = vunpack.c.l.b16 %v798
      %v808 = vunpack.c.l.b16 %v799
      %v809 = vunpack.c.l.b16 %v800
      %v810 = vpack.c.b16 %v807, %v806
      %v811 = vpack.c.b16 %v809, %v808
      %814 = vmatprep.subr.bf16.mxu0 0
      %815 = vmatpush1.bf16.msra.mxu0 %v810
      %816 = vmatprep.subr.bf16.mxu0 0
      %817 = vmatpush1.bf16.msra.mxu0 %v811
      %818 = vmatprep.subr.bf16.mxu0 0
      %819 = vmatpush1.bf16.msra.mxu0 0
      %820 = vmatprep.subr.bf16.mxu0 0
      %821 = vmatpush1.bf16.msra.mxu0 0
      %822 = vmatprep.subr.bf16.mxu0 0
      %823 = vmatpush1.bf16.msra.mxu0 0
      %824 = vmatprep.subr.bf16.mxu0 0
      %825 = vmatpush1.bf16.msra.mxu0 0
      %826 = vmatprep.subr.bf16.mxu0 0
      %827 = vmatpush1.bf16.msra.mxu0 0
      %828 = vmatprep.subr.bf16.mxu0 0
      %829 = vmatpush1.bf16.msra.mxu0 0
      %830 = vmatprep.subr.bf16.mxu0 0
      %831 = vmatpush1.bf16.msra.mxu0 0
      %832 = vmatprep.subr.bf16.mxu0 0
      %833 = vmatpush1.bf16.msra.mxu0 0
      %834 = vmatprep.subr.bf16.mxu0 0
      %835 = vmatpush1.bf16.msra.mxu0 0
      %836 = vmatprep.subr.bf16.mxu0 0
      %837 = vmatpush1.bf16.msra.mxu0 0
      %838 = vmatprep.subr.bf16.mxu0 0
      %839 = vmatpush1.bf16.msra.mxu0 0
      %840 = vmatprep.subr.bf16.mxu0 0
      %841 = vmatpush1.bf16.msra.mxu0 0
      %842 = vmatprep.subr.bf16.mxu0 0
      %843 = vmatpush1.bf16.msra.mxu0 0
      %844 = vmatprep.subr.bf16.mxu0 0
      %845 = vmatpush1.bf16.msra.mxu0 0
      %846 = vmatprep.mubr.bf16.mxu0 0
      %847 = vmatmul.mubr.bf16.gmra.mrb[0].mxu0 %v755
      %v848 = vpop.f32.mrb[0].mxu0
      %v849 = vadd.f32 %v801, %v848
      %v850 = vpop.f32.mrb[0].mxu0
      %v851 = vpop.f32.mrb[0].mxu0
      %v852 = vpop.f32.mrb[0].mxu0
      %853 = vdwg.mxu0
      %v854 = vpack.c.bf16 %v849, %v849
      %s855 = scalar_lea.vmem %s5, 144
      %v856 = vld [vmem:[%s855 + $0x40] sm:$0xf]
      %v857 = vld [vmem:[%s855 + $0x44] sm:$0xf]
      %v858 = vld [vmem:[%s855 + $0x48] sm:$0xf]
      %v859 = vld [vmem:[%s855 + $0x4c] sm:$0xf]
      %s860 = scalar_lea.vmem %s6, 1
      %v861 = vld [vmem:[%s860] sm:$0x1]
      %v866 = vunpack.c.l.b16 %v856
      %v867 = vunpack.c.l.b16 %v857
      %v868 = vunpack.c.l.b16 %v858
      %v869 = vunpack.c.l.b16 %v859
      %v870 = vpack.c.b16 %v867, %v866
      %v871 = vpack.c.b16 %v869, %v868
      %v875 = vsel %vm753, %v854, 0
      %877 = vmatprep.subr.bf16.mxu0 0
      %878 = vmatpush1.bf16.msra.mxu0 %v870
      %879 = vmatprep.subr.bf16.mxu0 0
      %880 = vmatpush1.bf16.msra.mxu0 %v871
      %881 = vmatprep.subr.bf16.mxu0 0
      %882 = vmatpush1.bf16.msra.mxu0 0
      %883 = vmatprep.subr.bf16.mxu0 0
      %884 = vmatpush1.bf16.msra.mxu0 0
      %885 = vmatprep.subr.bf16.mxu0 0
      %886 = vmatpush1.bf16.msra.mxu0 0
      %887 = vmatprep.subr.bf16.mxu0 0
      %888 = vmatpush1.bf16.msra.mxu0 0
      %889 = vmatprep.subr.bf16.mxu0 0
      %890 = vmatpush1.bf16.msra.mxu0 0
      %891 = vmatprep.subr.bf16.mxu0 0
      %892 = vmatpush1.bf16.msra.mxu0 0
      %893 = vmatprep.subr.bf16.mxu0 0
      %894 = vmatpush1.bf16.msra.mxu0 0
      %895 = vmatprep.subr.bf16.mxu0 0
      %896 = vmatpush1.bf16.msra.mxu0 0
      %897 = vmatprep.subr.bf16.mxu0 0
      %898 = vmatpush1.bf16.msra.mxu0 0
      %899 = vmatprep.subr.bf16.mxu0 0
      %900 = vmatpush1.bf16.msra.mxu0 0
      %901 = vmatprep.subr.bf16.mxu0 0
      %902 = vmatpush1.bf16.msra.mxu0 0
      %903 = vmatprep.subr.bf16.mxu0 0
      %904 = vmatpush1.bf16.msra.mxu0 0
      %905 = vmatprep.subr.bf16.mxu0 0
      %906 = vmatpush1.bf16.msra.mxu0 0
      %907 = vmatprep.subr.bf16.mxu0 0
      %908 = vmatpush1.bf16.msra.mxu0 0
      %909 = vmatprep.mubr.bf16.mxu0 0
      %910 = vmatmul.mubr.bf16.gmra.mrb[0].mxu0 %v875
      %v911 = vpop.f32.mrb[0].mxu0
      %v912 = vadd.f32 %v861, %v911
      %v913 = vpop.f32.mrb[0].mxu0
      %v914 = vpop.f32.mrb[0].mxu0
      %v915 = vpop.f32.mrb[0].mxu0
      %916 = vdwg.mxu0
      %v917 = vpack.c.bf16 %v912, %v912
      %s918 = scalar_lea.vmem %s5, 288
      %v919 = vld [vmem:[%s918 + $0x40] sm:$0xf]
      %v920 = vld [vmem:[%s918 + $0x44] sm:$0xf]
      %v921 = vld [vmem:[%s918 + $0x48] sm:$0xf]
      %v922 = vld [vmem:[%s918 + $0x4c] sm:$0xf]
      %s923 = scalar_lea.vmem %s6, 2
      %v924 = vld [vmem:[%s923] sm:$0x1]
      %v929 = vunpack.c.l.b16 %v919
      %v930 = vunpack.c.l.b16 %v920
      %v931 = vunpack.c.l.b16 %v921
      %v932 = vunpack.c.l.b16 %v922
      %v933 = vpack.c.b16 %v930, %v929
      %v934 = vpack.c.b16 %v932, %v931
      %v938 = vsel %vm753, %v917, 0
      %940 = vmatprep.subr.bf16.mxu0 0
      %941 = vmatpush1.bf16.msra.mxu0 %v933
      %942 = vmatprep.subr.bf16.mxu0 0
      %943 = vmatpush1.bf16.msra.mxu0 %v934
      %944 = vmatprep.subr.bf16.mxu0 0
      %945 = vmatpush1.bf16.msra.mxu0 0
      %946 = vmatprep.subr.bf16.mxu0 0
      %947 = vmatpush1.bf16.msra.mxu0 0
      %948 = vmatprep.subr.bf16.mxu0 0
      %949 = vmatpush1.bf16.msra.mxu0 0
      %950 = vmatprep.subr.bf16.mxu0 0
      %951 = vmatpush1.bf16.msra.mxu0 0
      %952 = vmatprep.subr.bf16.mxu0 0
      %953 = vmatpush1.bf16.msra.mxu0 0
      %954 = vmatprep.subr.bf16.mxu0 0
      %955 = vmatpush1.bf16.msra.mxu0 0
      %956 = vmatprep.subr.bf16.mxu0 0
      %957 = vmatpush1.bf16.msra.mxu0 0
      %958 = vmatprep.subr.bf16.mxu0 0
      %959 = vmatpush1.bf16.msra.mxu0 0
      %960 = vmatprep.subr.bf16.mxu0 0
      %961 = vmatpush1.bf16.msra.mxu0 0
      %962 = vmatprep.subr.bf16.mxu0 0
      %963 = vmatpush1.bf16.msra.mxu0 0
      %964 = vmatprep.subr.bf16.mxu0 0
      %965 = vmatpush1.bf16.msra.mxu0 0
      %966 = vmatprep.subr.bf16.mxu0 0
      %967 = vmatpush1.bf16.msra.mxu0 0
      %968 = vmatprep.subr.bf16.mxu0 0
      %969 = vmatpush1.bf16.msra.mxu0 0
      %970 = vmatprep.subr.bf16.mxu0 0
      %971 = vmatpush1.bf16.msra.mxu0 0
      %972 = vmatprep.mubr.bf16.mxu0 0
      %973 = vmatmul.mubr.bf16.gmra.mrb[0].mxu0 %v938
      %v974 = vpop.f32.mrb[0].mxu0
      %v975 = vadd.f32 %v924, %v974
      %v976 = vpop.f32.mrb[0].mxu0
      %v977 = vpop.f32.mrb[0].mxu0
      %v978 = vpop.f32.mrb[0].mxu0
      %979 = vdwg.mxu0
      %v980 = vmax.f32 %v975, 0.0
      %v981 = vpack.c.bf16 %v980, %v980
      %s982 = scalar_lea.vmem %s5, 432
      %v983 = vld [vmem:[%s982 + $0x40] sm:$0xf]
      %v984 = vld [vmem:[%s982 + $0x44] sm:$0xf]
      %v985 = vld [vmem:[%s982 + $0x48] sm:$0xf]
      %v986 = vld [vmem:[%s982 + $0x4c] sm:$0xf]
      %s987 = scalar_lea.vmem %s6, 3
      %v988 = vld [vmem:[%s987] sm:$0x1]
      %v993 = vunpack.c.l.b16 %v983
      %v994 = vunpack.c.l.b16 %v984
      %v995 = vunpack.c.l.b16 %v985
      %v996 = vunpack.c.l.b16 %v986
      %v997 = vpack.c.b16 %v994, %v993
      %v998 = vpack.c.b16 %v996, %v995
      %v1002 = vsel %vm753, %v981, 0
      %1004 = vmatprep.subr.bf16.mxu0 0
      %1005 = vmatpush1.bf16.msra.mxu0 %v997
      %1006 = vmatprep.subr.bf16.mxu0 0
      %1007 = vmatpush1.bf16.msra.mxu0 %v998
      %1008 = vmatprep.subr.bf16.mxu0 0
      %1009 = vmatpush1.bf16.msra.mxu0 0
      %1010 = vmatprep.subr.bf16.mxu0 0
      %1011 = vmatpush1.bf16.msra.mxu0 0
      %1012 = vmatprep.subr.bf16.mxu0 0
      %1013 = vmatpush1.bf16.msra.mxu0 0
      %1014 = vmatprep.subr.bf16.mxu0 0
      %1015 = vmatpush1.bf16.msra.mxu0 0
      %1016 = vmatprep.subr.bf16.mxu0 0
      %1017 = vmatpush1.bf16.msra.mxu0 0
      %1018 = vmatprep.subr.bf16.mxu0 0
      %1019 = vmatpush1.bf16.msra.mxu0 0
      %1020 = vmatprep.subr.bf16.mxu0 0
      %1021 = vmatpush1.bf16.msra.mxu0 0
      %1022 = vmatprep.subr.bf16.mxu0 0
      %1023 = vmatpush1.bf16.msra.mxu0 0
      %1024 = vmatprep.subr.bf16.mxu0 0
      %1025 = vmatpush1.bf16.msra.mxu0 0
      %1026 = vmatprep.subr.bf16.mxu0 0
      %1027 = vmatpush1.bf16.msra.mxu0 0
      %1028 = vmatprep.subr.bf16.mxu0 0
      %1029 = vmatpush1.bf16.msra.mxu0 0
      %1030 = vmatprep.subr.bf16.mxu0 0
      %1031 = vmatpush1.bf16.msra.mxu0 0
      %1032 = vmatprep.subr.bf16.mxu0 0
      %1033 = vmatpush1.bf16.msra.mxu0 0
      %1034 = vmatprep.subr.bf16.mxu0 0
      %1035 = vmatpush1.bf16.msra.mxu0 0
      %1036 = vmatprep.mubr.bf16.mxu0 0
      %1037 = vmatmul.mubr.bf16.gmra.mrb[0].mxu0 %v1002
      %v1038 = vpop.f32.mrb[0].mxu0
      %v1039 = vadd.f32 %v988, %v1038
      %v1040 = vpop.f32.mrb[0].mxu0
      %v1041 = vpop.f32.mrb[0].mxu0
      %v1042 = vpop.f32.mrb[0].mxu0
      %1043 = vdwg.mxu0
      %v1044 = vpack.c.bf16 %v1039, %v1039
      %s1045 = scalar_lea.vmem %s5, 576
      %v1046 = vld [vmem:[%s1045 + $0x40] sm:$0xf]
      %v1047 = vld [vmem:[%s1045 + $0x44] sm:$0xf]
      %v1048 = vld [vmem:[%s1045 + $0x48] sm:$0xf]
      %v1049 = vld [vmem:[%s1045 + $0x4c] sm:$0xf]
      %s1050 = scalar_lea.vmem %s6, 4
      %v1051 = vld [vmem:[%s1050] sm:$0x1]
      %v1056 = vunpack.c.l.b16 %v1046
      %v1057 = vunpack.c.l.b16 %v1047
      %v1058 = vunpack.c.l.b16 %v1048
      %v1059 = vunpack.c.l.b16 %v1049
      %v1060 = vpack.c.b16 %v1057, %v1056
      %v1061 = vpack.c.b16 %v1059, %v1058
      %v1065 = vsel %vm753, %v1044, 0
      %1067 = vmatprep.subr.bf16.mxu0 0
      %1068 = vmatpush1.bf16.msra.mxu0 %v1060
      %1069 = vmatprep.subr.bf16.mxu0 0
      %1070 = vmatpush1.bf16.msra.mxu0 %v1061
      %1071 = vmatprep.subr.bf16.mxu0 0
      %1072 = vmatpush1.bf16.msra.mxu0 0
      %1073 = vmatprep.subr.bf16.mxu0 0
      %1074 = vmatpush1.bf16.msra.mxu0 0
      %1075 = vmatprep.subr.bf16.mxu0 0
      %1076 = vmatpush1.bf16.msra.mxu0 0
      %1077 = vmatprep.subr.bf16.mxu0 0
      %1078 = vmatpush1.bf16.msra.mxu0 0
      %1079 = vmatprep.subr.bf16.mxu0 0
      %1080 = vmatpush1.bf16.msra.mxu0 0
      %1081 = vmatprep.subr.bf16.mxu0 0
      %1082 = vmatpush1.bf16.msra.mxu0 0
      %1083 = vmatprep.subr.bf16.mxu0 0
      %1084 = vmatpush1.bf16.msra.mxu0 0
      %1085 = vmatprep.subr.bf16.mxu0 0
      %1086 = vmatpush1.bf16.msra.mxu0 0
      %1087 = vmatprep.subr.bf16.mxu0 0
      %1088 = vmatpush1.bf16.msra.mxu0 0
      %1089 = vmatprep.subr.bf16.mxu0 0
      %1090 = vmatpush1.bf16.msra.mxu0 0
      %1091 = vmatprep.subr.bf16.mxu0 0
      %1092 = vmatpush1.bf16.msra.mxu0 0
      %1093 = vmatprep.subr.bf16.mxu0 0
      %1094 = vmatpush1.bf16.msra.mxu0 0
      %1095 = vmatprep.subr.bf16.mxu0 0
      %1096 = vmatpush1.bf16.msra.mxu0 0
      %1097 = vmatprep.subr.bf16.mxu0 0
      %1098 = vmatpush1.bf16.msra.mxu0 0
      %1099 = vmatprep.mubr.bf16.mxu0 0
      %1100 = vmatmul.mubr.bf16.gmra.mrb[0].mxu0 %v1065
      %v1101 = vpop.f32.mrb[0].mxu0
      %v1102 = vadd.f32 %v1051, %v1101
      %v1103 = vpop.f32.mrb[0].mxu0
      %v1104 = vpop.f32.mrb[0].mxu0
      %v1105 = vpop.f32.mrb[0].mxu0
      %1106 = vdwg.mxu0
      %v1107 = vpack.c.bf16 %v1102, %v1102
      %s1108 = scalar_lea.vmem %s5, 720
      %v1109 = vld [vmem:[%s1108 + $0x40] sm:$0xf]
      %v1110 = vld [vmem:[%s1108 + $0x44] sm:$0xf]
      %v1111 = vld [vmem:[%s1108 + $0x48] sm:$0xf]
      %v1112 = vld [vmem:[%s1108 + $0x4c] sm:$0xf]
      %s1113 = scalar_lea.vmem %s6, 5
      %v1114 = vld [vmem:[%s1113] sm:$0x1]
      %v1119 = vunpack.c.l.b16 %v1109
      %v1120 = vunpack.c.l.b16 %v1110
      %v1121 = vunpack.c.l.b16 %v1111
      %v1122 = vunpack.c.l.b16 %v1112
      %v1123 = vpack.c.b16 %v1120, %v1119
      %v1124 = vpack.c.b16 %v1122, %v1121
      %v1128 = vsel %vm753, %v1107, 0
      %1130 = vmatprep.subr.bf16.mxu0 0
      %1131 = vmatpush1.bf16.msra.mxu0 %v1123
      %1132 = vmatprep.subr.bf16.mxu0 0
      %1133 = vmatpush1.bf16.msra.mxu0 %v1124
      %1134 = vmatprep.subr.bf16.mxu0 0
      %1135 = vmatpush1.bf16.msra.mxu0 0
      %1136 = vmatprep.subr.bf16.mxu0 0
      %1137 = vmatpush1.bf16.msra.mxu0 0
      %1138 = vmatprep.subr.bf16.mxu0 0
      %1139 = vmatpush1.bf16.msra.mxu0 0
      %1140 = vmatprep.subr.bf16.mxu0 0
      %1141 = vmatpush1.bf16.msra.mxu0 0
      %1142 = vmatprep.subr.bf16.mxu0 0
      %1143 = vmatpush1.bf16.msra.mxu0 0
      %1144 = vmatprep.subr.bf16.mxu0 0
      %1145 = vmatpush1.bf16.msra.mxu0 0
      %1146 = vmatprep.subr.bf16.mxu0 0
      %1147 = vmatpush1.bf16.msra.mxu0 0
      %1148 = vmatprep.subr.bf16.mxu0 0
      %1149 = vmatpush1.bf16.msra.mxu0 0
      %1150 = vmatprep.subr.bf16.mxu0 0
      %1151 = vmatpush1.bf16.msra.mxu0 0
      %1152 = vmatprep.subr.bf16.mxu0 0
      %1153 = vmatpush1.bf16.msra.mxu0 0
      %1154 = vmatprep.subr.bf16.mxu0 0
      %1155 = vmatpush1.bf16.msra.mxu0 0
      %1156 = vmatprep.subr.bf16.mxu0 0
      %1157 = vmatpush1.bf16.msra.mxu0 0
      %1158 = vmatprep.subr.bf16.mxu0 0
      %1159 = vmatpush1.bf16.msra.mxu0 0
      %1160 = vmatprep.subr.bf16.mxu0 0
      %1161 = vmatpush1.bf16.msra.mxu0 0
      %1162 = vmatprep.mubr.bf16.mxu0 0
      %1163 = vmatmul.mubr.bf16.gmra.mrb[0].mxu0 %v1128
      %v1164 = vpop.f32.mrb[0].mxu0
      %v1165 = vadd.f32 %v1114, %v1164
      %v1166 = vpop.f32.mrb[0].mxu0
      %v1167 = vpop.f32.mrb[0].mxu0
      %v1168 = vpop.f32.mrb[0].mxu0
      %1169 = vdwg.mxu0
      %v1170 = vadd.f32 %v1165, %v792
      %v1171 = vpack.c.bf16 %v1170, %v1170
      %v1172 = vld [vmem:[%s7] sm:$0xf]
      %v1173 = vld [vmem:[%s7 + $0x4] sm:$0xf]
      %v1174 = vld [vmem:[%s7 + $0x8] sm:$0xf]
      %v1175 = vld [vmem:[%s7 + $0xc] sm:$0xf]
      %v1176 = vld [vmem:[%s8] sm:$0x1]
      %v1181 = vunpack.c.l.b16 %v1172
      %v1182 = vunpack.c.l.b16 %v1173
      %v1183 = vunpack.c.l.b16 %v1174
      %v1184 = vunpack.c.l.b16 %v1175
      %v1185 = vpack.c.b16 %v1182, %v1181
      %v1186 = vpack.c.b16 %v1184, %v1183
      %v1190 = vsel %vm753, %v1171, 0
      %1192 = vmatprep.subr.bf16.mxu0 0
      %1193 = vmatpush1.bf16.msra.mxu0 %v1185
      %1194 = vmatprep.subr.bf16.mxu0 0
      %1195 = vmatpush1.bf16.msra.mxu0 %v1186
      %1196 = vmatprep.subr.bf16.mxu0 0
      %1197 = vmatpush1.bf16.msra.mxu0 0
      %1198 = vmatprep.subr.bf16.mxu0 0
      %1199 = vmatpush1.bf16.msra.mxu0 0
      %1200 = vmatprep.subr.bf16.mxu0 0
      %1201 = vmatpush1.bf16.msra.mxu0 0
      %1202 = vmatprep.subr.bf16.mxu0 0
      %1203 = vmatpush1.bf16.msra.mxu0 0
      %1204 = vmatprep.subr.bf16.mxu0 0
      %1205 = vmatpush1.bf16.msra.mxu0 0
      %1206 = vmatprep.subr.bf16.mxu0 0
      %1207 = vmatpush1.bf16.msra.mxu0 0
      %1208 = vmatprep.subr.bf16.mxu0 0
      %1209 = vmatpush1.bf16.msra.mxu0 0
      %1210 = vmatprep.subr.bf16.mxu0 0
      %1211 = vmatpush1.bf16.msra.mxu0 0
      %1212 = vmatprep.subr.bf16.mxu0 0
      %1213 = vmatpush1.bf16.msra.mxu0 0
      %1214 = vmatprep.subr.bf16.mxu0 0
      %1215 = vmatpush1.bf16.msra.mxu0 0
      %1216 = vmatprep.subr.bf16.mxu0 0
      %1217 = vmatpush1.bf16.msra.mxu0 0
      %1218 = vmatprep.subr.bf16.mxu0 0
      %1219 = vmatpush1.bf16.msra.mxu0 0
      %1220 = vmatprep.subr.bf16.mxu0 0
      %1221 = vmatpush1.bf16.msra.mxu0 0
      %1222 = vmatprep.subr.bf16.mxu0 0
      %1223 = vmatpush1.bf16.msra.mxu0 0
      %1224 = vmatprep.mubr.bf16.mxu0 0
      %1225 = vmatmul.mubr.bf16.gmra.mrb[0].mxu0 %v1190
      %v1226 = vpop.f32.mrb[0].mxu0
      %v1227 = vadd.f32 %v1176, %v1226
      %v1228 = vpop.f32.mrb[0].mxu0
      %v1229 = vpop.f32.mrb[0].mxu0
      %v1230 = vpop.f32.mrb[0].mxu0
      %1231 = vdwg.mxu0
      %v1232 = vmax.f32 %v1227, 0.0
      %vm1233 = vcmask 253952
      %1234 = vst.msk [vmem:[#allocation2 + $0x3] sm:$0x1] %vm1233, %v1232
      %v1235 = vld [vmem:[%s7] sm:$0xf]
      %v1236 = vld [vmem:[%s7 + $0x4] sm:$0xf]
      %v1237 = vld [vmem:[%s7 + $0x8] sm:$0xf]
      %v1238 = vld [vmem:[%s7 + $0xc] sm:$0xf]
      %v1239 = vld [vmem:[%s8] sm:$0x1]
      %v1244 = vunpack.c.l.b16 %v1235
      %v1245 = vunpack.c.l.b16 %v1236
      %v1246 = vunpack.c.l.b16 %v1237
      %v1247 = vunpack.c.l.b16 %v1238
      %v1248 = vpack.c.b16 %v1245, %v1244
      %v1249 = vpack.c.b16 %v1247, %v1246
      %1250 = vrot.lane.b32.xlu0 %v1248, 96
      %v1251 = vpop.permute.xlu0 %1250
      %1252 = vrot.lane.b32.xlu0 %v1249, 96
      %v1253 = vpop.permute.xlu0 %1252
      %v1257 = vlaneseq
      %v1258 = vshrl.u32 %v1257, 7
      %v1259 = vsub.s32 0, %v1258
      %v1260 = vrot.slane %v1239, %v1259
      %1261 = vrot.lane.b32.xlu0 %v1260, 96
      %v1262 = vpop.permute.xlu0 %1261
      %1264 = vmatprep.subr.bf16.mxu0 0
      %1265 = vmatpush1.bf16.msra.mxu0 %v1251
      %1266 = vmatprep.subr.bf16.mxu0 0
      %1267 = vmatpush1.bf16.msra.mxu0 %v1253
      %1268 = vmatprep.subr.bf16.mxu0 0
      %1269 = vmatpush1.bf16.msra.mxu0 0
      %1270 = vmatprep.subr.bf16.mxu0 0
      %1271 = vmatpush1.bf16.msra.mxu0 0
      %1272 = vmatprep.subr.bf16.mxu0 0
      %1273 = vmatpush1.bf16.msra.mxu0 0
      %1274 = vmatprep.subr.bf16.mxu0 0
      %1275 = vmatpush1.bf16.msra.mxu0 0
      %1276 = vmatprep.subr.bf16.mxu0 0
      %1277 = vmatpush1.bf16.msra.mxu0 0
      %1278 = vmatprep.subr.bf16.mxu0 0
      %1279 = vmatpush1.bf16.msra.mxu0 0
      %1280 = vmatprep.subr.bf16.mxu0 0
      %1281 = vmatpush1.bf16.msra.mxu0 0
      %1282 = vmatprep.subr.bf16.mxu0 0
      %1283 = vmatpush1.bf16.msra.mxu0 0
      %1284 = vmatprep.subr.bf16.mxu0 0
      %1285 = vmatpush1.bf16.msra.mxu0 0
      %1286 = vmatprep.subr.bf16.mxu0 0
      %1287 = vmatpush1.bf16.msra.mxu0 0
      %1288 = vmatprep.subr.bf16.mxu0 0
      %1289 = vmatpush1.bf16.msra.mxu0 0
      %1290 = vmatprep.subr.bf16.mxu0 0
      %1291 = vmatpush1.bf16.msra.mxu0 0
      %1292 = vmatprep.subr.bf16.mxu0 0
      %1293 = vmatpush1.bf16.msra.mxu0 0
      %1294 = vmatprep.subr.bf16.mxu0 0
      %1295 = vmatpush1.bf16.msra.mxu0 0
      %1296 = vmatprep.mubr.bf16.mxu0 0
      %1297 = vmatmul.mubr.bf16.gmra.mrb[0].mxu0 %v1190
      %v1298 = vpop.f32.mrb[0].mxu0
      %v1299 = vadd.f32 %v1262, %v1298
      %v1300 = vpop.f32.mrb[0].mxu0
      %v1301 = vpop.f32.mrb[0].mxu0
      %v1302 = vpop.f32.mrb[0].mxu0
      %1303 = vdwg.mxu0
      %v1304 = vmax.f32 %v1299, 0.0
      %1305 = vst.msk [vmem:[#allocation2 + $0x4] sm:$0x1] %vm1233, %v1304
      %v1306 = vld [vmem:[%s7] sm:$0xf]
      %v1307 = vld [vmem:[%s7 + $0x4] sm:$0xf]
      %v1308 = vld [vmem:[%s7 + $0x8] sm:$0xf]
      %v1309 = vld [vmem:[%s7 + $0xc] sm:$0xf]
      %v1310 = vld [vmem:[%s8] sm:$0x1]
      %v1315 = vunpack.c.l.b16 %v1306
      %v1316 = vunpack.c.l.b16 %v1307
      %v1317 = vunpack.c.l.b16 %v1308
      %v1318 = vunpack.c.l.b16 %v1309
      %v1319 = vpack.c.b16 %v1316, %v1315
      %v1320 = vpack.c.b16 %v1318, %v1317
      %1321 = vrot.lane.b32.xlu0 %v1319, 64
      %v1322 = vpop.permute.xlu0 %1321
      %1323 = vrot.lane.b32.xlu0 %v1320, 64
      %v1324 = vpop.permute.xlu0 %1323
      %v1328 = vlaneseq
      %v1329 = vshrl.u32 %v1328, 7
      %v1330 = vsub.s32 0, %v1329
      %v1331 = vrot.slane %v1310, %v1330
      %1332 = vrot.lane.b32.xlu0 %v1331, 64
      %v1333 = vpop.permute.xlu0 %1332
      %1335 = vmatprep.subr.bf16.mxu0 0
      %1336 = vmatpush1.bf16.msra.mxu0 %v1322
      %1337 = vmatprep.subr.bf16.mxu0 0
      %1338 = vmatpush1.bf16.msra.mxu0 %v1324
      %1339 = vmatprep.subr.bf16.mxu0 0
      %1340 = vmatpush1.bf16.msra.mxu0 0
      %1341 = vmatprep.subr.bf16.mxu0 0
      %1342 = vmatpush1.bf16.msra.mxu0 0
      %1343 = vmatprep.subr.bf16.mxu0 0
      %1344 = vmatpush1.bf16.msra.mxu0 0
      %1345 = vmatprep.subr.bf16.mxu0 0
      %1346 = vmatpush1.bf16.msra.mxu0 0
      %1347 = vmatprep.subr.bf16.mxu0 0
      %1348 = vmatpush1.bf16.msra.mxu0 0
      %1349 = vmatprep.subr.bf16.mxu0 0
      %1350 = vmatpush1.bf16.msra.mxu0 0
      %1351 = vmatprep.subr.bf16.mxu0 0
      %1352 = vmatpush1.bf16.msra.mxu0 0
      %1353 = vmatprep.subr.bf16.mxu0 0
      %1354 = vmatpush1.bf16.msra.mxu0 0
      %1355 = vmatprep.subr.bf16.mxu0 0
      %1356 = vmatpush1.bf16.msra.mxu0 0
      %1357 = vmatprep.subr.bf16.mxu0 0
      %1358 = vmatpush1.bf16.msra.mxu0 0
      %1359 = vmatprep.subr.bf16.mxu0 0
      %1360 = vmatpush1.bf16.msra.mxu0 0
      %1361 = vmatprep.subr.bf16.mxu0 0
      %1362 = vmatpush1.bf16.msra.mxu0 0
      %1363 = vmatprep.subr.bf16.mxu0 0
      %1364 = vmatpush1.bf16.msra.mxu0 0
      %1365 = vmatprep.subr.bf16.mxu0 0
      %1366 = vmatpush1.bf16.msra.mxu0 0
      %1367 = vmatprep.mubr.bf16.mxu0 0
      %1368 = vmatmul.mubr.bf16.gmra.mrb[0].mxu0 %v1190
      %v1369 = vpop.f32.mrb[0].mxu0
      %v1370 = vadd.f32 %v1333, %v1369
      %v1371 = vpop.f32.mrb[0].mxu0
      %v1372 = vpop.f32.mrb[0].mxu0
      %v1373 = vpop.f32.mrb[0].mxu0
      %1374 = vdwg.mxu0
      %v1375 = vmax.f32 %v1370, 0.0
      %1376 = vst.msk [vmem:[#allocation2 + $0x5] sm:$0x1] %vm1233, %v1375
      %v1377 = vld [vmem:[%s7] sm:$0xf]
      %v1378 = vld [vmem:[%s7 + $0x4] sm:$0xf]
      %v1379 = vld [vmem:[%s7 + $0x8] sm:$0xf]
      %v1380 = vld [vmem:[%s7 + $0xc] sm:$0xf]
      %v1381 = vld [vmem:[%s8] sm:$0x1]
      %v1386 = vunpack.c.l.b16 %v1377
      %v1387 = vunpack.c.l.b16 %v1378
      %v1388 = vunpack.c.l.b16 %v1379
      %v1389 = vunpack.c.l.b16 %v1380
      %v1390 = vpack.c.b16 %v1387, %v1386
      %v1391 = vpack.c.b16 %v1389, %v1388
      %1392 = vrot.lane.b32.xlu0 %v1390, 32
      %v1393 = vpop.permute.xlu0 %1392
      %1394 = vrot.lane.b32.xlu0 %v1391, 32
      %v1395 = vpop.permute.xlu0 %1394
      %v1399 = vlaneseq
      %v1400 = vshrl.u32 %v1399, 7
      %v1401 = vsub.s32 0, %v1400
      %v1402 = vrot.slane %v1381, %v1401
      %1403 = vrot.lane.b32.xlu0 %v1402, 32
      %v1404 = vpop.permute.xlu0 %1403
      %1406 = vmatprep.subr.bf16.mxu0 0
      %1407 = vmatpush1.bf16.msra.mxu0 %v1393
      %1408 = vmatprep.subr.bf16.mxu0 0
      %1409 = vmatpush1.bf16.msra.mxu0 %v1395
      %1410 = vmatprep.subr.bf16.mxu0 0
      %1411 = vmatpush1.bf16.msra.mxu0 0
      %1412 = vmatprep.subr.bf16.mxu0 0
      %1413 = vmatpush1.bf16.msra.mxu0 0
      %1414 = vmatprep.subr.bf16.mxu0 0
      %1415 = vmatpush1.bf16.msra.mxu0 0
      %1416 = vmatprep.subr.bf16.mxu0 0
      %1417 = vmatpush1.bf16.msra.mxu0 0
      %1418 = vmatprep.subr.bf16.mxu0 0
      %1419 = vmatpush1.bf16.msra.mxu0 0
      %1420 = vmatprep.subr.bf16.mxu0 0
      %1421 = vmatpush1.bf16.msra.mxu0 0
      %1422 = vmatprep.subr.bf16.mxu0 0
      %1423 = vmatpush1.bf16.msra.mxu0 0
      %1424 = vmatprep.subr.bf16.mxu0 0
      %1425 = vmatpush1.bf16.msra.mxu0 0
      %1426 = vmatprep.subr.bf16.mxu0 0
      %1427 = vmatpush1.bf16.msra.mxu0 0
      %1428 = vmatprep.subr.bf16.mxu0 0
      %1429 = vmatpush1.bf16.msra.mxu0 0
      %1430 = vmatprep.subr.bf16.mxu0 0
      %1431 = vmatpush1.bf16.msra.mxu0 0
      %1432 = vmatprep.subr.bf16.mxu0 0
      %1433 = vmatpush1.bf16.msra.mxu0 0
      %1434 = vmatprep.subr.bf16.mxu0 0
      %1435 = vmatpush1.bf16.msra.mxu0 0
      %1436 = vmatprep.subr.bf16.mxu0 0
      %1437 = vmatpush1.bf16.msra.mxu0 0
      %1438 = vmatprep.mubr.bf16.mxu0 0
      %1439 = vmatmul.mubr.bf16.gmra.mrb[0].mxu0 %v1190
      %v1440 = vpop.f32.mrb[0].mxu0
      %v1441 = vadd.f32 %v1404, %v1440
      %v1442 = vpop.f32.mrb[0].mxu0
      %v1443 = vpop.f32.mrb[0].mxu0
      %v1444 = vpop.f32.mrb[0].mxu0
      %1445 = vdwg.mxu0
      %v1446 = vmax.f32 %v1441, 0.0
      %1447 = vst.msk [vmem:[#allocation2 + $0x6] sm:$0x1] %vm1233, %v1446
      %v1448 = vlaneseq
      %v1449 = vshrl.u32 %v1448, 7
      %v1450 = vand.u32 %v1449, 1
      %vm1451 = vcmp.gt.s32.totalorder %v1450, 0
      %v1452 = vsel %vm1451, 1, 0
      %v1453 = vcvt.s32.f32 %v1452
      %vm1454 = vcmp.lt.s32.totalorder %v1450, 1
      %v1455 = vsel %vm1454, 1, 0
      %v1456 = vcvt.s32.f32 %v1455
      %v1457 = vld [vmem:[#allocation2 + $0x3] sm:$0xf]
      %v1458 = vpack.c.bf16 %v1457, %v1457
      %v1459 = vld [vmem:[%s9] sm:$0xf]
      %v1460 = vld [vmem:[%s9 + $0x4] sm:$0xf]
      %v1461 = vld [vmem:[%s9 + $0x8] sm:$0xf]
      %v1462 = vld [vmem:[%s9 + $0xc] sm:$0xf]
      %v1463 = vld [vmem:[%s10] sm:$0x1]
      %v1465 = vlaneseq
      %v1466 = vshrl.u32 %v1465, 7
      %v1467 = vsub.s32 0, %v1466
      %v1468 = vrot.slane %v1463, %v1467
      %v1474 = vunpack.c.l.b16 %v1459
      %v1475 = vunpack.c.l.b16 %v1460
      %v1476 = vunpack.c.l.b16 %v1461
      %v1477 = vunpack.c.l.b16 %v1462
      %v1478 = vpack.c.b16 %v1475, %v1474
      %v1479 = vpack.c.b16 %v1477, %v1476
      %v1483 = vsel %vm753, %v1458, 0
      %1485 = vmatprep.subr.bf16.mxu0 0
      %1486 = vmatpush1.bf16.msra.mxu0 %v1478
      %1487 = vmatprep.subr.bf16.mxu0 0
      %1488 = vmatpush1.bf16.msra.mxu0 %v1479
      %1489 = vmatprep.subr.bf16.mxu0 0
      %1490 = vmatpush1.bf16.msra.mxu0 0
      %1491 = vmatprep.subr.bf16.mxu0 0
      %1492 = vmatpush1.bf16.msra.mxu0 0
      %1493 = vmatprep.subr.bf16.mxu0 0
      %1494 = vmatpush1.bf16.msra.mxu0 0
      %1495 = vmatprep.subr.bf16.mxu0 0
      %1496 = vmatpush1.bf16.msra.mxu0 0
      %1497 = vmatprep.subr.bf16.mxu0 0
      %1498 = vmatpush1.bf16.msra.mxu0 0
      %1499 = vmatprep.subr.bf16.mxu0 0
      %1500 = vmatpush1.bf16.msra.mxu0 0
      %1501 = vmatprep.subr.bf16.mxu0 0
      %1502 = vmatpush1.bf16.msra.mxu0 0
      %1503 = vmatprep.subr.bf16.mxu0 0
      %1504 = vmatpush1.bf16.msra.mxu0 0
      %1505 = vmatprep.subr.bf16.mxu0 0
      %1506 = vmatpush1.bf16.msra.mxu0 0
      %1507 = vmatprep.subr.bf16.mxu0 0
      %1508 = vmatpush1.bf16.msra.mxu0 0
      %1509 = vmatprep.subr.bf16.mxu0 0
      %1510 = vmatpush1.bf16.msra.mxu0 0
      %1511 = vmatprep.subr.bf16.mxu0 0
      %1512 = vmatpush1.bf16.msra.mxu0 0
      %1513 = vmatprep.subr.bf16.mxu0 0
      %1514 = vmatpush1.bf16.msra.mxu0 0
      %1515 = vmatprep.subr.bf16.mxu0 0
      %1516 = vmatpush1.bf16.msra.mxu0 0
      %1517 = vmatprep.mubr.bf16.mxu0 0
      %1518 = vmatmul.mubr.bf16.gmra.mrb[0].mxu0 %v1483
      %v1519 = vpop.f32.mrb[0].mxu0
      %v1520 = vadd.f32 %v1468, %v1519
      %v1521 = vpop.f32.mrb[0].mxu0
      %v1522 = vpop.f32.mrb[0].mxu0
      %v1523 = vpop.f32.mrb[0].mxu0
      %1524 = vdwg.mxu0
      %v1525 = vld [vmem:[#allocation2] sm:$0xf]
      %v1526 = vmul.f32 %v1525, %v1453
      %vm1527 = vcmask 257024
      %1528 = vst.msk [vmem:[#allocation3] sm:$0xf] %vm1527, %v1526
      %v1529 = vld [vmem:[#allocation2 + $0x1] sm:$0xf]
      %1531 = vrot.lane.b32.xlu0 %v1529, 32
      %v1532 = vpop.permute.xlu0 %1531
      %vm1534 = vcmask 519424
      %1535 = vst.msk [vmem:[#allocation3] sm:$0xf] %vm1534, %v1532
      %v1536 = vld [vmem:[#allocation2 + $0x2] sm:$0xf]
      %v1537 = vmul.f32 %v1536, %v1456
      %1539 = vrot.lane.b32.xlu0 %v1537, 64
      %v1540 = vpop.permute.xlu0 %1539
      %vm1542 = vcmask 781824
      %1543 = vst.msk [vmem:[#allocation3] sm:$0xf] %vm1542, %v1540
      %v1544 = vld [vmem:[#allocation2 + $0x2] sm:$0xf]
      %v1545 = vmul.f32 %v1544, %v1453
      %1547 = vrot.lane.b32.xlu0 %v1545, 96
      %v1548 = vpop.permute.xlu0 %1547
      %vm1550 = vcmask 1044224
      %1551 = vst.msk [vmem:[#allocation3] sm:$0xf] %vm1550, %v1548
      %v1552 = vld [vmem:[#allocation2 + $0x3] sm:$0xf]
      %1553 = vst.msk [vmem:[#allocation3 + $0x4] sm:$0xf] %vm1527, %v1552
      %v1554 = vld [vmem:[#allocation2 + $0x4] sm:$0xf]
      %v1555 = vmul.f32 %v1554, %v1456
      %1557 = vrot.lane.b32.xlu0 %v1555, 32
      %v1558 = vpop.permute.xlu0 %1557
      %1560 = vst.msk [vmem:[#allocation3 + $0x4] sm:$0xf] %vm1534, %v1558
      %v1561 = vld [vmem:[#allocation2 + $0x4] sm:$0xf]
      %v1562 = vmul.f32 %v1561, %v1453
      %1564 = vrot.lane.b32.xlu0 %v1562, 64
      %v1565 = vpop.permute.xlu0 %1564
      %1567 = vst.msk [vmem:[#allocation3 + $0x4] sm:$0xf] %vm1542, %v1565
      %v1568 = vld [vmem:[#allocation2 + $0x5] sm:$0xf]
      %1570 = vrot.lane.b32.xlu0 %v1568, 96
      %v1571 = vpop.permute.xlu0 %1570
      %1573 = vst.msk [vmem:[#allocation3 + $0x4] sm:$0xf] %vm1550, %v1571
      %v1574 = vld [vmem:[#allocation2 + $0x6] sm:$0xf]
      %v1575 = vmul.f32 %v1574, %v1456
      %1576 = vst.msk [vmem:[#allocation3 + $0x8] sm:$0xf] %vm1527, %v1575
      %v1577 = vld [vmem:[#allocation3] sm:$0xff]
      %v1578 = vld [vmem:[#allocation3 + $0x8] sm:$0xf]
      %v1580 = vcombine.high %v1577, %v1577
      %v1582 = vpack.c.bf16 %v1577, %v1577
      %v1583 = vpack.c.bf16 %v1580, %v1580
      %v1584 = vpack.c.bf16 %v1578, %v1578
      %v1585 = vld [vmem:[%s11] sm:$0xf]
      %v1586 = vld [vmem:[%s11 + $0x4] sm:$0xf]
      %v1587 = vld [vmem:[%s11 + $0x8] sm:$0xf]
      %v1588 = vld [vmem:[%s11 + $0xc] sm:$0xf]
      %v1589 = vld [vmem:[%s11 + $0x10] sm:$0xf]
      %v1590 = vld [vmem:[%s11 + $0x14] sm:$0xf]
      %v1591 = vld [vmem:[%s11 + $0x18] sm:$0xf]
      %v1592 = vld [vmem:[%s11 + $0x1c] sm:$0xf]
      %v1593 = vld [vmem:[%s11 + $0x20] sm:$0xf]
      %v1594 = vld [vmem:[%s11 + $0x24] sm:$0xf]
      %v1595 = vld [vmem:[%s11 + $0x28] sm:$0xf]
      %v1596 = vld [vmem:[%s11 + $0x2c] sm:$0xf]
      %v1597 = vld [vmem:[%s11 + $0x30] sm:$0xf]
      %v1598 = vld [vmem:[%s11 + $0x34] sm:$0xf]
      %v1599 = vld [vmem:[%s11 + $0x38] sm:$0xf]
      %v1600 = vld [vmem:[%s11 + $0x3c] sm:$0xf]
      %v1601 = vld [vmem:[%s11 + $0x40] sm:$0xf]
      %v1602 = vld [vmem:[%s11 + $0x44] sm:$0xf]
      %v1603 = vld [vmem:[%s11 + $0x48] sm:$0xf]
      %v1604 = vld [vmem:[%s11 + $0x4c] sm:$0xf]
      %v1605 = vld [vmem:[%s11 + $0x50] sm:$0xf]
      %v1606 = vld [vmem:[%s11 + $0x54] sm:$0xf]
      %v1607 = vld [vmem:[%s11 + $0x58] sm:$0xf]
      %v1608 = vld [vmem:[%s11 + $0x5c] sm:$0xf]
      %v1609 = vld [vmem:[%s11 + $0x60] sm:$0xf]
      %v1610 = vld [vmem:[%s11 + $0x64] sm:$0xf]
      %v1611 = vld [vmem:[%s11 + $0x68] sm:$0xf]
      %v1612 = vld [vmem:[%s11 + $0x6c] sm:$0xf]
      %v1613 = vld [vmem:[%s11 + $0x70] sm:$0xf]
      %v1614 = vld [vmem:[%s11 + $0x74] sm:$0xf]
      %v1615 = vld [vmem:[%s11 + $0x78] sm:$0xf]
      %v1616 = vld [vmem:[%s11 + $0x7c] sm:$0xf]
      %v1617 = vld [vmem:[%s11 + $0x80] sm:$0xf]
      %v1618 = vld [vmem:[%s11 + $0x84] sm:$0xf]
      %v1619 = vld [vmem:[%s11 + $0x88] sm:$0xf]
      %v1620 = vld [vmem:[%s11 + $0x8c] sm:$0xf]
      %v1621 = vld [vmem:[%s12] sm:$0x1]
      %v1623 = vlaneseq
      %v1624 = vshrl.u32 %v1623, 7
      %v1625 = vsub.s32 0, %v1624
      %v1626 = vrot.slane %v1621, %v1625
      %v1664 = vunpack.c.l.b16 %v1585
      %v1665 = vunpack.c.l.b16 %v1586
      %v1666 = vunpack.c.l.b16 %v1587
      %v1667 = vunpack.c.l.b16 %v1588
      %v1668 = vunpack.c.l.b16 %v1589
      %v1669 = vunpack.c.l.b16 %v1590
      %v1670 = vunpack.c.l.b16 %v1591
      %v1671 = vunpack.c.l.b16 %v1592
      %v1672 = vunpack.c.l.b16 %v1593
      %v1673 = vunpack.c.l.b16 %v1594
      %v1674 = vunpack.c.l.b16 %v1595
      %v1675 = vunpack.c.l.b16 %v1596
      %v1676 = vunpack.c.l.b16 %v1597
      %v1677 = vunpack.c.l.b16 %v1598
      %v1678 = vunpack.c.l.b16 %v1599
      %v1679 = vunpack.c.l.b16 %v1600
      %v1680 = vunpack.c.l.b16 %v1601
      %v1681 = vunpack.c.l.b16 %v1602
      %v1682 = vunpack.c.l.b16 %v1603
      %v1683 = vunpack.c.l.b16 %v1604
      %v1684 = vunpack.c.l.b16 %v1605
      %v1685 = vunpack.c.l.b16 %v1606
      %v1686 = vunpack.c.l.b16 %v1607
      %v1687 = vunpack.c.l.b16 %v1608
      %v1688 = vunpack.c.l.b16 %v1609
      %v1689 = vunpack.c.l.b16 %v1610
      %v1690 = vunpack.c.l.b16 %v1611
      %v1691 = vunpack.c.l.b16 %v1612
      %v1692 = vunpack.c.l.b16 %v1613
      %v1693 = vunpack.c.l.b16 %v1614
      %v1694 = vunpack.c.l.b16 %v1615
      %v1695 = vunpack.c.l.b16 %v1616
      %v1696 = vunpack.c.l.b16 %v1617
      %v1697 = vunpack.c.l.b16 %v1618
      %v1698 = vunpack.c.l.b16 %v1619
      %v1699 = vunpack.c.l.b16 %v1620
      %v1700 = vpack.c.b16 %v1665, %v1664
      %v1701 = vpack.c.b16 %v1667, %v1666
      %v1702 = vpack.c.b16 %v1669, %v1668
      %v1703 = vpack.c.b16 %v1671, %v1670
      %v1704 = vpack.c.b16 %v1673, %v1672
      %v1705 = vpack.c.b16 %v1675, %v1674
      %v1706 = vpack.c.b16 %v1677, %v1676
      %v1707 = vpack.c.b16 %v1679, %v1678
      %v1708 = vpack.c.b16 %v1681, %v1680
      %v1709 = vpack.c.b16 %v1683, %v1682
      %v1710 = vpack.c.b16 %v1685, %v1684
      %v1711 = vpack.c.b16 %v1687, %v1686
      %v1712 = vpack.c.b16 %v1689, %v1688
      %v1713 = vpack.c.b16 %v1691, %v1690
      %v1714 = vpack.c.b16 %v1693, %v1692
      %v1715 = vpack.c.b16 %v1695, %v1694
      %v1716 = vpack.c.b16 %v1697, %v1696
      %v1717 = vpack.c.b16 %v1699, %v1698
      %v1737 = vsel %vm753, %v1584, 0
      %1739 = vmatprep.subr.bf16.mxu0 0
      %1740 = vmatpush1.bf16.msra.mxu0 %v1700
      %1741 = vmatprep.subr.bf16.mxu0 0
      %1742 = vmatpush1.bf16.msra.mxu0 %v1701
      %1743 = vmatprep.subr.bf16.mxu0 0
      %1744 = vmatpush1.bf16.msra.mxu0 %v1702
      %1745 = vmatprep.subr.bf16.mxu0 0
      %1746 = vmatpush1.bf16.msra.mxu0 %v1703
      %1747 = vmatprep.subr.bf16.mxu0 0
      %1748 = vmatpush1.bf16.msra.mxu0 %v1704
      %1749 = vmatprep.subr.bf16.mxu0 0
      %1750 = vmatpush1.bf16.msra.mxu0 %v1705
      %1751 = vmatprep.subr.bf16.mxu0 0
      %1752 = vmatpush1.bf16.msra.mxu0 %v1706
      %1753 = vmatprep.subr.bf16.mxu0 0
      %1754 = vmatpush1.bf16.msra.mxu0 %v1707
      %1755 = vmatprep.subr.bf16.mxu0 0
      %1756 = vmatpush1.bf16.msra.mxu0 %v1708
      %1757 = vmatprep.subr.bf16.mxu0 0
      %1758 = vmatpush1.bf16.msra.mxu0 %v1709
      %1759 = vmatprep.subr.bf16.mxu0 0
      %1760 = vmatpush1.bf16.msra.mxu0 %v1710
      %1761 = vmatprep.subr.bf16.mxu0 0
      %1762 = vmatpush1.bf16.msra.mxu0 %v1711
      %1763 = vmatprep.subr.bf16.mxu0 0
      %1764 = vmatpush1.bf16.msra.mxu0 %v1712
      %1765 = vmatprep.subr.bf16.mxu0 0
      %1766 = vmatpush1.bf16.msra.mxu0 %v1713
      %1767 = vmatprep.subr.bf16.mxu0 0
      %1768 = vmatpush1.bf16.msra.mxu0 %v1714
      %1769 = vmatprep.subr.bf16.mxu0 0
      %1770 = vmatpush1.bf16.msra.mxu0 %v1715
      %1771 = vmatprep.mubr.bf16.mxu0 %v1583
      %1772 = vmatmul.mubr.bf16.gmra.mrb[0].mxu0 %v1582
      %v1773 = vpop.f32.mrb[0].mxu0
      %v1774 = vadd.f32 %v1626, %v1773
      %v1775 = vpop.f32.mrb[0].mxu0
      %v1776 = vpop.f32.mrb[0].mxu0
      %v1777 = vpop.f32.mrb[0].mxu0
      %1778 = vdwg.mxu0
      %1779 = vmatprep.subr.bf16.mxu0 0
      %1780 = vmatpush1.bf16.msra.mxu0 %v1716
      %1781 = vmatprep.subr.bf16.mxu0 0
      %1782 = vmatpush1.bf16.msra.mxu0 %v1717
      %1783 = vmatprep.subr.bf16.mxu0 0
      %1784 = vmatpush1.bf16.msra.mxu0 0
      %1785 = vmatprep.subr.bf16.mxu0 0
      %1786 = vmatpush1.bf16.msra.mxu0 0
      %1787 = vmatprep.subr.bf16.mxu0 0
      %1788 = vmatpush1.bf16.msra.mxu0 0
      %1789 = vmatprep.subr.bf16.mxu0 0
      %1790 = vmatpush1.bf16.msra.mxu0 0
      %1791 = vmatprep.subr.bf16.mxu0 0
      %1792 = vmatpush1.bf16.msra.mxu0 0
      %1793 = vmatprep.subr.bf16.mxu0 0
      %1794 = vmatpush1.bf16.msra.mxu0 0
      %1795 = vmatprep.subr.bf16.mxu0 0
      %1796 = vmatpush1.bf16.msra.mxu0 0
      %1797 = vmatprep.subr.bf16.mxu0 0
      %1798 = vmatpush1.bf16.msra.mxu0 0
      %1799 = vmatprep.subr.bf16.mxu0 0
      %1800 = vmatpush1.bf16.msra.mxu0 0
      %1801 = vmatprep.subr.bf16.mxu0 0
      %1802 = vmatpush1.bf16.msra.mxu0 0
      %1803 = vmatprep.subr.bf16.mxu0 0
      %1804 = vmatpush1.bf16.msra.mxu0 0
      %1805 = vmatprep.subr.bf16.mxu0 0
      %1806 = vmatpush1.bf16.msra.mxu0 0
      %1807 = vmatprep.subr.bf16.mxu0 0
      %1808 = vmatpush1.bf16.msra.mxu0 0
      %1809 = vmatprep.subr.bf16.mxu0 0
      %1810 = vmatpush1.bf16.msra.mxu0 0
      %1811 = vmatprep.mubr.bf16.mxu0 0
      %1812 = vmatmul.mubr.bf16.gmra.mrb[0].mxu0 %v1737
      %v1813 = vpop.f32.mrb[0].mxu0
      %v1814 = vadd.f32 %v1774, %v1813
      %v1815 = vpop.f32.mrb[0].mxu0
      %v1816 = vpop.f32.mrb[0].mxu0
      %v1817 = vpop.f32.mrb[0].mxu0
      %1818 = vdwg.mxu0
      %1819 = vst.msk [vmem:[#allocation2 + $0x3] sm:$0xf] %vm1527, %v1814
      %v1820 = vld [vmem:[#allocation2] sm:$0xf]
      %v1821 = vmul.f32 %v1820, %v1453
      %1822 = vst.msk [vmem:[#allocation3] sm:$0xf] %vm1527, %v1821
      %v1823 = vld [vmem:[#allocation2 + $0x1] sm:$0xf]
      %1825 = vrot.lane.b32.xlu0 %v1823, 32
      %v1826 = vpop.permute.xlu0 %1825
      %1828 = vst.msk [vmem:[#allocation3] sm:$0xf] %vm1534, %v1826
      %v1829 = vld [vmem:[#allocation2 + $0x2] sm:$0xf]
      %v1830 = vmul.f32 %v1829, %v1456
      %1832 = vrot.lane.b32.xlu0 %v1830, 64
      %v1833 = vpop.permute.xlu0 %1832
      %1835 = vst.msk [vmem:[#allocation3] sm:$0xf] %vm1542, %v1833
      %v1836 = vld [vmem:[#allocation2 + $0x2] sm:$0xf]
      %v1837 = vmul.f32 %v1836, %v1453
      %1839 = vrot.lane.b32.xlu0 %v1837, 96
      %v1840 = vpop.permute.xlu0 %1839
      %1842 = vst.msk [vmem:[#allocation3] sm:$0xf] %vm1550, %v1840
      %v1843 = vld [vmem:[#allocation2 + $0x3] sm:$0xf]
      %1844 = vst.msk [vmem:[#allocation3 + $0x4] sm:$0xf] %vm1527, %v1843
      %v1845 = vld [vmem:[#allocation2 + $0x4] sm:$0xf]
      %v1846 = vmul.f32 %v1845, %v1456
      %1848 = vrot.lane.b32.xlu0 %v1846, 32
      %v1849 = vpop.permute.xlu0 %1848
      %1851 = vst.msk [vmem:[#allocation3 + $0x4] sm:$0xf] %vm1534, %v1849
      %v1852 = vld [vmem:[#allocation2 + $0x4] sm:$0xf]
      %v1853 = vmul.f32 %v1852, %v1453
      %1855 = vrot.lane.b32.xlu0 %v1853, 64
      %v1856 = vpop.permute.xlu0 %1855
      %1858 = vst.msk [vmem:[#allocation3 + $0x4] sm:$0xf] %vm1542, %v1856
      %v1859 = vld [vmem:[#allocation2 + $0x5] sm:$0xf]
      %1861 = vrot.lane.b32.xlu0 %v1859, 96
      %v1862 = vpop.permute.xlu0 %1861
      %1864 = vst.msk [vmem:[#allocation3 + $0x4] sm:$0xf] %vm1550, %v1862
      %v1865 = vld [vmem:[#allocation2 + $0x6] sm:$0xf]
      %v1866 = vmul.f32 %v1865, %v1456
      %1867 = vst.msk [vmem:[#allocation3 + $0x8] sm:$0xf] %vm1527, %v1866
      %v1868 = vld [vmem:[#allocation3] sm:$0xff]
      %v1869 = vld [vmem:[#allocation3 + $0x8] sm:$0xf]
      %v1871 = vcombine.high %v1868, %v1868
      %v1873 = vpack.c.bf16 %v1868, %v1868
      %v1874 = vpack.c.bf16 %v1871, %v1871
      %v1875 = vpack.c.bf16 %v1869, %v1869
      %s1876 = scalar_lea.vmem %s11, 144
      %v1877 = vld [vmem:[%s1876] sm:$0xf]
      %v1878 = vld [vmem:[%s1876 + $0x4] sm:$0xf]
      %v1879 = vld [vmem:[%s1876 + $0x8] sm:$0xf]
      %v1880 = vld [vmem:[%s1876 + $0xc] sm:$0xf]
      %v1881 = vld [vmem:[%s1876 + $0x10] sm:$0xf]
      %v1882 = vld [vmem:[%s1876 + $0x14] sm:$0xf]
      %v1883 = vld [vmem:[%s1876 + $0x18] sm:$0xf]
      %v1884 = vld [vmem:[%s1876 + $0x1c] sm:$0xf]
      %v1885 = vld [vmem:[%s1876 + $0x20] sm:$0xf]
      %v1886 = vld [vmem:[%s1876 + $0x24] sm:$0xf]
      %v1887 = vld [vmem:[%s1876 + $0x28] sm:$0xf]
      %v1888 = vld [vmem:[%s1876 + $0x2c] sm:$0xf]
      %v1889 = vld [vmem:[%s1876 + $0x30] sm:$0xf]
      %v1890 = vld [vmem:[%s1876 + $0x34] sm:$0xf]
      %v1891 = vld [vmem:[%s1876 + $0x38] sm:$0xf]
      %v1892 = vld [vmem:[%s1876 + $0x3c] sm:$0xf]
      %v1893 = vld [vmem:[%s1876 + $0x40] sm:$0xf]
      %v1894 = vld [vmem:[%s1876 + $0x44] sm:$0xf]
      %v1895 = vld [vmem:[%s1876 + $0x48] sm:$0xf]
      %v1896 = vld [vmem:[%s1876 + $0x4c] sm:$0xf]
      %v1897 = vld [vmem:[%s1876 + $0x50] sm:$0xf]
      %v1898 = vld [vmem:[%s1876 + $0x54] sm:$0xf]
      %v1899 = vld [vmem:[%s1876 + $0x58] sm:$0xf]
      %v1900 = vld [vmem:[%s1876 + $0x5c] sm:$0xf]
      %v1901 = vld [vmem:[%s1876 + $0x60] sm:$0xf]
      %v1902 = vld [vmem:[%s1876 + $0x64] sm:$0xf]
      %v1903 = vld [vmem:[%s1876 + $0x68] sm:$0xf]
      %v1904 = vld [vmem:[%s1876 + $0x6c] sm:$0xf]
      %v1905 = vld [vmem:[%s1876 + $0x70] sm:$0xf]
      %v1906 = vld [vmem:[%s1876 + $0x74] sm:$0xf]
      %v1907 = vld [vmem:[%s1876 + $0x78] sm:$0xf]
      %v1908 = vld [vmem:[%s1876 + $0x7c] sm:$0xf]
      %v1909 = vld [vmem:[%s1876 + $0x80] sm:$0xf]
      %v1910 = vld [vmem:[%s1876 + $0x84] sm:$0xf]
      %v1911 = vld [vmem:[%s1876 + $0x88] sm:$0xf]
      %v1912 = vld [vmem:[%s1876 + $0x8c] sm:$0xf]
      %s1913 = scalar_lea.vmem %s12, 1
      %v1914 = vld [vmem:[%s1913] sm:$0x1]
      %v1916 = vlaneseq
      %v1917 = vshrl.u32 %v1916, 7
      %v1918 = vsub.s32 0, %v1917
      %v1919 = vrot.slane %v1914, %v1918
      %v1957 = vunpack.c.l.b16 %v1877
      %v1958 = vunpack.c.l.b16 %v1878
      %v1959 = vunpack.c.l.b16 %v1879
      %v1960 = vunpack.c.l.b16 %v1880
      %v1961 = vunpack.c.l.b16 %v1881
      %v1962 = vunpack.c.l.b16 %v1882
      %v1963 = vunpack.c.l.b16 %v1883
      %v1964 = vunpack.c.l.b16 %v1884
      %v1965 = vunpack.c.l.b16 %v1885
      %v1966 = vunpack.c.l.b16 %v1886
      %v1967 = vunpack.c.l.b16 %v1887
      %v1968 = vunpack.c.l.b16 %v1888
      %v1969 = vunpack.c.l.b16 %v1889
      %v1970 = vunpack.c.l.b16 %v1890
      %v1971 = vunpack.c.l.b16 %v1891
      %v1972 = vunpack.c.l.b16 %v1892
      %v1973 = vunpack.c.l.b16 %v1893
      %v1974 = vunpack.c.l.b16 %v1894
      %v1975 = vunpack.c.l.b16 %v1895
      %v1976 = vunpack.c.l.b16 %v1896
      %v1977 = vunpack.c.l.b16 %v1897
      %v1978 = vunpack.c.l.b16 %v1898
      %v1979 = vunpack.c.l.b16 %v1899
      %v1980 = vunpack.c.l.b16 %v1900
      %v1981 = vunpack.c.l.b16 %v1901
      %v1982 = vunpack.c.l.b16 %v1902
      %v1983 = vunpack.c.l.b16 %v1903
      %v1984 = vunpack.c.l.b16 %v1904
      %v1985 = vunpack.c.l.b16 %v1905
      %v1986 = vunpack.c.l.b16 %v1906
      %v1987 = vunpack.c.l.b16 %v1907
      %v1988 = vunpack.c.l.b16 %v1908
      %v1989 = vunpack.c.l.b16 %v1909
      %v1990 = vunpack.c.l.b16 %v1910
      %v1991 = vunpack.c.l.b16 %v1911
      %v1992 = vunpack.c.l.b16 %v1912
      %v1993 = vpack.c.b16 %v1958, %v1957
      %v1994 = vpack.c.b16 %v1960, %v1959
      %v1995 = vpack.c.b16 %v1962, %v1961
      %v1996 = vpack.c.b16 %v1964, %v1963
      %v1997 = vpack.c.b16 %v1966, %v1965
      %v1998 = vpack.c.b16 %v1968, %v1967
      %v1999 = vpack.c.b16 %v1970, %v1969
      %v2000 = vpack.c.b16 %v1972, %v1971
      %v2001 = vpack.c.b16 %v1974, %v1973
      %v2002 = vpack.c.b16 %v1976, %v1975
      %v2003 = vpack.c.b16 %v1978, %v1977
      %v2004 = vpack.c.b16 %v1980, %v1979
      %v2005 = vpack.c.b16 %v1982, %v1981
      %v2006 = vpack.c.b16 %v1984, %v1983
      %v2007 = vpack.c.b16 %v1986, %v1985
      %v2008 = vpack.c.b16 %v1988, %v1987
      %v2009 = vpack.c.b16 %v1990, %v1989
      %v2010 = vpack.c.b16 %v1992, %v1991
      %v2030 = vsel %vm753, %v1875, 0
      %2032 = vmatprep.subr.bf16.mxu0 0
      %2033 = vmatpush1.bf16.msra.mxu0 %v1993
      %2034 = vmatprep.subr.bf16.mxu0 0
      %2035 = vmatpush1.bf16.msra.mxu0 %v1994
      %2036 = vmatprep.subr.bf16.mxu0 0
      %2037 = vmatpush1.bf16.msra.mxu0 %v1995
      %2038 = vmatprep.subr.bf16.mxu0 0
      %2039 = vmatpush1.bf16.msra.mxu0 %v1996
      %2040 = vmatprep.subr.bf16.mxu0 0
      %2041 = vmatpush1.bf16.msra.mxu0 %v1997
      %2042 = vmatprep.subr.bf16.mxu0 0
      %2043 = vmatpush1.bf16.msra.mxu0 %v1998
      %2044 = vmatprep.subr.bf16.mxu0 0
      %2045 = vmatpush1.bf16.msra.mxu0 %v1999
      %2046 = vmatprep.subr.bf16.mxu0 0
      %2047 = vmatpush1.bf16.msra.mxu0 %v2000
      %2048 = vmatprep.subr.bf16.mxu0 0
      %2049 = vmatpush1.bf16.msra.mxu0 %v2001
      %2050 = vmatprep.subr.bf16.mxu0 0
      %2051 = vmatpush1.bf16.msra.mxu0 %v2002
      %2052 = vmatprep.subr.bf16.mxu0 0
      %2053 = vmatpush1.bf16.msra.mxu0 %v2003
      %2054 = vmatprep.subr.bf16.mxu0 0
      %2055 = vmatpush1.bf16.msra.mxu0 %v2004
      %2056 = vmatprep.subr.bf16.mxu0 0
      %2057 = vmatpush1.bf16.msra.mxu0 %v2005
      %2058 = vmatprep.subr.bf16.mxu0 0
      %2059 = vmatpush1.bf16.msra.mxu0 %v2006
      %2060 = vmatprep.subr.bf16.mxu0 0
      %2061 = vmatpush1.bf16.msra.mxu0 %v2007
      %2062 = vmatprep.subr.bf16.mxu0 0
      %2063 = vmatpush1.bf16.msra.mxu0 %v2008
      %2064 = vmatprep.mubr.bf16.mxu0 %v1874
      %2065 = vmatmul.mubr.bf16.gmra.mrb[0].mxu0 %v1873
      %v2066 = vpop.f32.mrb[0].mxu0
      %v2067 = vadd.f32 %v1919, %v2066
      %v2068 = vpop.f32.mrb[0].mxu0
      %v2069 = vpop.f32.mrb[0].mxu0
      %v2070 = vpop.f32.mrb[0].mxu0
      %2071 = vdwg.mxu0
      %2072 = vmatprep.subr.bf16.mxu0 0
      %2073 = vmatpush1.bf16.msra.mxu0 %v2009
      %2074 = vmatprep.subr.bf16.mxu0 0
      %2075 = vmatpush1.bf16.msra.mxu0 %v2010
      %2076 = vmatprep.subr.bf16.mxu0 0
      %2077 = vmatpush1.bf16.msra.mxu0 0
      %2078 = vmatprep.subr.bf16.mxu0 0
      %2079 = vmatpush1.bf16.msra.mxu0 0
      %2080 = vmatprep.subr.bf16.mxu0 0
      %2081 = vmatpush1.bf16.msra.mxu0 0
      %2082 = vmatprep.subr.bf16.mxu0 0
      %2083 = vmatpush1.bf16.msra.mxu0 0
      %2084 = vmatprep.subr.bf16.mxu0 0
      %2085 = vmatpush1.bf16.msra.mxu0 0
      %2086 = vmatprep.subr.bf16.mxu0 0
      %2087 = vmatpush1.bf16.msra.mxu0 0
      %2088 = vmatprep.subr.bf16.mxu0 0
      %2089 = vmatpush1.bf16.msra.mxu0 0
      %2090 = vmatprep.subr.bf16.mxu0 0
      %2091 = vmatpush1.bf16.msra.mxu0 0
      %2092 = vmatprep.subr.bf16.mxu0 0
      %2093 = vmatpush1.bf16.msra.mxu0 0
      %2094 = vmatprep.subr.bf16.mxu0 0
      %2095 = vmatpush1.bf16.msra.mxu0 0
      %2096 = vmatprep.subr.bf16.mxu0 0
      %2097 = vmatpush1.bf16.msra.mxu0 0
      %2098 = vmatprep.subr.bf16.mxu0 0
      %2099 = vmatpush1.bf16.msra.mxu0 0
      %2100 = vmatprep.subr.bf16.mxu0 0
      %2101 = vmatpush1.bf16.msra.mxu0 0
      %2102 = vmatprep.subr.bf16.mxu0 0
      %2103 = vmatpush1.bf16.msra.mxu0 0
      %2104 = vmatprep.mubr.bf16.mxu0 0
      %2105 = vmatmul.mubr.bf16.gmra.mrb[0].mxu0 %v2030
      %v2106 = vpop.f32.mrb[0].mxu0
      %v2107 = vadd.f32 %v2067, %v2106
      %v2108 = vpop.f32.mrb[0].mxu0
      %v2109 = vpop.f32.mrb[0].mxu0
      %v2110 = vpop.f32.mrb[0].mxu0
      %2111 = vdwg.mxu0
      %2112 = vst.msk [vmem:[#allocation2 + $0x3] sm:$0xf] %vm1527, %v2107
      %v2113 = vld [vmem:[#allocation2] sm:$0xf]
      %v2114 = vmul.f32 %v2113, %v1453
      %2115 = vst.msk [vmem:[#allocation3] sm:$0xf] %vm1527, %v2114
      %v2116 = vld [vmem:[#allocation2 + $0x1] sm:$0xf]
      %2118 = vrot.lane.b32.xlu0 %v2116, 32
      %v2119 = vpop.permute.xlu0 %2118
      %2121 = vst.msk [vmem:[#allocation3] sm:$0xf] %vm1534, %v2119
      %v2122 = vld [vmem:[#allocation2 + $0x2] sm:$0xf]
      %v2123 = vmul.f32 %v2122, %v1456
      %2125 = vrot.lane.b32.xlu0 %v2123, 64
      %v2126 = vpop.permute.xlu0 %2125
      %2128 = vst.msk [vmem:[#allocation3] sm:$0xf] %vm1542, %v2126
      %v2129 = vld [vmem:[#allocation2 + $0x2] sm:$0xf]
      %v2130 = vmul.f32 %v2129, %v1453
      %2132 = vrot.lane.b32.xlu0 %v2130, 96
      %v2133 = vpop.permute.xlu0 %2132
      %2135 = vst.msk [vmem:[#allocation3] sm:$0xf] %vm1550, %v2133
      %v2136 = vld [vmem:[#allocation2 + $0x3] sm:$0xf]
      %2137 = vst.msk [vmem:[#allocation3 + $0x4] sm:$0xf] %vm1527, %v2136
      %v2138 = vld [vmem:[#allocation2 + $0x4] sm:$0xf]
      %v2139 = vmul.f32 %v2138, %v1456
      %2141 = vrot.lane.b32.xlu0 %v2139, 32
      %v2142 = vpop.permute.xlu0 %2141
      %2144 = vst.msk [vmem:[#allocation3 + $0x4] sm:$0xf] %vm1534, %v2142
      %v2145 = vld [vmem:[#allocation2 + $0x4] sm:$0xf]
      %v2146 = vmul.f32 %v2145, %v1453
      %2148 = vrot.lane.b32.xlu0 %v2146, 64
      %v2149 = vpop.permute.xlu0 %2148
      %2151 = vst.msk [vmem:[#allocation3 + $0x4] sm:$0xf] %vm1542, %v2149
      %v2152 = vld [vmem:[#allocation2 + $0x5] sm:$0xf]
      %2154 = vrot.lane.b32.xlu0 %v2152, 96
      %v2155 = vpop.permute.xlu0 %2154
      %2157 = vst.msk [vmem:[#allocation3 + $0x4] sm:$0xf] %vm1550, %v2155
      %v2158 = vld [vmem:[#allocation2 + $0x6] sm:$0xf]
      %v2159 = vmul.f32 %v2158, %v1456
      %2160 = vst.msk [vmem:[#allocation3 + $0x8] sm:$0xf] %vm1527, %v2159
      %v2161 = vld [vmem:[#allocation3] sm:$0xff]
      %v2162 = vld [vmem:[#allocation3 + $0x8] sm:$0xf]
      %v2164 = vcombine.high %v2161, %v2161
      %v2166 = vpack.c.bf16 %v2161, %v2161
      %v2167 = vpack.c.bf16 %v2164, %v2164
      %v2168 = vpack.c.bf16 %v2162, %v2162
      %s2169 = scalar_lea.vmem %s11, 288
      %v2170 = vld [vmem:[%s2169] sm:$0xf]
      %v2171 = vld [vmem:[%s2169 + $0x4] sm:$0xf]
      %v2172 = vld [vmem:[%s2169 + $0x8] sm:$0xf]
      %v2173 = vld [vmem:[%s2169 + $0xc] sm:$0xf]
      %v2174 = vld [vmem:[%s2169 + $0x10] sm:$0xf]
      %v2175 = vld [vmem:[%s2169 + $0x14] sm:$0xf]
      %v2176 = vld [vmem:[%s2169 + $0x18] sm:$0xf]
      %v2177 = vld [vmem:[%s2169 + $0x1c] sm:$0xf]
      %v2178 = vld [vmem:[%s2169 + $0x20] sm:$0xf]
      %v2179 = vld [vmem:[%s2169 + $0x24] sm:$0xf]
      %v2180 = vld [vmem:[%s2169 + $0x28] sm:$0xf]
      %v2181 = vld [vmem:[%s2169 + $0x2c] sm:$0xf]
      %v2182 = vld [vmem:[%s2169 + $0x30] sm:$0xf]
      %v2183 = vld [vmem:[%s2169 + $0x34] sm:$0xf]
      %v2184 = vld [vmem:[%s2169 + $0x38] sm:$0xf]
      %v2185 = vld [vmem:[%s2169 + $0x3c] sm:$0xf]
      %v2186 = vld [vmem:[%s2169 + $0x40] sm:$0xf]
      %v2187 = vld [vmem:[%s2169 + $0x44] sm:$0xf]
      %v2188 = vld [vmem:[%s2169 + $0x48] sm:$0xf]
      %v2189 = vld [vmem:[%s2169 + $0x4c] sm:$0xf]
      %v2190 = vld [vmem:[%s2169 + $0x50] sm:$0xf]
      %v2191 = vld [vmem:[%s2169 + $0x54] sm:$0xf]
      %v2192 = vld [vmem:[%s2169 + $0x58] sm:$0xf]
      %v2193 = vld [vmem:[%s2169 + $0x5c] sm:$0xf]
      %v2194 = vld [vmem:[%s2169 + $0x60] sm:$0xf]
      %v2195 = vld [vmem:[%s2169 + $0x64] sm:$0xf]
      %v2196 = vld [vmem:[%s2169 + $0x68] sm:$0xf]
      %v2197 = vld [vmem:[%s2169 + $0x6c] sm:$0xf]
      %v2198 = vld [vmem:[%s2169 + $0x70] sm:$0xf]
      %v2199 = vld [vmem:[%s2169 + $0x74] sm:$0xf]
      %v2200 = vld [vmem:[%s2169 + $0x78] sm:$0xf]
      %v2201 = vld [vmem:[%s2169 + $0x7c] sm:$0xf]
      %v2202 = vld [vmem:[%s2169 + $0x80] sm:$0xf]
      %v2203 = vld [vmem:[%s2169 + $0x84] sm:$0xf]
      %v2204 = vld [vmem:[%s2169 + $0x88] sm:$0xf]
      %v2205 = vld [vmem:[%s2169 + $0x8c] sm:$0xf]
      %s2206 = scalar_lea.vmem %s12, 2
      %v2207 = vld [vmem:[%s2206] sm:$0x1]
      %v2209 = vlaneseq
      %v2210 = vshrl.u32 %v2209, 7
      %v2211 = vsub.s32 0, %v2210
      %v2212 = vrot.slane %v2207, %v2211
      %v2250 = vunpack.c.l.b16 %v2170
      %v2251 = vunpack.c.l.b16 %v2171
      %v2252 = vunpack.c.l.b16 %v2172
      %v2253 = vunpack.c.l.b16 %v2173
      %v2254 = vunpack.c.l.b16 %v2174
      %v2255 = vunpack.c.l.b16 %v2175
      %v2256 = vunpack.c.l.b16 %v2176
      %v2257 = vunpack.c.l.b16 %v2177
      %v2258 = vunpack.c.l.b16 %v2178
      %v2259 = vunpack.c.l.b16 %v2179
      %v2260 = vunpack.c.l.b16 %v2180
      %v2261 = vunpack.c.l.b16 %v2181
      %v2262 = vunpack.c.l.b16 %v2182
      %v2263 = vunpack.c.l.b16 %v2183
      %v2264 = vunpack.c.l.b16 %v2184
      %v2265 = vunpack.c.l.b16 %v2185
      %v2266 = vunpack.c.l.b16 %v2186
      %v2267 = vunpack.c.l.b16 %v2187
      %v2268 = vunpack.c.l.b16 %v2188
      %v2269 = vunpack.c.l.b16 %v2189
      %v2270 = vunpack.c.l.b16 %v2190
      %v2271 = vunpack.c.l.b16 %v2191
      %v2272 = vunpack.c.l.b16 %v2192
      %v2273 = vunpack.c.l.b16 %v2193
      %v2274 = vunpack.c.l.b16 %v2194
      %v2275 = vunpack.c.l.b16 %v2195
      %v2276 = vunpack.c.l.b16 %v2196
      %v2277 = vunpack.c.l.b16 %v2197
      %v2278 = vunpack.c.l.b16 %v2198
      %v2279 = vunpack.c.l.b16 %v2199
      %v2280 = vunpack.c.l.b16 %v2200
      %v2281 = vunpack.c.l.b16 %v2201
      %v2282 = vunpack.c.l.b16 %v2202
      %v2283 = vunpack.c.l.b16 %v2203
      %v2284 = vunpack.c.l.b16 %v2204
      %v2285 = vunpack.c.l.b16 %v2205
      %v2286 = vpack.c.b16 %v2251, %v2250
      %v2287 = vpack.c.b16 %v2253, %v2252
      %v2288 = vpack.c.b16 %v2255, %v2254
      %v2289 = vpack.c.b16 %v2257, %v2256
      %v2290 = vpack.c.b16 %v2259, %v2258
      %v2291 = vpack.c.b16 %v2261, %v2260
      %v2292 = vpack.c.b16 %v2263, %v2262
      %v2293 = vpack.c.b16 %v2265, %v2264
      %v2294 = vpack.c.b16 %v2267, %v2266
      %v2295 = vpack.c.b16 %v2269, %v2268
      %v2296 = vpack.c.b16 %v2271, %v2270
      %v2297 = vpack.c.b16 %v2273, %v2272
      %v2298 = vpack.c.b16 %v2275, %v2274
      %v2299 = vpack.c.b16 %v2277, %v2276
      %v2300 = vpack.c.b16 %v2279, %v2278
      %v2301 = vpack.c.b16 %v2281, %v2280
      %v2302 = vpack.c.b16 %v2283, %v2282
      %v2303 = vpack.c.b16 %v2285, %v2284
      %v2323 = vsel %vm753, %v2168, 0
      %2325 = vmatprep.subr.bf16.mxu0 0
      %2326 = vmatpush1.bf16.msra.mxu0 %v2286
      %2327 = vmatprep.subr.bf16.mxu0 0
      %2328 = vmatpush1.bf16.msra.mxu0 %v2287
      %2329 = vmatprep.subr.bf16.mxu0 0
      %2330 = vmatpush1.bf16.msra.mxu0 %v2288
      %2331 = vmatprep.subr.bf16.mxu0 0
      %2332 = vmatpush1.bf16.msra.mxu0 %v2289
      %2333 = vmatprep.subr.bf16.mxu0 0
      %2334 = vmatpush1.bf16.msra.mxu0 %v2290
      %2335 = vmatprep.subr.bf16.mxu0 0
      %2336 = vmatpush1.bf16.msra.mxu0 %v2291
      %2337 = vmatprep.subr.bf16.mxu0 0
      %2338 = vmatpush1.bf16.msra.mxu0 %v2292
      %2339 = vmatprep.subr.bf16.mxu0 0
      %2340 = vmatpush1.bf16.msra.mxu0 %v2293
      %2341 = vmatprep.subr.bf16.mxu0 0
      %2342 = vmatpush1.bf16.msra.mxu0 %v2294
      %2343 = vmatprep.subr.bf16.mxu0 0
      %2344 = vmatpush1.bf16.msra.mxu0 %v2295
      %2345 = vmatprep.subr.bf16.mxu0 0
      %2346 = vmatpush1.bf16.msra.mxu0 %v2296
      %2347 = vmatprep.subr.bf16.mxu0 0
      %2348 = vmatpush1.bf16.msra.mxu0 %v2297
      %2349 = vmatprep.subr.bf16.mxu0 0
      %2350 = vmatpush1.bf16.msra.mxu0 %v2298
      %2351 = vmatprep.subr.bf16.mxu0 0
      %2352 = vmatpush1.bf16.msra.mxu0 %v2299
      %2353 = vmatprep.subr.bf16.mxu0 0
      %2354 = vmatpush1.bf16.msra.mxu0 %v2300
      %2355 = vmatprep.subr.bf16.mxu0 0
      %2356 = vmatpush1.bf16.msra.mxu0 %v2301
      %2357 = vmatprep.mubr.bf16.mxu0 %v2167
      %2358 = vmatmul.mubr.bf16.gmra.mrb[0].mxu0 %v2166
      %v2359 = vpop.f32.mrb[0].mxu0
      %v2360 = vadd.f32 %v2212, %v2359
      %v2361 = vpop.f32.mrb[0].mxu0
      %v2362 = vpop.f32.mrb[0].mxu0
      %v2363 = vpop.f32.mrb[0].mxu0
      %2364 = vdwg.mxu0
      %2365 = vmatprep.subr.bf16.mxu0 0
      %2366 = vmatpush1.bf16.msra.mxu0 %v2302
      %2367 = vmatprep.subr.bf16.mxu0 0
      %2368 = vmatpush1.bf16.msra.mxu0 %v2303
      %2369 = vmatprep.subr.bf16.mxu0 0
      %2370 = vmatpush1.bf16.msra.mxu0 0
      %2371 = vmatprep.subr.bf16.mxu0 0
      %2372 = vmatpush1.bf16.msra.mxu0 0
      %2373 = vmatprep.subr.bf16.mxu0 0
      %2374 = vmatpush1.bf16.msra.mxu0 0
      %2375 = vmatprep.subr.bf16.mxu0 0
      %2376 = vmatpush1.bf16.msra.mxu0 0
      %2377 = vmatprep.subr.bf16.mxu0 0
      %2378 = vmatpush1.bf16.msra.mxu0 0
      %2379 = vmatprep.subr.bf16.mxu0 0
      %2380 = vmatpush1.bf16.msra.mxu0 0
      %2381 = vmatprep.subr.bf16.mxu0 0
      %2382 = vmatpush1.bf16.msra.mxu0 0
      %2383 = vmatprep.subr.bf16.mxu0 0
      %2384 = vmatpush1.bf16.msra.mxu0 0
      %2385 = vmatprep.subr.bf16.mxu0 0
      %2386 = vmatpush1.bf16.msra.mxu0 0
      %2387 = vmatprep.subr.bf16.mxu0 0
      %2388 = vmatpush1.bf16.msra.mxu0 0
      %2389 = vmatprep.subr.bf16.mxu0 0
      %2390 = vmatpush1.bf16.msra.mxu0 0
      %2391 = vmatprep.subr.bf16.mxu0 0
      %2392 = vmatpush1.bf16.msra.mxu0 0
      %2393 = vmatprep.subr.bf16.mxu0 0
      %2394 = vmatpush1.bf16.msra.mxu0 0
      %2395 = vmatprep.subr.bf16.mxu0 0
      %2396 = vmatpush1.bf16.msra.mxu0 0
      %2397 = vmatprep.mubr.bf16.mxu0 0
      %2398 = vmatmul.mubr.bf16.gmra.mrb[0].mxu0 %v2323
      %v2399 = vpop.f32.mrb[0].mxu0
      %v2400 = vadd.f32 %v2360, %v2399
      %v2401 = vpop.f32.mrb[0].mxu0
      %v2402 = vpop.f32.mrb[0].mxu0
      %v2403 = vpop.f32.mrb[0].mxu0
      %2404 = vdwg.mxu0
      %v2405 = vmax.f32 %v2400, 0.0
      %2406 = vst.msk [vmem:[#allocation2 + $0x3] sm:$0xf] %vm1527, %v2405
      %v2407 = vld [vmem:[#allocation2] sm:$0xf]
      %v2408 = vmul.f32 %v2407, %v1453
      %2409 = vst.msk [vmem:[#allocation3] sm:$0xf] %vm1527, %v2408
      %v2410 = vld [vmem:[#allocation2 + $0x1] sm:$0xf]
      %2412 = vrot.lane.b32.xlu0 %v2410, 32
      %v2413 = vpop.permute.xlu0 %2412
      %2415 = vst.msk [vmem:[#allocation3] sm:$0xf] %vm1534, %v2413
      %v2416 = vld [vmem:[#allocation2 + $0x2] sm:$0xf]
      %v2417 = vmul.f32 %v2416, %v1456
      %2419 = vrot.lane.b32.xlu0 %v2417, 64
      %v2420 = vpop.permute.xlu0 %2419
      %2422 = vst.msk [vmem:[#allocation3] sm:$0xf] %vm1542, %v2420
      %v2423 = vld [vmem:[#allocation2 + $0x2] sm:$0xf]
      %v2424 = vmul.f32 %v2423, %v1453
      %2426 = vrot.lane.b32.xlu0 %v2424, 96
      %v2427 = vpop.permute.xlu0 %2426
      %2429 = vst.msk [vmem:[#allocation3] sm:$0xf] %vm1550, %v2427
      %v2430 = vld [vmem:[#allocation2 + $0x3] sm:$0xf]
      %2431 = vst.msk [vmem:[#allocation3 + $0x4] sm:$0xf] %vm1527, %v2430
      %v2432 = vld [vmem:[#allocation2 + $0x4] sm:$0xf]
      %v2433 = vmul.f32 %v2432, %v1456
      %2435 = vrot.lane.b32.xlu0 %v2433, 32
      %v2436 = vpop.permute.xlu0 %2435
      %2438 = vst.msk [vmem:[#allocation3 + $0x4] sm:$0xf] %vm1534, %v2436
      %v2439 = vld [vmem:[#allocation2 + $0x4] sm:$0xf]
      %v2440 = vmul.f32 %v2439, %v1453
      %2442 = vrot.lane.b32.xlu0 %v2440, 64
      %v2443 = vpop.permute.xlu0 %2442
      %2445 = vst.msk [vmem:[#allocation3 + $0x4] sm:$0xf] %vm1542, %v2443
      %v2446 = vld [vmem:[#allocation2 + $0x5] sm:$0xf]
      %2448 = vrot.lane.b32.xlu0 %v2446, 96
      %v2449 = vpop.permute.xlu0 %2448
      %2451 = vst.msk [vmem:[#allocation3 + $0x4] sm:$0xf] %vm1550, %v2449
      %v2452 = vld [vmem:[#allocation2 + $0x6] sm:$0xf]
      %v2453 = vmul.f32 %v2452, %v1456
      %2454 = vst.msk [vmem:[#allocation3 + $0x8] sm:$0xf] %vm1527, %v2453
      %v2455 = vld [vmem:[#allocation3] sm:$0xff]
      %v2456 = vld [vmem:[#allocation3 + $0x8] sm:$0xf]
      %v2458 = vcombine.high %v2455, %v2455
      %v2460 = vpack.c.bf16 %v2455, %v2455
      %v2461 = vpack.c.bf16 %v2458, %v2458
      %v2462 = vpack.c.bf16 %v2456, %v2456
      %s2463 = scalar_lea.vmem %s11, 432
      %v2464 = vld [vmem:[%s2463] sm:$0xf]
      %v2465 = vld [vmem:[%s2463 + $0x4] sm:$0xf]
      %v2466 = vld [vmem:[%s2463 + $0x8] sm:$0xf]
      %v2467 = vld [vmem:[%s2463 + $0xc] sm:$0xf]
      %v2468 = vld [vmem:[%s2463 + $0x10] sm:$0xf]
      %v2469 = vld [vmem:[%s2463 + $0x14] sm:$0xf]
      %v2470 = vld [vmem:[%s2463 + $0x18] sm:$0xf]
      %v2471 = vld [vmem:[%s2463 + $0x1c] sm:$0xf]
      %v2472 = vld [vmem:[%s2463 + $0x20] sm:$0xf]
      %v2473 = vld [vmem:[%s2463 + $0x24] sm:$0xf]
      %v2474 = vld [vmem:[%s2463 + $0x28] sm:$0xf]
      %v2475 = vld [vmem:[%s2463 + $0x2c] sm:$0xf]
      %v2476 = vld [vmem:[%s2463 + $0x30] sm:$0xf]
      %v2477 = vld [vmem:[%s2463 + $0x34] sm:$0xf]
      %v2478 = vld [vmem:[%s2463 + $0x38] sm:$0xf]
      %v2479 = vld [vmem:[%s2463 + $0x3c] sm:$0xf]
      %v2480 = vld [vmem:[%s2463 + $0x40] sm:$0xf]
      %v2481 = vld [vmem:[%s2463 + $0x44] sm:$0xf]
      %v2482 = vld [vmem:[%s2463 + $0x48] sm:$0xf]
      %v2483 = vld [vmem:[%s2463 + $0x4c] sm:$0xf]
      %v2484 = vld [vmem:[%s2463 + $0x50] sm:$0xf]
      %v2485 = vld [vmem:[%s2463 + $0x54] sm:$0xf]
      %v2486 = vld [vmem:[%s2463 + $0x58] sm:$0xf]
      %v2487 = vld [vmem:[%s2463 + $0x5c] sm:$0xf]
      %v2488 = vld [vmem:[%s2463 + $0x60] sm:$0xf]
      %v2489 = vld [vmem:[%s2463 + $0x64] sm:$0xf]
      %v2490 = vld [vmem:[%s2463 + $0x68] sm:$0xf]
      %v2491 = vld [vmem:[%s2463 + $0x6c] sm:$0xf]
      %v2492 = vld [vmem:[%s2463 + $0x70] sm:$0xf]
      %v2493 = vld [vmem:[%s2463 + $0x74] sm:$0xf]
      %v2494 = vld [vmem:[%s2463 + $0x78] sm:$0xf]
      %v2495 = vld [vmem:[%s2463 + $0x7c] sm:$0xf]
      %v2496 = vld [vmem:[%s2463 + $0x80] sm:$0xf]
      %v2497 = vld [vmem:[%s2463 + $0x84] sm:$0xf]
      %v2498 = vld [vmem:[%s2463 + $0x88] sm:$0xf]
      %v2499 = vld [vmem:[%s2463 + $0x8c] sm:$0xf]
      %s2500 = scalar_lea.vmem %s12, 3
      %v2501 = vld [vmem:[%s2500] sm:$0x1]
      %v2503 = vlaneseq
      %v2504 = vshrl.u32 %v2503, 7
      %v2505 = vsub.s32 0, %v2504
      %v2506 = vrot.slane %v2501, %v2505
      %v2544 = vunpack.c.l.b16 %v2464
      %v2545 = vunpack.c.l.b16 %v2465
      %v2546 = vunpack.c.l.b16 %v2466
      %v2547 = vunpack.c.l.b16 %v2467
      %v2548 = vunpack.c.l.b16 %v2468
      %v2549 = vunpack.c.l.b16 %v2469
      %v2550 = vunpack.c.l.b16 %v2470
      %v2551 = vunpack.c.l.b16 %v2471
      %v2552 = vunpack.c.l.b16 %v2472
      %v2553 = vunpack.c.l.b16 %v2473
      %v2554 = vunpack.c.l.b16 %v2474
      %v2555 = vunpack.c.l.b16 %v2475
      %v2556 = vunpack.c.l.b16 %v2476
      %v2557 = vunpack.c.l.b16 %v2477
      %v2558 = vunpack.c.l.b16 %v2478
      %v2559 = vunpack.c.l.b16 %v2479
      %v2560 = vunpack.c.l.b16 %v2480
      %v2561 = vunpack.c.l.b16 %v2481
      %v2562 = vunpack.c.l.b16 %v2482
      %v2563 = vunpack.c.l.b16 %v2483
      %v2564 = vunpack.c.l.b16 %v2484
      %v2565 = vunpack.c.l.b16 %v2485
      %v2566 = vunpack.c.l.b16 %v2486
      %v2567 = vunpack.c.l.b16 %v2487
      %v2568 = vunpack.c.l.b16 %v2488
      %v2569 = vunpack.c.l.b16 %v2489
      %v2570 = vunpack.c.l.b16 %v2490
      %v2571 = vunpack.c.l.b16 %v2491
      %v2572 = vunpack.c.l.b16 %v2492
      %v2573 = vunpack.c.l.b16 %v2493
      %v2574 = vunpack.c.l.b16 %v2494
      %v2575 = vunpack.c.l.b16 %v2495
      %v2576 = vunpack.c.l.b16 %v2496
      %v2577 = vunpack.c.l.b16 %v2497
      %v2578 = vunpack.c.l.b16 %v2498
      %v2579 = vunpack.c.l.b16 %v2499
      %v2580 = vpack.c.b16 %v2545, %v2544
      %v2581 = vpack.c.b16 %v2547, %v2546
      %v2582 = vpack.c.b16 %v2549, %v2548
      %v2583 = vpack.c.b16 %v2551, %v2550
      %v2584 = vpack.c.b16 %v2553, %v2552
      %v2585 = vpack.c.b16 %v2555, %v2554
      %v2586 = vpack.c.b16 %v2557, %v2556
      %v2587 = vpack.c.b16 %v2559, %v2558
      %v2588 = vpack.c.b16 %v2561, %v2560
      %v2589 = vpack.c.b16 %v2563, %v2562
      %v2590 = vpack.c.b16 %v2565, %v2564
      %v2591 = vpack.c.b16 %v2567, %v2566
      %v2592 = vpack.c.b16 %v2569, %v2568
      %v2593 = vpack.c.b16 %v2571, %v2570
      %v2594 = vpack.c.b16 %v2573, %v2572
      %v2595 = vpack.c.b16 %v2575, %v2574
      %v2596 = vpack.c.b16 %v2577, %v2576
      %v2597 = vpack.c.b16 %v2579, %v2578
      %v2617 = vsel %vm753, %v2462, 0
      %2619 = vmatprep.subr.bf16.mxu0 0
      %2620 = vmatpush1.bf16.msra.mxu0 %v2580
      %2621 = vmatprep.subr.bf16.mxu0 0
      %2622 = vmatpush1.bf16.msra.mxu0 %v2581
      %2623 = vmatprep.subr.bf16.mxu0 0
      %2624 = vmatpush1.bf16.msra.mxu0 %v2582
      %2625 = vmatprep.subr.bf16.mxu0 0
      %2626 = vmatpush1.bf16.msra.mxu0 %v2583
      %2627 = vmatprep.subr.bf16.mxu0 0
      %2628 = vmatpush1.bf16.msra.mxu0 %v2584
      %2629 = vmatprep.subr.bf16.mxu0 0
      %2630 = vmatpush1.bf16.msra.mxu0 %v2585
      %2631 = vmatprep.subr.bf16.mxu0 0
      %2632 = vmatpush1.bf16.msra.mxu0 %v2586
      %2633 = vmatprep.subr.bf16.mxu0 0
      %2634 = vmatpush1.bf16.msra.mxu0 %v2587
      %2635 = vmatprep.subr.bf16.mxu0 0
      %2636 = vmatpush1.bf16.msra.mxu0 %v2588
      %2637 = vmatprep.subr.bf16.mxu0 0
      %2638 = vmatpush1.bf16.msra.mxu0 %v2589
      %2639 = vmatprep.subr.bf16.mxu0 0
      %2640 = vmatpush1.bf16.msra.mxu0 %v2590
      %2641 = vmatprep.subr.bf16.mxu0 0
      %2642 = vmatpush1.bf16.msra.mxu0 %v2591
      %2643 = vmatprep.subr.bf16.mxu0 0
      %2644 = vmatpush1.bf16.msra.mxu0 %v2592
      %2645 = vmatprep.subr.bf16.mxu0 0
      %2646 = vmatpush1.bf16.msra.mxu0 %v2593
      %2647 = vmatprep.subr.bf16.mxu0 0
      %2648 = vmatpush1.bf16.msra.mxu0 %v2594
      %2649 = vmatprep.subr.bf16.mxu0 0
      %2650 = vmatpush1.bf16.msra.mxu0 %v2595
      %2651 = vmatprep.mubr.bf16.mxu0 %v2461
      %2652 = vmatmul.mubr.bf16.gmra.mrb[0].mxu0 %v2460
      %v2653 = vpop.f32.mrb[0].mxu0
      %v2654 = vadd.f32 %v2506, %v2653
      %v2655 = vpop.f32.mrb[0].mxu0
      %v2656 = vpop.f32.mrb[0].mxu0
      %v2657 = vpop.f32.mrb[0].mxu0
      %2658 = vdwg.mxu0
      %2659 = vmatprep.subr.bf16.mxu0 0
      %2660 = vmatpush1.bf16.msra.mxu0 %v2596
      %2661 = vmatprep.subr.bf16.mxu0 0
      %2662 = vmatpush1.bf16.msra.mxu0 %v2597
      %2663 = vmatprep.subr.bf16.mxu0 0
      %2664 = vmatpush1.bf16.msra.mxu0 0
      %2665 = vmatprep.subr.bf16.mxu0 0
      %2666 = vmatpush1.bf16.msra.mxu0 0
      %2667 = vmatprep.subr.bf16.mxu0 0
      %2668 = vmatpush1.bf16.msra.mxu0 0
      %2669 = vmatprep.subr.bf16.mxu0 0
      %2670 = vmatpush1.bf16.msra.mxu0 0
      %2671 = vmatprep.subr.bf16.mxu0 0
      %2672 = vmatpush1.bf16.msra.mxu0 0
      %2673 = vmatprep.subr.bf16.mxu0 0
      %2674 = vmatpush1.bf16.msra.mxu0 0
      %2675 = vmatprep.subr.bf16.mxu0 0
      %2676 = vmatpush1.bf16.msra.mxu0 0
      %2677 = vmatprep.subr.bf16.mxu0 0
      %2678 = vmatpush1.bf16.msra.mxu0 0
      %2679 = vmatprep.subr.bf16.mxu0 0
      %2680 = vmatpush1.bf16.msra.mxu0 0
      %2681 = vmatprep.subr.bf16.mxu0 0
      %2682 = vmatpush1.bf16.msra.mxu0 0
      %2683 = vmatprep.subr.bf16.mxu0 0
      %2684 = vmatpush1.bf16.msra.mxu0 0
      %2685 = vmatprep.subr.bf16.mxu0 0
      %2686 = vmatpush1.bf16.msra.mxu0 0
      %2687 = vmatprep.subr.bf16.mxu0 0
      %2688 = vmatpush1.bf16.msra.mxu0 0
      %2689 = vmatprep.subr.bf16.mxu0 0
      %2690 = vmatpush1.bf16.msra.mxu0 0
      %2691 = vmatprep.mubr.bf16.mxu0 0
      %2692 = vmatmul.mubr.bf16.gmra.mrb[0].mxu0 %v2617
      %v2693 = vpop.f32.mrb[0].mxu0
      %v2694 = vadd.f32 %v2654, %v2693
      %v2695 = vpop.f32.mrb[0].mxu0
      %v2696 = vpop.f32.mrb[0].mxu0
      %v2697 = vpop.f32.mrb[0].mxu0
      %2698 = vdwg.mxu0
      %2699 = vst.msk [vmem:[#allocation2 + $0x3] sm:$0xf] %vm1527, %v2694
      %v2700 = vld [vmem:[#allocation2] sm:$0xf]
      %v2701 = vmul.f32 %v2700, %v1453
      %2702 = vst.msk [vmem:[#allocation3] sm:$0xf] %vm1527, %v2701
      %v2703 = vld [vmem:[#allocation2 + $0x1] sm:$0xf]
      %2705 = vrot.lane.b32.xlu0 %v2703, 32
      %v2706 = vpop.permute.xlu0 %2705
      %2708 = vst.msk [vmem:[#allocation3] sm:$0xf] %vm1534, %v2706
      %v2709 = vld [vmem:[#allocation2 + $0x2] sm:$0xf]
      %v2710 = vmul.f32 %v2709, %v1456
      %2712 = vrot.lane.b32.xlu0 %v2710, 64
      %v2713 = vpop.permute.xlu0 %2712
      %2715 = vst.msk [vmem:[#allocation3] sm:$0xf] %vm1542, %v2713
      %v2716 = vld [vmem:[#allocation2 + $0x2] sm:$0xf]
      %v2717 = vmul.f32 %v2716, %v1453
      %2719 = vrot.lane.b32.xlu0 %v2717, 96
      %v2720 = vpop.permute.xlu0 %2719
      %2722 = vst.msk [vmem:[#allocation3] sm:$0xf] %vm1550, %v2720
      %v2723 = vld [vmem:[#allocation2 + $0x3] sm:$0xf]
      %2724 = vst.msk [vmem:[#allocation3 + $0x4] sm:$0xf] %vm1527, %v2723
      %v2725 = vld [vmem:[#allocation2 + $0x4] sm:$0xf]
      %v2726 = vmul.f32 %v2725, %v1456
      %2728 = vrot.lane.b32.xlu0 %v2726, 32
      %v2729 = vpop.permute.xlu0 %2728
      %2731 = vst.msk [vmem:[#allocation3 + $0x4] sm:$0xf] %vm1534, %v2729
      %v2732 = vld [vmem:[#allocation2 + $0x4] sm:$0xf]
      %v2733 = vmul.f32 %v2732, %v1453
      %2735 = vrot.lane.b32.xlu0 %v2733, 64
      %v2736 = vpop.permute.xlu0 %2735
      %2738 = vst.msk [vmem:[#allocation3 + $0x4] sm:$0xf] %vm1542, %v2736
      %v2739 = vld [vmem:[#allocation2 + $0x5] sm:$0xf]
      %2741 = vrot.lane.b32.xlu0 %v2739, 96
      %v2742 = vpop.permute.xlu0 %2741
      %2744 = vst.msk [vmem:[#allocation3 + $0x4] sm:$0xf] %vm1550, %v2742
      %v2745 = vld [vmem:[#allocation2 + $0x6] sm:$0xf]
      %v2746 = vmul.f32 %v2745, %v1456
      %2747 = vst.msk [vmem:[#allocation3 + $0x8] sm:$0xf] %vm1527, %v2746
      %v2748 = vld [vmem:[#allocation3] sm:$0xff]
      %v2749 = vld [vmem:[#allocation3 + $0x8] sm:$0xf]
      %v2751 = vcombine.high %v2748, %v2748
      %v2753 = vpack.c.bf16 %v2748, %v2748
      %v2754 = vpack.c.bf16 %v2751, %v2751
      %v2755 = vpack.c.bf16 %v2749, %v2749
      %s2756 = scalar_lea.vmem %s11, 576
      %v2757 = vld [vmem:[%s2756] sm:$0xf]
      %v2758 = vld [vmem:[%s2756 + $0x4] sm:$0xf]
      %v2759 = vld [vmem:[%s2756 + $0x8] sm:$0xf]
      %v2760 = vld [vmem:[%s2756 + $0xc] sm:$0xf]
      %v2761 = vld [vmem:[%s2756 + $0x10] sm:$0xf]
      %v2762 = vld [vmem:[%s2756 + $0x14] sm:$0xf]
      %v2763 = vld [vmem:[%s2756 + $0x18] sm:$0xf]
      %v2764 = vld [vmem:[%s2756 + $0x1c] sm:$0xf]
      %v2765 = vld [vmem:[%s2756 + $0x20] sm:$0xf]
      %v2766 = vld [vmem:[%s2756 + $0x24] sm:$0xf]
      %v2767 = vld [vmem:[%s2756 + $0x28] sm:$0xf]
      %v2768 = vld [vmem:[%s2756 + $0x2c] sm:$0xf]
      %v2769 = vld [vmem:[%s2756 + $0x30] sm:$0xf]
      %v2770 = vld [vmem:[%s2756 + $0x34] sm:$0xf]
      %v2771 = vld [vmem:[%s2756 + $0x38] sm:$0xf]
      %v2772 = vld [vmem:[%s2756 + $0x3c] sm:$0xf]
      %v2773 = vld [vmem:[%s2756 + $0x40] sm:$0xf]
      %v2774 = vld [vmem:[%s2756 + $0x44] sm:$0xf]
      %v2775 = vld [vmem:[%s2756 + $0x48] sm:$0xf]
      %v2776 = vld [vmem:[%s2756 + $0x4c] sm:$0xf]
      %v2777 = vld [vmem:[%s2756 + $0x50] sm:$0xf]
      %v2778 = vld [vmem:[%s2756 + $0x54] sm:$0xf]
      %v2779 = vld [vmem:[%s2756 + $0x58] sm:$0xf]
      %v2780 = vld [vmem:[%s2756 + $0x5c] sm:$0xf]
      %v2781 = vld [vmem:[%s2756 + $0x60] sm:$0xf]
      %v2782 = vld [vmem:[%s2756 + $0x64] sm:$0xf]
      %v2783 = vld [vmem:[%s2756 + $0x68] sm:$0xf]
      %v2784 = vld [vmem:[%s2756 + $0x6c] sm:$0xf]
      %v2785 = vld [vmem:[%s2756 + $0x70] sm:$0xf]
      %v2786 = vld [vmem:[%s2756 + $0x74] sm:$0xf]
      %v2787 = vld [vmem:[%s2756 + $0x78] sm:$0xf]
      %v2788 = vld [vmem:[%s2756 + $0x7c] sm:$0xf]
      %v2789 = vld [vmem:[%s2756 + $0x80] sm:$0xf]
      %v2790 = vld [vmem:[%s2756 + $0x84] sm:$0xf]
      %v2791 = vld [vmem:[%s2756 + $0x88] sm:$0xf]
      %v2792 = vld [vmem:[%s2756 + $0x8c] sm:$0xf]
      %s2793 = scalar_lea.vmem %s12, 4
      %v2794 = vld [vmem:[%s2793] sm:$0x1]
      %v2796 = vlaneseq
      %v2797 = vshrl.u32 %v2796, 7
      %v2798 = vsub.s32 0, %v2797
      %v2799 = vrot.slane %v2794, %v2798
      %v2837 = vunpack.c.l.b16 %v2757
      %v2838 = vunpack.c.l.b16 %v2758
      %v2839 = vunpack.c.l.b16 %v2759
      %v2840 = vunpack.c.l.b16 %v2760
      %v2841 = vunpack.c.l.b16 %v2761
      %v2842 = vunpack.c.l.b16 %v2762
      %v2843 = vunpack.c.l.b16 %v2763
      %v2844 = vunpack.c.l.b16 %v2764
      %v2845 = vunpack.c.l.b16 %v2765
      %v2846 = vunpack.c.l.b16 %v2766
      %v2847 = vunpack.c.l.b16 %v2767
      %v2848 = vunpack.c.l.b16 %v2768
      %v2849 = vunpack.c.l.b16 %v2769
      %v2850 = vunpack.c.l.b16 %v2770
      %v2851 = vunpack.c.l.b16 %v2771
      %v2852 = vunpack.c.l.b16 %v2772
      %v2853 = vunpack.c.l.b16 %v2773
      %v2854 = vunpack.c.l.b16 %v2774
      %v2855 = vunpack.c.l.b16 %v2775
      %v2856 = vunpack.c.l.b16 %v2776
      %v2857 = vunpack.c.l.b16 %v2777
      %v2858 = vunpack.c.l.b16 %v2778
      %v2859 = vunpack.c.l.b16 %v2779
      %v2860 = vunpack.c.l.b16 %v2780
      %v2861 = vunpack.c.l.b16 %v2781
      %v2862 = vunpack.c.l.b16 %v2782
      %v2863 = vunpack.c.l.b16 %v2783
      %v2864 = vunpack.c.l.b16 %v2784
      %v2865 = vunpack.c.l.b16 %v2785
      %v2866 = vunpack.c.l.b16 %v2786
      %v2867 = vunpack.c.l.b16 %v2787
      %v2868 = vunpack.c.l.b16 %v2788
      %v2869 = vunpack.c.l.b16 %v2789
      %v2870 = vunpack.c.l.b16 %v2790
      %v2871 = vunpack.c.l.b16 %v2791
      %v2872 = vunpack.c.l.b16 %v2792
      %v2873 = vpack.c.b16 %v2838, %v2837
      %v2874 = vpack.c.b16 %v2840, %v2839
      %v2875 = vpack.c.b16 %v2842, %v2841
      %v2876 = vpack.c.b16 %v2844, %v2843
      %v2877 = vpack.c.b16 %v2846, %v2845
      %v2878 = vpack.c.b16 %v2848, %v2847
      %v2879 = vpack.c.b16 %v2850, %v2849
      %v2880 = vpack.c.b16 %v2852, %v2851
      %v2881 = vpack.c.b16 %v2854, %v2853
      %v2882 = vpack.c.b16 %v2856, %v2855
      %v2883 = vpack.c.b16 %v2858, %v2857
      %v2884 = vpack.c.b16 %v2860, %v2859
      %v2885 = vpack.c.b16 %v2862, %v2861
      %v2886 = vpack.c.b16 %v2864, %v2863
      %v2887 = vpack.c.b16 %v2866, %v2865
      %v2888 = vpack.c.b16 %v2868, %v2867
      %v2889 = vpack.c.b16 %v2870, %v2869
      %v2890 = vpack.c.b16 %v2872, %v2871
      %v2910 = vsel %vm753, %v2755, 0
      %2912 = vmatprep.subr.bf16.mxu0 0
      %2913 = vmatpush1.bf16.msra.mxu0 %v2873
      %2914 = vmatprep.subr.bf16.mxu0 0
      %2915 = vmatpush1.bf16.msra.mxu0 %v2874
      %2916 = vmatprep.subr.bf16.mxu0 0
      %2917 = vmatpush1.bf16.msra.mxu0 %v2875
      %2918 = vmatprep.subr.bf16.mxu0 0
      %2919 = vmatpush1.bf16.msra.mxu0 %v2876
      %2920 = vmatprep.subr.bf16.mxu0 0
      %2921 = vmatpush1.bf16.msra.mxu0 %v2877
      %2922 = vmatprep.subr.bf16.mxu0 0
      %2923 = vmatpush1.bf16.msra.mxu0 %v2878
      %2924 = vmatprep.subr.bf16.mxu0 0
      %2925 = vmatpush1.bf16.msra.mxu0 %v2879
      %2926 = vmatprep.subr.bf16.mxu0 0
      %2927 = vmatpush1.bf16.msra.mxu0 %v2880
      %2928 = vmatprep.subr.bf16.mxu0 0
      %2929 = vmatpush1.bf16.msra.mxu0 %v2881
      %2930 = vmatprep.subr.bf16.mxu0 0
      %2931 = vmatpush1.bf16.msra.mxu0 %v2882
      %2932 = vmatprep.subr.bf16.mxu0 0
      %2933 = vmatpush1.bf16.msra.mxu0 %v2883
      %2934 = vmatprep.subr.bf16.mxu0 0
      %2935 = vmatpush1.bf16.msra.mxu0 %v2884
      %2936 = vmatprep.subr.bf16.mxu0 0
      %2937 = vmatpush1.bf16.msra.mxu0 %v2885
      %2938 = vmatprep.subr.bf16.mxu0 0
      %2939 = vmatpush1.bf16.msra.mxu0 %v2886
      %2940 = vmatprep.subr.bf16.mxu0 0
      %2941 = vmatpush1.bf16.msra.mxu0 %v2887
      %2942 = vmatprep.subr.bf16.mxu0 0
      %2943 = vmatpush1.bf16.msra.mxu0 %v2888
      %2944 = vmatprep.mubr.bf16.mxu0 %v2754
      %2945 = vmatmul.mubr.bf16.gmra.mrb[0].mxu0 %v2753
      %v2946 = vpop.f32.mrb[0].mxu0
      %v2947 = vadd.f32 %v2799, %v2946
      %v2948 = vpop.f32.mrb[0].mxu0
      %v2949 = vpop.f32.mrb[0].mxu0
      %v2950 = vpop.f32.mrb[0].mxu0
      %2951 = vdwg.mxu0
      %2952 = vmatprep.subr.bf16.mxu0 0
      %2953 = vmatpush1.bf16.msra.mxu0 %v2889
      %2954 = vmatprep.subr.bf16.mxu0 0
      %2955 = vmatpush1.bf16.msra.mxu0 %v2890
      %2956 = vmatprep.subr.bf16.mxu0 0
      %2957 = vmatpush1.bf16.msra.mxu0 0
      %2958 = vmatprep.subr.bf16.mxu0 0
      %2959 = vmatpush1.bf16.msra.mxu0 0
      %2960 = vmatprep.subr.bf16.mxu0 0
      %2961 = vmatpush1.bf16.msra.mxu0 0
      %2962 = vmatprep.subr.bf16.mxu0 0
      %2963 = vmatpush1.bf16.msra.mxu0 0
      %2964 = vmatprep.subr.bf16.mxu0 0
      %2965 = vmatpush1.bf16.msra.mxu0 0
      %2966 = vmatprep.subr.bf16.mxu0 0
      %2967 = vmatpush1.bf16.msra.mxu0 0
      %2968 = vmatprep.subr.bf16.mxu0 0
      %2969 = vmatpush1.bf16.msra.mxu0 0
      %2970 = vmatprep.subr.bf16.mxu0 0
      %2971 = vmatpush1.bf16.msra.mxu0 0
      %2972 = vmatprep.subr.bf16.mxu0 0
      %2973 = vmatpush1.bf16.msra.mxu0 0
      %2974 = vmatprep.subr.bf16.mxu0 0
      %2975 = vmatpush1.bf16.msra.mxu0 0
      %2976 = vmatprep.subr.bf16.mxu0 0
      %2977 = vmatpush1.bf16.msra.mxu0 0
      %2978 = vmatprep.subr.bf16.mxu0 0
      %2979 = vmatpush1.bf16.msra.mxu0 0
      %2980 = vmatprep.subr.bf16.mxu0 0
      %2981 = vmatpush1.bf16.msra.mxu0 0
      %2982 = vmatprep.subr.bf16.mxu0 0
      %2983 = vmatpush1.bf16.msra.mxu0 0
      %2984 = vmatprep.mubr.bf16.mxu0 0
      %2985 = vmatmul.mubr.bf16.gmra.mrb[0].mxu0 %v2910
      %v2986 = vpop.f32.mrb[0].mxu0
      %v2987 = vadd.f32 %v2947, %v2986
      %v2988 = vpop.f32.mrb[0].mxu0
      %v2989 = vpop.f32.mrb[0].mxu0
      %v2990 = vpop.f32.mrb[0].mxu0
      %2991 = vdwg.mxu0
      %2992 = vst.msk [vmem:[#allocation2 + $0x3] sm:$0xf] %vm1527, %v2987
      %v2993 = vld [vmem:[#allocation2] sm:$0xf]
      %v2994 = vmul.f32 %v2993, %v1453
      %2995 = vst.msk [vmem:[#allocation3] sm:$0xf] %vm1527, %v2994
      %v2996 = vld [vmem:[#allocation2 + $0x1] sm:$0xf]
      %2998 = vrot.lane.b32.xlu0 %v2996, 32
      %v2999 = vpop.permute.xlu0 %2998
      %3001 = vst.msk [vmem:[#allocation3] sm:$0xf] %vm1534, %v2999
      %v3002 = vld [vmem:[#allocation2 + $0x2] sm:$0xf]
      %v3003 = vmul.f32 %v3002, %v1456
      %3005 = vrot.lane.b32.xlu0 %v3003, 64
      %v3006 = vpop.permute.xlu0 %3005
      %3008 = vst.msk [vmem:[#allocation3] sm:$0xf] %vm1542, %v3006
      %v3009 = vld [vmem:[#allocation2 + $0x2] sm:$0xf]
      %v3010 = vmul.f32 %v3009, %v1453
      %3012 = vrot.lane.b32.xlu0 %v3010, 96
      %v3013 = vpop.permute.xlu0 %3012
      %3015 = vst.msk [vmem:[#allocation3] sm:$0xf] %vm1550, %v3013
      %v3016 = vld [vmem:[#allocation2 + $0x3] sm:$0xf]
      %3017 = vst.msk [vmem:[#allocation3 + $0x4] sm:$0xf] %vm1527, %v3016
      %v3018 = vld [vmem:[#allocation2 + $0x4] sm:$0xf]
      %v3019 = vmul.f32 %v3018, %v1456
      %3021 = vrot.lane.b32.xlu0 %v3019, 32
      %v3022 = vpop.permute.xlu0 %3021
      %3024 = vst.msk [vmem:[#allocation3 + $0x4] sm:$0xf] %vm1534, %v3022
      %v3025 = vld [vmem:[#allocation2 + $0x4] sm:$0xf]
      %v3026 = vmul.f32 %v3025, %v1453
      %3028 = vrot.lane.b32.xlu0 %v3026, 64
      %v3029 = vpop.permute.xlu0 %3028
      %3031 = vst.msk [vmem:[#allocation3 + $0x4] sm:$0xf] %vm1542, %v3029
      %v3032 = vld [vmem:[#allocation2 + $0x5] sm:$0xf]
      %3034 = vrot.lane.b32.xlu0 %v3032, 96
      %v3035 = vpop.permute.xlu0 %3034
      %3037 = vst.msk [vmem:[#allocation3 + $0x4] sm:$0xf] %vm1550, %v3035
      %v3038 = vld [vmem:[#allocation2 + $0x6] sm:$0xf]
      %v3039 = vmul.f32 %v3038, %v1456
      %3040 = vst.msk [vmem:[#allocation3 + $0x8] sm:$0xf] %vm1527, %v3039
      %v3041 = vld [vmem:[#allocation3] sm:$0xff]
      %v3042 = vld [vmem:[#allocation3 + $0x8] sm:$0xf]
      %v3044 = vcombine.high %v3041, %v3041
      %v3046 = vpack.c.bf16 %v3041, %v3041
      %v3047 = vpack.c.bf16 %v3044, %v3044
      %v3048 = vpack.c.bf16 %v3042, %v3042
      %s3049 = scalar_lea.vmem %s11, 720
      %v3050 = vld [vmem:[%s3049] sm:$0xf]
      %v3051 = vld [vmem:[%s3049 + $0x4] sm:$0xf]
      %v3052 = vld [vmem:[%s3049 + $0x8] sm:$0xf]
      %v3053 = vld [vmem:[%s3049 + $0xc] sm:$0xf]
      %v3054 = vld [vmem:[%s3049 + $0x10] sm:$0xf]
      %v3055 = vld [vmem:[%s3049 + $0x14] sm:$0xf]
      %v3056 = vld [vmem:[%s3049 + $0x18] sm:$0xf]
      %v3057 = vld [vmem:[%s3049 + $0x1c] sm:$0xf]
      %v3058 = vld [vmem:[%s3049 + $0x20] sm:$0xf]
      %v3059 = vld [vmem:[%s3049 + $0x24] sm:$0xf]
      %v3060 = vld [vmem:[%s3049 + $0x28] sm:$0xf]
      %v3061 = vld [vmem:[%s3049 + $0x2c] sm:$0xf]
      %v3062 = vld [vmem:[%s3049 + $0x30] sm:$0xf]
      %v3063 = vld [vmem:[%s3049 + $0x34] sm:$0xf]
      %v3064 = vld [vmem:[%s3049 + $0x38] sm:$0xf]
      %v3065 = vld [vmem:[%s3049 + $0x3c] sm:$0xf]
      %v3066 = vld [vmem:[%s3049 + $0x40] sm:$0xf]
      %v3067 = vld [vmem:[%s3049 + $0x44] sm:$0xf]
      %v3068 = vld [vmem:[%s3049 + $0x48] sm:$0xf]
      %v3069 = vld [vmem:[%s3049 + $0x4c] sm:$0xf]
      %v3070 = vld [vmem:[%s3049 + $0x50] sm:$0xf]
      %v3071 = vld [vmem:[%s3049 + $0x54] sm:$0xf]
      %v3072 = vld [vmem:[%s3049 + $0x58] sm:$0xf]
      %v3073 = vld [vmem:[%s3049 + $0x5c] sm:$0xf]
      %v3074 = vld [vmem:[%s3049 + $0x60] sm:$0xf]
      %v3075 = vld [vmem:[%s3049 + $0x64] sm:$0xf]
      %v3076 = vld [vmem:[%s3049 + $0x68] sm:$0xf]
      %v3077 = vld [vmem:[%s3049 + $0x6c] sm:$0xf]
      %v3078 = vld [vmem:[%s3049 + $0x70] sm:$0xf]
      %v3079 = vld [vmem:[%s3049 + $0x74] sm:$0xf]
      %v3080 = vld [vmem:[%s3049 + $0x78] sm:$0xf]
      %v3081 = vld [vmem:[%s3049 + $0x7c] sm:$0xf]
      %v3082 = vld [vmem:[%s3049 + $0x80] sm:$0xf]
      %v3083 = vld [vmem:[%s3049 + $0x84] sm:$0xf]
      %v3084 = vld [vmem:[%s3049 + $0x88] sm:$0xf]
      %v3085 = vld [vmem:[%s3049 + $0x8c] sm:$0xf]
      %s3086 = scalar_lea.vmem %s12, 5
      %v3087 = vld [vmem:[%s3086] sm:$0x1]
      %v3089 = vlaneseq
      %v3090 = vshrl.u32 %v3089, 7
      %v3091 = vsub.s32 0, %v3090
      %v3092 = vrot.slane %v3087, %v3091
      %v3130 = vunpack.c.l.b16 %v3050
      %v3131 = vunpack.c.l.b16 %v3051
      %v3132 = vunpack.c.l.b16 %v3052
      %v3133 = vunpack.c.l.b16 %v3053
      %v3134 = vunpack.c.l.b16 %v3054
      %v3135 = vunpack.c.l.b16 %v3055
      %v3136 = vunpack.c.l.b16 %v3056
      %v3137 = vunpack.c.l.b16 %v3057
      %v3138 = vunpack.c.l.b16 %v3058
      %v3139 = vunpack.c.l.b16 %v3059
      %v3140 = vunpack.c.l.b16 %v3060
      %v3141 = vunpack.c.l.b16 %v3061
      %v3142 = vunpack.c.l.b16 %v3062
      %v3143 = vunpack.c.l.b16 %v3063
      %v3144 = vunpack.c.l.b16 %v3064
      %v3145 = vunpack.c.l.b16 %v3065
      %v3146 = vunpack.c.l.b16 %v3066
      %v3147 = vunpack.c.l.b16 %v3067
      %v3148 = vunpack.c.l.b16 %v3068
      %v3149 = vunpack.c.l.b16 %v3069
      %v3150 = vunpack.c.l.b16 %v3070
      %v3151 = vunpack.c.l.b16 %v3071
      %v3152 = vunpack.c.l.b16 %v3072
      %v3153 = vunpack.c.l.b16 %v3073
      %v3154 = vunpack.c.l.b16 %v3074
      %v3155 = vunpack.c.l.b16 %v3075
      %v3156 = vunpack.c.l.b16 %v3076
      %v3157 = vunpack.c.l.b16 %v3077
      %v3158 = vunpack.c.l.b16 %v3078
      %v3159 = vunpack.c.l.b16 %v3079
      %v3160 = vunpack.c.l.b16 %v3080
      %v3161 = vunpack.c.l.b16 %v3081
      %v3162 = vunpack.c.l.b16 %v3082
      %v3163 = vunpack.c.l.b16 %v3083
      %v3164 = vunpack.c.l.b16 %v3084
      %v3165 = vunpack.c.l.b16 %v3085
      %v3166 = vpack.c.b16 %v3131, %v3130
      %v3167 = vpack.c.b16 %v3133, %v3132
      %v3168 = vpack.c.b16 %v3135, %v3134
      %v3169 = vpack.c.b16 %v3137, %v3136
      %v3170 = vpack.c.b16 %v3139, %v3138
      %v3171 = vpack.c.b16 %v3141, %v3140
      %v3172 = vpack.c.b16 %v3143, %v3142
      %v3173 = vpack.c.b16 %v3145, %v3144
      %v3174 = vpack.c.b16 %v3147, %v3146
      %v3175 = vpack.c.b16 %v3149, %v3148
      %v3176 = vpack.c.b16 %v3151, %v3150
      %v3177 = vpack.c.b16 %v3153, %v3152
      %v3178 = vpack.c.b16 %v3155, %v3154
      %v3179 = vpack.c.b16 %v3157, %v3156
      %v3180 = vpack.c.b16 %v3159, %v3158
      %v3181 = vpack.c.b16 %v3161, %v3160
      %v3182 = vpack.c.b16 %v3163, %v3162
      %v3183 = vpack.c.b16 %v3165, %v3164
      %v3203 = vsel %vm753, %v3048, 0
      %3205 = vmatprep.subr.bf16.mxu0 0
      %3206 = vmatpush1.bf16.msra.mxu0 %v3166
      %3207 = vmatprep.subr.bf16.mxu0 0
      %3208 = vmatpush1.bf16.msra.mxu0 %v3167
      %3209 = vmatprep.subr.bf16.mxu0 0
      %3210 = vmatpush1.bf16.msra.mxu0 %v3168
      %3211 = vmatprep.subr.bf16.mxu0 0
      %3212 = vmatpush1.bf16.msra.mxu0 %v3169
      %3213 = vmatprep.subr.bf16.mxu0 0
      %3214 = vmatpush1.bf16.msra.mxu0 %v3170
      %3215 = vmatprep.subr.bf16.mxu0 0
      %3216 = vmatpush1.bf16.msra.mxu0 %v3171
      %3217 = vmatprep.subr.bf16.mxu0 0
      %3218 = vmatpush1.bf16.msra.mxu0 %v3172
      %3219 = vmatprep.subr.bf16.mxu0 0
      %3220 = vmatpush1.bf16.msra.mxu0 %v3173
      %3221 = vmatprep.subr.bf16.mxu0 0
      %3222 = vmatpush1.bf16.msra.mxu0 %v3174
      %3223 = vmatprep.subr.bf16.mxu0 0
      %3224 = vmatpush1.bf16.msra.mxu0 %v3175
      %3225 = vmatprep.subr.bf16.mxu0 0
      %3226 = vmatpush1.bf16.msra.mxu0 %v3176
      %3227 = vmatprep.subr.bf16.mxu0 0
      %3228 = vmatpush1.bf16.msra.mxu0 %v3177
      %3229 = vmatprep.subr.bf16.mxu0 0
      %3230 = vmatpush1.bf16.msra.mxu0 %v3178
      %3231 = vmatprep.subr.bf16.mxu0 0
      %3232 = vmatpush1.bf16.msra.mxu0 %v3179
      %3233 = vmatprep.subr.bf16.mxu0 0
      %3234 = vmatpush1.bf16.msra.mxu0 %v3180
      %3235 = vmatprep.subr.bf16.mxu0 0
      %3236 = vmatpush1.bf16.msra.mxu0 %v3181
      %3237 = vmatprep.mubr.bf16.mxu0 %v3047
      %3238 = vmatmul.mubr.bf16.gmra.mrb[0].mxu0 %v3046
      %v3239 = vpop.f32.mrb[0].mxu0
      %v3240 = vadd.f32 %v3092, %v3239
      %v3241 = vpop.f32.mrb[0].mxu0
      %v3242 = vpop.f32.mrb[0].mxu0
      %v3243 = vpop.f32.mrb[0].mxu0
      %3244 = vdwg.mxu0
      %3245 = vmatprep.subr.bf16.mxu0 0
      %3246 = vmatpush1.bf16.msra.mxu0 %v3182
      %3247 = vmatprep.subr.bf16.mxu0 0
      %3248 = vmatpush1.bf16.msra.mxu0 %v3183
      %3249 = vmatprep.subr.bf16.mxu0 0
      %3250 = vmatpush1.bf16.msra.mxu0 0
      %3251 = vmatprep.subr.bf16.mxu0 0
      %3252 = vmatpush1.bf16.msra.mxu0 0
      %3253 = vmatprep.subr.bf16.mxu0 0
      %3254 = vmatpush1.bf16.msra.mxu0 0
      %3255 = vmatprep.subr.bf16.mxu0 0
      %3256 = vmatpush1.bf16.msra.mxu0 0
      %3257 = vmatprep.subr.bf16.mxu0 0
      %3258 = vmatpush1.bf16.msra.mxu0 0
      %3259 = vmatprep.subr.bf16.mxu0 0
      %3260 = vmatpush1.bf16.msra.mxu0 0
      %3261 = vmatprep.subr.bf16.mxu0 0
      %3262 = vmatpush1.bf16.msra.mxu0 0
      %3263 = vmatprep.subr.bf16.mxu0 0
      %3264 = vmatpush1.bf16.msra.mxu0 0
      %3265 = vmatprep.subr.bf16.mxu0 0
      %3266 = vmatpush1.bf16.msra.mxu0 0
      %3267 = vmatprep.subr.bf16.mxu0 0
      %3268 = vmatpush1.bf16.msra.mxu0 0
      %3269 = vmatprep.subr.bf16.mxu0 0
      %3270 = vmatpush1.bf16.msra.mxu0 0
      %3271 = vmatprep.subr.bf16.mxu0 0
      %3272 = vmatpush1.bf16.msra.mxu0 0
      %3273 = vmatprep.subr.bf16.mxu0 0
      %3274 = vmatpush1.bf16.msra.mxu0 0
      %3275 = vmatprep.subr.bf16.mxu0 0
      %3276 = vmatpush1.bf16.msra.mxu0 0
      %3277 = vmatprep.mubr.bf16.mxu0 0
      %3278 = vmatmul.mubr.bf16.gmra.mrb[0].mxu0 %v3203
      %v3279 = vpop.f32.mrb[0].mxu0
      %v3280 = vadd.f32 %v3240, %v3279
      %v3281 = vpop.f32.mrb[0].mxu0
      %v3282 = vpop.f32.mrb[0].mxu0
      %v3283 = vpop.f32.mrb[0].mxu0
      %3284 = vdwg.mxu0
      %v3285 = vadd.f32 %v3280, %v1520
      %v3286 = vpack.c.bf16 %v3285, %v3285
      %v3287 = vld [vmem:[%s13] sm:$0xf]
      %v3288 = vld [vmem:[%s13 + $0x4] sm:$0xf]
      %v3289 = vld [vmem:[%s13 + $0x8] sm:$0xf]
      %v3290 = vld [vmem:[%s13 + $0xc] sm:$0xf]
      %v3291 = vld [vmem:[%s14] sm:$0x1]
      %v3293 = vlaneseq
      %v3294 = vshrl.u32 %v3293, 7
      %v3295 = vsub.s32 0, %v3294
      %v3296 = vrot.slane %v3291, %v3295
      %v3302 = vunpack.c.l.b16 %v3287
      %v3303 = vunpack.c.l.b16 %v3288
      %v3304 = vunpack.c.l.b16 %v3289
      %v3305 = vunpack.c.l.b16 %v3290
      %v3306 = vpack.c.b16 %v3303, %v3302
      %v3307 = vpack.c.b16 %v3305, %v3304
      %v3311 = vsel %vm753, %v3286, 0
      %3313 = vmatprep.subr.bf16.mxu0 0
      %3314 = vmatpush1.bf16.msra.mxu0 %v3306
      %3315 = vmatprep.subr.bf16.mxu0 0
      %3316 = vmatpush1.bf16.msra.mxu0 %v3307
      %3317 = vmatprep.subr.bf16.mxu0 0
      %3318 = vmatpush1.bf16.msra.mxu0 0
      %3319 = vmatprep.subr.bf16.mxu0 0
      %3320 = vmatpush1.bf16.msra.mxu0 0
      %3321 = vmatprep.subr.bf16.mxu0 0
      %3322 = vmatpush1.bf16.msra.mxu0 0
      %3323 = vmatprep.subr.bf16.mxu0 0
      %3324 = vmatpush1.bf16.msra.mxu0 0
      %3325 = vmatprep.subr.bf16.mxu0 0
      %3326 = vmatpush1.bf16.msra.mxu0 0
      %3327 = vmatprep.subr.bf16.mxu0 0
      %3328 = vmatpush1.bf16.msra.mxu0 0
      %3329 = vmatprep.subr.bf16.mxu0 0
      %3330 = vmatpush1.bf16.msra.mxu0 0
      %3331 = vmatprep.subr.bf16.mxu0 0
      %3332 = vmatpush1.bf16.msra.mxu0 0
      %3333 = vmatprep.subr.bf16.mxu0 0
      %3334 = vmatpush1.bf16.msra.mxu0 0
      %3335 = vmatprep.subr.bf16.mxu0 0
      %3336 = vmatpush1.bf16.msra.mxu0 0
      %3337 = vmatprep.subr.bf16.mxu0 0
      %3338 = vmatpush1.bf16.msra.mxu0 0
      %3339 = vmatprep.subr.bf16.mxu0 0
      %3340 = vmatpush1.bf16.msra.mxu0 0
      %3341 = vmatprep.subr.bf16.mxu0 0
      %3342 = vmatpush1.bf16.msra.mxu0 0
      %3343 = vmatprep.subr.bf16.mxu0 0
      %3344 = vmatpush1.bf16.msra.mxu0 0
      %3345 = vmatprep.mubr.bf16.mxu0 0
      %3346 = vmatmul.mubr.bf16.gmra.mrb[0].mxu0 %v3311
      %v3347 = vpop.f32.mrb[0].mxu0
      %v3348 = vadd.f32 %v3296, %v3347
      %v3349 = vpop.f32.mrb[0].mxu0
      %v3350 = vpop.f32.mrb[0].mxu0
      %v3351 = vpop.f32.mrb[0].mxu0
      %3352 = vdwg.mxu0
      %v3353 = vmax.f32 %v3348, 0.0
      %3354 = vst.msk [vmem:[#allocation4 + $0x5] sm:$0x1] %vm1233, %v3353
      %vm3355 = vcmask 254977
      %3356 = vst.msk [vmem:[#allocation4 + $0x6] sm:$0x2] %vm3355, %v3353
      %vm3357 = vcmask 256002
      %3358 = vst.msk [vmem:[#allocation4 + $0xb] sm:$0x4] %vm3357, %v3353
      %vm3359 = vcmask 257027
      %3360 = vst.msk [vmem:[#allocation4 + $0xc] sm:$0x8] %vm3359, %v3353
      %v3361 = vld [vmem:[%s13] sm:$0xf]
      %v3362 = vld [vmem:[%s13 + $0x4] sm:$0xf]
      %v3363 = vld [vmem:[%s13 + $0x8] sm:$0xf]
      %v3364 = vld [vmem:[%s13 + $0xc] sm:$0xf]
      %v3365 = vld [vmem:[%s14] sm:$0x1]
      %v3367 = vlaneseq
      %v3368 = vshrl.u32 %v3367, 7
      %v3369 = vsub.s32 0, %v3368
      %v3370 = vrot.slane %v3365, %v3369
      %v3375 = vunpack.c.l.b16 %v3361
      %v3376 = vunpack.c.l.b16 %v3362
      %v3377 = vunpack.c.l.b16 %v3363
      %v3378 = vunpack.c.l.b16 %v3364
      %v3379 = vpack.c.b16 %v3376, %v3375
      %v3380 = vpack.c.b16 %v3378, %v3377
      %3381 = vrot.lane.b32.xlu0 %v3379, 96
      %v3382 = vpop.permute.xlu0 %3381
      %3383 = vrot.lane.b32.xlu0 %v3380, 96
      %v3384 = vpop.permute.xlu0 %3383
      %3387 = vrot.lane.b32.xlu0 %v3370, 96
      %v3388 = vpop.permute.xlu0 %3387
      %3390 = vmatprep.subr.bf16.mxu0 0
      %3391 = vmatpush1.bf16.msra.mxu0 %v3382
      %3392 = vmatprep.subr.bf16.mxu0 0
      %3393 = vmatpush1.bf16.msra.mxu0 %v3384
      %3394 = vmatprep.subr.bf16.mxu0 0
      %3395 = vmatpush1.bf16.msra.mxu0 0
      %3396 = vmatprep.subr.bf16.mxu0 0
      %3397 = vmatpush1.bf16.msra.mxu0 0
      %3398 = vmatprep.subr.bf16.mxu0 0
      %3399 = vmatpush1.bf16.msra.mxu0 0
      %3400 = vmatprep.subr.bf16.mxu0 0
      %3401 = vmatpush1.bf16.msra.mxu0 0
      %3402 = vmatprep.subr.bf16.mxu0 0
      %3403 = vmatpush1.bf16.msra.mxu0 0
      %3404 = vmatprep.subr.bf16.mxu0 0
      %3405 = vmatpush1.bf16.msra.mxu0 0
      %3406 = vmatprep.subr.bf16.mxu0 0
      %3407 = vmatpush1.bf16.msra.mxu0 0
      %3408 = vmatprep.subr.bf16.mxu0 0
      %3409 = vmatpush1.bf16.msra.mxu0 0
      %3410 = vmatprep.subr.bf16.mxu0 0
      %3411 = vmatpush1.bf16.msra.mxu0 0
      %3412 = vmatprep.subr.bf16.mxu0 0
      %3413 = vmatpush1.bf16.msra.mxu0 0
      %3414 = vmatprep.subr.bf16.mxu0 0
      %3415 = vmatpush1.bf16.msra.mxu0 0
      %3416 = vmatprep.subr.bf16.mxu0 0
      %3417 = vmatpush1.bf16.msra.mxu0 0
      %3418 = vmatprep.subr.bf16.mxu0 0
      %3419 = vmatpush1.bf16.msra.mxu0 0
      %3420 = vmatprep.subr.bf16.mxu0 0
      %3421 = vmatpush1.bf16.msra.mxu0 0
      %3422 = vmatprep.mubr.bf16.mxu0 0
      %3423 = vmatmul.mubr.bf16.gmra.mrb[0].mxu0 %v3311
      %v3424 = vpop.f32.mrb[0].mxu0
      %v3425 = vadd.f32 %v3388, %v3424
      %v3426 = vpop.f32.mrb[0].mxu0
      %v3427 = vpop.f32.mrb[0].mxu0
      %v3428 = vpop.f32.mrb[0].mxu0
      %3429 = vdwg.mxu0
      %v3430 = vmax.f32 %v3425, 0.0
      %3431 = vst.msk [vmem:[#allocation4 + $0x6] sm:$0x1] %vm1233, %v3430
      %3432 = vst.msk [vmem:[#allocation4 + $0x7] sm:$0x2] %vm3355, %v3430
      %3433 = vst.msk [vmem:[#allocation4 + $0xc] sm:$0x4] %vm3357, %v3430
      %3434 = vst.msk [vmem:[#allocation4 + $0xd] sm:$0x8] %vm3359, %v3430
      %v3435 = vld [vmem:[%s13] sm:$0xf]
      %v3436 = vld [vmem:[%s13 + $0x4] sm:$0xf]
      %v3437 = vld [vmem:[%s13 + $0x8] sm:$0xf]
      %v3438 = vld [vmem:[%s13 + $0xc] sm:$0xf]
      %v3439 = vld [vmem:[%s14] sm:$0x1]
      %v3441 = vlaneseq
      %v3442 = vshrl.u32 %v3441, 7
      %v3443 = vsub.s32 0, %v3442
      %v3444 = vrot.slane %v3439, %v3443
      %v3449 = vunpack.c.l.b16 %v3435
      %v3450 = vunpack.c.l.b16 %v3436
      %v3451 = vunpack.c.l.b16 %v3437
      %v3452 = vunpack.c.l.b16 %v3438
      %v3453 = vpack.c.b16 %v3450, %v3449
      %v3454 = vpack.c.b16 %v3452, %v3451
      %3455 = vrot.lane.b32.xlu0 %v3453, 64
      %v3456 = vpop.permute.xlu0 %3455
      %3457 = vrot.lane.b32.xlu0 %v3454, 64
      %v3458 = vpop.permute.xlu0 %3457
      %3461 = vrot.lane.b32.xlu0 %v3444, 64
      %v3462 = vpop.permute.xlu0 %3461
      %3464 = vmatprep.subr.bf16.mxu0 0
      %3465 = vmatpush1.bf16.msra.mxu0 %v3456
      %3466 = vmatprep.subr.bf16.mxu0 0
      %3467 = vmatpush1.bf16.msra.mxu0 %v3458
      %3468 = vmatprep.subr.bf16.mxu0 0
      %3469 = vmatpush1.bf16.msra.mxu0 0
      %3470 = vmatprep.subr.bf16.mxu0 0
      %3471 = vmatpush1.bf16.msra.mxu0 0
      %3472 = vmatprep.subr.bf16.mxu0 0
      %3473 = vmatpush1.bf16.msra.mxu0 0
      %3474 = vmatprep.subr.bf16.mxu0 0
      %3475 = vmatpush1.bf16.msra.mxu0 0
      %3476 = vmatprep.subr.bf16.mxu0 0
      %3477 = vmatpush1.bf16.msra.mxu0 0
      %3478 = vmatprep.subr.bf16.mxu0 0
      %3479 = vmatpush1.bf16.msra.mxu0 0
      %3480 = vmatprep.subr.bf16.mxu0 0
      %3481 = vmatpush1.bf16.msra.mxu0 0
      %3482 = vmatprep.subr.bf16.mxu0 0
      %3483 = vmatpush1.bf16.msra.mxu0 0
      %3484 = vmatprep.subr.bf16.mxu0 0
      %3485 = vmatpush1.bf16.msra.mxu0 0
      %3486 = vmatprep.subr.bf16.mxu0 0
      %3487 = vmatpush1.bf16.msra.mxu0 0
      %3488 = vmatprep.subr.bf16.mxu0 0
      %3489 = vmatpush1.bf16.msra.mxu0 0
      %3490 = vmatprep.subr.bf16.mxu0 0
      %3491 = vmatpush1.bf16.msra.mxu0 0
      %3492 = vmatprep.subr.bf16.mxu0 0
      %3493 = vmatpush1.bf16.msra.mxu0 0
      %3494 = vmatprep.subr.bf16.mxu0 0
      %3495 = vmatpush1.bf16.msra.mxu0 0
      %3496 = vmatprep.mubr.bf16.mxu0 0
      %3497 = vmatmul.mubr.bf16.gmra.mrb[0].mxu0 %v3311
      %v3498 = vpop.f32.mrb[0].mxu0
      %v3499 = vadd.f32 %v3462, %v3498
      %v3500 = vpop.f32.mrb[0].mxu0
      %v3501 = vpop.f32.mrb[0].mxu0
      %v3502 = vpop.f32.mrb[0].mxu0
      %3503 = vdwg.mxu0
      %v3504 = vmax.f32 %v3499, 0.0
      %3505 = vst.msk [vmem:[#allocation4 + $0x9] sm:$0x1] %vm1233, %v3504
      %3506 = vst.msk [vmem:[#allocation4 + $0xa] sm:$0x2] %vm3355, %v3504
      %3507 = vst.msk [vmem:[#allocation4 + $0xf] sm:$0x4] %vm3357, %v3504
      %3508 = vst.msk [vmem:[#allocation4 + $0x10] sm:$0x8] %vm3359, %v3504
      %v3509 = vld [vmem:[%s13] sm:$0xf]
      %v3510 = vld [vmem:[%s13 + $0x4] sm:$0xf]
      %v3511 = vld [vmem:[%s13 + $0x8] sm:$0xf]
      %v3512 = vld [vmem:[%s13 + $0xc] sm:$0xf]
      %v3513 = vld [vmem:[%s14] sm:$0x1]
      %v3515 = vlaneseq
      %v3516 = vshrl.u32 %v3515, 7
      %v3517 = vsub.s32 0, %v3516
      %v3518 = vrot.slane %v3513, %v3517
      %v3523 = vunpack.c.l.b16 %v3509
      %v3524 = vunpack.c.l.b16 %v3510
      %v3525 = vunpack.c.l.b16 %v3511
      %v3526 = vunpack.c.l.b16 %v3512
      %v3527 = vpack.c.b16 %v3524, %v3523
      %v3528 = vpack.c.b16 %v3526, %v3525
      %3529 = vrot.lane.b32.xlu0 %v3527, 32
      %v3530 = vpop.permute.xlu0 %3529
      %3531 = vrot.lane.b32.xlu0 %v3528, 32
      %v3532 = vpop.permute.xlu0 %3531
      %3535 = vrot.lane.b32.xlu0 %v3518, 32
      %v3536 = vpop.permute.xlu0 %3535
      %3538 = vmatprep.subr.bf16.mxu0 0
      %3539 = vmatpush1.bf16.msra.mxu0 %v3530
      %3540 = vmatprep.subr.bf16.mxu0 0
      %3541 = vmatpush1.bf16.msra.mxu0 %v3532
      %3542 = vmatprep.subr.bf16.mxu0 0
      %3543 = vmatpush1.bf16.msra.mxu0 0
      %3544 = vmatprep.subr.bf16.mxu0 0
      %3545 = vmatpush1.bf16.msra.mxu0 0
      %3546 = vmatprep.subr.bf16.mxu0 0
      %3547 = vmatpush1.bf16.msra.mxu0 0
      %3548 = vmatprep.subr.bf16.mxu0 0
      %3549 = vmatpush1.bf16.msra.mxu0 0
      %3550 = vmatprep.subr.bf16.mxu0 0
      %3551 = vmatpush1.bf16.msra.mxu0 0
      %3552 = vmatprep.subr.bf16.mxu0 0
      %3553 = vmatpush1.bf16.msra.mxu0 0
      %3554 = vmatprep.subr.bf16.mxu0 0
      %3555 = vmatpush1.bf16.msra.mxu0 0
      %3556 = vmatprep.subr.bf16.mxu0 0
      %3557 = vmatpush1.bf16.msra.mxu0 0
      %3558 = vmatprep.subr.bf16.mxu0 0
      %3559 = vmatpush1.bf16.msra.mxu0 0
      %3560 = vmatprep.subr.bf16.mxu0 0
      %3561 = vmatpush1.bf16.msra.mxu0 0
      %3562 = vmatprep.subr.bf16.mxu0 0
      %3563 = vmatpush1.bf16.msra.mxu0 0
      %3564 = vmatprep.subr.bf16.mxu0 0
      %3565 = vmatpush1.bf16.msra.mxu0 0
      %3566 = vmatprep.subr.bf16.mxu0 0
      %3567 = vmatpush1.bf16.msra.mxu0 0
      %3568 = vmatprep.subr.bf16.mxu0 0
      %3569 = vmatpush1.bf16.msra.mxu0 0
      %3570 = vmatprep.mubr.bf16.mxu0 0
      %3571 = vmatmul.mubr.bf16.gmra.mrb[0].mxu0 %v3311
      %v3572 = vpop.f32.mrb[0].mxu0
      %v3573 = vadd.f32 %v3536, %v3572
      %v3574 = vpop.f32.mrb[0].mxu0
      %v3575 = vpop.f32.mrb[0].mxu0
      %v3576 = vpop.f32.mrb[0].mxu0
      %3577 = vdwg.mxu0
      %v3578 = vmax.f32 %v3573, 0.0
      %3579 = vst.msk [vmem:[#allocation4 + $0xa] sm:$0x1] %vm1233, %v3578
      %3580 = vst.msk [vmem:[#allocation4 + $0xb] sm:$0x2] %vm3355, %v3578
      %3581 = vst.msk [vmem:[#allocation4 + $0x10] sm:$0x4] %vm3357, %v3578
      %3582 = vst.msk [vmem:[#allocation4 + $0x11] sm:$0x8] %vm3359, %v3578
      %v3583 = vadd.s32 %v1449, 8
      %v3584 = vand.u32 %v1449, 3
      %v3585 = vand.u32 %v3583, 3
      %vm3586 = vcmp.gt.s32.totalorder %v3584, 0
      %vm3587 = vcmp.gt.s32.totalorder %v3585, 0
      %v3588 = vsel %vm3586, 1, 0
      %v3589 = vsel %vm3587, 1, 0
      %v3590 = vcvt.s32.f32 %v3588
      %v3591 = vcvt.s32.f32 %v3589
      %vm3592 = vcmp.lt.s32.totalorder %v3584, 3
      %vm3593 = vcmp.lt.s32.totalorder %v3585, 3
      %v3594 = vsel %vm3592, 1, 0
      %v3595 = vsel %vm3593, 1, 0
      %v3596 = vcvt.s32.f32 %v3594
      %v3597 = vcvt.s32.f32 %v3595
      %v3598 = vld [vmem:[#allocation4 + $0x5] sm:$0xff]
      %v3599 = vld [vmem:[#allocation4 + $0xd] sm:$0xff]
      %v3600 = vpack.c.bf16 %v3599, %v3598
      %v3601 = vld [vmem:[%s15] sm:$0xf]
      %v3602 = vld [vmem:[%s15 + $0x4] sm:$0xf]
      %v3603 = vld [vmem:[%s15 + $0x8] sm:$0xf]
      %v3604 = vld [vmem:[%s15 + $0xc] sm:$0xf]
      %v3605 = vld [vmem:[%s16] sm:$0x1]
      %v3607 = vlaneseq
      %v3608 = vshrl.u32 %v3607, 7
      %v3609 = vsub.s32 0, %v3608
      %v3610 = vrot.slane %v3605, %v3609
      %v3616 = vunpack.c.l.b16 %v3601
      %v3617 = vunpack.c.l.b16 %v3602
      %v3618 = vunpack.c.l.b16 %v3603
      %v3619 = vunpack.c.l.b16 %v3604
      %v3620 = vpack.c.b16 %v3617, %v3616
      %v3621 = vpack.c.b16 %v3619, %v3618
      %v3625 = vsel %vm753, %v3600, 0
      %3627 = vmatprep.subr.bf16.mxu0 0
      %3628 = vmatpush1.bf16.msra.mxu0 %v3620
      %3629 = vmatprep.subr.bf16.mxu0 0
      %3630 = vmatpush1.bf16.msra.mxu0 %v3621
      %3631 = vmatprep.subr.bf16.mxu0 0
      %3632 = vmatpush1.bf16.msra.mxu0 0
      %3633 = vmatprep.subr.bf16.mxu0 0
      %3634 = vmatpush1.bf16.msra.mxu0 0
      %3635 = vmatprep.subr.bf16.mxu0 0
      %3636 = vmatpush1.bf16.msra.mxu0 0
      %3637 = vmatprep.subr.bf16.mxu0 0
      %3638 = vmatpush1.bf16.msra.mxu0 0
      %3639 = vmatprep.subr.bf16.mxu0 0
      %3640 = vmatpush1.bf16.msra.mxu0 0
      %3641 = vmatprep.subr.bf16.mxu0 0
      %3642 = vmatpush1.bf16.msra.mxu0 0
      %3643 = vmatprep.subr.bf16.mxu0 0
      %3644 = vmatpush1.bf16.msra.mxu0 0
      %3645 = vmatprep.subr.bf16.mxu0 0
      %3646 = vmatpush1.bf16.msra.mxu0 0
      %3647 = vmatprep.subr.bf16.mxu0 0
      %3648 = vmatpush1.bf16.msra.mxu0 0
      %3649 = vmatprep.subr.bf16.mxu0 0
      %3650 = vmatpush1.bf16.msra.mxu0 0
      %3651 = vmatprep.subr.bf16.mxu0 0
      %3652 = vmatpush1.bf16.msra.mxu0 0
      %3653 = vmatprep.subr.bf16.mxu0 0
      %3654 = vmatpush1.bf16.msra.mxu0 0
      %3655 = vmatprep.subr.bf16.mxu0 0
      %3656 = vmatpush1.bf16.msra.mxu0 0
      %3657 = vmatprep.subr.bf16.mxu0 0
      %3658 = vmatpush1.bf16.msra.mxu0 0
      %3659 = vmatprep.mubr.bf16.mxu0 0
      %3660 = vmatmul.mubr.bf16.gmra.mrb[0].mxu0 %v3625
      %v3661 = vpop.f32.mrb[0].mxu0
      %v3662 = vadd.f32 %v3610, %v3661
      %v3663 = vpop.f32.mrb[0].mxu0
      %v3664 = vpop.f32.mrb[0].mxu0
      %v3665 = vadd.f32 %v3610, %v3664
      %v3666 = vpop.f32.mrb[0].mxu0
      %3667 = vdwg.mxu0
      %v3668 = vld [vmem:[#allocation4] sm:$0xff]
      %v3669 = vld [vmem:[#allocation4 + $0x8] sm:$0xff]
      %v3670 = vmul.f32 %v3668, %v3590
      %v3671 = vmul.f32 %v3669, %v3591
      %3672 = vst.msk [vmem:[#allocation5] sm:$0xff] %vm753, %v3670
      %3673 = vst.msk [vmem:[#allocation5 + $0x18] sm:$0xff] %vm753, %v3671
      %v3674 = vld [vmem:[#allocation4 + $0x1] sm:$0xff]
      %v3675 = vld [vmem:[#allocation4 + $0x9] sm:$0xff]
      %3678 = vrot.lane.b32.xlu0 %v3674, 32
      %v3679 = vpop.permute.xlu0 %3678
      %3680 = vrot.lane.b32.xlu0 %v3675, 32
      %v3681 = vpop.permute.xlu0 %3680
      %vm3684 = vcmask 523520
      %3685 = vst.msk [vmem:[#allocation5] sm:$0xff] %vm3684, %v3679
      %3686 = vst.msk [vmem:[#allocation5 + $0x18] sm:$0xff] %vm3684, %v3681
      %v3687 = vld [vmem:[#allocation4 + $0x2] sm:$0xff]
      %v3688 = vld [vmem:[#allocation4 + $0xa] sm:$0xff]
      %v3689 = vmul.f32 %v3687, %v3596
      %v3690 = vmul.f32 %v3688, %v3597
      %3693 = vrot.lane.b32.xlu0 %v3689, 64
      %v3694 = vpop.permute.xlu0 %3693
      %3695 = vrot.lane.b32.xlu0 %v3690, 64
      %v3696 = vpop.permute.xlu0 %3695
      %vm3699 = vcmask 785920
      %3700 = vst.msk [vmem:[#allocation5] sm:$0xff] %vm3699, %v3694
      %3701 = vst.msk [vmem:[#allocation5 + $0x18] sm:$0xff] %vm3699, %v3696
      %v3702 = vld [vmem:[#allocation4 + $0x4] sm:$0xff]
      %v3703 = vld [vmem:[#allocation4 + $0xc] sm:$0xff]
      %v3704 = vmul.f32 %v3702, %v3590
      %v3705 = vmul.f32 %v3703, %v3591
      %3708 = vrot.lane.b32.xlu0 %v3704, 96
      %v3709 = vpop.permute.xlu0 %3708
      %3710 = vrot.lane.b32.xlu0 %v3705, 96
      %v3711 = vpop.permute.xlu0 %3710
      %vm3714 = vcmask 1048320
      %3715 = vst.msk [vmem:[#allocation5] sm:$0xff] %vm3714, %v3709
      %3716 = vst.msk [vmem:[#allocation5 + $0x18] sm:$0xff] %vm3714, %v3711
      %v3717 = vld [vmem:[#allocation4 + $0x5] sm:$0xff]
      %v3718 = vld [vmem:[#allocation4 + $0xd] sm:$0xff]
      %3719 = vst.msk [vmem:[#allocation5 + $0x8] sm:$0xff] %vm753, %v3717
      %3720 = vst.msk [vmem:[#allocation5 + $0x20] sm:$0xff] %vm753, %v3718
      %v3721 = vld [vmem:[#allocation4 + $0x6] sm:$0xff]
      %v3722 = vld [vmem:[#allocation4 + $0xe] sm:$0xff]
      %v3723 = vmul.f32 %v3721, %v3596
      %v3724 = vmul.f32 %v3722, %v3597
      %3727 = vrot.lane.b32.xlu0 %v3723, 32
      %v3728 = vpop.permute.xlu0 %3727
      %3729 = vrot.lane.b32.xlu0 %v3724, 32
      %v3730 = vpop.permute.xlu0 %3729
      %3733 = vst.msk [vmem:[#allocation5 + $0x8] sm:$0xff] %vm3684, %v3728
      %3734 = vst.msk [vmem:[#allocation5 + $0x20] sm:$0xff] %vm3684, %v3730
      %v3735 = vld [vmem:[#allocation4 + $0x8] sm:$0xff]
      %v3736 = vld [vmem:[#allocation4 + $0x10] sm:$0xff]
      %v3737 = vmul.f32 %v3735, %v3590
      %v3738 = vmul.f32 %v3736, %v3591
      %3741 = vrot.lane.b32.xlu0 %v3737, 64
      %v3742 = vpop.permute.xlu0 %3741
      %3743 = vrot.lane.b32.xlu0 %v3738, 64
      %v3744 = vpop.permute.xlu0 %3743
      %3747 = vst.msk [vmem:[#allocation5 + $0x8] sm:$0xff] %vm3699, %v3742
      %3748 = vst.msk [vmem:[#allocation5 + $0x20] sm:$0xff] %vm3699, %v3744
      %v3749 = vld [vmem:[#allocation4 + $0x9] sm:$0xff]
      %v3750 = vld [vmem:[#allocation4 + $0x11] sm:$0xff]
      %3753 = vrot.lane.b32.xlu0 %v3749, 96
      %v3754 = vpop.permute.xlu0 %3753
      %3755 = vrot.lane.b32.xlu0 %v3750, 96
      %v3756 = vpop.permute.xlu0 %3755
      %3759 = vst.msk [vmem:[#allocation5 + $0x8] sm:$0xff] %vm3714, %v3754
      %3760 = vst.msk [vmem:[#allocation5 + $0x20] sm:$0xff] %vm3714, %v3756
      %v3761 = vld [vmem:[#allocation4 + $0xa] sm:$0xff]
      %v3762 = vld [vmem:[#allocation4 + $0x12] sm:$0xff]
      %v3763 = vmul.f32 %v3761, %v3596
      %v3764 = vmul.f32 %v3762, %v3597
      %3765 = vst.msk [vmem:[#allocation5 + $0x10] sm:$0xff] %vm753, %v3763
      %3766 = vst.msk [vmem:[#allocation5 + $0x28] sm:$0xff] %vm753, %v3764
      %v3767 = vld [vmem:[#allocation5] sm:$0xff]
      %v3768 = vld [vmem:[#allocation5 + $0x8] sm:$0xff]
      %v3769 = vld [vmem:[#allocation5 + $0x10] sm:$0xff]
      %v3770 = vld [vmem:[#allocation5 + $0x18] sm:$0xff]
      %v3771 = vld [vmem:[#allocation5 + $0x20] sm:$0xff]
      %v3772 = vld [vmem:[#allocation5 + $0x28] sm:$0xff]
      %v3773 = vpack.c.bf16 %v3770, %v3767
      %v3774 = vpack.c.bf16 %v3771, %v3768
      %v3775 = vpack.c.bf16 %v3772, %v3769
      %v3776 = vld [vmem:[%s17] sm:$0xf]
      %v3777 = vld [vmem:[%s17 + $0x4] sm:$0xf]
      %v3778 = vld [vmem:[%s17 + $0x8] sm:$0xf]
      %v3779 = vld [vmem:[%s17 + $0xc] sm:$0xf]
      %v3780 = vld [vmem:[%s17 + $0x10] sm:$0xf]
      %v3781 = vld [vmem:[%s17 + $0x14] sm:$0xf]
      %v3782 = vld [vmem:[%s17 + $0x18] sm:$0xf]
      %v3783 = vld [vmem:[%s17 + $0x1c] sm:$0xf]
      %v3784 = vld [vmem:[%s17 + $0x20] sm:$0xf]
      %v3785 = vld [vmem:[%s17 + $0x24] sm:$0xf]
      %v3786 = vld [vmem:[%s17 + $0x28] sm:$0xf]
      %v3787 = vld [vmem:[%s17 + $0x2c] sm:$0xf]
      %v3788 = vld [vmem:[%s17 + $0x30] sm:$0xf]
      %v3789 = vld [vmem:[%s17 + $0x34] sm:$0xf]
      %v3790 = vld [vmem:[%s17 + $0x38] sm:$0xf]
      %v3791 = vld [vmem:[%s17 + $0x3c] sm:$0xf]
      %v3792 = vld [vmem:[%s17 + $0x40] sm:$0xf]
      %v3793 = vld [vmem:[%s17 + $0x44] sm:$0xf]
      %v3794 = vld [vmem:[%s17 + $0x48] sm:$0xf]
      %v3795 = vld [vmem:[%s17 + $0x4c] sm:$0xf]
      %v3796 = vld [vmem:[%s17 + $0x50] sm:$0xf]
      %v3797 = vld [vmem:[%s17 + $0x54] sm:$0xf]
      %v3798 = vld [vmem:[%s17 + $0x58] sm:$0xf]
      %v3799 = vld [vmem:[%s17 + $0x5c] sm:$0xf]
      %v3800 = vld [vmem:[%s17 + $0x60] sm:$0xf]
      %v3801 = vld [vmem:[%s17 + $0x64] sm:$0xf]
      %v3802 = vld [vmem:[%s17 + $0x68] sm:$0xf]
      %v3803 = vld [vmem:[%s17 + $0x6c] sm:$0xf]
      %v3804 = vld [vmem:[%s17 + $0x70] sm:$0xf]
      %v3805 = vld [vmem:[%s17 + $0x74] sm:$0xf]
      %v3806 = vld [vmem:[%s17 + $0x78] sm:$0xf]
      %v3807 = vld [vmem:[%s17 + $0x7c] sm:$0xf]
      %v3808 = vld [vmem:[%s17 + $0x80] sm:$0xf]
      %v3809 = vld [vmem:[%s17 + $0x84] sm:$0xf]
      %v3810 = vld [vmem:[%s17 + $0x88] sm:$0xf]
      %v3811 = vld [vmem:[%s17 + $0x8c] sm:$0xf]
      %v3812 = vld [vmem:[%s18] sm:$0x1]
      %v3814 = vlaneseq
      %v3815 = vshrl.u32 %v3814, 7
      %v3816 = vsub.s32 0, %v3815
      %v3817 = vrot.slane %v3812, %v3816
      %v3855 = vunpack.c.l.b16 %v3776
      %v3856 = vunpack.c.l.b16 %v3777
      %v3857 = vunpack.c.l.b16 %v3778
      %v3858 = vunpack.c.l.b16 %v3779
      %v3859 = vunpack.c.l.b16 %v3780
      %v3860 = vunpack.c.l.b16 %v3781
      %v3861 = vunpack.c.l.b16 %v3782
      %v3862 = vunpack.c.l.b16 %v3783
      %v3863 = vunpack.c.l.b16 %v3784
      %v3864 = vunpack.c.l.b16 %v3785
      %v3865 = vunpack.c.l.b16 %v3786
      %v3866 = vunpack.c.l.b16 %v3787
      %v3867 = vunpack.c.l.b16 %v3788
      %v3868 = vunpack.c.l.b16 %v3789
      %v3869 = vunpack.c.l.b16 %v3790
      %v3870 = vunpack.c.l.b16 %v3791
      %v3871 = vunpack.c.l.b16 %v3792
      %v3872 = vunpack.c.l.b16 %v3793
      %v3873 = vunpack.c.l.b16 %v3794
      %v3874 = vunpack.c.l.b16 %v3795
      %v3875 = vunpack.c.l.b16 %v3796
      %v3876 = vunpack.c.l.b16 %v3797
      %v3877 = vunpack.c.l.b16 %v3798
      %v3878 = vunpack.c.l.b16 %v3799
      %v3879 = vunpack.c.l.b16 %v3800
      %v3880 = vunpack.c.l.b16 %v3801
      %v3881 = vunpack.c.l.b16 %v3802
      %v3882 = vunpack.c.l.b16 %v3803
      %v3883 = vunpack.c.l.b16 %v3804
      %v3884 = vunpack.c.l.b16 %v3805
      %v3885 = vunpack.c.l.b16 %v3806
      %v3886 = vunpack.c.l.b16 %v3807
      %v3887 = vunpack.c.l.b16 %v3808
      %v3888 = vunpack.c.l.b16 %v3809
      %v3889 = vunpack.c.l.b16 %v3810
      %v3890 = vunpack.c.l.b16 %v3811
      %v3891 = vpack.c.b16 %v3856, %v3855
      %v3892 = vpack.c.b16 %v3858, %v3857
      %v3893 = vpack.c.b16 %v3860, %v3859
      %v3894 = vpack.c.b16 %v3862, %v3861
      %v3895 = vpack.c.b16 %v3864, %v3863
      %v3896 = vpack.c.b16 %v3866, %v3865
      %v3897 = vpack.c.b16 %v3868, %v3867
      %v3898 = vpack.c.b16 %v3870, %v3869
      %v3899 = vpack.c.b16 %v3872, %v3871
      %v3900 = vpack.c.b16 %v3874, %v3873
      %v3901 = vpack.c.b16 %v3876, %v3875
      %v3902 = vpack.c.b16 %v3878, %v3877
      %v3903 = vpack.c.b16 %v3880, %v3879
      %v3904 = vpack.c.b16 %v3882, %v3881
      %v3905 = vpack.c.b16 %v3884, %v3883
      %v3906 = vpack.c.b16 %v3886, %v3885
      %v3907 = vpack.c.b16 %v3888, %v3887
      %v3908 = vpack.c.b16 %v3890, %v3889
      %v3928 = vsel %vm753, %v3775, 0
      %3930 = vmatprep.subr.bf16.mxu0 0
      %3931 = vmatpush1.bf16.msra.mxu0 %v3891
      %3932 = vmatprep.subr.bf16.mxu0 0
      %3933 = vmatpush1.bf16.msra.mxu0 %v3892
      %3934 = vmatprep.subr.bf16.mxu0 0
      %3935 = vmatpush1.bf16.msra.mxu0 %v3893
      %3936 = vmatprep.subr.bf16.mxu0 0
      %3937 = vmatpush1.bf16.msra.mxu0 %v3894
      %3938 = vmatprep.subr.bf16.mxu0 0
      %3939 = vmatpush1.bf16.msra.mxu0 %v3895
      %3940 = vmatprep.subr.bf16.mxu0 0
      %3941 = vmatpush1.bf16.msra.mxu0 %v3896
      %3942 = vmatprep.subr.bf16.mxu0 0
      %3943 = vmatpush1.bf16.msra.mxu0 %v3897
      %3944 = vmatprep.subr.bf16.mxu0 0
      %3945 = vmatpush1.bf16.msra.mxu0 %v3898
      %3946 = vmatprep.subr.bf16.mxu0 0
      %3947 = vmatpush1.bf16.msra.mxu0 %v3899
      %3948 = vmatprep.subr.bf16.mxu0 0
      %3949 = vmatpush1.bf16.msra.mxu0 %v3900
      %3950 = vmatprep.subr.bf16.mxu0 0
      %3951 = vmatpush1.bf16.msra.mxu0 %v3901
      %3952 = vmatprep.subr.bf16.mxu0 0
      %3953 = vmatpush1.bf16.msra.mxu0 %v3902
      %3954 = vmatprep.subr.bf16.mxu0 0
      %3955 = vmatpush1.bf16.msra.mxu0 %v3903
      %3956 = vmatprep.subr.bf16.mxu0 0
      %3957 = vmatpush1.bf16.msra.mxu0 %v3904
      %3958 = vmatprep.subr.bf16.mxu0 0
      %3959 = vmatpush1.bf16.msra.mxu0 %v3905
      %3960 = vmatprep.subr.bf16.mxu0 0
      %3961 = vmatpush1.bf16.msra.mxu0 %v3906
      %3962 = vmatprep.mubr.bf16.mxu0 %v3774
      %3963 = vmatmul.mubr.bf16.gmra.mrb[0].mxu0 %v3773
      %v3964 = vpop.f32.mrb[0].mxu0
      %v3965 = vadd.f32 %v3817, %v3964
      %v3966 = vpop.f32.mrb[0].mxu0
      %v3967 = vpop.f32.mrb[0].mxu0
      %v3968 = vadd.f32 %v3817, %v3967
      %v3969 = vpop.f32.mrb[0].mxu0
      %3970 = vdwg.mxu0
      %3971 = vmatprep.subr.bf16.mxu0 0
      %3972 = vmatpush1.bf16.msra.mxu0 %v3907
      %3973 = vmatprep.subr.bf16.mxu0 0
      %3974 = vmatpush1.bf16.msra.mxu0 %v3908
      %3975 = vmatprep.subr.bf16.mxu0 0
      %3976 = vmatpush1.bf16.msra.mxu0 0
      %3977 = vmatprep.subr.bf16.mxu0 0
      %3978 = vmatpush1.bf16.msra.mxu0 0
      %3979 = vmatprep.subr.bf16.mxu0 0
      %3980 = vmatpush1.bf16.msra.mxu0 0
      %3981 = vmatprep.subr.bf16.mxu0 0
      %3982 = vmatpush1.bf16.msra.mxu0 0
      %3983 = vmatprep.subr.bf16.mxu0 0
      %3984 = vmatpush1.bf16.msra.mxu0 0
      %3985 = vmatprep.subr.bf16.mxu0 0
      %3986 = vmatpush1.bf16.msra.mxu0 0
      %3987 = vmatprep.subr.bf16.mxu0 0
      %3988 = vmatpush1.bf16.msra.mxu0 0
      %3989 = vmatprep.subr.bf16.mxu0 0
      %3990 = vmatpush1.bf16.msra.mxu0 0
      %3991 = vmatprep.subr.bf16.mxu0 0
      %3992 = vmatpush1.bf16.msra.mxu0 0
      %3993 = vmatprep.subr.bf16.mxu0 0
      %3994 = vmatpush1.bf16.msra.mxu0 0
      %3995 = vmatprep.subr.bf16.mxu0 0
      %3996 = vmatpush1.bf16.msra.mxu0 0
      %3997 = vmatprep.subr.bf16.mxu0 0
      %3998 = vmatpush1.bf16.msra.mxu0 0
      %3999 = vmatprep.subr.bf16.mxu0 0
      %4000 = vmatpush1.bf16.msra.mxu0 0
      %4001 = vmatprep.subr.bf16.mxu0 0
      %4002 = vmatpush1.bf16.msra.mxu0 0
      %4003 = vmatprep.mubr.bf16.mxu0 0
      %4004 = vmatmul.mubr.bf16.gmra.mrb[0].mxu0 %v3928
      %v4005 = vpop.f32.mrb[0].mxu0
      %v4006 = vadd.f32 %v3965, %v4005
      %v4007 = vpop.f32.mrb[0].mxu0
      %v4008 = vpop.f32.mrb[0].mxu0
      %v4009 = vadd.f32 %v3968, %v4008
      %v4010 = vpop.f32.mrb[0].mxu0
      %4011 = vdwg.mxu0
      %4012 = vst.msk [vmem:[#allocation4 + $0x5] sm:$0xff] %vm753, %v4006
      %4013 = vst.msk [vmem:[#allocation4 + $0xd] sm:$0xff] %vm753, %v4009
      %v4014 = vld [vmem:[#allocation4] sm:$0xff]
      %v4015 = vld [vmem:[#allocation4 + $0x8] sm:$0xff]
      %v4016 = vmul.f32 %v4014, %v3590
      %v4017 = vmul.f32 %v4015, %v3591
      %4018 = vst.msk [vmem:[#allocation5] sm:$0xff] %vm753, %v4016
      %4019 = vst.msk [vmem:[#allocation5 + $0x18] sm:$0xff] %vm753, %v4017
      %v4020 = vld [vmem:[#allocation4 + $0x1] sm:$0xff]
      %v4021 = vld [vmem:[#allocation4 + $0x9] sm:$0xff]
      %4024 = vrot.lane.b32.xlu0 %v4020, 32
      %v4025 = vpop.permute.xlu0 %4024
      %4026 = vrot.lane.b32.xlu0 %v4021, 32
      %v4027 = vpop.permute.xlu0 %4026
      %4030 = vst.msk [vmem:[#allocation5] sm:$0xff] %vm3684, %v4025
      %4031 = vst.msk [vmem:[#allocation5 + $0x18] sm:$0xff] %vm3684, %v4027
      %v4032 = vld [vmem:[#allocation4 + $0x2] sm:$0xff]
      %v4033 = vld [vmem:[#allocation4 + $0xa] sm:$0xff]
      %v4034 = vmul.f32 %v4032, %v3596
      %v4035 = vmul.f32 %v4033, %v3597
      %4038 = vrot.lane.b32.xlu0 %v4034, 64
      %v4039 = vpop.permute.xlu0 %4038
      %4040 = vrot.lane.b32.xlu0 %v4035, 64
      %v4041 = vpop.permute.xlu0 %4040
      %4044 = vst.msk [vmem:[#allocation5] sm:$0xff] %vm3699, %v4039
      %4045 = vst.msk [vmem:[#allocation5 + $0x18] sm:$0xff] %vm3699, %v4041
      %v4046 = vld [vmem:[#allocation4 + $0x4] sm:$0xff]
      %v4047 = vld [vmem:[#allocation4 + $0xc] sm:$0xff]
      %v4048 = vmul.f32 %v4046, %v3590
      %v4049 = vmul.f32 %v4047, %v3591
      %4052 = vrot.lane.b32.xlu0 %v4048, 96
      %v4053 = vpop.permute.xlu0 %4052
      %4054 = vrot.lane.b32.xlu0 %v4049, 96
      %v4055 = vpop.permute.xlu0 %4054
      %4058 = vst.msk [vmem:[#allocation5] sm:$0xff] %vm3714, %v4053
      %4059 = vst.msk [vmem:[#allocation5 + $0x18] sm:$0xff] %vm3714, %v4055
      %v4060 = vld [vmem:[#allocation4 + $0x5] sm:$0xff]
      %v4061 = vld [vmem:[#allocation4 + $0xd] sm:$0xff]
      %4062 = vst.msk [vmem:[#allocation5 + $0x8] sm:$0xff] %vm753, %v4060
      %4063 = vst.msk [vmem:[#allocation5 + $0x20] sm:$0xff] %vm753, %v4061
      %v4064 = vld [vmem:[#allocation4 + $0x6] sm:$0xff]
      %v4065 = vld [vmem:[#allocation4 + $0xe] sm:$0xff]
      %v4066 = vmul.f32 %v4064, %v3596
      %v4067 = vmul.f32 %v4065, %v3597
      %4070 = vrot.lane.b32.xlu0 %v4066, 32
      %v4071 = vpop.permute.xlu0 %4070
      %4072 = vrot.lane.b32.xlu0 %v4067, 32
      %v4073 = vpop.permute.xlu0 %4072
      %4076 = vst.msk [vmem:[#allocation5 + $0x8] sm:$0xff] %vm3684, %v4071
      %4077 = vst.msk [vmem:[#allocation5 + $0x20] sm:$0xff] %vm3684, %v4073
      %v4078 = vld [vmem:[#allocation4 + $0x8] sm:$0xff]
      %v4079 = vld [vmem:[#allocation4 + $0x10] sm:$0xff]
      %v4080 = vmul.f32 %v4078, %v3590
      %v4081 = vmul.f32 %v4079, %v3591
      %4084 = vrot.lane.b32.xlu0 %v4080, 64
      %v4085 = vpop.permute.xlu0 %4084
      %4086 = vrot.lane.b32.xlu0 %v4081, 64
      %v4087 = vpop.permute.xlu0 %4086
      %4090 = vst.msk [vmem:[#allocation5 + $0x8] sm:$0xff] %vm3699, %v4085
      %4091 = vst.msk [vmem:[#allocation5 + $0x20] sm:$0xff] %vm3699, %v4087
      %v4092 = vld [vmem:[#allocation4 + $0x9] sm:$0xff]
      %v4093 = vld [vmem:[#allocation4 + $0x11] sm:$0xff]
      %4096 = vrot.lane.b32.xlu0 %v4092, 96
      %v4097 = vpop.permute.xlu0 %4096
      %4098 = vrot.lane.b32.xlu0 %v4093, 96
      %v4099 = vpop.permute.xlu0 %4098
      %4102 = vst.msk [vmem:[#allocation5 + $0x8] sm:$0xff] %vm3714, %v4097
      %4103 = vst.msk [vmem:[#allocation5 + $0x20] sm:$0xff] %vm3714, %v4099
      %v4104 = vld [vmem:[#allocation4 + $0xa] sm:$0xff]
      %v4105 = vld [vmem:[#allocation4 + $0x12] sm:$0xff]
      %v4106 = vmul.f32 %v4104, %v3596
      %v4107 = vmul.f32 %v4105, %v3597
      %4108 = vst.msk [vmem:[#allocation5 + $0x10] sm:$0xff] %vm753, %v4106
      %4109 = vst.msk [vmem:[#allocation5 + $0x28] sm:$0xff] %vm753, %v4107
      %v4110 = vld [vmem:[#allocation5] sm:$0xff]
      %v4111 = vld [vmem:[#allocation5 + $0x8] sm:$0xff]
      %v4112 = vld [vmem:[#allocation5 + $0x10] sm:$0xff]
      %v4113 = vld [vmem:[#allocation5 + $0x18] sm:$0xff]
      %v4114 = vld [vmem:[#allocation5 + $0x20] sm:$0xff]
      %v4115 = vld [vmem:[#allocation5 + $0x28] sm:$0xff]
      %v4116 = vpack.c.bf16 %v4113, %v4110
      %v4117 = vpack.c.bf16 %v4114, %v4111
      %v4118 = vpack.c.bf16 %v4115, %v4112
      %s4119 = scalar_lea.vmem %s17, 144
      %v4120 = vld [vmem:[%s4119] sm:$0xf]
      %v4121 = vld [vmem:[%s4119 + $0x4] sm:$0xf]
      %v4122 = vld [vmem:[%s4119 + $0x8] sm:$0xf]
      %v4123 = vld [vmem:[%s4119 + $0xc] sm:$0xf]
      %v4124 = vld [vmem:[%s4119 + $0x10] sm:$0xf]
      %v4125 = vld [vmem:[%s4119 + $0x14] sm:$0xf]
      %v4126 = vld [vmem:[%s4119 + $0x18] sm:$0xf]
      %v4127 = vld [vmem:[%s4119 + $0x1c] sm:$0xf]
      %v4128 = vld [vmem:[%s4119 + $0x20] sm:$0xf]
      %v4129 = vld [vmem:[%s4119 + $0x24] sm:$0xf]
      %v4130 = vld [vmem:[%s4119 + $0x28] sm:$0xf]
      %v4131 = vld [vmem:[%s4119 + $0x2c] sm:$0xf]
      %v4132 = vld [vmem:[%s4119 + $0x30] sm:$0xf]
      %v4133 = vld [vmem:[%s4119 + $0x34] sm:$0xf]
      %v4134 = vld [vmem:[%s4119 + $0x38] sm:$0xf]
      %v4135 = vld [vmem:[%s4119 + $0x3c] sm:$0xf]
      %v4136 = vld [vmem:[%s4119 + $0x40] sm:$0xf]
      %v4137 = vld [vmem:[%s4119 + $0x44] sm:$0xf]
      %v4138 = vld [vmem:[%s4119 + $0x48] sm:$0xf]
      %v4139 = vld [vmem:[%s4119 + $0x4c] sm:$0xf]
      %v4140 = vld [vmem:[%s4119 + $0x50] sm:$0xf]
      %v4141 = vld [vmem:[%s4119 + $0x54] sm:$0xf]
      %v4142 = vld [vmem:[%s4119 + $0x58] sm:$0xf]
      %v4143 = vld [vmem:[%s4119 + $0x5c] sm:$0xf]
      %v4144 = vld [vmem:[%s4119 + $0x60] sm:$0xf]
      %v4145 = vld [vmem:[%s4119 + $0x64] sm:$0xf]
      %v4146 = vld [vmem:[%s4119 + $0x68] sm:$0xf]
      %v4147 = vld [vmem:[%s4119 + $0x6c] sm:$0xf]
      %v4148 = vld [vmem:[%s4119 + $0x70] sm:$0xf]
      %v4149 = vld [vmem:[%s4119 + $0x74] sm:$0xf]
      %v4150 = vld [vmem:[%s4119 + $0x78] sm:$0xf]
      %v4151 = vld [vmem:[%s4119 + $0x7c] sm:$0xf]
      %v4152 = vld [vmem:[%s4119 + $0x80] sm:$0xf]
      %v4153 = vld [vmem:[%s4119 + $0x84] sm:$0xf]
      %v4154 = vld [vmem:[%s4119 + $0x88] sm:$0xf]
      %v4155 = vld [vmem:[%s4119 + $0x8c] sm:$0xf]
      %s4156 = scalar_lea.vmem %s18, 1
      %v4157 = vld [vmem:[%s4156] sm:$0x1]
      %v4159 = vlaneseq
      %v4160 = vshrl.u32 %v4159, 7
      %v4161 = vsub.s32 0, %v4160
      %v4162 = vrot.slane %v4157, %v4161
      %v4200 = vunpack.c.l.b16 %v4120
      %v4201 = vunpack.c.l.b16 %v4121
      %v4202 = vunpack.c.l.b16 %v4122
      %v4203 = vunpack.c.l.b16 %v4123
      %v4204 = vunpack.c.l.b16 %v4124
      %v4205 = vunpack.c.l.b16 %v4125
      %v4206 = vunpack.c.l.b16 %v4126
      %v4207 = vunpack.c.l.b16 %v4127
      %v4208 = vunpack.c.l.b16 %v4128
      %v4209 = vunpack.c.l.b16 %v4129
      %v4210 = vunpack.c.l.b16 %v4130
      %v4211 = vunpack.c.l.b16 %v4131
      %v4212 = vunpack.c.l.b16 %v4132
      %v4213 = vunpack.c.l.b16 %v4133
      %v4214 = vunpack.c.l.b16 %v4134
      %v4215 = vunpack.c.l.b16 %v4135
      %v4216 = vunpack.c.l.b16 %v4136
      %v4217 = vunpack.c.l.b16 %v4137
      %v4218 = vunpack.c.l.b16 %v4138
      %v4219 = vunpack.c.l.b16 %v4139
      %v4220 = vunpack.c.l.b16 %v4140
      %v4221 = vunpack.c.l.b16 %v4141
      %v4222 = vunpack.c.l.b16 %v4142
      %v4223 = vunpack.c.l.b16 %v4143
      %v4224 = vunpack.c.l.b16 %v4144
      %v4225 = vunpack.c.l.b16 %v4145
      %v4226 = vunpack.c.l.b16 %v4146
      %v4227 = vunpack.c.l.b16 %v4147
      %v4228 = vunpack.c.l.b16 %v4148
      %v4229 = vunpack.c.l.b16 %v4149
      %v4230 = vunpack.c.l.b16 %v4150
      %v4231 = vunpack.c.l.b16 %v4151
      %v4232 = vunpack.c.l.b16 %v4152
      %v4233 = vunpack.c.l.b16 %v4153
      %v4234 = vunpack.c.l.b16 %v4154
      %v4235 = vunpack.c.l.b16 %v4155
      %v4236 = vpack.c.b16 %v4201, %v4200
      %v4237 = vpack.c.b16 %v4203, %v4202
      %v4238 = vpack.c.b16 %v4205, %v4204
      %v4239 = vpack.c.b16 %v4207, %v4206
      %v4240 = vpack.c.b16 %v4209, %v4208
      %v4241 = vpack.c.b16 %v4211, %v4210
      %v4242 = vpack.c.b16 %v4213, %v4212
      %v4243 = vpack.c.b16 %v4215, %v4214
      %v4244 = vpack.c.b16 %v4217, %v4216
      %v4245 = vpack.c.b16 %v4219, %v4218
      %v4246 = vpack.c.b16 %v4221, %v4220
      %v4247 = vpack.c.b16 %v4223, %v4222
      %v4248 = vpack.c.b16 %v4225, %v4224
      %v4249 = vpack.c.b16 %v4227, %v4226
      %v4250 = vpack.c.b16 %v4229, %v4228
      %v4251 = vpack.c.b16 %v4231, %v4230
      %v4252 = vpack.c.b16 %v4233, %v4232
      %v4253 = vpack.c.b16 %v4235, %v4234
      %v4273 = vsel %vm753, %v4118, 0
      %4275 = vmatprep.subr.bf16.mxu0 0
      %4276 = vmatpush1.bf16.msra.mxu0 %v4236
      %4277 = vmatprep.subr.bf16.mxu0 0
      %4278 = vmatpush1.bf16.msra.mxu0 %v4237
      %4279 = vmatprep.subr.bf16.mxu0 0
      %4280 = vmatpush1.bf16.msra.mxu0 %v4238
      %4281 = vmatprep.subr.bf16.mxu0 0
      %4282 = vmatpush1.bf16.msra.mxu0 %v4239
      %4283 = vmatprep.subr.bf16.mxu0 0
      %4284 = vmatpush1.bf16.msra.mxu0 %v4240
      %4285 = vmatprep.subr.bf16.mxu0 0
      %4286 = vmatpush1.bf16.msra.mxu0 %v4241
      %4287 = vmatprep.subr.bf16.mxu0 0
      %4288 = vmatpush1.bf16.msra.mxu0 %v4242
      %4289 = vmatprep.subr.bf16.mxu0 0
      %4290 = vmatpush1.bf16.msra.mxu0 %v4243
      %4291 = vmatprep.subr.bf16.mxu0 0
      %4292 = vmatpush1.bf16.msra.mxu0 %v4244
      %4293 = vmatprep.subr.bf16.mxu0 0
      %4294 = vmatpush1.bf16.msra.mxu0 %v4245
      %4295 = vmatprep.subr.bf16.mxu0 0
      %4296 = vmatpush1.bf16.msra.mxu0 %v4246
      %4297 = vmatprep.subr.bf16.mxu0 0
      %4298 = vmatpush1.bf16.msra.mxu0 %v4247
      %4299 = vmatprep.subr.bf16.mxu0 0
      %4300 = vmatpush1.bf16.msra.mxu0 %v4248
      %4301 = vmatprep.subr.bf16.mxu0 0
      %4302 = vmatpush1.bf16.msra.mxu0 %v4249
      %4303 = vmatprep.subr.bf16.mxu0 0
      %4304 = vmatpush1.bf16.msra.mxu0 %v4250
      %4305 = vmatprep.subr.bf16.mxu0 0
      %4306 = vmatpush1.bf16.msra.mxu0 %v4251
      %4307 = vmatprep.mubr.bf16.mxu0 %v4117
      %4308 = vmatmul.mubr.bf16.gmra.mrb[0].mxu0 %v4116
      %v4309 = vpop.f32.mrb[0].mxu0
      %v4310 = vadd.f32 %v4162, %v4309
      %v4311 = vpop.f32.mrb[0].mxu0
      %v4312 = vpop.f32.mrb[0].mxu0
      %v4313 = vadd.f32 %v4162, %v4312
      %v4314 = vpop.f32.mrb[0].mxu0
      %4315 = vdwg.mxu0
      %4316 = vmatprep.subr.bf16.mxu0 0
      %4317 = vmatpush1.bf16.msra.mxu0 %v4252
      %4318 = vmatprep.subr.bf16.mxu0 0
      %4319 = vmatpush1.bf16.msra.mxu0 %v4253
      %4320 = vmatprep.subr.bf16.mxu0 0
      %4321 = vmatpush1.bf16.msra.mxu0 0
      %4322 = vmatprep.subr.bf16.mxu0 0
      %4323 = vmatpush1.bf16.msra.mxu0 0
      %4324 = vmatprep.subr.bf16.mxu0 0
      %4325 = vmatpush1.bf16.msra.mxu0 0
      %4326 = vmatprep.subr.bf16.mxu0 0
      %4327 = vmatpush1.bf16.msra.mxu0 0
      %4328 = vmatprep.subr.bf16.mxu0 0
      %4329 = vmatpush1.bf16.msra.mxu0 0
      %4330 = vmatprep.subr.bf16.mxu0 0
      %4331 = vmatpush1.bf16.msra.mxu0 0
      %4332 = vmatprep.subr.bf16.mxu0 0
      %4333 = vmatpush1.bf16.msra.mxu0 0
      %4334 = vmatprep.subr.bf16.mxu0 0
      %4335 = vmatpush1.bf16.msra.mxu0 0
      %4336 = vmatprep.subr.bf16.mxu0 0
      %4337 = vmatpush1.bf16.msra.mxu0 0
      %4338 = vmatprep.subr.bf16.mxu0 0
      %4339 = vmatpush1.bf16.msra.mxu0 0
      %4340 = vmatprep.subr.bf16.mxu0 0
      %4341 = vmatpush1.bf16.msra.mxu0 0
      %4342 = vmatprep.subr.bf16.mxu0 0
      %4343 = vmatpush1.bf16.msra.mxu0 0
      %4344 = vmatprep.subr.bf16.mxu0 0
      %4345 = vmatpush1.bf16.msra.mxu0 0
      %4346 = vmatprep.subr.bf16.mxu0 0
      %4347 = vmatpush1.bf16.msra.mxu0 0
      %4348 = vmatprep.mubr.bf16.mxu0 0
      %4349 = vmatmul.mubr.bf16.gmra.mrb[0].mxu0 %v4273
      %v4350 = vpop.f32.mrb[0].mxu0
      %v4351 = vadd.f32 %v4310, %v4350
      %v4352 = vpop.f32.mrb[0].mxu0
      %v4353 = vpop.f32.mrb[0].mxu0
      %v4354 = vadd.f32 %v4313, %v4353
      %v4355 = vpop.f32.mrb[0].mxu0
      %4356 = vdwg.mxu0
      %4357 = vst.msk [vmem:[#allocation4 + $0x5] sm:$0xff] %vm753, %v4351
      %4358 = vst.msk [vmem:[#allocation4 + $0xd] sm:$0xff] %vm753, %v4354
      %v4359 = vld [vmem:[#allocation4] sm:$0xff]
      %v4360 = vld [vmem:[#allocation4 + $0x8] sm:$0xff]
      %v4361 = vmul.f32 %v4359, %v3590
      %v4362 = vmul.f32 %v4360, %v3591
      %4363 = vst.msk [vmem:[#allocation5] sm:$0xff] %vm753, %v4361
      %4364 = vst.msk [vmem:[#allocation5 + $0x18] sm:$0xff] %vm753, %v4362
      %v4365 = vld [vmem:[#allocation4 + $0x1] sm:$0xff]
      %v4366 = vld [vmem:[#allocation4 + $0x9] sm:$0xff]
      %4369 = vrot.lane.b32.xlu0 %v4365, 32
      %v4370 = vpop.permute.xlu0 %4369
      %4371 = vrot.lane.b32.xlu0 %v4366, 32
      %v4372 = vpop.permute.xlu0 %4371
      %4375 = vst.msk [vmem:[#allocation5] sm:$0xff] %vm3684, %v4370
      %4376 = vst.msk [vmem:[#allocation5 + $0x18] sm:$0xff] %vm3684, %v4372
      %v4377 = vld [vmem:[#allocation4 + $0x2] sm:$0xff]
      %v4378 = vld [vmem:[#allocation4 + $0xa] sm:$0xff]
      %v4379 = vmul.f32 %v4377, %v3596
      %v4380 = vmul.f32 %v4378, %v3597
      %4383 = vrot.lane.b32.xlu0 %v4379, 64
      %v4384 = vpop.permute.xlu0 %4383
      %4385 = vrot.lane.b32.xlu0 %v4380, 64
      %v4386 = vpop.permute.xlu0 %4385
      %4389 = vst.msk [vmem:[#allocation5] sm:$0xff] %vm3699, %v4384
      %4390 = vst.msk [vmem:[#allocation5 + $0x18] sm:$0xff] %vm3699, %v4386
      %v4391 = vld [vmem:[#allocation4 + $0x4] sm:$0xff]
      %v4392 = vld [vmem:[#allocation4 + $0xc] sm:$0xff]
      %v4393 = vmul.f32 %v4391, %v3590
      %v4394 = vmul.f32 %v4392, %v3591
      %4397 = vrot.lane.b32.xlu0 %v4393, 96
      %v4398 = vpop.permute.xlu0 %4397
      %4399 = vrot.lane.b32.xlu0 %v4394, 96
      %v4400 = vpop.permute.xlu0 %4399
      %4403 = vst.msk [vmem:[#allocation5] sm:$0xff] %vm3714, %v4398
      %4404 = vst.msk [vmem:[#allocation5 + $0x18] sm:$0xff] %vm3714, %v4400
      %v4405 = vld [vmem:[#allocation4 + $0x5] sm:$0xff]
      %v4406 = vld [vmem:[#allocation4 + $0xd] sm:$0xff]
      %4407 = vst.msk [vmem:[#allocation5 + $0x8] sm:$0xff] %vm753, %v4405
      %4408 = vst.msk [vmem:[#allocation5 + $0x20] sm:$0xff] %vm753, %v4406
      %v4409 = vld [vmem:[#allocation4 + $0x6] sm:$0xff]
      %v4410 = vld [vmem:[#allocation4 + $0xe] sm:$0xff]
      %v4411 = vmul.f32 %v4409, %v3596
      %v4412 = vmul.f32 %v4410, %v3597
      %4415 = vrot.lane.b32.xlu0 %v4411, 32
      %v4416 = vpop.permute.xlu0 %4415
      %4417 = vrot.lane.b32.xlu0 %v4412, 32
      %v4418 = vpop.permute.xlu0 %4417
      %4421 = vst.msk [vmem:[#allocation5 + $0x8] sm:$0xff] %vm3684, %v4416
      %4422 = vst.msk [vmem:[#allocation5 + $0x20] sm:$0xff] %vm3684, %v4418
      %v4423 = vld [vmem:[#allocation4 + $0x8] sm:$0xff]
      %v4424 = vld [vmem:[#allocation4 + $0x10] sm:$0xff]
      %v4425 = vmul.f32 %v4423, %v3590
      %v4426 = vmul.f32 %v4424, %v3591
      %4429 = vrot.lane.b32.xlu0 %v4425, 64
      %v4430 = vpop.permute.xlu0 %4429
      %4431 = vrot.lane.b32.xlu0 %v4426, 64
      %v4432 = vpop.permute.xlu0 %4431
      %4435 = vst.msk [vmem:[#allocation5 + $0x8] sm:$0xff] %vm3699, %v4430
      %4436 = vst.msk [vmem:[#allocation5 + $0x20] sm:$0xff] %vm3699, %v4432
      %v4437 = vld [vmem:[#allocation4 + $0x9] sm:$0xff]
      %v4438 = vld [vmem:[#allocation4 + $0x11] sm:$0xff]
      %4441 = vrot.lane.b32.xlu0 %v4437, 96
      %v4442 = vpop.permute.xlu0 %4441
      %4443 = vrot.lane.b32.xlu0 %v4438, 96
      %v4444 = vpop.permute.xlu0 %4443
      %4447 = vst.msk [vmem:[#allocation5 + $0x8] sm:$0xff] %vm3714, %v4442
      %4448 = vst.msk [vmem:[#allocation5 + $0x20] sm:$0xff] %vm3714, %v4444
      %v4449 = vld [vmem:[#allocation4 + $0xa] sm:$0xff]
      %v4450 = vld [vmem:[#allocation4 + $0x12] sm:$0xff]
      %v4451 = vmul.f32 %v4449, %v3596
      %v4452 = vmul.f32 %v4450, %v3597
      %4453 = vst.msk [vmem:[#allocation5 + $0x10] sm:$0xff] %vm753, %v4451
      %4454 = vst.msk [vmem:[#allocation5 + $0x28] sm:$0xff] %vm753, %v4452
      %v4455 = vld [vmem:[#allocation5] sm:$0xff]
      %v4456 = vld [vmem:[#allocation5 + $0x8] sm:$0xff]
      %v4457 = vld [vmem:[#allocation5 + $0x10] sm:$0xff]
      %v4458 = vld [vmem:[#allocation5 + $0x18] sm:$0xff]
      %v4459 = vld [vmem:[#allocation5 + $0x20] sm:$0xff]
      %v4460 = vld [vmem:[#allocation5 + $0x28] sm:$0xff]
      %v4461 = vpack.c.bf16 %v4458, %v4455
      %v4462 = vpack.c.bf16 %v4459, %v4456
      %v4463 = vpack.c.bf16 %v4460, %v4457
      %s4464 = scalar_lea.vmem %s17, 288
      %v4465 = vld [vmem:[%s4464] sm:$0xf]
      %v4466 = vld [vmem:[%s4464 + $0x4] sm:$0xf]
      %v4467 = vld [vmem:[%s4464 + $0x8] sm:$0xf]
      %v4468 = vld [vmem:[%s4464 + $0xc] sm:$0xf]
      %v4469 = vld [vmem:[%s4464 + $0x10] sm:$0xf]
      %v4470 = vld [vmem:[%s4464 + $0x14] sm:$0xf]
      %v4471 = vld [vmem:[%s4464 + $0x18] sm:$0xf]
      %v4472 = vld [vmem:[%s4464 + $0x1c] sm:$0xf]
      %v4473 = vld [vmem:[%s4464 + $0x20] sm:$0xf]
      %v4474 = vld [vmem:[%s4464 + $0x24] sm:$0xf]
      %v4475 = vld [vmem:[%s4464 + $0x28] sm:$0xf]
      %v4476 = vld [vmem:[%s4464 + $0x2c] sm:$0xf]
      %v4477 = vld [vmem:[%s4464 + $0x30] sm:$0xf]
      %v4478 = vld [vmem:[%s4464 + $0x34] sm:$0xf]
      %v4479 = vld [vmem:[%s4464 + $0x38] sm:$0xf]
      %v4480 = vld [vmem:[%s4464 + $0x3c] sm:$0xf]
      %v4481 = vld [vmem:[%s4464 + $0x40] sm:$0xf]
      %v4482 = vld [vmem:[%s4464 + $0x44] sm:$0xf]
      %v4483 = vld [vmem:[%s4464 + $0x48] sm:$0xf]
      %v4484 = vld [vmem:[%s4464 + $0x4c] sm:$0xf]
      %v4485 = vld [vmem:[%s4464 + $0x50] sm:$0xf]
      %v4486 = vld [vmem:[%s4464 + $0x54] sm:$0xf]
      %v4487 = vld [vmem:[%s4464 + $0x58] sm:$0xf]
      %v4488 = vld [vmem:[%s4464 + $0x5c] sm:$0xf]
      %v4489 = vld [vmem:[%s4464 + $0x60] sm:$0xf]
      %v4490 = vld [vmem:[%s4464 + $0x64] sm:$0xf]
      %v4491 = vld [vmem:[%s4464 + $0x68] sm:$0xf]
      %v4492 = vld [vmem:[%s4464 + $0x6c] sm:$0xf]
      %v4493 = vld [vmem:[%s4464 + $0x70] sm:$0xf]
      %v4494 = vld [vmem:[%s4464 + $0x74] sm:$0xf]
      %v4495 = vld [vmem:[%s4464 + $0x78] sm:$0xf]
      %v4496 = vld [vmem:[%s4464 + $0x7c] sm:$0xf]
      %v4497 = vld [vmem:[%s4464 + $0x80] sm:$0xf]
      %v4498 = vld [vmem:[%s4464 + $0x84] sm:$0xf]
      %v4499 = vld [vmem:[%s4464 + $0x88] sm:$0xf]
      %v4500 = vld [vmem:[%s4464 + $0x8c] sm:$0xf]
      %s4501 = scalar_lea.vmem %s18, 2
      %v4502 = vld [vmem:[%s4501] sm:$0x1]
      %v4504 = vlaneseq
      %v4505 = vshrl.u32 %v4504, 7
      %v4506 = vsub.s32 0, %v4505
      %v4507 = vrot.slane %v4502, %v4506
      %v4545 = vunpack.c.l.b16 %v4465
      %v4546 = vunpack.c.l.b16 %v4466
      %v4547 = vunpack.c.l.b16 %v4467
      %v4548 = vunpack.c.l.b16 %v4468
      %v4549 = vunpack.c.l.b16 %v4469
      %v4550 = vunpack.c.l.b16 %v4470
      %v4551 = vunpack.c.l.b16 %v4471
      %v4552 = vunpack.c.l.b16 %v4472
      %v4553 = vunpack.c.l.b16 %v4473
      %v4554 = vunpack.c.l.b16 %v4474
      %v4555 = vunpack.c.l.b16 %v4475
      %v4556 = vunpack.c.l.b16 %v4476
      %v4557 = vunpack.c.l.b16 %v4477
      %v4558 = vunpack.c.l.b16 %v4478
      %v4559 = vunpack.c.l.b16 %v4479
      %v4560 = vunpack.c.l.b16 %v4480
      %v4561 = vunpack.c.l.b16 %v4481
      %v4562 = vunpack.c.l.b16 %v4482
      %v4563 = vunpack.c.l.b16 %v4483
      %v4564 = vunpack.c.l.b16 %v4484
      %v4565 = vunpack.c.l.b16 %v4485
      %v4566 = vunpack.c.l.b16 %v4486
      %v4567 = vunpack.c.l.b16 %v4487
      %v4568 = vunpack.c.l.b16 %v4488
      %v4569 = vunpack.c.l.b16 %v4489
      %v4570 = vunpack.c.l.b16 %v4490
      %v4571 = vunpack.c.l.b16 %v4491
      %v4572 = vunpack.c.l.b16 %v4492
      %v4573 = vunpack.c.l.b16 %v4493
      %v4574 = vunpack.c.l.b16 %v4494
      %v4575 = vunpack.c.l.b16 %v4495
      %v4576 = vunpack.c.l.b16 %v4496
      %v4577 = vunpack.c.l.b16 %v4497
      %v4578 = vunpack.c.l.b16 %v4498
      %v4579 = vunpack.c.l.b16 %v4499
      %v4580 = vunpack.c.l.b16 %v4500
      %v4581 = vpack.c.b16 %v4546, %v4545
      %v4582 = vpack.c.b16 %v4548, %v4547
      %v4583 = vpack.c.b16 %v4550, %v4549
      %v4584 = vpack.c.b16 %v4552, %v4551
      %v4585 = vpack.c.b16 %v4554, %v4553
      %v4586 = vpack.c.b16 %v4556, %v4555
      %v4587 = vpack.c.b16 %v4558, %v4557
      %v4588 = vpack.c.b16 %v4560, %v4559
      %v4589 = vpack.c.b16 %v4562, %v4561
      %v4590 = vpack.c.b16 %v4564, %v4563
      %v4591 = vpack.c.b16 %v4566, %v4565
      %v4592 = vpack.c.b16 %v4568, %v4567
      %v4593 = vpack.c.b16 %v4570, %v4569
      %v4594 = vpack.c.b16 %v4572, %v4571
      %v4595 = vpack.c.b16 %v4574, %v4573
      %v4596 = vpack.c.b16 %v4576, %v4575
      %v4597 = vpack.c.b16 %v4578, %v4577
      %v4598 = vpack.c.b16 %v4580, %v4579
      %v4618 = vsel %vm753, %v4463, 0
      %4620 = vmatprep.subr.bf16.mxu0 0
      %4621 = vmatpush1.bf16.msra.mxu0 %v4581
      %4622 = vmatprep.subr.bf16.mxu0 0
      %4623 = vmatpush1.bf16.msra.mxu0 %v4582
      %4624 = vmatprep.subr.bf16.mxu0 0
      %4625 = vmatpush1.bf16.msra.mxu0 %v4583
      %4626 = vmatprep.subr.bf16.mxu0 0
      %4627 = vmatpush1.bf16.msra.mxu0 %v4584
      %4628 = vmatprep.subr.bf16.mxu0 0
      %4629 = vmatpush1.bf16.msra.mxu0 %v4585
      %4630 = vmatprep.subr.bf16.mxu0 0
      %4631 = vmatpush1.bf16.msra.mxu0 %v4586
      %4632 = vmatprep.subr.bf16.mxu0 0
      %4633 = vmatpush1.bf16.msra.mxu0 %v4587
      %4634 = vmatprep.subr.bf16.mxu0 0
      %4635 = vmatpush1.bf16.msra.mxu0 %v4588
      %4636 = vmatprep.subr.bf16.mxu0 0
      %4637 = vmatpush1.bf16.msra.mxu0 %v4589
      %4638 = vmatprep.subr.bf16.mxu0 0
      %4639 = vmatpush1.bf16.msra.mxu0 %v4590
      %4640 = vmatprep.subr.bf16.mxu0 0
      %4641 = vmatpush1.bf16.msra.mxu0 %v4591
      %4642 = vmatprep.subr.bf16.mxu0 0
      %4643 = vmatpush1.bf16.msra.mxu0 %v4592
      %4644 = vmatprep.subr.bf16.mxu0 0
      %4645 = vmatpush1.bf16.msra.mxu0 %v4593
      %4646 = vmatprep.subr.bf16.mxu0 0
      %4647 = vmatpush1.bf16.msra.mxu0 %v4594
      %4648 = vmatprep.subr.bf16.mxu0 0
      %4649 = vmatpush1.bf16.msra.mxu0 %v4595
      %4650 = vmatprep.subr.bf16.mxu0 0
      %4651 = vmatpush1.bf16.msra.mxu0 %v4596
      %4652 = vmatprep.mubr.bf16.mxu0 %v4462
      %4653 = vmatmul.mubr.bf16.gmra.mrb[0].mxu0 %v4461
      %v4654 = vpop.f32.mrb[0].mxu0
      %v4655 = vadd.f32 %v4507, %v4654
      %v4656 = vpop.f32.mrb[0].mxu0
      %v4657 = vpop.f32.mrb[0].mxu0
      %v4658 = vadd.f32 %v4507, %v4657
      %v4659 = vpop.f32.mrb[0].mxu0
      %4660 = vdwg.mxu0
      %4661 = vmatprep.subr.bf16.mxu0 0
      %4662 = vmatpush1.bf16.msra.mxu0 %v4597
      %4663 = vmatprep.subr.bf16.mxu0 0
      %4664 = vmatpush1.bf16.msra.mxu0 %v4598
      %4665 = vmatprep.subr.bf16.mxu0 0
      %4666 = vmatpush1.bf16.msra.mxu0 0
      %4667 = vmatprep.subr.bf16.mxu0 0
      %4668 = vmatpush1.bf16.msra.mxu0 0
      %4669 = vmatprep.subr.bf16.mxu0 0
      %4670 = vmatpush1.bf16.msra.mxu0 0
      %4671 = vmatprep.subr.bf16.mxu0 0
      %4672 = vmatpush1.bf16.msra.mxu0 0
      %4673 = vmatprep.subr.bf16.mxu0 0
      %4674 = vmatpush1.bf16.msra.mxu0 0
      %4675 = vmatprep.subr.bf16.mxu0 0
      %4676 = vmatpush1.bf16.msra.mxu0 0
      %4677 = vmatprep.subr.bf16.mxu0 0
      %4678 = vmatpush1.bf16.msra.mxu0 0
      %4679 = vmatprep.subr.bf16.mxu0 0
      %4680 = vmatpush1.bf16.msra.mxu0 0
      %4681 = vmatprep.subr.bf16.mxu0 0
      %4682 = vmatpush1.bf16.msra.mxu0 0
      %4683 = vmatprep.subr.bf16.mxu0 0
      %4684 = vmatpush1.bf16.msra.mxu0 0
      %4685 = vmatprep.subr.bf16.mxu0 0
      %4686 = vmatpush1.bf16.msra.mxu0 0
      %4687 = vmatprep.subr.bf16.mxu0 0
      %4688 = vmatpush1.bf16.msra.mxu0 0
      %4689 = vmatprep.subr.bf16.mxu0 0
      %4690 = vmatpush1.bf16.msra.mxu0 0
      %4691 = vmatprep.subr.bf16.mxu0 0
      %4692 = vmatpush1.bf16.msra.mxu0 0
      %4693 = vmatprep.mubr.bf16.mxu0 0
      %4694 = vmatmul.mubr.bf16.gmra.mrb[0].mxu0 %v4618
      %v4695 = vpop.f32.mrb[0].mxu0
      %v4696 = vadd.f32 %v4655, %v4695
      %v4697 = vpop.f32.mrb[0].mxu0
      %v4698 = vpop.f32.mrb[0].mxu0
      %v4699 = vadd.f32 %v4658, %v4698
      %v4700 = vpop.f32.mrb[0].mxu0
      %4701 = vdwg.mxu0
      %v4702 = vmax.f32 %v4696, 0.0
      %v4703 = vmax.f32 %v4699, 0.0
      %4704 = vst.msk [vmem:[#allocation4 + $0x5] sm:$0xff] %vm753, %v4702
      %4705 = vst.msk [vmem:[#allocation4 + $0xd] sm:$0xff] %vm753, %v4703
      %v4706 = vld [vmem:[#allocation4] sm:$0xff]
      %v4707 = vld [vmem:[#allocation4 + $0x8] sm:$0xff]
      %v4708 = vmul.f32 %v4706, %v3590
      %v4709 = vmul.f32 %v4707, %v3591
      %4710 = vst.msk [vmem:[#allocation5] sm:$0xff] %vm753, %v4708
      %4711 = vst.msk [vmem:[#allocation5 + $0x18] sm:$0xff] %vm753, %v4709
      %v4712 = vld [vmem:[#allocation4 + $0x1] sm:$0xff]
      %v4713 = vld [vmem:[#allocation4 + $0x9] sm:$0xff]
      %4716 = vrot.lane.b32.xlu0 %v4712, 32
      %v4717 = vpop.permute.xlu0 %4716
      %4718 = vrot.lane.b32.xlu0 %v4713, 32
      %v4719 = vpop.permute.xlu0 %4718
      %4722 = vst.msk [vmem:[#allocation5] sm:$0xff] %vm3684, %v4717
      %4723 = vst.msk [vmem:[#allocation5 + $0x18] sm:$0xff] %vm3684, %v4719
      %v4724 = vld [vmem:[#allocation4 + $0x2] sm:$0xff]
      %v4725 = vld [vmem:[#allocation4 + $0xa] sm:$0xff]
      %v4726 = vmul.f32 %v4724, %v3596
      %v4727 = vmul.f32 %v4725, %v3597
      %4730 = vrot.lane.b32.xlu0 %v4726, 64
      %v4731 = vpop.permute.xlu0 %4730
      %4732 = vrot.lane.b32.xlu0 %v4727, 64
      %v4733 = vpop.permute.xlu0 %4732
      %4736 = vst.msk [vmem:[#allocation5] sm:$0xff] %vm3699, %v4731
      %4737 = vst.msk [vmem:[#allocation5 + $0x18] sm:$0xff] %vm3699, %v4733
      %v4738 = vld [vmem:[#allocation4 + $0x4] sm:$0xff]
      %v4739 = vld [vmem:[#allocation4 + $0xc] sm:$0xff]
      %v4740 = vmul.f32 %v4738, %v3590
      %v4741 = vmul.f32 %v4739, %v3591
      %4744 = vrot.lane.b32.xlu0 %v4740, 96
      %v4745 = vpop.permute.xlu0 %4744
      %4746 = vrot.lane.b32.xlu0 %v4741, 96
      %v4747 = vpop.permute.xlu0 %4746
      %4750 = vst.msk [vmem:[#allocation5] sm:$0xff] %vm3714, %v4745
      %4751 = vst.msk [vmem:[#allocation5 + $0x18] sm:$0xff] %vm3714, %v4747
      %v4752 = vld [vmem:[#allocation4 + $0x5] sm:$0xff]
      %v4753 = vld [vmem:[#allocation4 + $0xd] sm:$0xff]
      %4754 = vst.msk [vmem:[#allocation5 + $0x8] sm:$0xff] %vm753, %v4752
      %4755 = vst.msk [vmem:[#allocation5 + $0x20] sm:$0xff] %vm753, %v4753
      %v4756 = vld [vmem:[#allocation4 + $0x6] sm:$0xff]
      %v4757 = vld [vmem:[#allocation4 + $0xe] sm:$0xff]
      %v4758 = vmul.f32 %v4756, %v3596
      %v4759 = vmul.f32 %v4757, %v3597
      %4762 = vrot.lane.b32.xlu0 %v4758, 32
      %v4763 = vpop.permute.xlu0 %4762
      %4764 = vrot.lane.b32.xlu0 %v4759, 32
      %v4765 = vpop.permute.xlu0 %4764
      %4768 = vst.msk [vmem:[#allocation5 + $0x8] sm:$0xff] %vm3684, %v4763
      %4769 = vst.msk [vmem:[#allocation5 + $0x20] sm:$0xff] %vm3684, %v4765
      %v4770 = vld [vmem:[#allocation4 + $0x8] sm:$0xff]
      %v4771 = vld [vmem:[#allocation4 + $0x10] sm:$0xff]
      %v4772 = vmul.f32 %v4770, %v3590
      %v4773 = vmul.f32 %v4771, %v3591
      %4776 = vrot.lane.b32.xlu0 %v4772, 64
      %v4777 = vpop.permute.xlu0 %4776
      %4778 = vrot.lane.b32.xlu0 %v4773, 64
      %v4779 = vpop.permute.xlu0 %4778
      %4782 = vst.msk [vmem:[#allocation5 + $0x8] sm:$0xff] %vm3699, %v4777
      %4783 = vst.msk [vmem:[#allocation5 + $0x20] sm:$0xff] %vm3699, %v4779
      %v4784 = vld [vmem:[#allocation4 + $0x9] sm:$0xff]
      %v4785 = vld [vmem:[#allocation4 + $0x11] sm:$0xff]
      %4788 = vrot.lane.b32.xlu0 %v4784, 96
      %v4789 = vpop.permute.xlu0 %4788
      %4790 = vrot.lane.b32.xlu0 %v4785, 96
      %v4791 = vpop.permute.xlu0 %4790
      %4794 = vst.msk [vmem:[#allocation5 + $0x8] sm:$0xff] %vm3714, %v4789
      %4795 = vst.msk [vmem:[#allocation5 + $0x20] sm:$0xff] %vm3714, %v4791
      %v4796 = vld [vmem:[#allocation4 + $0xa] sm:$0xff]
      %v4797 = vld [vmem:[#allocation4 + $0x12] sm:$0xff]
      %v4798 = vmul.f32 %v4796, %v3596
      %v4799 = vmul.f32 %v4797, %v3597
      %4800 = vst.msk [vmem:[#allocation5 + $0x10] sm:$0xff] %vm753, %v4798
      %4801 = vst.msk [vmem:[#allocation5 + $0x28] sm:$0xff] %vm753, %v4799
      %v4802 = vld [vmem:[#allocation5] sm:$0xff]
      %v4803 = vld [vmem:[#allocation5 + $0x8] sm:$0xff]
      %v4804 = vld [vmem:[#allocation5 + $0x10] sm:$0xff]
      %v4805 = vld [vmem:[#allocation5 + $0x18] sm:$0xff]
      %v4806 = vld [vmem:[#allocation5 + $0x20] sm:$0xff]
      %v4807 = vld [vmem:[#allocation5 + $0x28] sm:$0xff]
      %v4808 = vpack.c.bf16 %v4805, %v4802
      %v4809 = vpack.c.bf16 %v4806, %v4803
      %v4810 = vpack.c.bf16 %v4807, %v4804
      %s4811 = scalar_lea.vmem %s17, 432
      %v4812 = vld [vmem:[%s4811] sm:$0xf]
      %v4813 = vld [vmem:[%s4811 + $0x4] sm:$0xf]
      %v4814 = vld [vmem:[%s4811 + $0x8] sm:$0xf]
      %v4815 = vld [vmem:[%s4811 + $0xc] sm:$0xf]
      %v4816 = vld [vmem:[%s4811 + $0x10] sm:$0xf]
      %v4817 = vld [vmem:[%s4811 + $0x14] sm:$0xf]
      %v4818 = vld [vmem:[%s4811 + $0x18] sm:$0xf]
      %v4819 = vld [vmem:[%s4811 + $0x1c] sm:$0xf]
      %v4820 = vld [vmem:[%s4811 + $0x20] sm:$0xf]
      %v4821 = vld [vmem:[%s4811 + $0x24] sm:$0xf]
      %v4822 = vld [vmem:[%s4811 + $0x28] sm:$0xf]
      %v4823 = vld [vmem:[%s4811 + $0x2c] sm:$0xf]
      %v4824 = vld [vmem:[%s4811 + $0x30] sm:$0xf]
      %v4825 = vld [vmem:[%s4811 + $0x34] sm:$0xf]
      %v4826 = vld [vmem:[%s4811 + $0x38] sm:$0xf]
      %v4827 = vld [vmem:[%s4811 + $0x3c] sm:$0xf]
      %v4828 = vld [vmem:[%s4811 + $0x40] sm:$0xf]
      %v4829 = vld [vmem:[%s4811 + $0x44] sm:$0xf]
      %v4830 = vld [vmem:[%s4811 + $0x48] sm:$0xf]
      %v4831 = vld [vmem:[%s4811 + $0x4c] sm:$0xf]
      %v4832 = vld [vmem:[%s4811 + $0x50] sm:$0xf]
      %v4833 = vld [vmem:[%s4811 + $0x54] sm:$0xf]
      %v4834 = vld [vmem:[%s4811 + $0x58] sm:$0xf]
      %v4835 = vld [vmem:[%s4811 + $0x5c] sm:$0xf]
      %v4836 = vld [vmem:[%s4811 + $0x60] sm:$0xf]
      %v4837 = vld [vmem:[%s4811 + $0x64] sm:$0xf]
      %v4838 = vld [vmem:[%s4811 + $0x68] sm:$0xf]
      %v4839 = vld [vmem:[%s4811 + $0x6c] sm:$0xf]
      %v4840 = vld [vmem:[%s4811 + $0x70] sm:$0xf]
      %v4841 = vld [vmem:[%s4811 + $0x74] sm:$0xf]
      %v4842 = vld [vmem:[%s4811 + $0x78] sm:$0xf]
      %v4843 = vld [vmem:[%s4811 + $0x7c] sm:$0xf]
      %v4844 = vld [vmem:[%s4811 + $0x80] sm:$0xf]
      %v4845 = vld [vmem:[%s4811 + $0x84] sm:$0xf]
      %v4846 = vld [vmem:[%s4811 + $0x88] sm:$0xf]
      %v4847 = vld [vmem:[%s4811 + $0x8c] sm:$0xf]
      %s4848 = scalar_lea.vmem %s18, 3
      %v4849 = vld [vmem:[%s4848] sm:$0x1]
      %v4851 = vlaneseq
      %v4852 = vshrl.u32 %v4851, 7
      %v4853 = vsub.s32 0, %v4852
      %v4854 = vrot.slane %v4849, %v4853
      %v4892 = vunpack.c.l.b16 %v4812
      %v4893 = vunpack.c.l.b16 %v4813
      %v4894 = vunpack.c.l.b16 %v4814
      %v4895 = vunpack.c.l.b16 %v4815
      %v4896 = vunpack.c.l.b16 %v4816
      %v4897 = vunpack.c.l.b16 %v4817
      %v4898 = vunpack.c.l.b16 %v4818
      %v4899 = vunpack.c.l.b16 %v4819
      %v4900 = vunpack.c.l.b16 %v4820
      %v4901 = vunpack.c.l.b16 %v4821
      %v4902 = vunpack.c.l.b16 %v4822
      %v4903 = vunpack.c.l.b16 %v4823
      %v4904 = vunpack.c.l.b16 %v4824
      %v4905 = vunpack.c.l.b16 %v4825
      %v4906 = vunpack.c.l.b16 %v4826
      %v4907 = vunpack.c.l.b16 %v4827
      %v4908 = vunpack.c.l.b16 %v4828
      %v4909 = vunpack.c.l.b16 %v4829
      %v4910 = vunpack.c.l.b16 %v4830
      %v4911 = vunpack.c.l.b16 %v4831
      %v4912 = vunpack.c.l.b16 %v4832
      %v4913 = vunpack.c.l.b16 %v4833
      %v4914 = vunpack.c.l.b16 %v4834
      %v4915 = vunpack.c.l.b16 %v4835
      %v4916 = vunpack.c.l.b16 %v4836
      %v4917 = vunpack.c.l.b16 %v4837
      %v4918 = vunpack.c.l.b16 %v4838
      %v4919 = vunpack.c.l.b16 %v4839
      %v4920 = vunpack.c.l.b16 %v4840
      %v4921 = vunpack.c.l.b16 %v4841
      %v4922 = vunpack.c.l.b16 %v4842
      %v4923 = vunpack.c.l.b16 %v4843
      %v4924 = vunpack.c.l.b16 %v4844
      %v4925 = vunpack.c.l.b16 %v4845
      %v4926 = vunpack.c.l.b16 %v4846
      %v4927 = vunpack.c.l.b16 %v4847
      %v4928 = vpack.c.b16 %v4893, %v4892
      %v4929 = vpack.c.b16 %v4895, %v4894
      %v4930 = vpack.c.b16 %v4897, %v4896
      %v4931 = vpack.c.b16 %v4899, %v4898
      %v4932 = vpack.c.b16 %v4901, %v4900
      %v4933 = vpack.c.b16 %v4903, %v4902
      %v4934 = vpack.c.b16 %v4905, %v4904
      %v4935 = vpack.c.b16 %v4907, %v4906
      %v4936 = vpack.c.b16 %v4909, %v4908
      %v4937 = vpack.c.b16 %v4911, %v4910
      %v4938 = vpack.c.b16 %v4913, %v4912
      %v4939 = vpack.c.b16 %v4915, %v4914
      %v4940 = vpack.c.b16 %v4917, %v4916
      %v4941 = vpack.c.b16 %v4919, %v4918
      %v4942 = vpack.c.b16 %v4921, %v4920
      %v4943 = vpack.c.b16 %v4923, %v4922
      %v4944 = vpack.c.b16 %v4925, %v4924
      %v4945 = vpack.c.b16 %v4927, %v4926
      %v4965 = vsel %vm753, %v4810, 0
      %4967 = vmatprep.subr.bf16.mxu0 0
      %4968 = vmatpush1.bf16.msra.mxu0 %v4928
      %4969 = vmatprep.subr.bf16.mxu0 0
      %4970 = vmatpush1.bf16.msra.mxu0 %v4929
      %4971 = vmatprep.subr.bf16.mxu0 0
      %4972 = vmatpush1.bf16.msra.mxu0 %v4930
      %4973 = vmatprep.subr.bf16.mxu0 0
      %4974 = vmatpush1.bf16.msra.mxu0 %v4931
      %4975 = vmatprep.subr.bf16.mxu0 0
      %4976 = vmatpush1.bf16.msra.mxu0 %v4932
      %4977 = vmatprep.subr.bf16.mxu0 0
      %4978 = vmatpush1.bf16.msra.mxu0 %v4933
      %4979 = vmatprep.subr.bf16.mxu0 0
      %4980 = vmatpush1.bf16.msra.mxu0 %v4934
      %4981 = vmatprep.subr.bf16.mxu0 0
      %4982 = vmatpush1.bf16.msra.mxu0 %v4935
      %4983 = vmatprep.subr.bf16.mxu0 0
      %4984 = vmatpush1.bf16.msra.mxu0 %v4936
      %4985 = vmatprep.subr.bf16.mxu0 0
      %4986 = vmatpush1.bf16.msra.mxu0 %v4937
      %4987 = vmatprep.subr.bf16.mxu0 0
      %4988 = vmatpush1.bf16.msra.mxu0 %v4938
      %4989 = vmatprep.subr.bf16.mxu0 0
      %4990 = vmatpush1.bf16.msra.mxu0 %v4939
      %4991 = vmatprep.subr.bf16.mxu0 0
      %4992 = vmatpush1.bf16.msra.mxu0 %v4940
      %4993 = vmatprep.subr.bf16.mxu0 0
      %4994 = vmatpush1.bf16.msra.mxu0 %v4941
      %4995 = vmatprep.subr.bf16.mxu0 0
      %4996 = vmatpush1.bf16.msra.mxu0 %v4942
      %4997 = vmatprep.subr.bf16.mxu0 0
      %4998 = vmatpush1.bf16.msra.mxu0 %v4943
      %4999 = vmatprep.mubr.bf16.mxu0 %v4809
      %5000 = vmatmul.mubr.bf16.gmra.mrb[0].mxu0 %v4808
      %v5001 = vpop.f32.mrb[0].mxu0
      %v5002 = vadd.f32 %v4854, %v5001
      %v5003 = vpop.f32.mrb[0].mxu0
      %v5004 = vpop.f32.mrb[0].mxu0
      %v5005 = vadd.f32 %v4854, %v5004
      %v5006 = vpop.f32.mrb[0].mxu0
      %5007 = vdwg.mxu0
      %5008 = vmatprep.subr.bf16.mxu0 0
      %5009 = vmatpush1.bf16.msra.mxu0 %v4944
      %5010 = vmatprep.subr.bf16.mxu0 0
      %5011 = vmatpush1.bf16.msra.mxu0 %v4945
      %5012 = vmatprep.subr.bf16.mxu0 0
      %5013 = vmatpush1.bf16.msra.mxu0 0
      %5014 = vmatprep.subr.bf16.mxu0 0
      %5015 = vmatpush1.bf16.msra.mxu0 0
      %5016 = vmatprep.subr.bf16.mxu0 0
      %5017 = vmatpush1.bf16.msra.mxu0 0
      %5018 = vmatprep.subr.bf16.mxu0 0
      %5019 = vmatpush1.bf16.msra.mxu0 0
      %5020 = vmatprep.subr.bf16.mxu0 0
      %5021 = vmatpush1.bf16.msra.mxu0 0
      %5022 = vmatprep.subr.bf16.mxu0 0
      %5023 = vmatpush1.bf16.msra.mxu0 0
      %5024 = vmatprep.subr.bf16.mxu0 0
      %5025 = vmatpush1.bf16.msra.mxu0 0
      %5026 = vmatprep.subr.bf16.mxu0 0
      %5027 = vmatpush1.bf16.msra.mxu0 0
      %5028 = vmatprep.subr.bf16.mxu0 0
      %5029 = vmatpush1.bf16.msra.mxu0 0
      %5030 = vmatprep.subr.bf16.mxu0 0
      %5031 = vmatpush1.bf16.msra.mxu0 0
      %5032 = vmatprep.subr.bf16.mxu0 0
      %5033 = vmatpush1.bf16.msra.mxu0 0
      %5034 = vmatprep.subr.bf16.mxu0 0
      %5035 = vmatpush1.bf16.msra.mxu0 0
      %5036 = vmatprep.subr.bf16.mxu0 0
      %5037 = vmatpush1.bf16.msra.mxu0 0
      %5038 = vmatprep.subr.bf16.mxu0 0
      %5039 = vmatpush1.bf16.msra.mxu0 0
      %5040 = vmatprep.mubr.bf16.mxu0 0
      %5041 = vmatmul.mubr.bf16.gmra.mrb[0].mxu0 %v4965
      %v5042 = vpop.f32.mrb[0].mxu0
      %v5043 = vadd.f32 %v5002, %v5042
      %v5044 = vpop.f32.mrb[0].mxu0
      %v5045 = vpop.f32.mrb[0].mxu0
      %v5046 = vadd.f32 %v5005, %v5045
      %v5047 = vpop.f32.mrb[0].mxu0
      %5048 = vdwg.mxu0
      %5049 = vst.msk [vmem:[#allocation4 + $0x5] sm:$0xff] %vm753, %v5043
      %5050 = vst.msk [vmem:[#allocation4 + $0xd] sm:$0xff] %vm753, %v5046
      %v5051 = vld [vmem:[#allocation4] sm:$0xff]
      %v5052 = vld [vmem:[#allocation4 + $0x8] sm:$0xff]
      %v5053 = vmul.f32 %v5051, %v3590
      %v5054 = vmul.f32 %v5052, %v3591
      %5055 = vst.msk [vmem:[#allocation5] sm:$0xff] %vm753, %v5053
      %5056 = vst.msk [vmem:[#allocation5 + $0x18] sm:$0xff] %vm753, %v5054
      %v5057 = vld [vmem:[#allocation4 + $0x1] sm:$0xff]
      %v5058 = vld [vmem:[#allocation4 + $0x9] sm:$0xff]
      %5061 = vrot.lane.b32.xlu0 %v5057, 32
      %v5062 = vpop.permute.xlu0 %5061
      %5063 = vrot.lane.b32.xlu0 %v5058, 32
      %v5064 = vpop.permute.xlu0 %5063
      %5067 = vst.msk [vmem:[#allocation5] sm:$0xff] %vm3684, %v5062
      %5068 = vst.msk [vmem:[#allocation5 + $0x18] sm:$0xff] %vm3684, %v5064
      %v5069 = vld [vmem:[#allocation4 + $0x2] sm:$0xff]
      %v5070 = vld [vmem:[#allocation4 + $0xa] sm:$0xff]
      %v5071 = vmul.f32 %v5069, %v3596
      %v5072 = vmul.f32 %v5070, %v3597
      %5075 = vrot.lane.b32.xlu0 %v5071, 64
      %v5076 = vpop.permute.xlu0 %5075
      %5077 = vrot.lane.b32.xlu0 %v5072, 64
      %v5078 = vpop.permute.xlu0 %5077
      %5081 = vst.msk [vmem:[#allocation5] sm:$0xff] %vm3699, %v5076
      %5082 = vst.msk [vmem:[#allocation5 + $0x18] sm:$0xff] %vm3699, %v5078
      %v5083 = vld [vmem:[#allocation4 + $0x4] sm:$0xff]
      %v5084 = vld [vmem:[#allocation4 + $0xc] sm:$0xff]
      %v5085 = vmul.f32 %v5083, %v3590
      %v5086 = vmul.f32 %v5084, %v3591
      %5089 = vrot.lane.b32.xlu0 %v5085, 96
      %v5090 = vpop.permute.xlu0 %5089
      %5091 = vrot.lane.b32.xlu0 %v5086, 96
      %v5092 = vpop.permute.xlu0 %5091
      %5095 = vst.msk [vmem:[#allocation5] sm:$0xff] %vm3714, %v5090
      %5096 = vst.msk [vmem:[#allocation5 + $0x18] sm:$0xff] %vm3714, %v5092
      %v5097 = vld [vmem:[#allocation4 + $0x5] sm:$0xff]
      %v5098 = vld [vmem:[#allocation4 + $0xd] sm:$0xff]
      %5099 = vst.msk [vmem:[#allocation5 + $0x8] sm:$0xff] %vm753, %v5097
      %5100 = vst.msk [vmem:[#allocation5 + $0x20] sm:$0xff] %vm753, %v5098
      %v5101 = vld [vmem:[#allocation4 + $0x6] sm:$0xff]
      %v5102 = vld [vmem:[#allocation4 + $0xe] sm:$0xff]
      %v5103 = vmul.f32 %v5101, %v3596
      %v5104 = vmul.f32 %v5102, %v3597
      %5107 = vrot.lane.b32.xlu0 %v5103, 32
      %v5108 = vpop.permute.xlu0 %5107
      %5109 = vrot.lane.b32.xlu0 %v5104, 32
      %v5110 = vpop.permute.xlu0 %5109
      %5113 = vst.msk [vmem:[#allocation5 + $0x8] sm:$0xff] %vm3684, %v5108
      %5114 = vst.msk [vmem:[#allocation5 + $0x20] sm:$0xff] %vm3684, %v5110
      %v5115 = vld [vmem:[#allocation4 + $0x8] sm:$0xff]
      %v5116 = vld [vmem:[#allocation4 + $0x10] sm:$0xff]
      %v5117 = vmul.f32 %v5115, %v3590
      %v5118 = vmul.f32 %v5116, %v3591
      %5121 = vrot.lane.b32.xlu0 %v5117, 64
      %v5122 = vpop.permute.xlu0 %5121
      %5123 = vrot.lane.b32.xlu0 %v5118, 64
      %v5124 = vpop.permute.xlu0 %5123
      %5127 = vst.msk [vmem:[#allocation5 + $0x8] sm:$0xff] %vm3699, %v5122
      %5128 = vst.msk [vmem:[#allocation5 + $0x20] sm:$0xff] %vm3699, %v5124
      %v5129 = vld [vmem:[#allocation4 + $0x9] sm:$0xff]
      %v5130 = vld [vmem:[#allocation4 + $0x11] sm:$0xff]
      %5133 = vrot.lane.b32.xlu0 %v5129, 96
      %v5134 = vpop.permute.xlu0 %5133
      %5135 = vrot.lane.b32.xlu0 %v5130, 96
      %v5136 = vpop.permute.xlu0 %5135
      %5139 = vst.msk [vmem:[#allocation5 + $0x8] sm:$0xff] %vm3714, %v5134
      %5140 = vst.msk [vmem:[#allocation5 + $0x20] sm:$0xff] %vm3714, %v5136
      %v5141 = vld [vmem:[#allocation4 + $0xa] sm:$0xff]
      %v5142 = vld [vmem:[#allocation4 + $0x12] sm:$0xff]
      %v5143 = vmul.f32 %v5141, %v3596
      %v5144 = vmul.f32 %v5142, %v3597
      %5145 = vst.msk [vmem:[#allocation5 + $0x10] sm:$0xff] %vm753, %v5143
      %5146 = vst.msk [vmem:[#allocation5 + $0x28] sm:$0xff] %vm753, %v5144
      %v5147 = vld [vmem:[#allocation5] sm:$0xff]
      %v5148 = vld [vmem:[#allocation5 + $0x8] sm:$0xff]
      %v5149 = vld [vmem:[#allocation5 + $0x10] sm:$0xff]
      %v5150 = vld [vmem:[#allocation5 + $0x18] sm:$0xff]
      %v5151 = vld [vmem:[#allocation5 + $0x20] sm:$0xff]
      %v5152 = vld [vmem:[#allocation5 + $0x28] sm:$0xff]
      %v5153 = vpack.c.bf16 %v5150, %v5147
      %v5154 = vpack.c.bf16 %v5151, %v5148
      %v5155 = vpack.c.bf16 %v5152, %v5149
      %s5156 = scalar_lea.vmem %s17, 576
      %v5157 = vld [vmem:[%s5156] sm:$0xf]
      %v5158 = vld [vmem:[%s5156 + $0x4] sm:$0xf]
      %v5159 = vld [vmem:[%s5156 + $0x8] sm:$0xf]
      %v5160 = vld [vmem:[%s5156 + $0xc] sm:$0xf]
      %v5161 = vld [vmem:[%s5156 + $0x10] sm:$0xf]
      %v5162 = vld [vmem:[%s5156 + $0x14] sm:$0xf]
      %v5163 = vld [vmem:[%s5156 + $0x18] sm:$0xf]
      %v5164 = vld [vmem:[%s5156 + $0x1c] sm:$0xf]
      %v5165 = vld [vmem:[%s5156 + $0x20] sm:$0xf]
      %v5166 = vld [vmem:[%s5156 + $0x24] sm:$0xf]
      %v5167 = vld [vmem:[%s5156 + $0x28] sm:$0xf]
      %v5168 = vld [vmem:[%s5156 + $0x2c] sm:$0xf]
      %v5169 = vld [vmem:[%s5156 + $0x30] sm:$0xf]
      %v5170 = vld [vmem:[%s5156 + $0x34] sm:$0xf]
      %v5171 = vld [vmem:[%s5156 + $0x38] sm:$0xf]
      %v5172 = vld [vmem:[%s5156 + $0x3c] sm:$0xf]
      %v5173 = vld [vmem:[%s5156 + $0x40] sm:$0xf]
      %v5174 = vld [vmem:[%s5156 + $0x44] sm:$0xf]
      %v5175 = vld [vmem:[%s5156 + $0x48] sm:$0xf]
      %v5176 = vld [vmem:[%s5156 + $0x4c] sm:$0xf]
      %v5177 = vld [vmem:[%s5156 + $0x50] sm:$0xf]
      %v5178 = vld [vmem:[%s5156 + $0x54] sm:$0xf]
      %v5179 = vld [vmem:[%s5156 + $0x58] sm:$0xf]
      %v5180 = vld [vmem:[%s5156 + $0x5c] sm:$0xf]
      %v5181 = vld [vmem:[%s5156 + $0x60] sm:$0xf]
      %v5182 = vld [vmem:[%s5156 + $0x64] sm:$0xf]
      %v5183 = vld [vmem:[%s5156 + $0x68] sm:$0xf]
      %v5184 = vld [vmem:[%s5156 + $0x6c] sm:$0xf]
      %v5185 = vld [vmem:[%s5156 + $0x70] sm:$0xf]
      %v5186 = vld [vmem:[%s5156 + $0x74] sm:$0xf]
      %v5187 = vld [vmem:[%s5156 + $0x78] sm:$0xf]
      %v5188 = vld [vmem:[%s5156 + $0x7c] sm:$0xf]
      %v5189 = vld [vmem:[%s5156 + $0x80] sm:$0xf]
      %v5190 = vld [vmem:[%s5156 + $0x84] sm:$0xf]
      %v5191 = vld [vmem:[%s5156 + $0x88] sm:$0xf]
      %v5192 = vld [vmem:[%s5156 + $0x8c] sm:$0xf]
      %s5193 = scalar_lea.vmem %s18, 4
      %v5194 = vld [vmem:[%s5193] sm:$0x1]
      %v5196 = vlaneseq
      %v5197 = vshrl.u32 %v5196, 7
      %v5198 = vsub.s32 0, %v5197
      %v5199 = vrot.slane %v5194, %v5198
      %v5237 = vunpack.c.l.b16 %v5157
      %v5238 = vunpack.c.l.b16 %v5158
      %v5239 = vunpack.c.l.b16 %v5159
      %v5240 = vunpack.c.l.b16 %v5160
      %v5241 = vunpack.c.l.b16 %v5161
      %v5242 = vunpack.c.l.b16 %v5162
      %v5243 = vunpack.c.l.b16 %v5163
      %v5244 = vunpack.c.l.b16 %v5164
      %v5245 = vunpack.c.l.b16 %v5165
      %v5246 = vunpack.c.l.b16 %v5166
      %v5247 = vunpack.c.l.b16 %v5167
      %v5248 = vunpack.c.l.b16 %v5168
      %v5249 = vunpack.c.l.b16 %v5169
      %v5250 = vunpack.c.l.b16 %v5170
      %v5251 = vunpack.c.l.b16 %v5171
      %v5252 = vunpack.c.l.b16 %v5172
      %v5253 = vunpack.c.l.b16 %v5173
      %v5254 = vunpack.c.l.b16 %v5174
      %v5255 = vunpack.c.l.b16 %v5175
      %v5256 = vunpack.c.l.b16 %v5176
      %v5257 = vunpack.c.l.b16 %v5177
      %v5258 = vunpack.c.l.b16 %v5178
      %v5259 = vunpack.c.l.b16 %v5179
      %v5260 = vunpack.c.l.b16 %v5180
      %v5261 = vunpack.c.l.b16 %v5181
      %v5262 = vunpack.c.l.b16 %v5182
      %v5263 = vunpack.c.l.b16 %v5183
      %v5264 = vunpack.c.l.b16 %v5184
      %v5265 = vunpack.c.l.b16 %v5185
      %v5266 = vunpack.c.l.b16 %v5186
      %v5267 = vunpack.c.l.b16 %v5187
      %v5268 = vunpack.c.l.b16 %v5188
      %v5269 = vunpack.c.l.b16 %v5189
      %v5270 = vunpack.c.l.b16 %v5190
      %v5271 = vunpack.c.l.b16 %v5191
      %v5272 = vunpack.c.l.b16 %v5192
      %v5273 = vpack.c.b16 %v5238, %v5237
      %v5274 = vpack.c.b16 %v5240, %v5239
      %v5275 = vpack.c.b16 %v5242, %v5241
      %v5276 = vpack.c.b16 %v5244, %v5243
      %v5277 = vpack.c.b16 %v5246, %v5245
      %v5278 = vpack.c.b16 %v5248, %v5247
      %v5279 = vpack.c.b16 %v5250, %v5249
      %v5280 = vpack.c.b16 %v5252, %v5251
      %v5281 = vpack.c.b16 %v5254, %v5253
      %v5282 = vpack.c.b16 %v5256, %v5255
      %v5283 = vpack.c.b16 %v5258, %v5257
      %v5284 = vpack.c.b16 %v5260, %v5259
      %v5285 = vpack.c.b16 %v5262, %v5261
      %v5286 = vpack.c.b16 %v5264, %v5263
      %v5287 = vpack.c.b16 %v5266, %v5265
      %v5288 = vpack.c.b16 %v5268, %v5267
      %v5289 = vpack.c.b16 %v5270, %v5269
      %v5290 = vpack.c.b16 %v5272, %v5271
      %v5310 = vsel %vm753, %v5155, 0
      %5312 = vmatprep.subr.bf16.mxu0 0
      %5313 = vmatpush1.bf16.msra.mxu0 %v5273
      %5314 = vmatprep.subr.bf16.mxu0 0
      %5315 = vmatpush1.bf16.msra.mxu0 %v5274
      %5316 = vmatprep.subr.bf16.mxu0 0
      %5317 = vmatpush1.bf16.msra.mxu0 %v5275
      %5318 = vmatprep.subr.bf16.mxu0 0
      %5319 = vmatpush1.bf16.msra.mxu0 %v5276
      %5320 = vmatprep.subr.bf16.mxu0 0
      %5321 = vmatpush1.bf16.msra.mxu0 %v5277
      %5322 = vmatprep.subr.bf16.mxu0 0
      %5323 = vmatpush1.bf16.msra.mxu0 %v5278
      %5324 = vmatprep.subr.bf16.mxu0 0
      %5325 = vmatpush1.bf16.msra.mxu0 %v5279
      %5326 = vmatprep.subr.bf16.mxu0 0
      %5327 = vmatpush1.bf16.msra.mxu0 %v5280
      %5328 = vmatprep.subr.bf16.mxu0 0
      %5329 = vmatpush1.bf16.msra.mxu0 %v5281
      %5330 = vmatprep.subr.bf16.mxu0 0
      %5331 = vmatpush1.bf16.msra.mxu0 %v5282
      %5332 = vmatprep.subr.bf16.mxu0 0
      %5333 = vmatpush1.bf16.msra.mxu0 %v5283
      %5334 = vmatprep.subr.bf16.mxu0 0
      %5335 = vmatpush1.bf16.msra.mxu0 %v5284
      %5336 = vmatprep.subr.bf16.mxu0 0
      %5337 = vmatpush1.bf16.msra.mxu0 %v5285
      %5338 = vmatprep.subr.bf16.mxu0 0
      %5339 = vmatpush1.bf16.msra.mxu0 %v5286
      %5340 = vmatprep.subr.bf16.mxu0 0
      %5341 = vmatpush1.bf16.msra.mxu0 %v5287
      %5342 = vmatprep.subr.bf16.mxu0 0
      %5343 = vmatpush1.bf16.msra.mxu0 %v5288
      %5344 = vmatprep.mubr.bf16.mxu0 %v5154
      %5345 = vmatmul.mubr.bf16.gmra.mrb[0].mxu0 %v5153
      %v5346 = vpop.f32.mrb[0].mxu0
      %v5347 = vadd.f32 %v5199, %v5346
      %v5348 = vpop.f32.mrb[0].mxu0
      %v5349 = vpop.f32.mrb[0].mxu0
      %v5350 = vadd.f32 %v5199, %v5349
      %v5351 = vpop.f32.mrb[0].mxu0
      %5352 = vdwg.mxu0
      %5353 = vmatprep.subr.bf16.mxu0 0
      %5354 = vmatpush1.bf16.msra.mxu0 %v5289
      %5355 = vmatprep.subr.bf16.mxu0 0
      %5356 = vmatpush1.bf16.msra.mxu0 %v5290
      %5357 = vmatprep.subr.bf16.mxu0 0
      %5358 = vmatpush1.bf16.msra.mxu0 0
      %5359 = vmatprep.subr.bf16.mxu0 0
      %5360 = vmatpush1.bf16.msra.mxu0 0
      %5361 = vmatprep.subr.bf16.mxu0 0
      %5362 = vmatpush1.bf16.msra.mxu0 0
      %5363 = vmatprep.subr.bf16.mxu0 0
      %5364 = vmatpush1.bf16.msra.mxu0 0
      %5365 = vmatprep.subr.bf16.mxu0 0
      %5366 = vmatpush1.bf16.msra.mxu0 0
      %5367 = vmatprep.subr.bf16.mxu0 0
      %5368 = vmatpush1.bf16.msra.mxu0 0
      %5369 = vmatprep.subr.bf16.mxu0 0
      %5370 = vmatpush1.bf16.msra.mxu0 0
      %5371 = vmatprep.subr.bf16.mxu0 0
      %5372 = vmatpush1.bf16.msra.mxu0 0
      %5373 = vmatprep.subr.bf16.mxu0 0
      %5374 = vmatpush1.bf16.msra.mxu0 0
      %5375 = vmatprep.subr.bf16.mxu0 0
      %5376 = vmatpush1.bf16.msra.mxu0 0
      %5377 = vmatprep.subr.bf16.mxu0 0
      %5378 = vmatpush1.bf16.msra.mxu0 0
      %5379 = vmatprep.subr.bf16.mxu0 0
      %5380 = vmatpush1.bf16.msra.mxu0 0
      %5381 = vmatprep.subr.bf16.mxu0 0
      %5382 = vmatpush1.bf16.msra.mxu0 0
      %5383 = vmatprep.subr.bf16.mxu0 0
      %5384 = vmatpush1.bf16.msra.mxu0 0
      %5385 = vmatprep.mubr.bf16.mxu0 0
      %5386 = vmatmul.mubr.bf16.gmra.mrb[0].mxu0 %v5310
      %v5387 = vpop.f32.mrb[0].mxu0
      %v5388 = vadd.f32 %v5347, %v5387
      %v5389 = vpop.f32.mrb[0].mxu0
      %v5390 = vpop.f32.mrb[0].mxu0
      %v5391 = vadd.f32 %v5350, %v5390
      %v5392 = vpop.f32.mrb[0].mxu0
      %5393 = vdwg.mxu0
      %5394 = vst.msk [vmem:[#allocation4 + $0x5] sm:$0xff] %vm753, %v5388
      %5395 = vst.msk [vmem:[#allocation4 + $0xd] sm:$0xff] %vm753, %v5391
      %v5396 = vld [vmem:[#allocation4] sm:$0xff]
      %v5397 = vld [vmem:[#allocation4 + $0x8] sm:$0xff]
      %v5398 = vmul.f32 %v5396, %v3590
      %v5399 = vmul.f32 %v5397, %v3591
      %5400 = vst.msk [vmem:[#allocation5] sm:$0xff] %vm753, %v5398
      %5401 = vst.msk [vmem:[#allocation5 + $0x18] sm:$0xff] %vm753, %v5399
      %v5402 = vld [vmem:[#allocation4 + $0x1] sm:$0xff]
      %v5403 = vld [vmem:[#allocation4 + $0x9] sm:$0xff]
      %5406 = vrot.lane.b32.xlu0 %v5402, 32
      %v5407 = vpop.permute.xlu0 %5406
      %5408 = vrot.lane.b32.xlu0 %v5403, 32
      %v5409 = vpop.permute.xlu0 %5408
      %5412 = vst.msk [vmem:[#allocation5] sm:$0xff] %vm3684, %v5407
      %5413 = vst.msk [vmem:[#allocation5 + $0x18] sm:$0xff] %vm3684, %v5409
      %v5414 = vld [vmem:[#allocation4 + $0x2] sm:$0xff]
      %v5415 = vld [vmem:[#allocation4 + $0xa] sm:$0xff]
      %v5416 = vmul.f32 %v5414, %v3596
      %v5417 = vmul.f32 %v5415, %v3597
      %5420 = vrot.lane.b32.xlu0 %v5416, 64
      %v5421 = vpop.permute.xlu0 %5420
      %5422 = vrot.lane.b32.xlu0 %v5417, 64
      %v5423 = vpop.permute.xlu0 %5422
      %5426 = vst.msk [vmem:[#allocation5] sm:$0xff] %vm3699, %v5421
      %5427 = vst.msk [vmem:[#allocation5 + $0x18] sm:$0xff] %vm3699, %v5423
      %v5428 = vld [vmem:[#allocation4 + $0x4] sm:$0xff]
      %v5429 = vld [vmem:[#allocation4 + $0xc] sm:$0xff]
      %v5430 = vmul.f32 %v5428, %v3590
      %v5431 = vmul.f32 %v5429, %v3591
      %5434 = vrot.lane.b32.xlu0 %v5430, 96
      %v5435 = vpop.permute.xlu0 %5434
      %5436 = vrot.lane.b32.xlu0 %v5431, 96
      %v5437 = vpop.permute.xlu0 %5436
      %5440 = vst.msk [vmem:[#allocation5] sm:$0xff] %vm3714, %v5435
      %5441 = vst.msk [vmem:[#allocation5 + $0x18] sm:$0xff] %vm3714, %v5437
      %v5442 = vld [vmem:[#allocation4 + $0x5] sm:$0xff]
      %v5443 = vld [vmem:[#allocation4 + $0xd] sm:$0xff]
      %5444 = vst.msk [vmem:[#allocation5 + $0x8] sm:$0xff] %vm753, %v5442
      %5445 = vst.msk [vmem:[#allocation5 + $0x20] sm:$0xff] %vm753, %v5443
      %v5446 = vld [vmem:[#allocation4 + $0x6] sm:$0xff]
      %v5447 = vld [vmem:[#allocation4 + $0xe] sm:$0xff]
      %v5448 = vmul.f32 %v5446, %v3596
      %v5449 = vmul.f32 %v5447, %v3597
      %5452 = vrot.lane.b32.xlu0 %v5448, 32
      %v5453 = vpop.permute.xlu0 %5452
      %5454 = vrot.lane.b32.xlu0 %v5449, 32
      %v5455 = vpop.permute.xlu0 %5454
      %5458 = vst.msk [vmem:[#allocation5 + $0x8] sm:$0xff] %vm3684, %v5453
      %5459 = vst.msk [vmem:[#allocation5 + $0x20] sm:$0xff] %vm3684, %v5455
      %v5460 = vld [vmem:[#allocation4 + $0x8] sm:$0xff]
      %v5461 = vld [vmem:[#allocation4 + $0x10] sm:$0xff]
      %v5462 = vmul.f32 %v5460, %v3590
      %v5463 = vmul.f32 %v5461, %v3591
      %5466 = vrot.lane.b32.xlu0 %v5462, 64
      %v5467 = vpop.permute.xlu0 %5466
      %5468 = vrot.lane.b32.xlu0 %v5463, 64
      %v5469 = vpop.permute.xlu0 %5468
      %5472 = vst.msk [vmem:[#allocation5 + $0x8] sm:$0xff] %vm3699, %v5467
      %5473 = vst.msk [vmem:[#allocation5 + $0x20] sm:$0xff] %vm3699, %v5469
      %v5474 = vld [vmem:[#allocation4 + $0x9] sm:$0xff]
      %v5475 = vld [vmem:[#allocation4 + $0x11] sm:$0xff]
      %5478 = vrot.lane.b32.xlu0 %v5474, 96
      %v5479 = vpop.permute.xlu0 %5478
      %5480 = vrot.lane.b32.xlu0 %v5475, 96
      %v5481 = vpop.permute.xlu0 %5480
      %5484 = vst.msk [vmem:[#allocation5 + $0x8] sm:$0xff] %vm3714, %v5479
      %5485 = vst.msk [vmem:[#allocation5 + $0x20] sm:$0xff] %vm3714, %v5481
      %v5486 = vld [vmem:[#allocation4 + $0xa] sm:$0xff]
      %v5487 = vld [vmem:[#allocation4 + $0x12] sm:$0xff]
      %v5488 = vmul.f32 %v5486, %v3596
      %v5489 = vmul.f32 %v5487, %v3597
      %5490 = vst.msk [vmem:[#allocation5 + $0x10] sm:$0xff] %vm753, %v5488
      %5491 = vst.msk [vmem:[#allocation5 + $0x28] sm:$0xff] %vm753, %v5489
      %v5492 = vld [vmem:[#allocation5] sm:$0xff]
      %v5493 = vld [vmem:[#allocation5 + $0x8] sm:$0xff]
      %v5494 = vld [vmem:[#allocation5 + $0x10] sm:$0xff]
      %v5495 = vld [vmem:[#allocation5 + $0x18] sm:$0xff]
      %v5496 = vld [vmem:[#allocation5 + $0x20] sm:$0xff]
      %v5497 = vld [vmem:[#allocation5 + $0x28] sm:$0xff]
      %v5498 = vpack.c.bf16 %v5495, %v5492
      %v5499 = vpack.c.bf16 %v5496, %v5493
      %v5500 = vpack.c.bf16 %v5497, %v5494
      %s5501 = scalar_lea.vmem %s17, 720
      %v5502 = vld [vmem:[%s5501] sm:$0xf]
      %v5503 = vld [vmem:[%s5501 + $0x4] sm:$0xf]
      %v5504 = vld [vmem:[%s5501 + $0x8] sm:$0xf]
      %v5505 = vld [vmem:[%s5501 + $0xc] sm:$0xf]
      %v5506 = vld [vmem:[%s5501 + $0x10] sm:$0xf]
      %v5507 = vld [vmem:[%s5501 + $0x14] sm:$0xf]
      %v5508 = vld [vmem:[%s5501 + $0x18] sm:$0xf]
      %v5509 = vld [vmem:[%s5501 + $0x1c] sm:$0xf]
      %v5510 = vld [vmem:[%s5501 + $0x20] sm:$0xf]
      %v5511 = vld [vmem:[%s5501 + $0x24] sm:$0xf]
      %v5512 = vld [vmem:[%s5501 + $0x28] sm:$0xf]
      %v5513 = vld [vmem:[%s5501 + $0x2c] sm:$0xf]
      %v5514 = vld [vmem:[%s5501 + $0x30] sm:$0xf]
      %v5515 = vld [vmem:[%s5501 + $0x34] sm:$0xf]
      %v5516 = vld [vmem:[%s5501 + $0x38] sm:$0xf]
      %v5517 = vld [vmem:[%s5501 + $0x3c] sm:$0xf]
      %v5518 = vld [vmem:[%s5501 + $0x40] sm:$0xf]
      %v5519 = vld [vmem:[%s5501 + $0x44] sm:$0xf]
      %v5520 = vld [vmem:[%s5501 + $0x48] sm:$0xf]
      %v5521 = vld [vmem:[%s5501 + $0x4c] sm:$0xf]
      %v5522 = vld [vmem:[%s5501 + $0x50] sm:$0xf]
      %v5523 = vld [vmem:[%s5501 + $0x54] sm:$0xf]
      %v5524 = vld [vmem:[%s5501 + $0x58] sm:$0xf]
      %v5525 = vld [vmem:[%s5501 + $0x5c] sm:$0xf]
      %v5526 = vld [vmem:[%s5501 + $0x60] sm:$0xf]
      %v5527 = vld [vmem:[%s5501 + $0x64] sm:$0xf]
      %v5528 = vld [vmem:[%s5501 + $0x68] sm:$0xf]
      %v5529 = vld [vmem:[%s5501 + $0x6c] sm:$0xf]
      %v5530 = vld [vmem:[%s5501 + $0x70] sm:$0xf]
      %v5531 = vld [vmem:[%s5501 + $0x74] sm:$0xf]
      %v5532 = vld [vmem:[%s5501 + $0x78] sm:$0xf]
      %v5533 = vld [vmem:[%s5501 + $0x7c] sm:$0xf]
      %v5534 = vld [vmem:[%s5501 + $0x80] sm:$0xf]
      %v5535 = vld [vmem:[%s5501 + $0x84] sm:$0xf]
      %v5536 = vld [vmem:[%s5501 + $0x88] sm:$0xf]
      %v5537 = vld [vmem:[%s5501 + $0x8c] sm:$0xf]
      %s5538 = scalar_lea.vmem %s18, 5
      %v5539 = vld [vmem:[%s5538] sm:$0x1]
      %v5541 = vlaneseq
      %v5542 = vshrl.u32 %v5541, 7
      %v5543 = vsub.s32 0, %v5542
      %v5544 = vrot.slane %v5539, %v5543
      %v5582 = vunpack.c.l.b16 %v5502
      %v5583 = vunpack.c.l.b16 %v5503
      %v5584 = vunpack.c.l.b16 %v5504
      %v5585 = vunpack.c.l.b16 %v5505
      %v5586 = vunpack.c.l.b16 %v5506
      %v5587 = vunpack.c.l.b16 %v5507
      %v5588 = vunpack.c.l.b16 %v5508
      %v5589 = vunpack.c.l.b16 %v5509
      %v5590 = vunpack.c.l.b16 %v5510
      %v5591 = vunpack.c.l.b16 %v5511
      %v5592 = vunpack.c.l.b16 %v5512
      %v5593 = vunpack.c.l.b16 %v5513
      %v5594 = vunpack.c.l.b16 %v5514
      %v5595 = vunpack.c.l.b16 %v5515
      %v5596 = vunpack.c.l.b16 %v5516
      %v5597 = vunpack.c.l.b16 %v5517
      %v5598 = vunpack.c.l.b16 %v5518
      %v5599 = vunpack.c.l.b16 %v5519
      %v5600 = vunpack.c.l.b16 %v5520
      %v5601 = vunpack.c.l.b16 %v5521
      %v5602 = vunpack.c.l.b16 %v5522
      %v5603 = vunpack.c.l.b16 %v5523
      %v5604 = vunpack.c.l.b16 %v5524
      %v5605 = vunpack.c.l.b16 %v5525
      %v5606 = vunpack.c.l.b16 %v5526
      %v5607 = vunpack.c.l.b16 %v5527
      %v5608 = vunpack.c.l.b16 %v5528
      %v5609 = vunpack.c.l.b16 %v5529
      %v5610 = vunpack.c.l.b16 %v5530
      %v5611 = vunpack.c.l.b16 %v5531
      %v5612 = vunpack.c.l.b16 %v5532
      %v5613 = vunpack.c.l.b16 %v5533
      %v5614 = vunpack.c.l.b16 %v5534
      %v5615 = vunpack.c.l.b16 %v5535
      %v5616 = vunpack.c.l.b16 %v5536
      %v5617 = vunpack.c.l.b16 %v5537
      %v5618 = vpack.c.b16 %v5583, %v5582
      %v5619 = vpack.c.b16 %v5585, %v5584
      %v5620 = vpack.c.b16 %v5587, %v5586
      %v5621 = vpack.c.b16 %v5589, %v5588
      %v5622 = vpack.c.b16 %v5591, %v5590
      %v5623 = vpack.c.b16 %v5593, %v5592
      %v5624 = vpack.c.b16 %v5595, %v5594
      %v5625 = vpack.c.b16 %v5597, %v5596
      %v5626 = vpack.c.b16 %v5599, %v5598
      %v5627 = vpack.c.b16 %v5601, %v5600
      %v5628 = vpack.c.b16 %v5603, %v5602
      %v5629 = vpack.c.b16 %v5605, %v5604
      %v5630 = vpack.c.b16 %v5607, %v5606
      %v5631 = vpack.c.b16 %v5609, %v5608
      %v5632 = vpack.c.b16 %v5611, %v5610
      %v5633 = vpack.c.b16 %v5613, %v5612
      %v5634 = vpack.c.b16 %v5615, %v5614
      %v5635 = vpack.c.b16 %v5617, %v5616
      %v5655 = vsel %vm753, %v5500, 0
      %5657 = vmatprep.subr.bf16.mxu0 0
      %5658 = vmatpush1.bf16.msra.mxu0 %v5618
      %5659 = vmatprep.subr.bf16.mxu0 0
      %5660 = vmatpush1.bf16.msra.mxu0 %v5619
      %5661 = vmatprep.subr.bf16.mxu0 0
      %5662 = vmatpush1.bf16.msra.mxu0 %v5620
      %5663 = vmatprep.subr.bf16.mxu0 0
      %5664 = vmatpush1.bf16.msra.mxu0 %v5621
      %5665 = vmatprep.subr.bf16.mxu0 0
      %5666 = vmatpush1.bf16.msra.mxu0 %v5622
      %5667 = vmatprep.subr.bf16.mxu0 0
      %5668 = vmatpush1.bf16.msra.mxu0 %v5623
      %5669 = vmatprep.subr.bf16.mxu0 0
      %5670 = vmatpush1.bf16.msra.mxu0 %v5624
      %5671 = vmatprep.subr.bf16.mxu0 0
      %5672 = vmatpush1.bf16.msra.mxu0 %v5625
      %5673 = vmatprep.subr.bf16.mxu0 0
      %5674 = vmatpush1.bf16.msra.mxu0 %v5626
      %5675 = vmatprep.subr.bf16.mxu0 0
      %5676 = vmatpush1.bf16.msra.mxu0 %v5627
      %5677 = vmatprep.subr.bf16.mxu0 0
      %5678 = vmatpush1.bf16.msra.mxu0 %v5628
      %5679 = vmatprep.subr.bf16.mxu0 0
      %5680 = vmatpush1.bf16.msra.mxu0 %v5629
      %5681 = vmatprep.subr.bf16.mxu0 0
      %5682 = vmatpush1.bf16.msra.mxu0 %v5630
      %5683 = vmatprep.subr.bf16.mxu0 0
      %5684 = vmatpush1.bf16.msra.mxu0 %v5631
      %5685 = vmatprep.subr.bf16.mxu0 0
      %5686 = vmatpush1.bf16.msra.mxu0 %v5632
      %5687 = vmatprep.subr.bf16.mxu0 0
      %5688 = vmatpush1.bf16.msra.mxu0 %v5633
      %5689 = vmatprep.mubr.bf16.mxu0 %v5499
      %5690 = vmatmul.mubr.bf16.gmra.mrb[0].mxu0 %v5498
      %v5691 = vpop.f32.mrb[0].mxu0
      %v5692 = vadd.f32 %v5544, %v5691
      %v5693 = vpop.f32.mrb[0].mxu0
      %v5694 = vpop.f32.mrb[0].mxu0
      %v5695 = vadd.f32 %v5544, %v5694
      %v5696 = vpop.f32.mrb[0].mxu0
      %5697 = vdwg.mxu0
      %5698 = vmatprep.subr.bf16.mxu0 0
      %5699 = vmatpush1.bf16.msra.mxu0 %v5634
      %5700 = vmatprep.subr.bf16.mxu0 0
      %5701 = vmatpush1.bf16.msra.mxu0 %v5635
      %5702 = vmatprep.subr.bf16.mxu0 0
      %5703 = vmatpush1.bf16.msra.mxu0 0
      %5704 = vmatprep.subr.bf16.mxu0 0
      %5705 = vmatpush1.bf16.msra.mxu0 0
      %5706 = vmatprep.subr.bf16.mxu0 0
      %5707 = vmatpush1.bf16.msra.mxu0 0
      %5708 = vmatprep.subr.bf16.mxu0 0
      %5709 = vmatpush1.bf16.msra.mxu0 0
      %5710 = vmatprep.subr.bf16.mxu0 0
      %5711 = vmatpush1.bf16.msra.mxu0 0
      %5712 = vmatprep.subr.bf16.mxu0 0
      %5713 = vmatpush1.bf16.msra.mxu0 0
      %5714 = vmatprep.subr.bf16.mxu0 0
      %5715 = vmatpush1.bf16.msra.mxu0 0
      %5716 = vmatprep.subr.bf16.mxu0 0
      %5717 = vmatpush1.bf16.msra.mxu0 0
      %5718 = vmatprep.subr.bf16.mxu0 0
      %5719 = vmatpush1.bf16.msra.mxu0 0
      %5720 = vmatprep.subr.bf16.mxu0 0
      %5721 = vmatpush1.bf16.msra.mxu0 0
      %5722 = vmatprep.subr.bf16.mxu0 0
      %5723 = vmatpush1.bf16.msra.mxu0 0
      %5724 = vmatprep.subr.bf16.mxu0 0
      %5725 = vmatpush1.bf16.msra.mxu0 0
      %5726 = vmatprep.subr.bf16.mxu0 0
      %5727 = vmatpush1.bf16.msra.mxu0 0
      %5728 = vmatprep.subr.bf16.mxu0 0
      %5729 = vmatpush1.bf16.msra.mxu0 0
      %5730 = vmatprep.mubr.bf16.mxu0 0
      %5731 = vmatmul.mubr.bf16.gmra.mrb[0].mxu0 %v5655
      %v5732 = vpop.f32.mrb[0].mxu0
      %v5733 = vadd.f32 %v5692, %v5732
      %v5734 = vpop.f32.mrb[0].mxu0
      %v5735 = vpop.f32.mrb[0].mxu0
      %v5736 = vadd.f32 %v5695, %v5735
      %v5737 = vpop.f32.mrb[0].mxu0
      %5738 = vdwg.mxu0
      %v5739 = vadd.f32 %v5733, %v3662
      %v5740 = vadd.f32 %v5736, %v3665
      %v5741 = vpack.c.bf16 %v5740, %v5739
      %v5742 = vld [vmem:[%s19] sm:$0xf]
      %v5743 = vld [vmem:[%s19 + $0x4] sm:$0xf]
      %v5744 = vld [vmem:[%s19 + $0x8] sm:$0xf]
      %v5745 = vld [vmem:[%s19 + $0xc] sm:$0xf]
      %v5746 = vld [vmem:[%s20] sm:$0x1]
      %v5748 = vlaneseq
      %v5749 = vshrl.u32 %v5748, 7
      %v5750 = vsub.s32 0, %v5749
      %v5751 = vrot.slane %v5746, %v5750
      %v5757 = vunpack.c.l.b16 %v5742
      %v5758 = vunpack.c.l.b16 %v5743
      %v5759 = vunpack.c.l.b16 %v5744
      %v5760 = vunpack.c.l.b16 %v5745
      %v5761 = vpack.c.b16 %v5758, %v5757
      %v5762 = vpack.c.b16 %v5760, %v5759
      %v5766 = vsel %vm753, %v5741, 0
      %5768 = vmatprep.subr.bf16.mxu0 0
      %5769 = vmatpush1.bf16.msra.mxu0 %v5761
      %5770 = vmatprep.subr.bf16.mxu0 0
      %5771 = vmatpush1.bf16.msra.mxu0 %v5762
      %5772 = vmatprep.subr.bf16.mxu0 0
      %5773 = vmatpush1.bf16.msra.mxu0 0
      %5774 = vmatprep.subr.bf16.mxu0 0
      %5775 = vmatpush1.bf16.msra.mxu0 0
      %5776 = vmatprep.subr.bf16.mxu0 0
      %5777 = vmatpush1.bf16.msra.mxu0 0
      %5778 = vmatprep.subr.bf16.mxu0 0
      %5779 = vmatpush1.bf16.msra.mxu0 0
      %5780 = vmatprep.subr.bf16.mxu0 0
      %5781 = vmatpush1.bf16.msra.mxu0 0
      %5782 = vmatprep.subr.bf16.mxu0 0
      %5783 = vmatpush1.bf16.msra.mxu0 0
      %5784 = vmatprep.subr.bf16.mxu0 0
      %5785 = vmatpush1.bf16.msra.mxu0 0
      %5786 = vmatprep.subr.bf16.mxu0 0
      %5787 = vmatpush1.bf16.msra.mxu0 0
      %5788 = vmatprep.subr.bf16.mxu0 0
      %5789 = vmatpush1.bf16.msra.mxu0 0
      %5790 = vmatprep.subr.bf16.mxu0 0
      %5791 = vmatpush1.bf16.msra.mxu0 0
      %5792 = vmatprep.subr.bf16.mxu0 0
      %5793 = vmatpush1.bf16.msra.mxu0 0
      %5794 = vmatprep.subr.bf16.mxu0 0
      %5795 = vmatpush1.bf16.msra.mxu0 0
      %5796 = vmatprep.subr.bf16.mxu0 0
      %5797 = vmatpush1.bf16.msra.mxu0 0
      %5798 = vmatprep.subr.bf16.mxu0 0
      %5799 = vmatpush1.bf16.msra.mxu0 0
      %5800 = vmatprep.mubr.bf16.mxu0 0
      %5801 = vmatmul.mubr.bf16.gmra.mrb[0].mxu0 %v5766
      %v5802 = vpop.f32.mrb[0].mxu0
      %v5803 = vadd.f32 %v5751, %v5802
      %v5804 = vpop.f32.mrb[0].mxu0
      %v5805 = vpop.f32.mrb[0].mxu0
      %v5806 = vadd.f32 %v5751, %v5805
      %v5807 = vpop.f32.mrb[0].mxu0
      %5808 = vdwg.mxu0
      %v5809 = vmax.f32 %v5803, 0.0
      %v5810 = vmax.f32 %v5806, 0.0
      %5811 = vst [vmem:[%s650] sm:$0xff] %v5809
      %5812 = vst [vmem:[%s650 + $0x8] sm:$0xff] %v5810
      %p5813 = scmp.lt.s32.totalorder %s32, 1
      %s5814 = scalar_select %p5813, %s32, 1
      %s5815 = smul.addr %s5814, 2
      %s5816 = smul.addr %s5815, 8
      %s5817 = scalar_lea.vmem %s21, %s5816
      // Predicated region
      $region105: #{decoder_forward.1} parent=103 // pred_check
        %p5818 = pneg %p496
      $region106: #{decoder_forward.1} parent=103 // pred_check_branch
        %5820 = sbr.rel (%p5818) target = $region108
      $region107: #{decoder_forward.1} parent=103 // pred_region
        _
      $region108: #{decoder_forward.1} parent=103 // pred_fallthru
        _
    $region104: #{decoder_forward.1} parent=5 // pred_fallthru
      _
    %p5821 = scmp.le.s32.totalorder 2, %s27
    // Predicated region
    $region109: #{decoder_forward.1} parent=5 // pred_check
      %p5822 = pneg %p5821
    $region110: #{decoder_forward.1} parent=5 // pred_check_branch
      %5824 = sbr.rel (%p5822) target = $region112
    $region111: #{decoder_forward.1} parent=5 // pred_region
      %s5825 = ssub.s32 %s27, 2
      // Predicated region
      $region113: #{decoder_forward.1} parent=111 // pred_check
        %p5826 = pneg %p502
      $region114: #{decoder_forward.1} parent=111 // pred_check_branch
        %5828 = sbr.rel (%p5826) target = $region116
      $region115: #{decoder_forward.1} parent=111 // pred_region
        %p5829 = scmp.lt.s32.totalorder %s33, 1
        %s5830 = scalar_select %p5829, %s33, 1
        %s5831 = smul.addr %s5830, 2
        %s5832 = smul.addr %s5831, 8
        %s5833 = scalar_lea.vmem %s21, %s5832
      $region116: #{decoder_forward.1} parent=111 // pred_fallthru
        _
    $region112: #{decoder_forward.1} parent=5 // pred_fallthru
      _
  $region6: #{decoder_forward.1} parent=0 // loop_footer
    %s31 = sadd.s32 1, %s27
  $region7: #{decoder_forward.1} parent=0 // loop_footer_branch
    %26 = sbr.rel target = $region3
  $region8: #{decoder_forward.1} parent=0 // loop_exit
    _

</llo_original>
